<compile_context>
chip_gen: v6e
topology: v6e:2x2x1
jax: 0.10.0
libtpu: 0.0.40
codegen_flags: <defaults>
</compile_context>

<pallas_src>
import functools
import math

import jax
import jax.numpy as jnp
from jax.experimental import pallas as pl
from jax.experimental.pallas import tpu as pltpu


# ----------------------------- Pallas kernel -------------------------------


def causal_conv_kernel(x_ref, w1_ref, b1_ref, w2_ref, b2_ref, o_ref, *, K, L, Bt):
    """One grid step: Bt raw (C, L) rows -> Bt output (C, L) rows.

    All heavy math is done time-major (rows = time, lanes = channels C) on a
    batch-flattened slab of Bt*Lp rows so each conv tap is a single large
    MXU matmul with bf16 operands and f32 accumulation.
    """
    C = o_ref.shape[1]
    p = K - 1
    Lp = L + 2 * p            # replication-padded length per batch row
    N1 = Bt * Lp - p          # conv1 rows computed on the flattened slab
    N2 = Bt * Lp - 2 * p      # conv2 rows (covers every needed output row)

    # --- ReplicationPad1d + NCW -> time-major transpose, entirely in VMEM ---
    pieces = []
    for b in range(Bt):
        xt = jnp.transpose(x_ref[b])                                # (L, C) f32
        pieces += [jnp.broadcast_to(xt[:1], (p, C)), xt,
                   jnp.broadcast_to(xt[L - 1:], (p, C))]
    X = jnp.concatenate(pieces, axis=0)                             # (Bt*Lp, C)

    # --- conv1: K-tap accumulate, bf16 MXU operands, f32 accumulation ---
    acc1 = jnp.broadcast_to(b1_ref[...], (N1, C)).astype(jnp.float32)
    for j in range(K):
        acc1 = acc1 + jnp.dot(X[j:j + N1].astype(jnp.bfloat16), w1_ref[j],
                              preferred_element_type=jnp.float32)
    # LeakyReLU(0.01); Dropout(p=0.0) is the identity.
    h = jnp.maximum(acc1, 0.01 * acc1)                              # (N1, C) f32

    # --- conv2 + Tanh ---
    acc2 = jnp.broadcast_to(b2_ref[...], (N2, C)).astype(jnp.float32)
    for j in range(K):
        acc2 = acc2 + jnp.dot(h[j:j + N2].astype(jnp.bfloat16), w2_ref[j],
                              preferred_element_type=jnp.float32)
    y = jnp.tanh(acc2)                                              # (N2, C) f32

    # --- back to (C, L); segment b starts at the (aligned) row b*Lp ---
    for b in range(Bt):
        o_ref[b] = jnp.transpose(y[b * Lp:b * Lp + L]).astype(o_ref.dtype)


# ------------------------------- wrapper ------------------------------------


def _pick_batch_tile(B, max_tile=8):
    """Largest divisor of B that still leaves >= 4 grid steps (>= 2 per v7x
    TensorCore), capped so per-step slabs/accumulators stay small in VMEM."""
    target = max(1, B // 4)
    bt = 1
    for cand in range(1, min(B, max_tile) + 1):
        if B % cand == 0 and cand <= target:
            bt = cand
    return bt


def causal_conv_block(x, w1, b1, w2, b2, batch_tile=None, single_buffer_weights=True):
    """CausalConvBlock forward.

    x : (B, C, L)   PyTorch NCW layout.
    w1, w2 : (C, C, K)  PyTorch Conv1d weights (out, in, K).
    b1, b2 : (C,)       Conv1d biases.
    Returns (B, C, L) in x.dtype.
    """
    B, C, L = x.shape
    K = w1.shape[-1]

    # Tap-major weights: w_t[j, ci, co] = w[co, ci, j]; bf16 for the MXU.
    w1t = jnp.transpose(w1, (2, 1, 0)).astype(jnp.bfloat16)        # (K, C, C)
    w2t = jnp.transpose(w2, (2, 1, 0)).astype(jnp.bfloat16)
    b1m = b1.reshape(1, C).astype(jnp.float32)
    b2m = b2.reshape(1, C).astype(jnp.float32)

    if batch_tile is None:
        batch_tile = _pick_batch_tile(B)
    Bt = batch_tile
    assert B % Bt == 0, (B, Bt)  # TODO(synk): remainder tile for ragged batch sizes.

    def const_spec(shape):
        index_map = lambda i: (0,) * len(shape)
        if single_buffer_weights:
            # Constant index_map -> fetched once; single-buffer to halve VMEM.
            return pl.BlockSpec(shape, index_map, pipeline_mode=pl.Buffered(1))
        return pl.BlockSpec(shape, index_map)

    kern = functools.partial(causal_conv_kernel, K=K, L=L, Bt=Bt)
    return pl.pallas_call(
        kern,
        out_shape=jax.ShapeDtypeStruct((B, C, L), x.dtype),
        grid_spec=pltpu.PrefetchScalarGridSpec(
            num_scalar_prefetch=0,
            grid=(B // Bt,),
            in_specs=[
                pl.BlockSpec((Bt, C, L), lambda i: (i, 0, 0)),
                const_spec((K, C, C)),
                const_spec((1, C)),
                const_spec((K, C, C)),
                const_spec((1, C)),
            ],
            out_specs=pl.BlockSpec((Bt, C, L), lambda i: (i, 0, 0)),
        ),
        compiler_params=pltpu.CompilerParams(
            dimension_semantics=("parallel",),
            vmem_limit_bytes=32 * 1024 * 1024,
        ),
    )(x, w1t, b1m, w2t, b2m)


# ------------------------ pure-JAX reference (check) ------------------------


def causal_conv_block_ref(x, w1, b1, w2, b2):
    K = w1.shape[-1]
    p = K - 1
    dn = ("NCH", "OIH", "NCH")
    xp = jnp.pad(x, ((0, 0), (0, 0), (p, p)), mode="edge")
    h = jax.lax.conv_general_dilated(
        xp, w1, (1,), "VALID", dimension_numbers=dn,
        precision=jax.lax.Precision.HIGHEST) + b1[None, :, None]
    h = jnp.where(h >= 0.0, h, 0.01 * h)
    o = jax.lax.conv_general_dilated(
        h, w2, (1,), "VALID", dimension_numbers=dn,
        precision=jax.lax.Precision.HIGHEST) + b2[None, :, None]
    return jnp.tanh(o)


# ---------------------------------- main -------------------------------------


if __name__ == "__main__":
    # D_MODEL=128 keeps the channel (lane) dim dense; B=16 with Bt=4 gives a
    # 4-step "parallel" grid (2 iterations per v7x TensorCore).
    B, D_MODEL, L, K = 16, 128, 64, 5

    key = jax.random.PRNGKey(0)
    kx, k1, kb1, k2, kb2 = jax.random.split(key, 5)
    x = jax.random.normal(kx, (B, D_MODEL, L), jnp.float32)        # NCW, like PyTorch
    scale = 1.0 / math.sqrt(D_MODEL * K)
    w1 = scale * jax.random.normal(k1, (D_MODEL, D_MODEL, K), jnp.float32)
    b1 = 0.1 * jax.random.normal(kb1, (D_MODEL,), jnp.float32)
    w2 = scale * jax.random.normal(k2, (D_MODEL, D_MODEL, K), jnp.float32)
    b2 = 0.1 * jax.random.normal(kb2, (D_MODEL,), jnp.float32)

    def run(single_buffer_weights):
        fwd = jax.jit(functools.partial(
            causal_conv_block, single_buffer_weights=single_buffer_weights))
        return jax.block_until_ready(fwd(x, w1, b1, w2, b2))

    try:
        out = run(True)
    except Exception:
        # Fall back to default double buffering if this JAX build rejects
        # pipeline_mode=pl.Buffered(1) on the resident weight/bias blocks.
        out = run(False)

    ref = causal_conv_block_ref(x, w1, b1, w2, b2)
    assert out.shape == (B, D_MODEL, L), out.shape
    err = float(jnp.max(jnp.abs(out - ref)))
    # bf16 MXU operands (f32 accumulation) vs. f32 HIGHEST reference.
    assert err < 5e-2, f"mismatch vs reference: max abs err {err}"
    # TODO(synk): training-mode nn.Dropout(p>0) (stochastic masking) is not
    # implemented; the module default p=0.0 makes it the identity here.
    print("KERNEL_OK")
</pallas_src>

<mosaic_0001>
module attributes {stable_mosaic.version = 11 : i64} {
  func.func @causal_conv_kernel(%arg0: i32, %arg1: memref<4x128x64xf32, #tpu.memory_space<vmem>>, %arg2: memref<5x128x128xbf16, #tpu.memory_space<vmem>>, %arg3: memref<1x128xf32, #tpu.memory_space<vmem>>, %arg4: memref<5x128x128xbf16, #tpu.memory_space<vmem>>, %arg5: memref<1x128xf32, #tpu.memory_space<vmem>>, %arg6: memref<4x128x64xf32, #tpu.memory_space<vmem>>) attributes {dimension_semantics = [#tpu.dimension_semantics<parallel>], iteration_bounds = array<i64: 4>, scalar_prefetch = 0 : i64, scratch_operands = 0 : i64, tpu.core_type = #tpu.core_type<tc>, window_params = [{transform_indices = @transform_0, window_bounds = array<i64: 4, 128, 64>}, {pipeline_mode = #tpu.pipeline_mode<synchronous>, transform_indices = @transform_1, window_bounds = array<i64: 5, 128, 128>}, {pipeline_mode = #tpu.pipeline_mode<synchronous>, transform_indices = @transform_2, window_bounds = array<i64: 1, 128>}, {pipeline_mode = #tpu.pipeline_mode<synchronous>, transform_indices = @transform_3, window_bounds = array<i64: 5, 128, 128>}, {pipeline_mode = #tpu.pipeline_mode<synchronous>, transform_indices = @transform_4, window_bounds = array<i64: 1, 128>}, {transform_indices = @transform_5, window_bounds = array<i64: 4, 128, 64>}]} {
    %c0 = arith.constant 0 : index
    %c0_0 = arith.constant 0 : index
    %c0_1 = arith.constant 0 : index
    %0 = vector.load %arg1[%c0, %c0_0, %c0_1] : memref<4x128x64xf32, #tpu.memory_space<vmem>>, vector<1x128x64xf32>
    %1 = vector.shape_cast %0 : vector<1x128x64xf32> to vector<128x64xf32>
    %2 = tpu.transpose %1, [1, 0] : vector<128x64xf32> -> vector<64x128xf32>
    %3 = vector.extract_strided_slice %2 {offsets = [0, 0], sizes = [1, 128], strides = [1, 1]} : vector<64x128xf32> to vector<1x128xf32>
    %4 = vector.shape_cast %3 : vector<1x128xf32> to vector<1x128xf32>
    %5 = vector.broadcast %4 : vector<1x128xf32> to vector<4x128xf32>
    %6 = vector.extract_strided_slice %2 {offsets = [63, 0], sizes = [1, 128], strides = [1, 1]} : vector<64x128xf32> to vector<1x128xf32>
    %7 = vector.shape_cast %6 : vector<1x128xf32> to vector<1x128xf32>
    %8 = vector.broadcast %7 : vector<1x128xf32> to vector<4x128xf32>
    %c1 = arith.constant 1 : index
    %c0_2 = arith.constant 0 : index
    %c0_3 = arith.constant 0 : index
    %9 = vector.load %arg1[%c1, %c0_2, %c0_3] : memref<4x128x64xf32, #tpu.memory_space<vmem>>, vector<1x128x64xf32>
    %10 = vector.shape_cast %9 : vector<1x128x64xf32> to vector<128x64xf32>
    %11 = tpu.transpose %10, [1, 0] : vector<128x64xf32> -> vector<64x128xf32>
    %12 = vector.extract_strided_slice %11 {offsets = [0, 0], sizes = [1, 128], strides = [1, 1]} : vector<64x128xf32> to vector<1x128xf32>
    %13 = vector.shape_cast %12 : vector<1x128xf32> to vector<1x128xf32>
    %14 = vector.broadcast %13 : vector<1x128xf32> to vector<4x128xf32>
    %15 = vector.extract_strided_slice %11 {offsets = [63, 0], sizes = [1, 128], strides = [1, 1]} : vector<64x128xf32> to vector<1x128xf32>
    %16 = vector.shape_cast %15 : vector<1x128xf32> to vector<1x128xf32>
    %17 = vector.broadcast %16 : vector<1x128xf32> to vector<4x128xf32>
    %c2 = arith.constant 2 : index
    %c0_4 = arith.constant 0 : index
    %c0_5 = arith.constant 0 : index
    %18 = vector.load %arg1[%c2, %c0_4, %c0_5] : memref<4x128x64xf32, #tpu.memory_space<vmem>>, vector<1x128x64xf32>
    %19 = vector.shape_cast %18 : vector<1x128x64xf32> to vector<128x64xf32>
    %20 = tpu.transpose %19, [1, 0] : vector<128x64xf32> -> vector<64x128xf32>
    %21 = vector.extract_strided_slice %20 {offsets = [0, 0], sizes = [1, 128], strides = [1, 1]} : vector<64x128xf32> to vector<1x128xf32>
    %22 = vector.shape_cast %21 : vector<1x128xf32> to vector<1x128xf32>
    %23 = vector.broadcast %22 : vector<1x128xf32> to vector<4x128xf32>
    %24 = vector.extract_strided_slice %20 {offsets = [63, 0], sizes = [1, 128], strides = [1, 1]} : vector<64x128xf32> to vector<1x128xf32>
    %25 = vector.shape_cast %24 : vector<1x128xf32> to vector<1x128xf32>
    %26 = vector.broadcast %25 : vector<1x128xf32> to vector<4x128xf32>
    %c3 = arith.constant 3 : index
    %c0_6 = arith.constant 0 : index
    %c0_7 = arith.constant 0 : index
    %27 = vector.load %arg1[%c3, %c0_6, %c0_7] : memref<4x128x64xf32, #tpu.memory_space<vmem>>, vector<1x128x64xf32>
    %28 = vector.shape_cast %27 : vector<1x128x64xf32> to vector<128x64xf32>
    %29 = tpu.transpose %28, [1, 0] : vector<128x64xf32> -> vector<64x128xf32>
    %30 = vector.extract_strided_slice %29 {offsets = [0, 0], sizes = [1, 128], strides = [1, 1]} : vector<64x128xf32> to vector<1x128xf32>
    %31 = vector.shape_cast %30 : vector<1x128xf32> to vector<1x128xf32>
    %32 = vector.broadcast %31 : vector<1x128xf32> to vector<4x128xf32>
    %33 = vector.extract_strided_slice %29 {offsets = [63, 0], sizes = [1, 128], strides = [1, 1]} : vector<64x128xf32> to vector<1x128xf32>
    %34 = vector.shape_cast %33 : vector<1x128xf32> to vector<1x128xf32>
    %35 = vector.broadcast %34 : vector<1x128xf32> to vector<4x128xf32>
    %36 = tpu.concatenate %5, %2, %8, %14, %11, %17, %23, %20, %26, %32, %29, %35 in 0 : vector<4x128xf32>, vector<64x128xf32>, vector<4x128xf32>, vector<4x128xf32>, vector<64x128xf32>, vector<4x128xf32>, vector<4x128xf32>, vector<64x128xf32>, vector<4x128xf32>, vector<4x128xf32>, vector<64x128xf32>, vector<4x128xf32> -> vector<288x128xf32>
    %c0_8 = arith.constant 0 : index
    %c0_9 = arith.constant 0 : index
    %37 = vector.load %arg3[%c0_8, %c0_9] : memref<1x128xf32, #tpu.memory_space<vmem>>, vector<1x128xf32>
    %38 = vector.shape_cast %37 : vector<1x128xf32> to vector<1x128xf32>
    %39 = vector.broadcast %38 : vector<1x128xf32> to vector<284x128xf32>
    %40 = vector.extract_strided_slice %36 {offsets = [0, 0], sizes = [284, 128], strides = [1, 1]} : vector<288x128xf32> to vector<284x128xf32>
    %41 = arith.truncf %40 : vector<284x128xf32> to vector<284x128xbf16>
    %c0_10 = arith.constant 0 : index
    %c0_11 = arith.constant 0 : index
    %c0_12 = arith.constant 0 : index
    %42 = vector.load %arg2[%c0_10, %c0_11, %c0_12] : memref<5x128x128xbf16, #tpu.memory_space<vmem>>, vector<1x128x128xbf16>
    %43 = vector.shape_cast %42 : vector<1x128x128xbf16> to vector<128x128xbf16>
    %cst = arith.constant dense<0.000000e+00> : vector<284x128xf32>
    %44 = tpu.matmul %41, %43, %cst {dimension_numbers = #tpu.dot_dimension_numbers<[1], [0], [0], [1], [0, 0, 1, 1], [], []>} : vector<284x128xbf16>, vector<128x128xbf16>, vector<284x128xf32> -> vector<284x128xf32>
    %45 = arith.addf %39, %44 : vector<284x128xf32>
    %46 = vector.extract_strided_slice %36 {offsets = [1, 0], sizes = [284, 128], strides = [1, 1]} : vector<288x128xf32> to vector<284x128xf32>
    %47 = arith.truncf %46 : vector<284x128xf32> to vector<284x128xbf16>
    %c1_13 = arith.constant 1 : index
    %c0_14 = arith.constant 0 : index
    %c0_15 = arith.constant 0 : index
    %48 = vector.load %arg2[%c1_13, %c0_14, %c0_15] : memref<5x128x128xbf16, #tpu.memory_space<vmem>>, vector<1x128x128xbf16>
    %49 = vector.shape_cast %48 : vector<1x128x128xbf16> to vector<128x128xbf16>
    %cst_16 = arith.constant dense<0.000000e+00> : vector<284x128xf32>
    %50 = tpu.matmul %47, %49, %cst_16 {dimension_numbers = #tpu.dot_dimension_numbers<[1], [0], [0], [1], [0, 0, 1, 1], [], []>} : vector<284x128xbf16>, vector<128x128xbf16>, vector<284x128xf32> -> vector<284x128xf32>
    %51 = arith.addf %45, %50 : vector<284x128xf32>
    %52 = vector.extract_strided_slice %36 {offsets = [2, 0], sizes = [284, 128], strides = [1, 1]} : vector<288x128xf32> to vector<284x128xf32>
    %53 = arith.truncf %52 : vector<284x128xf32> to vector<284x128xbf16>
    %c2_17 = arith.constant 2 : index
    %c0_18 = arith.constant 0 : index
    %c0_19 = arith.constant 0 : index
    %54 = vector.load %arg2[%c2_17, %c0_18, %c0_19] : memref<5x128x128xbf16, #tpu.memory_space<vmem>>, vector<1x128x128xbf16>
    %55 = vector.shape_cast %54 : vector<1x128x128xbf16> to vector<128x128xbf16>
    %cst_20 = arith.constant dense<0.000000e+00> : vector<284x128xf32>
    %56 = tpu.matmul %53, %55, %cst_20 {dimension_numbers = #tpu.dot_dimension_numbers<[1], [0], [0], [1], [0, 0, 1, 1], [], []>} : vector<284x128xbf16>, vector<128x128xbf16>, vector<284x128xf32> -> vector<284x128xf32>
    %57 = arith.addf %51, %56 : vector<284x128xf32>
    %58 = vector.extract_strided_slice %36 {offsets = [3, 0], sizes = [284, 128], strides = [1, 1]} : vector<288x128xf32> to vector<284x128xf32>
    %59 = arith.truncf %58 : vector<284x128xf32> to vector<284x128xbf16>
    %c3_21 = arith.constant 3 : index
    %c0_22 = arith.constant 0 : index
    %c0_23 = arith.constant 0 : index
    %60 = vector.load %arg2[%c3_21, %c0_22, %c0_23] : memref<5x128x128xbf16, #tpu.memory_space<vmem>>, vector<1x128x128xbf16>
    %61 = vector.shape_cast %60 : vector<1x128x128xbf16> to vector<128x128xbf16>
    %cst_24 = arith.constant dense<0.000000e+00> : vector<284x128xf32>
    %62 = tpu.matmul %59, %61, %cst_24 {dimension_numbers = #tpu.dot_dimension_numbers<[1], [0], [0], [1], [0, 0, 1, 1], [], []>} : vector<284x128xbf16>, vector<128x128xbf16>, vector<284x128xf32> -> vector<284x128xf32>
    %63 = arith.addf %57, %62 : vector<284x128xf32>
    %64 = vector.extract_strided_slice %36 {offsets = [4, 0], sizes = [284, 128], strides = [1, 1]} : vector<288x128xf32> to vector<284x128xf32>
    %65 = arith.truncf %64 : vector<284x128xf32> to vector<284x128xbf16>
    %c4 = arith.constant 4 : index
    %c0_25 = arith.constant 0 : index
    %c0_26 = arith.constant 0 : index
    %66 = vector.load %arg2[%c4, %c0_25, %c0_26] : memref<5x128x128xbf16, #tpu.memory_space<vmem>>, vector<1x128x128xbf16>
    %67 = vector.shape_cast %66 : vector<1x128x128xbf16> to vector<128x128xbf16>
    %cst_27 = arith.constant dense<0.000000e+00> : vector<284x128xf32>
    %68 = tpu.matmul %65, %67, %cst_27 {dimension_numbers = #tpu.dot_dimension_numbers<[1], [0], [0], [1], [0, 0, 1, 1], [], []>} : vector<284x128xbf16>, vector<128x128xbf16>, vector<284x128xf32> -> vector<284x128xf32>
    %69 = arith.addf %63, %68 : vector<284x128xf32>
    %cst_28 = arith.constant 0.00999999977 : f32
    %70 = vector.broadcast %cst_28 : f32 to vector<284x128xf32>
    %71 = arith.mulf %70, %69 : vector<284x128xf32>
    %72 = arith.maximumf %69, %71 : vector<284x128xf32>
    %c0_29 = arith.constant 0 : index
    %c0_30 = arith.constant 0 : index
    %73 = vector.load %arg5[%c0_29, %c0_30] : memref<1x128xf32, #tpu.memory_space<vmem>>, vector<1x128xf32>
    %74 = vector.shape_cast %73 : vector<1x128xf32> to vector<1x128xf32>
    %75 = vector.broadcast %74 : vector<1x128xf32> to vector<280x128xf32>
    %76 = vector.extract_strided_slice %72 {offsets = [0, 0], sizes = [280, 128], strides = [1, 1]} : vector<284x128xf32> to vector<280x128xf32>
    %77 = arith.truncf %76 : vector<280x128xf32> to vector<280x128xbf16>
    %c0_31 = arith.constant 0 : index
    %c0_32 = arith.constant 0 : index
    %c0_33 = arith.constant 0 : index
    %78 = vector.load %arg4[%c0_31, %c0_32, %c0_33] : memref<5x128x128xbf16, #tpu.memory_space<vmem>>, vector<1x128x128xbf16>
    %79 = vector.shape_cast %78 : vector<1x128x128xbf16> to vector<128x128xbf16>
    %cst_34 = arith.constant dense<0.000000e+00> : vector<280x128xf32>
    %80 = tpu.matmul %77, %79, %cst_34 {dimension_numbers = #tpu.dot_dimension_numbers<[1], [0], [0], [1], [0, 0, 1, 1], [], []>} : vector<280x128xbf16>, vector<128x128xbf16>, vector<280x128xf32> -> vector<280x128xf32>
    %81 = arith.addf %75, %80 : vector<280x128xf32>
    %82 = vector.extract_strided_slice %72 {offsets = [1, 0], sizes = [280, 128], strides = [1, 1]} : vector<284x128xf32> to vector<280x128xf32>
    %83 = arith.truncf %82 : vector<280x128xf32> to vector<280x128xbf16>
    %c1_35 = arith.constant 1 : index
    %c0_36 = arith.constant 0 : index
    %c0_37 = arith.constant 0 : index
    %84 = vector.load %arg4[%c1_35, %c0_36, %c0_37] : memref<5x128x128xbf16, #tpu.memory_space<vmem>>, vector<1x128x128xbf16>
    %85 = vector.shape_cast %84 : vector<1x128x128xbf16> to vector<128x128xbf16>
    %cst_38 = arith.constant dense<0.000000e+00> : vector<280x128xf32>
    %86 = tpu.matmul %83, %85, %cst_38 {dimension_numbers = #tpu.dot_dimension_numbers<[1], [0], [0], [1], [0, 0, 1, 1], [], []>} : vector<280x128xbf16>, vector<128x128xbf16>, vector<280x128xf32> -> vector<280x128xf32>
    %87 = arith.addf %81, %86 : vector<280x128xf32>
    %88 = vector.extract_strided_slice %72 {offsets = [2, 0], sizes = [280, 128], strides = [1, 1]} : vector<284x128xf32> to vector<280x128xf32>
    %89 = arith.truncf %88 : vector<280x128xf32> to vector<280x128xbf16>
    %c2_39 = arith.constant 2 : index
    %c0_40 = arith.constant 0 : index
    %c0_41 = arith.constant 0 : index
    %90 = vector.load %arg4[%c2_39, %c0_40, %c0_41] : memref<5x128x128xbf16, #tpu.memory_space<vmem>>, vector<1x128x128xbf16>
    %91 = vector.shape_cast %90 : vector<1x128x128xbf16> to vector<128x128xbf16>
    %cst_42 = arith.constant dense<0.000000e+00> : vector<280x128xf32>
    %92 = tpu.matmul %89, %91, %cst_42 {dimension_numbers = #tpu.dot_dimension_numbers<[1], [0], [0], [1], [0, 0, 1, 1], [], []>} : vector<280x128xbf16>, vector<128x128xbf16>, vector<280x128xf32> -> vector<280x128xf32>
    %93 = arith.addf %87, %92 : vector<280x128xf32>
    %94 = vector.extract_strided_slice %72 {offsets = [3, 0], sizes = [280, 128], strides = [1, 1]} : vector<284x128xf32> to vector<280x128xf32>
    %95 = arith.truncf %94 : vector<280x128xf32> to vector<280x128xbf16>
    %c3_43 = arith.constant 3 : index
    %c0_44 = arith.constant 0 : index
    %c0_45 = arith.constant 0 : index
    %96 = vector.load %arg4[%c3_43, %c0_44, %c0_45] : memref<5x128x128xbf16, #tpu.memory_space<vmem>>, vector<1x128x128xbf16>
    %97 = vector.shape_cast %96 : vector<1x128x128xbf16> to vector<128x128xbf16>
    %cst_46 = arith.constant dense<0.000000e+00> : vector<280x128xf32>
    %98 = tpu.matmul %95, %97, %cst_46 {dimension_numbers = #tpu.dot_dimension_numbers<[1], [0], [0], [1], [0, 0, 1, 1], [], []>} : vector<280x128xbf16>, vector<128x128xbf16>, vector<280x128xf32> -> vector<280x128xf32>
    %99 = arith.addf %93, %98 : vector<280x128xf32>
    %100 = vector.extract_strided_slice %72 {offsets = [4, 0], sizes = [280, 128], strides = [1, 1]} : vector<284x128xf32> to vector<280x128xf32>
    %101 = arith.truncf %100 : vector<280x128xf32> to vector<280x128xbf16>
    %c4_47 = arith.constant 4 : index
    %c0_48 = arith.constant 0 : index
    %c0_49 = arith.constant 0 : index
    %102 = vector.load %arg4[%c4_47, %c0_48, %c0_49] : memref<5x128x128xbf16, #tpu.memory_space<vmem>>, vector<1x128x128xbf16>
    %103 = vector.shape_cast %102 : vector<1x128x128xbf16> to vector<128x128xbf16>
    %cst_50 = arith.constant dense<0.000000e+00> : vector<280x128xf32>
    %104 = tpu.matmul %101, %103, %cst_50 {dimension_numbers = #tpu.dot_dimension_numbers<[1], [0], [0], [1], [0, 0, 1, 1], [], []>} : vector<280x128xbf16>, vector<128x128xbf16>, vector<280x128xf32> -> vector<280x128xf32>
    %105 = arith.addf %99, %104 : vector<280x128xf32>
    %106 = math.tanh %105 : vector<280x128xf32>
    %107 = vector.extract_strided_slice %106 {offsets = [0, 0], sizes = [64, 128], strides = [1, 1]} : vector<280x128xf32> to vector<64x128xf32>
    %108 = tpu.transpose %107, [1, 0] : vector<64x128xf32> -> vector<128x64xf32>
    %c0_51 = arith.constant 0 : index
    %c0_52 = arith.constant 0 : index
    %c0_53 = arith.constant 0 : index
    %109 = vector.load %arg6[%c0_51, %c0_52, %c0_53] : memref<4x128x64xf32, #tpu.memory_space<vmem>>, vector<1x128x64xf32>
    %110 = vector.shape_cast %109 : vector<1x128x64xf32> to vector<128x64xf32>
    %111 = vector.shape_cast %108 : vector<128x64xf32> to vector<1x128x64xf32>
    tpu.vector_store %arg6[%c0_51, %c0_52, %c0_53], %111 {strides = array<i32>} : memref<4x128x64xf32, #tpu.memory_space<vmem>>, vector<1x128x64xf32>,
    %112 = vector.extract_strided_slice %106 {offsets = [72, 0], sizes = [64, 128], strides = [1, 1]} : vector<280x128xf32> to vector<64x128xf32>
    %113 = tpu.transpose %112, [1, 0] : vector<64x128xf32> -> vector<128x64xf32>
    %c1_54 = arith.constant 1 : index
    %c0_55 = arith.constant 0 : index
    %c0_56 = arith.constant 0 : index
    %114 = vector.load %arg6[%c1_54, %c0_55, %c0_56] : memref<4x128x64xf32, #tpu.memory_space<vmem>>, vector<1x128x64xf32>
    %115 = vector.shape_cast %114 : vector<1x128x64xf32> to vector<128x64xf32>
    %116 = vector.shape_cast %113 : vector<128x64xf32> to vector<1x128x64xf32>
    tpu.vector_store %arg6[%c1_54, %c0_55, %c0_56], %116 {strides = array<i32>} : memref<4x128x64xf32, #tpu.memory_space<vmem>>, vector<1x128x64xf32>,
    %117 = vector.extract_strided_slice %106 {offsets = [144, 0], sizes = [64, 128], strides = [1, 1]} : vector<280x128xf32> to vector<64x128xf32>
    %118 = tpu.transpose %117, [1, 0] : vector<64x128xf32> -> vector<128x64xf32>
    %c2_57 = arith.constant 2 : index
    %c0_58 = arith.constant 0 : index
    %c0_59 = arith.constant 0 : index
    %119 = vector.load %arg6[%c2_57, %c0_58, %c0_59] : memref<4x128x64xf32, #tpu.memory_space<vmem>>, vector<1x128x64xf32>
    %120 = vector.shape_cast %119 : vector<1x128x64xf32> to vector<128x64xf32>
    %121 = vector.shape_cast %118 : vector<128x64xf32> to vector<1x128x64xf32>
    tpu.vector_store %arg6[%c2_57, %c0_58, %c0_59], %121 {strides = array<i32>} : memref<4x128x64xf32, #tpu.memory_space<vmem>>, vector<1x128x64xf32>,
    %122 = vector.extract_strided_slice %106 {offsets = [216, 0], sizes = [64, 128], strides = [1, 1]} : vector<280x128xf32> to vector<64x128xf32>
    %123 = tpu.transpose %122, [1, 0] : vector<64x128xf32> -> vector<128x64xf32>
    %c3_60 = arith.constant 3 : index
    %c0_61 = arith.constant 0 : index
    %c0_62 = arith.constant 0 : index
    %124 = vector.load %arg6[%c3_60, %c0_61, %c0_62] : memref<4x128x64xf32, #tpu.memory_space<vmem>>, vector<1x128x64xf32>
    %125 = vector.shape_cast %124 : vector<1x128x64xf32> to vector<128x64xf32>
    %126 = vector.shape_cast %123 : vector<128x64xf32> to vector<1x128x64xf32>
    tpu.vector_store %arg6[%c3_60, %c0_61, %c0_62], %126 {strides = array<i32>} : memref<4x128x64xf32, #tpu.memory_space<vmem>>, vector<1x128x64xf32>,
    return
  }
  func.func @transform_0(%arg0: i32) -> (i32, i32, i32) {
    %c0_i32 = arith.constant 0 : i32
    %c0_i32_0 = arith.constant 0 : i32
    %c0_i32_1 = arith.constant 0 : i32
    return %arg0, %c0_i32, %c0_i32_0 : i32, i32, i32
  }
  func.func @transform_1(%arg0: i32) -> (i32, i32, i32) {
    %c0_i32 = arith.constant 0 : i32
    %c0_i32_0 = arith.constant 0 : i32
    %c0_i32_1 = arith.constant 0 : i32
    %c0_i32_2 = arith.constant 0 : i32
    return %c0_i32, %c0_i32_0, %c0_i32_1 : i32, i32, i32
  }
  func.func @transform_2(%arg0: i32) -> (i32, i32) {
    %c0_i32 = arith.constant 0 : i32
    %c0_i32_0 = arith.constant 0 : i32
    %c0_i32_1 = arith.constant 0 : i32
    return %c0_i32, %c0_i32_0 : i32, i32
  }
  func.func @transform_3(%arg0: i32) -> (i32, i32, i32) {
    %c0_i32 = arith.constant 0 : i32
    %c0_i32_0 = arith.constant 0 : i32
    %c0_i32_1 = arith.constant 0 : i32
    %c0_i32_2 = arith.constant 0 : i32
    return %c0_i32, %c0_i32_0, %c0_i32_1 : i32, i32, i32
  }
  func.func @transform_4(%arg0: i32) -> (i32, i32) {
    %c0_i32 = arith.constant 0 : i32
    %c0_i32_0 = arith.constant 0 : i32
    %c0_i32_1 = arith.constant 0 : i32
    return %c0_i32, %c0_i32_0 : i32, i32
  }
  func.func @transform_5(%arg0: i32) -> (i32, i32, i32) {
    %c0_i32 = arith.constant 0 : i32
    %c0_i32_0 = arith.constant 0 : i32
    %c0_i32_1 = arith.constant 0 : i32
    return %arg0, %c0_i32, %c0_i32_0 : i32, i32, i32
  }
}

module attributes {stable_mosaic.version = 11 : i64} {
  func.func @causal_conv_kernel(%arg0: i32, %arg1: memref<4x128x64xf32, #tpu.memory_space<vmem>>, %arg2: memref<5x128x128xbf16, #tpu.memory_space<vmem>>, %arg3: memref<1x128xf32, #tpu.memory_space<vmem>>, %arg4: memref<5x128x128xbf16, #tpu.memory_space<vmem>>, %arg5: memref<1x128xf32, #tpu.memory_space<vmem>>, %arg6: memref<4x128x64xf32, #tpu.memory_space<vmem>>) attributes {dimension_semantics = [#tpu.dimension_semantics<parallel>], iteration_bounds = array<i64: 4>, scalar_prefetch = 0 : i64, scratch_operands = 0 : i64, tpu.core_type = #tpu.core_type<tc>, window_params = [{transform_indices = @transform_0, window_bounds = array<i64: 4, 128, 64>}, {pipeline_mode = #tpu.pipeline_mode<synchronous>, transform_indices = @transform_1, window_bounds = array<i64: 5, 128, 128>}, {pipeline_mode = #tpu.pipeline_mode<synchronous>, transform_indices = @transform_2, window_bounds = array<i64: 1, 128>}, {pipeline_mode = #tpu.pipeline_mode<synchronous>, transform_indices = @transform_3, window_bounds = array<i64: 5, 128, 128>}, {pipeline_mode = #tpu.pipeline_mode<synchronous>, transform_indices = @transform_4, window_bounds = array<i64: 1, 128>}, {transform_indices = @transform_5, window_bounds = array<i64: 4, 128, 64>}]} {
    %c0 = arith.constant 0 : index
    %c0_0 = arith.constant 0 : index
    %c0_1 = arith.constant 0 : index
    %0 = vector.load %arg1[%c0, %c0_0, %c0_1] : memref<4x128x64xf32, #tpu.memory_space<vmem>>, vector<1x128x64xf32>
    %1 = vector.shape_cast %0 : vector<1x128x64xf32> to vector<128x64xf32>
    %2 = tpu.transpose %1, [1, 0] : vector<128x64xf32> -> vector<64x128xf32>
    %3 = vector.extract_strided_slice %2 {offsets = [0, 0], sizes = [1, 128], strides = [1, 1]} : vector<64x128xf32> to vector<1x128xf32>
    %4 = vector.shape_cast %3 : vector<1x128xf32> to vector<1x128xf32>
    %5 = vector.broadcast %4 : vector<1x128xf32> to vector<4x128xf32>
    %6 = vector.extract_strided_slice %2 {offsets = [63, 0], sizes = [1, 128], strides = [1, 1]} : vector<64x128xf32> to vector<1x128xf32>
    %7 = vector.shape_cast %6 : vector<1x128xf32> to vector<1x128xf32>
    %8 = vector.broadcast %7 : vector<1x128xf32> to vector<4x128xf32>
    %c1 = arith.constant 1 : index
    %c0_2 = arith.constant 0 : index
    %c0_3 = arith.constant 0 : index
    %9 = vector.load %arg1[%c1, %c0_2, %c0_3] : memref<4x128x64xf32, #tpu.memory_space<vmem>>, vector<1x128x64xf32>
    %10 = vector.shape_cast %9 : vector<1x128x64xf32> to vector<128x64xf32>
    %11 = tpu.transpose %10, [1, 0] : vector<128x64xf32> -> vector<64x128xf32>
    %12 = vector.extract_strided_slice %11 {offsets = [0, 0], sizes = [1, 128], strides = [1, 1]} : vector<64x128xf32> to vector<1x128xf32>
    %13 = vector.shape_cast %12 : vector<1x128xf32> to vector<1x128xf32>
    %14 = vector.broadcast %13 : vector<1x128xf32> to vector<4x128xf32>
    %15 = vector.extract_strided_slice %11 {offsets = [63, 0], sizes = [1, 128], strides = [1, 1]} : vector<64x128xf32> to vector<1x128xf32>
    %16 = vector.shape_cast %15 : vector<1x128xf32> to vector<1x128xf32>
    %17 = vector.broadcast %16 : vector<1x128xf32> to vector<4x128xf32>
    %c2 = arith.constant 2 : index
    %c0_4 = arith.constant 0 : index
    %c0_5 = arith.constant 0 : index
    %18 = vector.load %arg1[%c2, %c0_4, %c0_5] : memref<4x128x64xf32, #tpu.memory_space<vmem>>, vector<1x128x64xf32>
    %19 = vector.shape_cast %18 : vector<1x128x64xf32> to vector<128x64xf32>
    %20 = tpu.transpose %19, [1, 0] : vector<128x64xf32> -> vector<64x128xf32>
    %21 = vector.extract_strided_slice %20 {offsets = [0, 0], sizes = [1, 128], strides = [1, 1]} : vector<64x128xf32> to vector<1x128xf32>
    %22 = vector.shape_cast %21 : vector<1x128xf32> to vector<1x128xf32>
    %23 = vector.broadcast %22 : vector<1x128xf32> to vector<4x128xf32>
    %24 = vector.extract_strided_slice %20 {offsets = [63, 0], sizes = [1, 128], strides = [1, 1]} : vector<64x128xf32> to vector<1x128xf32>
    %25 = vector.shape_cast %24 : vector<1x128xf32> to vector<1x128xf32>
    %26 = vector.broadcast %25 : vector<1x128xf32> to vector<4x128xf32>
    %c3 = arith.constant 3 : index
    %c0_6 = arith.constant 0 : index
    %c0_7 = arith.constant 0 : index
    %27 = vector.load %arg1[%c3, %c0_6, %c0_7] : memref<4x128x64xf32, #tpu.memory_space<vmem>>, vector<1x128x64xf32>
    %28 = vector.shape_cast %27 : vector<1x128x64xf32> to vector<128x64xf32>
    %29 = tpu.transpose %28, [1, 0] : vector<128x64xf32> -> vector<64x128xf32>
    %30 = vector.extract_strided_slice %29 {offsets = [0, 0], sizes = [1, 128], strides = [1, 1]} : vector<64x128xf32> to vector<1x128xf32>
    %31 = vector.shape_cast %30 : vector<1x128xf32> to vector<1x128xf32>
    %32 = vector.broadcast %31 : vector<1x128xf32> to vector<4x128xf32>
    %33 = vector.extract_strided_slice %29 {offsets = [63, 0], sizes = [1, 128], strides = [1, 1]} : vector<64x128xf32> to vector<1x128xf32>
    %34 = vector.shape_cast %33 : vector<1x128xf32> to vector<1x128xf32>
    %35 = vector.broadcast %34 : vector<1x128xf32> to vector<4x128xf32>
    %36 = tpu.concatenate %5, %2, %8, %14, %11, %17, %23, %20, %26, %32, %29, %35 in 0 : vector<4x128xf32>, vector<64x128xf32>, vector<4x128xf32>, vector<4x128xf32>, vector<64x128xf32>, vector<4x128xf32>, vector<4x128xf32>, vector<64x128xf32>, vector<4x128xf32>, vector<4x128xf32>, vector<64x128xf32>, vector<4x128xf32> -> vector<288x128xf32>
    %c0_8 = arith.constant 0 : index
    %c0_9 = arith.constant 0 : index
    %37 = vector.load %arg3[%c0_8, %c0_9] : memref<1x128xf32, #tpu.memory_space<vmem>>, vector<1x128xf32>
    %38 = vector.shape_cast %37 : vector<1x128xf32> to vector<1x128xf32>
    %39 = vector.broadcast %38 : vector<1x128xf32> to vector<284x128xf32>
    %40 = vector.extract_strided_slice %36 {offsets = [0, 0], sizes = [284, 128], strides = [1, 1]} : vector<288x128xf32> to vector<284x128xf32>
    %41 = arith.truncf %40 : vector<284x128xf32> to vector<284x128xbf16>
    %c0_10 = arith.constant 0 : index
    %c0_11 = arith.constant 0 : index
    %c0_12 = arith.constant 0 : index
    %42 = vector.load %arg2[%c0_10, %c0_11, %c0_12] : memref<5x128x128xbf16, #tpu.memory_space<vmem>>, vector<1x128x128xbf16>
    %43 = vector.shape_cast %42 : vector<1x128x128xbf16> to vector<128x128xbf16>
    %cst = arith.constant dense<0.000000e+00> : vector<284x128xf32>
    %44 = tpu.matmul %41, %43, %cst {dimension_numbers = #tpu.dot_dimension_numbers<[1], [0], [0], [1], [0, 0, 1, 1], [], []>} : vector<284x128xbf16>, vector<128x128xbf16>, vector<284x128xf32> -> vector<284x128xf32>
    %45 = arith.addf %39, %44 : vector<284x128xf32>
    %46 = vector.extract_strided_slice %36 {offsets = [1, 0], sizes = [284, 128], strides = [1, 1]} : vector<288x128xf32> to vector<284x128xf32>
    %47 = arith.truncf %46 : vector<284x128xf32> to vector<284x128xbf16>
    %c1_13 = arith.constant 1 : index
    %c0_14 = arith.constant 0 : index
    %c0_15 = arith.constant 0 : index
    %48 = vector.load %arg2[%c1_13, %c0_14, %c0_15] : memref<5x128x128xbf16, #tpu.memory_space<vmem>>, vector<1x128x128xbf16>
    %49 = vector.shape_cast %48 : vector<1x128x128xbf16> to vector<128x128xbf16>
    %cst_16 = arith.constant dense<0.000000e+00> : vector<284x128xf32>
    %50 = tpu.matmul %47, %49, %cst_16 {dimension_numbers = #tpu.dot_dimension_numbers<[1], [0], [0], [1], [0, 0, 1, 1], [], []>} : vector<284x128xbf16>, vector<128x128xbf16>, vector<284x128xf32> -> vector<284x128xf32>
    %51 = arith.addf %45, %50 : vector<284x128xf32>
    %52 = vector.extract_strided_slice %36 {offsets = [2, 0], sizes = [284, 128], strides = [1, 1]} : vector<288x128xf32> to vector<284x128xf32>
    %53 = arith.truncf %52 : vector<284x128xf32> to vector<284x128xbf16>
    %c2_17 = arith.constant 2 : index
    %c0_18 = arith.constant 0 : index
    %c0_19 = arith.constant 0 : index
    %54 = vector.load %arg2[%c2_17, %c0_18, %c0_19] : memref<5x128x128xbf16, #tpu.memory_space<vmem>>, vector<1x128x128xbf16>
    %55 = vector.shape_cast %54 : vector<1x128x128xbf16> to vector<128x128xbf16>
    %cst_20 = arith.constant dense<0.000000e+00> : vector<284x128xf32>
    %56 = tpu.matmul %53, %55, %cst_20 {dimension_numbers = #tpu.dot_dimension_numbers<[1], [0], [0], [1], [0, 0, 1, 1], [], []>} : vector<284x128xbf16>, vector<128x128xbf16>, vector<284x128xf32> -> vector<284x128xf32>
    %57 = arith.addf %51, %56 : vector<284x128xf32>
    %58 = vector.extract_strided_slice %36 {offsets = [3, 0], sizes = [284, 128], strides = [1, 1]} : vector<288x128xf32> to vector<284x128xf32>
    %59 = arith.truncf %58 : vector<284x128xf32> to vector<284x128xbf16>
    %c3_21 = arith.constant 3 : index
    %c0_22 = arith.constant 0 : index
    %c0_23 = arith.constant 0 : index
    %60 = vector.load %arg2[%c3_21, %c0_22, %c0_23] : memref<5x128x128xbf16, #tpu.memory_space<vmem>>, vector<1x128x128xbf16>
    %61 = vector.shape_cast %60 : vector<1x128x128xbf16> to vector<128x128xbf16>
    %cst_24 = arith.constant dense<0.000000e+00> : vector<284x128xf32>
    %62 = tpu.matmul %59, %61, %cst_24 {dimension_numbers = #tpu.dot_dimension_numbers<[1], [0], [0], [1], [0, 0, 1, 1], [], []>} : vector<284x128xbf16>, vector<128x128xbf16>, vector<284x128xf32> -> vector<284x128xf32>
    %63 = arith.addf %57, %62 : vector<284x128xf32>
    %64 = vector.extract_strided_slice %36 {offsets = [4, 0], sizes = [284, 128], strides = [1, 1]} : vector<288x128xf32> to vector<284x128xf32>
    %65 = arith.truncf %64 : vector<284x128xf32> to vector<284x128xbf16>
    %c4 = arith.constant 4 : index
    %c0_25 = arith.constant 0 : index
    %c0_26 = arith.constant 0 : index
    %66 = vector.load %arg2[%c4, %c0_25, %c0_26] : memref<5x128x128xbf16, #tpu.memory_space<vmem>>, vector<1x128x128xbf16>
    %67 = vector.shape_cast %66 : vector<1x128x128xbf16> to vector<128x128xbf16>
    %cst_27 = arith.constant dense<0.000000e+00> : vector<284x128xf32>
    %68 = tpu.matmul %65, %67, %cst_27 {dimension_numbers = #tpu.dot_dimension_numbers<[1], [0], [0], [1], [0, 0, 1, 1], [], []>} : vector<284x128xbf16>, vector<128x128xbf16>, vector<284x128xf32> -> vector<284x128xf32>
    %69 = arith.addf %63, %68 : vector<284x128xf32>
    %cst_28 = arith.constant 0.00999999977 : f32
    %70 = vector.broadcast %cst_28 : f32 to vector<284x128xf32>
    %71 = arith.mulf %70, %69 : vector<284x128xf32>
    %72 = arith.maximumf %69, %71 : vector<284x128xf32>
    %c0_29 = arith.constant 0 : index
    %c0_30 = arith.constant 0 : index
    %73 = vector.load %arg5[%c0_29, %c0_30] : memref<1x128xf32, #tpu.memory_space<vmem>>, vector<1x128xf32>
    %74 = vector.shape_cast %73 : vector<1x128xf32> to vector<1x128xf32>
    %75 = vector.broadcast %74 : vector<1x128xf32> to vector<280x128xf32>
    %76 = vector.extract_strided_slice %72 {offsets = [0, 0], sizes = [280, 128], strides = [1, 1]} : vector<284x128xf32> to vector<280x128xf32>
    %77 = arith.truncf %76 : vector<280x128xf32> to vector<280x128xbf16>
    %c0_31 = arith.constant 0 : index
    %c0_32 = arith.constant 0 : index
    %c0_33 = arith.constant 0 : index
    %78 = vector.load %arg4[%c0_31, %c0_32, %c0_33] : memref<5x128x128xbf16, #tpu.memory_space<vmem>>, vector<1x128x128xbf16>
    %79 = vector.shape_cast %78 : vector<1x128x128xbf16> to vector<128x128xbf16>
    %cst_34 = arith.constant dense<0.000000e+00> : vector<280x128xf32>
    %80 = tpu.matmul %77, %79, %cst_34 {dimension_numbers = #tpu.dot_dimension_numbers<[1], [0], [0], [1], [0, 0, 1, 1], [], []>} : vector<280x128xbf16>, vector<128x128xbf16>, vector<280x128xf32> -> vector<280x128xf32>
    %81 = arith.addf %75, %80 : vector<280x128xf32>
    %82 = vector.extract_strided_slice %72 {offsets = [1, 0], sizes = [280, 128], strides = [1, 1]} : vector<284x128xf32> to vector<280x128xf32>
    %83 = arith.truncf %82 : vector<280x128xf32> to vector<280x128xbf16>
    %c1_35 = arith.constant 1 : index
    %c0_36 = arith.constant 0 : index
    %c0_37 = arith.constant 0 : index
    %84 = vector.load %arg4[%c1_35, %c0_36, %c0_37] : memref<5x128x128xbf16, #tpu.memory_space<vmem>>, vector<1x128x128xbf16>
    %85 = vector.shape_cast %84 : vector<1x128x128xbf16> to vector<128x128xbf16>
    %cst_38 = arith.constant dense<0.000000e+00> : vector<280x128xf32>
    %86 = tpu.matmul %83, %85, %cst_38 {dimension_numbers = #tpu.dot_dimension_numbers<[1], [0], [0], [1], [0, 0, 1, 1], [], []>} : vector<280x128xbf16>, vector<128x128xbf16>, vector<280x128xf32> -> vector<280x128xf32>
    %87 = arith.addf %81, %86 : vector<280x128xf32>
    %88 = vector.extract_strided_slice %72 {offsets = [2, 0], sizes = [280, 128], strides = [1, 1]} : vector<284x128xf32> to vector<280x128xf32>
    %89 = arith.truncf %88 : vector<280x128xf32> to vector<280x128xbf16>
    %c2_39 = arith.constant 2 : index
    %c0_40 = arith.constant 0 : index
    %c0_41 = arith.constant 0 : index
    %90 = vector.load %arg4[%c2_39, %c0_40, %c0_41] : memref<5x128x128xbf16, #tpu.memory_space<vmem>>, vector<1x128x128xbf16>
    %91 = vector.shape_cast %90 : vector<1x128x128xbf16> to vector<128x128xbf16>
    %cst_42 = arith.constant dense<0.000000e+00> : vector<280x128xf32>
    %92 = tpu.matmul %89, %91, %cst_42 {dimension_numbers = #tpu.dot_dimension_numbers<[1], [0], [0], [1], [0, 0, 1, 1], [], []>} : vector<280x128xbf16>, vector<128x128xbf16>, vector<280x128xf32> -> vector<280x128xf32>
    %93 = arith.addf %87, %92 : vector<280x128xf32>
    %94 = vector.extract_strided_slice %72 {offsets = [3, 0], sizes = [280, 128], strides = [1, 1]} : vector<284x128xf32> to vector<280x128xf32>
    %95 = arith.truncf %94 : vector<280x128xf32> to vector<280x128xbf16>
    %c3_43 = arith.constant 3 : index
    %c0_44 = arith.constant 0 : index
    %c0_45 = arith.constant 0 : index
    %96 = vector.load %arg4[%c3_43, %c0_44, %c0_45] : memref<5x128x128xbf16, #tpu.memory_space<vmem>>, vector<1x128x128xbf16>
    %97 = vector.shape_cast %96 : vector<1x128x128xbf16> to vector<128x128xbf16>
    %cst_46 = arith.constant dense<0.000000e+00> : vector<280x128xf32>
    %98 = tpu.matmul %95, %97, %cst_46 {dimension_numbers = #tpu.dot_dimension_numbers<[1], [0], [0], [1], [0, 0, 1, 1], [], []>} : vector<280x128xbf16>, vector<128x128xbf16>, vector<280x128xf32> -> vector<280x128xf32>
    %99 = arith.addf %93, %98 : vector<280x128xf32>
    %100 = vector.extract_strided_slice %72 {offsets = [4, 0], sizes = [280, 128], strides = [1, 1]} : vector<284x128xf32> to vector<280x128xf32>
    %101 = arith.truncf %100 : vector<280x128xf32> to vector<280x128xbf16>
    %c4_47 = arith.constant 4 : index
    %c0_48 = arith.constant 0 : index
    %c0_49 = arith.constant 0 : index
    %102 = vector.load %arg4[%c4_47, %c0_48, %c0_49] : memref<5x128x128xbf16, #tpu.memory_space<vmem>>, vector<1x128x128xbf16>
    %103 = vector.shape_cast %102 : vector<1x128x128xbf16> to vector<128x128xbf16>
    %cst_50 = arith.constant dense<0.000000e+00> : vector<280x128xf32>
    %104 = tpu.matmul %101, %103, %cst_50 {dimension_numbers = #tpu.dot_dimension_numbers<[1], [0], [0], [1], [0, 0, 1, 1], [], []>} : vector<280x128xbf16>, vector<128x128xbf16>, vector<280x128xf32> -> vector<280x128xf32>
    %105 = arith.addf %99, %104 : vector<280x128xf32>
    %106 = math.tanh %105 : vector<280x128xf32>
    %107 = vector.extract_strided_slice %106 {offsets = [0, 0], sizes = [64, 128], strides = [1, 1]} : vector<280x128xf32> to vector<64x128xf32>
    %108 = tpu.transpose %107, [1, 0] : vector<64x128xf32> -> vector<128x64xf32>
    %c0_51 = arith.constant 0 : index
    %c0_52 = arith.constant 0 : index
    %c0_53 = arith.constant 0 : index
    %109 = vector.load %arg6[%c0_51, %c0_52, %c0_53] : memref<4x128x64xf32, #tpu.memory_space<vmem>>, vector<1x128x64xf32>
    %110 = vector.shape_cast %109 : vector<1x128x64xf32> to vector<128x64xf32>
    %111 = vector.shape_cast %108 : vector<128x64xf32> to vector<1x128x64xf32>
    tpu.vector_store %arg6[%c0_51, %c0_52, %c0_53], %111 {strides = array<i32>} : memref<4x128x64xf32, #tpu.memory_space<vmem>>, vector<1x128x64xf32>,
    %112 = vector.extract_strided_slice %106 {offsets = [72, 0], sizes = [64, 128], strides = [1, 1]} : vector<280x128xf32> to vector<64x128xf32>
    %113 = tpu.transpose %112, [1, 0] : vector<64x128xf32> -> vector<128x64xf32>
    %c1_54 = arith.constant 1 : index
    %c0_55 = arith.constant 0 : index
    %c0_56 = arith.constant 0 : index
    %114 = vector.load %arg6[%c1_54, %c0_55, %c0_56] : memref<4x128x64xf32, #tpu.memory_space<vmem>>, vector<1x128x64xf32>
    %115 = vector.shape_cast %114 : vector<1x128x64xf32> to vector<128x64xf32>
    %116 = vector.shape_cast %113 : vector<128x64xf32> to vector<1x128x64xf32>
    tpu.vector_store %arg6[%c1_54, %c0_55, %c0_56], %116 {strides = array<i32>} : memref<4x128x64xf32, #tpu.memory_space<vmem>>, vector<1x128x64xf32>,
    %117 = vector.extract_strided_slice %106 {offsets = [144, 0], sizes = [64, 128], strides = [1, 1]} : vector<280x128xf32> to vector<64x128xf32>
    %118 = tpu.transpose %117, [1, 0] : vector<64x128xf32> -> vector<128x64xf32>
    %c2_57 = arith.constant 2 : index
    %c0_58 = arith.constant 0 : index
    %c0_59 = arith.constant 0 : index
    %119 = vector.load %arg6[%c2_57, %c0_58, %c0_59] : memref<4x128x64xf32, #tpu.memory_space<vmem>>, vector<1x128x64xf32>
    %120 = vector.shape_cast %119 : vector<1x128x64xf32> to vector<128x64xf32>
    %121 = vector.shape_cast %118 : vector<128x64xf32> to vector<1x128x64xf32>
    tpu.vector_store %arg6[%c2_57, %c0_58, %c0_59], %121 {strides = array<i32>} : memref<4x128x64xf32, #tpu.memory_space<vmem>>, vector<1x128x64xf32>,
    %122 = vector.extract_strided_slice %106 {offsets = [216, 0], sizes = [64, 128], strides = [1, 1]} : vector<280x128xf32> to vector<64x128xf32>
    %123 = tpu.transpose %122, [1, 0] : vector<64x128xf32> -> vector<128x64xf32>
    %c3_60 = arith.constant 3 : index
    %c0_61 = arith.constant 0 : index
    %c0_62 = arith.constant 0 : index
    %124 = vector.load %arg6[%c3_60, %c0_61, %c0_62] : memref<4x128x64xf32, #tpu.memory_space<vmem>>, vector<1x128x64xf32>
    %125 = vector.shape_cast %124 : vector<1x128x64xf32> to vector<128x64xf32>
    %126 = vector.shape_cast %123 : vector<128x64xf32> to vector<1x128x64xf32>
    tpu.vector_store %arg6[%c3_60, %c0_61, %c0_62], %126 {strides = array<i32>} : memref<4x128x64xf32, #tpu.memory_space<vmem>>, vector<1x128x64xf32>,
    return
  }
  func.func @transform_0(%arg0: i32) -> (i32, i32, i32) {
    %c0_i32 = arith.constant 0 : i32
    %c0_i32_0 = arith.constant 0 : i32
    %c0_i32_1 = arith.constant 0 : i32
    return %arg0, %c0_i32, %c0_i32_0 : i32, i32, i32
  }
  func.func @transform_1(%arg0: i32) -> (i32, i32, i32) {
    %c0_i32 = arith.constant 0 : i32
    %c0_i32_0 = arith.constant 0 : i32
    %c0_i32_1 = arith.constant 0 : i32
    %c0_i32_2 = arith.constant 0 : i32
    return %c0_i32, %c0_i32_0, %c0_i32_1 : i32, i32, i32
  }
  func.func @transform_2(%arg0: i32) -> (i32, i32) {
    %c0_i32 = arith.constant 0 : i32
    %c0_i32_0 = arith.constant 0 : i32
    %c0_i32_1 = arith.constant 0 : i32
    return %c0_i32, %c0_i32_0 : i32, i32
  }
  func.func @transform_3(%arg0: i32) -> (i32, i32, i32) {
    %c0_i32 = arith.constant 0 : i32
    %c0_i32_0 = arith.constant 0 : i32
    %c0_i32_1 = arith.constant 0 : i32
    %c0_i32_2 = arith.constant 0 : i32
    return %c0_i32, %c0_i32_0, %c0_i32_1 : i32, i32, i32
  }
  func.func @transform_4(%arg0: i32) -> (i32, i32) {
    %c0_i32 = arith.constant 0 : i32
    %c0_i32_0 = arith.constant 0 : i32
    %c0_i32_1 = arith.constant 0 : i32
    return %c0_i32, %c0_i32_0 : i32, i32
  }
  func.func @transform_5(%arg0: i32) -> (i32, i32, i32) {
    %c0_i32 = arith.constant 0 : i32
    %c0_i32_0 = arith.constant 0 : i32
    %c0_i32_1 = arith.constant 0 : i32
    return %arg0, %c0_i32, %c0_i32_0 : i32, i32, i32
  }
}

</mosaic_0001>

<llo_original>
// kernel: causal_conv_block.1
$region0: #{causal_conv_block.1}
  #allocation0 [shape = 'u32[]', space=smem, size = 0x4, offset = 0x4, fixed_abs, tag = 'smem constant byte address 0x4 - core index']
  #allocation1 [shape = 'u32[144,128]{1,0:T(1,128)}', space=vmem, size = 0x12000, scoped, tag = 'internal scratch']
  %s0 = inlined_call_operand.vmem [shape: f32[16,128,64], index: 0, kind: input, shape index: {}]
  %s1 = inlined_call_operand.vmem [shape: bf16[5,128,128], index: 1, kind: input, shape index: {}]
  %s2 = inlined_call_operand.vmem [shape: f32[1,128], index: 2, kind: input, shape index: {}]
  %s3 = inlined_call_operand.vmem [shape: bf16[5,128,128], index: 3, kind: input, shape index: {}]
  %s4 = inlined_call_operand.vmem [shape: f32[1,128], index: 4, kind: input, shape index: {}]
  %s5 = inlined_call_operand.vmem [shape: f32[16,128,64], index: 5, kind: output, shape index: {}]
  %s6 = sld [smem:[#allocation0]]
  $region53: #{causal_conv_block.1} parent=0
    _
  %s8 = ssub.s32 1, %s6
  %s9 = scalar_select 0, %s8, %s6
  loop: start=0, step=1, limit=6
  $region2: #{causal_conv_block.1} parent=0 // loop_pre_header
    _
  $region3: #{causal_conv_block.1} parent=0 // loop_header
    %s11 = sphi 0, %s15
    %p12 = scmp.ge.s32.totalorder %s11, 6
    %s21 = sphi 0, %s23
    %s24 = sphi 0, %s21
    %s25 = sphi 0, %s24
    %s41 = sphi 0, %s25
    %s45 = sphi 0, %s45
    %s47 = sphi 0, %s45
    %s48 = sphi 0, %s47
    %s62 = sphi 0, %s48
    %s66 = sphi 0, %s66
    %s68 = sphi 0, %s66
    %s69 = sphi 0, %s68
    %s83 = sphi 0, %s69
    %s87 = sphi 0, %s87
    %s89 = sphi 0, %s87
    %s90 = sphi 0, %s89
    %s104 = sphi 0, %s90
    %s108 = sphi 0, %s108
    %s110 = sphi 0, %s108
    %s111 = sphi 0, %s110
    %s125 = sphi 0, %s111
    %s131 = sphi 0, %s133
    %s134 = sphi 0, %s131
    %s135 = sphi 0, %s134
    %s151 = sphi 0, %s135
  $region4: #{causal_conv_block.1} parent=0 // loop_header_branch
    %14 = sbr.rel (%p12) target = $region8
  $region5: #{causal_conv_block.1} parent=0 // loop_body
    %s16 = ssub.s32 %s11, 1
    %s17 = ssub.s32 %s11, 2
    %s18 = sadd.s32 %s11, 1
    %s19 = ssub.s32 %s11, %s18
    %p20 = scmp.eq.s32.totalorder %s19, 0
    %s22 = sadd.s32 %s21, 1
    %s23 = scalar_select %p20, %s21, %s22
    %p26 = pneg %p20
    %p27 = scmp.eq.s32.totalorder %s11, 3
    %p28 = por %p26, %p27
    %p29 = scmp.ne.s32.totalorder %s21, %s24
    %p30 = scmp.eq.s32.totalorder %s11, 0
    %p31 = por %p29, %p30
    %p32 = scmp.ne.s32.totalorder %s21, %s24
    %p33 = scmp.eq.s32.totalorder %s16, 3
    %p34 = por %p32, %p33
    %p35 = scmp.ne.s32.totalorder %s24, %s25
    %p36 = scmp.eq.s32.totalorder %s16, 0
    %p37 = por %p35, %p36
    %p38 = scmp.ne.s32.totalorder %s24, %s25
    %p39 = scmp.eq.s32.totalorder %s17, 3
    %p40 = por %p38, %p39
    %p42 = scmp.ne.s32.totalorder %s25, %s41
    %p43 = scmp.eq.s32.totalorder %s17, 0
    %p44 = por %p42, %p43
    %s46 = sadd.s32 %s45, 1
    %p49 = scmp.eq.s32.totalorder %s11, 3
    %p50 = scmp.ne.s32.totalorder %s45, %s47
    %p51 = scmp.eq.s32.totalorder %s11, 0
    %p52 = por %p50, %p51
    %p53 = scmp.ne.s32.totalorder %s45, %s47
    %p54 = scmp.eq.s32.totalorder %s16, 3
    %p55 = por %p53, %p54
    %p56 = scmp.ne.s32.totalorder %s47, %s48
    %p57 = scmp.eq.s32.totalorder %s16, 0
    %p58 = por %p56, %p57
    %p59 = scmp.ne.s32.totalorder %s47, %s48
    %p60 = scmp.eq.s32.totalorder %s17, 3
    %p61 = por %p59, %p60
    %p63 = scmp.ne.s32.totalorder %s48, %s62
    %p64 = scmp.eq.s32.totalorder %s17, 0
    %p65 = por %p63, %p64
    %s67 = sadd.s32 %s66, 1
    %p70 = scmp.eq.s32.totalorder %s11, 3
    %p71 = scmp.ne.s32.totalorder %s66, %s68
    %p72 = scmp.eq.s32.totalorder %s11, 0
    %p73 = por %p71, %p72
    %p74 = scmp.ne.s32.totalorder %s66, %s68
    %p75 = scmp.eq.s32.totalorder %s16, 3
    %p76 = por %p74, %p75
    %p77 = scmp.ne.s32.totalorder %s68, %s69
    %p78 = scmp.eq.s32.totalorder %s16, 0
    %p79 = por %p77, %p78
    %p80 = scmp.ne.s32.totalorder %s68, %s69
    %p81 = scmp.eq.s32.totalorder %s17, 3
    %p82 = por %p80, %p81
    %p84 = scmp.ne.s32.totalorder %s69, %s83
    %p85 = scmp.eq.s32.totalorder %s17, 0
    %p86 = por %p84, %p85
    %s88 = sadd.s32 %s87, 1
    %p91 = scmp.eq.s32.totalorder %s11, 3
    %p92 = scmp.ne.s32.totalorder %s87, %s89
    %p93 = scmp.eq.s32.totalorder %s11, 0
    %p94 = por %p92, %p93
    %p95 = scmp.ne.s32.totalorder %s87, %s89
    %p96 = scmp.eq.s32.totalorder %s16, 3
    %p97 = por %p95, %p96
    %p98 = scmp.ne.s32.totalorder %s89, %s90
    %p99 = scmp.eq.s32.totalorder %s16, 0
    %p100 = por %p98, %p99
    %p101 = scmp.ne.s32.totalorder %s89, %s90
    %p102 = scmp.eq.s32.totalorder %s17, 3
    %p103 = por %p101, %p102
    %p105 = scmp.ne.s32.totalorder %s90, %s104
    %p106 = scmp.eq.s32.totalorder %s17, 0
    %p107 = por %p105, %p106
    %s109 = sadd.s32 %s108, 1
    %p112 = scmp.eq.s32.totalorder %s11, 3
    %p113 = scmp.ne.s32.totalorder %s108, %s110
    %p114 = scmp.eq.s32.totalorder %s11, 0
    %p115 = por %p113, %p114
    %p116 = scmp.ne.s32.totalorder %s108, %s110
    %p117 = scmp.eq.s32.totalorder %s16, 3
    %p118 = por %p116, %p117
    %p119 = scmp.ne.s32.totalorder %s110, %s111
    %p120 = scmp.eq.s32.totalorder %s16, 0
    %p121 = por %p119, %p120
    %p122 = scmp.ne.s32.totalorder %s110, %s111
    %p123 = scmp.eq.s32.totalorder %s17, 3
    %p124 = por %p122, %p123
    %p126 = scmp.ne.s32.totalorder %s111, %s125
    %p127 = scmp.eq.s32.totalorder %s17, 0
    %p128 = por %p126, %p127
    %s129 = ssub.s32 %s11, %s18
    %p130 = scmp.eq.s32.totalorder %s129, 0
    %s132 = sadd.s32 %s131, 1
    %s133 = scalar_select %p130, %s131, %s132
    %p136 = pneg %p130
    %p137 = scmp.eq.s32.totalorder %s11, 3
    %p138 = por %p136, %p137
    %p139 = scmp.ne.s32.totalorder %s131, %s134
    %p140 = scmp.eq.s32.totalorder %s11, 0
    %p141 = por %p139, %p140
    %p142 = scmp.ne.s32.totalorder %s131, %s134
    %p143 = scmp.eq.s32.totalorder %s16, 3
    %p144 = por %p142, %p143
    %p145 = scmp.ne.s32.totalorder %s134, %s135
    %p146 = scmp.eq.s32.totalorder %s16, 0
    %p147 = por %p145, %p146
    %p148 = scmp.ne.s32.totalorder %s134, %s135
    %p149 = scmp.eq.s32.totalorder %s17, 3
    %p150 = por %p148, %p149
    %p152 = scmp.ne.s32.totalorder %s135, %s151
    %p153 = scmp.eq.s32.totalorder %s17, 0
    %p154 = por %p152, %p153
    %p155 = scmp.le.s32.totalorder 1, %s11
    %p156 = scmp.lt.s32.totalorder %s11, 5
    %p157 = pnand %p155, %p156
    %p158 = pneg %p157
    // Predicated region
    $region9: #{causal_conv_block.1} parent=5 // pred_check
      _
    $region10: #{causal_conv_block.1} parent=5 // pred_check_branch
      %160 = sbr.rel (%p157) target = $region12
    $region11: #{causal_conv_block.1} parent=5 // pred_region
      %s161 = ssub.s32 %s11, 1
      // Predicated region
      $region13: #{causal_conv_block.1} parent=11 // pred_check
        %p162 = pneg %p58
      $region14: #{causal_conv_block.1} parent=11 // pred_check_branch
        %164 = sbr.rel (%p162) target = $region16
      $region15: #{causal_conv_block.1} parent=11 // pred_region
        _
      $region16: #{causal_conv_block.1} parent=11 // pred_fallthru
        _
      // Predicated region
      $region17: #{causal_conv_block.1} parent=11 // pred_check
        %p165 = pneg %p79
      $region18: #{causal_conv_block.1} parent=11 // pred_check_branch
        %167 = sbr.rel (%p165) target = $region20
      $region19: #{causal_conv_block.1} parent=11 // pred_region
        _
      $region20: #{causal_conv_block.1} parent=11 // pred_fallthru
        _
      // Predicated region
      $region21: #{causal_conv_block.1} parent=11 // pred_check
        %p168 = pneg %p100
      $region22: #{causal_conv_block.1} parent=11 // pred_check_branch
        %170 = sbr.rel (%p168) target = $region24
      $region23: #{causal_conv_block.1} parent=11 // pred_region
        _
      $region24: #{causal_conv_block.1} parent=11 // pred_fallthru
        _
      // Predicated region
      $region25: #{causal_conv_block.1} parent=11 // pred_check
        %p171 = pneg %p121
      $region26: #{causal_conv_block.1} parent=11 // pred_check_branch
        %173 = sbr.rel (%p171) target = $region28
      $region27: #{causal_conv_block.1} parent=11 // pred_region
        _
      $region28: #{causal_conv_block.1} parent=11 // pred_fallthru
        _
    $region12: #{causal_conv_block.1} parent=5 // pred_fallthru
      _
    %p174 = scmp.lt.s32.totalorder %s11, 4
    // Predicated region
    $region29: #{causal_conv_block.1} parent=5 // pred_check
      %p175 = pneg %p174
    $region30: #{causal_conv_block.1} parent=5 // pred_check_branch
      %177 = sbr.rel (%p175) target = $region32
    $region31: #{causal_conv_block.1} parent=5 // pred_region
      // Predicated region
      $region33: #{causal_conv_block.1} parent=31 // pred_check
        %p178 = pneg %p31
      $region34: #{causal_conv_block.1} parent=31 // pred_check_branch
        %180 = sbr.rel (%p178) target = $region36
      $region35: #{causal_conv_block.1} parent=31 // pred_region
        %s181 = smul.u32 4, %s11
        %p182 = scmp.lt.s32.totalorder %s181, 15
        %s183 = scalar_select %p182, %s181, 15
        %s184 = smul.addr %s183, 16
        %s185 = smul.addr %s184, 8
        %s186 = scalar_lea.vmem %s0, %s185
        %s187 = smul.u32 4, %s11
      $region36: #{causal_conv_block.1} parent=31 // pred_fallthru
        _
    $region32: #{causal_conv_block.1} parent=5 // pred_fallthru
      _
    %p188 = scmp.le.s32.totalorder 1, %s11
    %p189 = scmp.lt.s32.totalorder %s11, 5
    %p190 = pnand %p188, %p189
    %p191 = pneg %p190
    // Predicated region
    $region37: #{causal_conv_block.1} parent=5 // pred_check
      _
    $region38: #{causal_conv_block.1} parent=5 // pred_check_branch
      %193 = sbr.rel (%p190) target = $region40
    $region39: #{causal_conv_block.1} parent=5 // pred_region
      %s194 = ssub.s32 %s11, 1
      %s195 = smul.u32 4, %s16
      %p196 = scmp.lt.s32.totalorder %s195, 15
      %s197 = scalar_select %p196, %s195, 15
      %s198 = smul.addr %s197, 16
      %s199 = smul.addr %s198, 8
      %s200 = scalar_lea.vmem %s0, %s199
      %p201 = pneg %p37
      %p202 = pneg %p34
      %p203 = pneg %p58
      %p204 = pneg %p55
      %p205 = pneg %p79
      %p206 = pneg %p76
      %p207 = pneg %p100
      %p208 = pneg %p97
      %p209 = pneg %p121
      %p210 = pneg %p118
      %p211 = pneg %p147
      %p212 = pneg %p144
      %s213 = smul.u32 4, %s16
      %p214 = scmp.lt.s32.totalorder %s213, 15
      %s215 = scalar_select %p214, %s213, 15
      %s216 = smul.addr %s215, 16
      %s217 = smul.addr %s216, 8
      %s218 = scalar_lea.vmem %s5, %s217
      %s219 = smul.u32 4, %s16
      %p220 = scmp.lt.s32.totalorder %s219, 15
      %s221 = scalar_select %p220, %s219, 15
      %s222 = smul.addr %s221, 16
      %s223 = smul.addr %s222, 8
      %s224 = scalar_lea.vmem %s0, %s223
      %s225 = smul.u32 4, %s16
      %s226 = smul.u32 4, %s16
      %p227 = scmp.lt.s32.totalorder %s226, 15
      %s228 = scalar_select %p227, %s226, 15
      %s229 = smul.addr %s228, 16
      %s230 = smul.addr %s229, 8
      %s231 = scalar_lea.vmem %s5, %s230
      %s232 = smul.u32 4, %s16
      %v234 = vld [vmem:[%s224] sm:$0xff]
      %v235 = vld [vmem:[%s224 + $0x8] sm:$0xff]
      %v236 = vld [vmem:[%s224 + $0x10] sm:$0xff]
      %v237 = vld [vmem:[%s224 + $0x18] sm:$0xff]
      %v238 = vld [vmem:[%s224 + $0x20] sm:$0xff]
      %v239 = vld [vmem:[%s224 + $0x28] sm:$0xff]
      %v240 = vld [vmem:[%s224 + $0x30] sm:$0xff]
      %v241 = vld [vmem:[%s224 + $0x38] sm:$0xff]
      %v242 = vld [vmem:[%s224 + $0x40] sm:$0xff]
      %v243 = vld [vmem:[%s224 + $0x48] sm:$0xff]
      %v244 = vld [vmem:[%s224 + $0x50] sm:$0xff]
      %v245 = vld [vmem:[%s224 + $0x58] sm:$0xff]
      %v246 = vld [vmem:[%s224 + $0x60] sm:$0xff]
      %v247 = vld [vmem:[%s224 + $0x68] sm:$0xff]
      %v248 = vld [vmem:[%s224 + $0x70] sm:$0xff]
      %v249 = vld [vmem:[%s224 + $0x78] sm:$0xff]
      %250 = vxpose.xlu0.b32.start [1/16] %v234, 128
      %251 = vxpose.xlu0.b32.cont [2/16] %v235, 128
      %252 = vxpose.xlu0.b32.cont [3/16] %v236, 128
      %253 = vxpose.xlu0.b32.cont [4/16] %v237, 128
      %254 = vxpose.xlu0.b32.cont [5/16] %v238, 128
      %255 = vxpose.xlu0.b32.cont [6/16] %v239, 128
      %256 = vxpose.xlu0.b32.cont [7/16] %v240, 128
      %257 = vxpose.xlu0.b32.cont [8/16] %v241, 128
      %258 = vxpose.xlu0.b32.cont [9/16] %v242, 128
      %259 = vxpose.xlu0.b32.cont [10/16] %v243, 128
      %260 = vxpose.xlu0.b32.cont [11/16] %v244, 128
      %261 = vxpose.xlu0.b32.cont [12/16] %v245, 128
      %262 = vxpose.xlu0.b32.cont [13/16] %v246, 128
      %263 = vxpose.xlu0.b32.cont [14/16] %v247, 128
      %264 = vxpose.xlu0.b32.cont [15/16] %v248, 128
      %265 = vxpose.xlu0.b32.end [16/16] %v249, 128
      %v266 = vpop.trf.xlu0
      %v267 = vpop.trf.xlu0
      %v268 = vpop.trf.xlu0
      %v269 = vpop.trf.xlu0
      %v270 = vpop.trf.xlu0
      %v271 = vpop.trf.xlu0
      %v272 = vpop.trf.xlu0
      %v273 = vpop.trf.xlu0
      %v274 = vpop.trf.xlu0
      %v275 = vpop.trf.xlu0
      %v276 = vpop.trf.xlu0
      %v277 = vpop.trf.xlu0
      %v278 = vpop.trf.xlu0
      %v279 = vpop.trf.xlu0
      %v280 = vpop.trf.xlu0
      %v281 = vpop.trf.xlu0
      %v282 = vlaneseq
      %v283 = vshrl.u32 %v282, 7
      %v284 = vsub.s32 0, %v283
      %v285 = vrot.slane %v266, %v284
      %v286 = vlaneseq
      %v287 = vshrl.u32 %v286, 7
      %v288 = vsub.s32 7, %v287
      %v289 = vrot.slane %v273, %v288
      %s290 = scalar_lea.vmem %s224, 128
      %v291 = vld [vmem:[%s290] sm:$0xff]
      %v292 = vld [vmem:[%s290 + $0x8] sm:$0xff]
      %v293 = vld [vmem:[%s290 + $0x10] sm:$0xff]
      %v294 = vld [vmem:[%s290 + $0x18] sm:$0xff]
      %v295 = vld [vmem:[%s290 + $0x20] sm:$0xff]
      %v296 = vld [vmem:[%s290 + $0x28] sm:$0xff]
      %v297 = vld [vmem:[%s290 + $0x30] sm:$0xff]
      %v298 = vld [vmem:[%s290 + $0x38] sm:$0xff]
      %v299 = vld [vmem:[%s290 + $0x40] sm:$0xff]
      %v300 = vld [vmem:[%s290 + $0x48] sm:$0xff]
      %v301 = vld [vmem:[%s290 + $0x50] sm:$0xff]
      %v302 = vld [vmem:[%s290 + $0x58] sm:$0xff]
      %v303 = vld [vmem:[%s290 + $0x60] sm:$0xff]
      %v304 = vld [vmem:[%s290 + $0x68] sm:$0xff]
      %v305 = vld [vmem:[%s290 + $0x70] sm:$0xff]
      %v306 = vld [vmem:[%s290 + $0x78] sm:$0xff]
      %307 = vxpose.xlu0.b32.start [1/16] %v291, 128
      %308 = vxpose.xlu0.b32.cont [2/16] %v292, 128
      %309 = vxpose.xlu0.b32.cont [3/16] %v293, 128
      %310 = vxpose.xlu0.b32.cont [4/16] %v294, 128
      %311 = vxpose.xlu0.b32.cont [5/16] %v295, 128
      %312 = vxpose.xlu0.b32.cont [6/16] %v296, 128
      %313 = vxpose.xlu0.b32.cont [7/16] %v297, 128
      %314 = vxpose.xlu0.b32.cont [8/16] %v298, 128
      %315 = vxpose.xlu0.b32.cont [9/16] %v299, 128
      %316 = vxpose.xlu0.b32.cont [10/16] %v300, 128
      %317 = vxpose.xlu0.b32.cont [11/16] %v301, 128
      %318 = vxpose.xlu0.b32.cont [12/16] %v302, 128
      %319 = vxpose.xlu0.b32.cont [13/16] %v303, 128
      %320 = vxpose.xlu0.b32.cont [14/16] %v304, 128
      %321 = vxpose.xlu0.b32.cont [15/16] %v305, 128
      %322 = vxpose.xlu0.b32.end [16/16] %v306, 128
      %v323 = vpop.trf.xlu0
      %v324 = vpop.trf.xlu0
      %v325 = vpop.trf.xlu0
      %v326 = vpop.trf.xlu0
      %v327 = vpop.trf.xlu0
      %v328 = vpop.trf.xlu0
      %v329 = vpop.trf.xlu0
      %v330 = vpop.trf.xlu0
      %v331 = vpop.trf.xlu0
      %v332 = vpop.trf.xlu0
      %v333 = vpop.trf.xlu0
      %v334 = vpop.trf.xlu0
      %v335 = vpop.trf.xlu0
      %v336 = vpop.trf.xlu0
      %v337 = vpop.trf.xlu0
      %v338 = vpop.trf.xlu0
      %v339 = vlaneseq
      %v340 = vshrl.u32 %v339, 7
      %v341 = vsub.s32 0, %v340
      %v342 = vrot.slane %v323, %v341
      %v343 = vlaneseq
      %v344 = vshrl.u32 %v343, 7
      %v345 = vsub.s32 7, %v344
      %v346 = vrot.slane %v330, %v345
      %s347 = scalar_lea.vmem %s224, 256
      %v348 = vld [vmem:[%s347] sm:$0xff]
      %v349 = vld [vmem:[%s347 + $0x8] sm:$0xff]
      %v350 = vld [vmem:[%s347 + $0x10] sm:$0xff]
      %v351 = vld [vmem:[%s347 + $0x18] sm:$0xff]
      %v352 = vld [vmem:[%s347 + $0x20] sm:$0xff]
      %v353 = vld [vmem:[%s347 + $0x28] sm:$0xff]
      %v354 = vld [vmem:[%s347 + $0x30] sm:$0xff]
      %v355 = vld [vmem:[%s347 + $0x38] sm:$0xff]
      %v356 = vld [vmem:[%s347 + $0x40] sm:$0xff]
      %v357 = vld [vmem:[%s347 + $0x48] sm:$0xff]
      %v358 = vld [vmem:[%s347 + $0x50] sm:$0xff]
      %v359 = vld [vmem:[%s347 + $0x58] sm:$0xff]
      %v360 = vld [vmem:[%s347 + $0x60] sm:$0xff]
      %v361 = vld [vmem:[%s347 + $0x68] sm:$0xff]
      %v362 = vld [vmem:[%s347 + $0x70] sm:$0xff]
      %v363 = vld [vmem:[%s347 + $0x78] sm:$0xff]
      %364 = vxpose.xlu0.b32.start [1/16] %v348, 128
      %365 = vxpose.xlu0.b32.cont [2/16] %v349, 128
      %366 = vxpose.xlu0.b32.cont [3/16] %v350, 128
      %367 = vxpose.xlu0.b32.cont [4/16] %v351, 128
      %368 = vxpose.xlu0.b32.cont [5/16] %v352, 128
      %369 = vxpose.xlu0.b32.cont [6/16] %v353, 128
      %370 = vxpose.xlu0.b32.cont [7/16] %v354, 128
      %371 = vxpose.xlu0.b32.cont [8/16] %v355, 128
      %372 = vxpose.xlu0.b32.cont [9/16] %v356, 128
      %373 = vxpose.xlu0.b32.cont [10/16] %v357, 128
      %374 = vxpose.xlu0.b32.cont [11/16] %v358, 128
      %375 = vxpose.xlu0.b32.cont [12/16] %v359, 128
      %376 = vxpose.xlu0.b32.cont [13/16] %v360, 128
      %377 = vxpose.xlu0.b32.cont [14/16] %v361, 128
      %378 = vxpose.xlu0.b32.cont [15/16] %v362, 128
      %379 = vxpose.xlu0.b32.end [16/16] %v363, 128
      %v380 = vpop.trf.xlu0
      %v381 = vpop.trf.xlu0
      %v382 = vpop.trf.xlu0
      %v383 = vpop.trf.xlu0
      %v384 = vpop.trf.xlu0
      %v385 = vpop.trf.xlu0
      %v386 = vpop.trf.xlu0
      %v387 = vpop.trf.xlu0
      %v388 = vpop.trf.xlu0
      %v389 = vpop.trf.xlu0
      %v390 = vpop.trf.xlu0
      %v391 = vpop.trf.xlu0
      %v392 = vpop.trf.xlu0
      %v393 = vpop.trf.xlu0
      %v394 = vpop.trf.xlu0
      %v395 = vpop.trf.xlu0
      %v396 = vlaneseq
      %v397 = vshrl.u32 %v396, 7
      %v398 = vsub.s32 0, %v397
      %v399 = vrot.slane %v380, %v398
      %v400 = vlaneseq
      %v401 = vshrl.u32 %v400, 7
      %v402 = vsub.s32 7, %v401
      %v403 = vrot.slane %v387, %v402
      %s404 = scalar_lea.vmem %s224, 384
      %v405 = vld [vmem:[%s404] sm:$0xff]
      %v406 = vld [vmem:[%s404 + $0x8] sm:$0xff]
      %v407 = vld [vmem:[%s404 + $0x10] sm:$0xff]
      %v408 = vld [vmem:[%s404 + $0x18] sm:$0xff]
      %v409 = vld [vmem:[%s404 + $0x20] sm:$0xff]
      %v410 = vld [vmem:[%s404 + $0x28] sm:$0xff]
      %v411 = vld [vmem:[%s404 + $0x30] sm:$0xff]
      %v412 = vld [vmem:[%s404 + $0x38] sm:$0xff]
      %v413 = vld [vmem:[%s404 + $0x40] sm:$0xff]
      %v414 = vld [vmem:[%s404 + $0x48] sm:$0xff]
      %v415 = vld [vmem:[%s404 + $0x50] sm:$0xff]
      %v416 = vld [vmem:[%s404 + $0x58] sm:$0xff]
      %v417 = vld [vmem:[%s404 + $0x60] sm:$0xff]
      %v418 = vld [vmem:[%s404 + $0x68] sm:$0xff]
      %v419 = vld [vmem:[%s404 + $0x70] sm:$0xff]
      %v420 = vld [vmem:[%s404 + $0x78] sm:$0xff]
      %421 = vxpose.xlu0.b32.start [1/16] %v405, 128
      %422 = vxpose.xlu0.b32.cont [2/16] %v406, 128
      %423 = vxpose.xlu0.b32.cont [3/16] %v407, 128
      %424 = vxpose.xlu0.b32.cont [4/16] %v408, 128
      %425 = vxpose.xlu0.b32.cont [5/16] %v409, 128
      %426 = vxpose.xlu0.b32.cont [6/16] %v410, 128
      %427 = vxpose.xlu0.b32.cont [7/16] %v411, 128
      %428 = vxpose.xlu0.b32.cont [8/16] %v412, 128
      %429 = vxpose.xlu0.b32.cont [9/16] %v413, 128
      %430 = vxpose.xlu0.b32.cont [10/16] %v414, 128
      %431 = vxpose.xlu0.b32.cont [11/16] %v415, 128
      %432 = vxpose.xlu0.b32.cont [12/16] %v416, 128
      %433 = vxpose.xlu0.b32.cont [13/16] %v417, 128
      %434 = vxpose.xlu0.b32.cont [14/16] %v418, 128
      %435 = vxpose.xlu0.b32.cont [15/16] %v419, 128
      %436 = vxpose.xlu0.b32.end [16/16] %v420, 128
      %v437 = vpop.trf.xlu0
      %v438 = vpop.trf.xlu0
      %v439 = vpop.trf.xlu0
      %v440 = vpop.trf.xlu0
      %v441 = vpop.trf.xlu0
      %v442 = vpop.trf.xlu0
      %v443 = vpop.trf.xlu0
      %v444 = vpop.trf.xlu0
      %v445 = vpop.trf.xlu0
      %v446 = vpop.trf.xlu0
      %v447 = vpop.trf.xlu0
      %v448 = vpop.trf.xlu0
      %v449 = vpop.trf.xlu0
      %v450 = vpop.trf.xlu0
      %v451 = vpop.trf.xlu0
      %v452 = vpop.trf.xlu0
      %v453 = vlaneseq
      %v454 = vshrl.u32 %v453, 7
      %v455 = vsub.s32 0, %v454
      %v456 = vrot.slane %v437, %v455
      %v457 = vlaneseq
      %v458 = vshrl.u32 %v457, 7
      %v459 = vsub.s32 7, %v458
      %v460 = vrot.slane %v444, %v459
      %vm469 = vcmask 1043456
      %v470 = vrot.slane %v266, 4
      %v471 = vrot.slane %v267, 4
      %v472 = vsel %vm469, %v470, %v471
      %v473 = vrot.slane %v268, 4
      %v474 = vsel %vm469, %v471, %v473
      %v475 = vrot.slane %v269, 4
      %v476 = vsel %vm469, %v473, %v475
      %v477 = vrot.slane %v270, 4
      %v478 = vsel %vm469, %v475, %v477
      %v479 = vrot.slane %v271, 4
      %v480 = vsel %vm469, %v477, %v479
      %v481 = vrot.slane %v272, 4
      %v482 = vsel %vm469, %v479, %v481
      %v483 = vrot.slane %v273, 4
      %v484 = vsel %vm469, %v481, %v483
      %v502 = vrot.slane %v323, 4
      %v503 = vrot.slane %v324, 4
      %v504 = vsel %vm469, %v502, %v503
      %v505 = vrot.slane %v325, 4
      %v506 = vsel %vm469, %v503, %v505
      %v507 = vrot.slane %v326, 4
      %v508 = vsel %vm469, %v505, %v507
      %v509 = vrot.slane %v327, 4
      %v510 = vsel %vm469, %v507, %v509
      %v511 = vrot.slane %v328, 4
      %v512 = vsel %vm469, %v509, %v511
      %v513 = vrot.slane %v329, 4
      %v514 = vsel %vm469, %v511, %v513
      %v515 = vrot.slane %v330, 4
      %v516 = vsel %vm469, %v513, %v515
      %v534 = vrot.slane %v380, 4
      %v535 = vrot.slane %v381, 4
      %v536 = vsel %vm469, %v534, %v535
      %v537 = vrot.slane %v382, 4
      %v538 = vsel %vm469, %v535, %v537
      %v539 = vrot.slane %v383, 4
      %v540 = vsel %vm469, %v537, %v539
      %v541 = vrot.slane %v384, 4
      %v542 = vsel %vm469, %v539, %v541
      %v543 = vrot.slane %v385, 4
      %v544 = vsel %vm469, %v541, %v543
      %v545 = vrot.slane %v386, 4
      %v546 = vsel %vm469, %v543, %v545
      %v547 = vrot.slane %v387, 4
      %v548 = vsel %vm469, %v545, %v547
      %v566 = vrot.slane %v437, 4
      %v567 = vrot.slane %v438, 4
      %v568 = vsel %vm469, %v566, %v567
      %v569 = vrot.slane %v439, 4
      %v570 = vsel %vm469, %v567, %v569
      %v571 = vrot.slane %v440, 4
      %v572 = vsel %vm469, %v569, %v571
      %v573 = vrot.slane %v441, 4
      %v574 = vsel %vm469, %v571, %v573
      %v575 = vrot.slane %v442, 4
      %v576 = vsel %vm469, %v573, %v575
      %v577 = vrot.slane %v443, 4
      %v578 = vsel %vm469, %v575, %v577
      %v579 = vrot.slane %v444, 4
      %v580 = vsel %vm469, %v577, %v579
      %v590 = vsel %vm469, %v285, %v470
      %v591 = vsel %vm469, %v483, %v289
      %v592 = vsel %vm469, %v342, %v502
      %v593 = vsel %vm469, %v515, %v346
      %v594 = vsel %vm469, %v399, %v534
      %v595 = vsel %vm469, %v547, %v403
      %v596 = vsel %vm469, %v456, %v566
      %v597 = vsel %vm469, %v579, %v460
      %v598 = vld [vmem:[%s2] sm:$0x1]
      %v600 = vlaneseq
      %v601 = vshrl.u32 %v600, 7
      %v602 = vsub.s32 0, %v601
      %v603 = vrot.slane %v598, %v602
      %v605 = vpack.c.bf16 %v472, %v590
      %v606 = vpack.c.bf16 %v476, %v474
      %v607 = vpack.c.bf16 %v480, %v478
      %v608 = vpack.c.bf16 %v484, %v482
      %v609 = vpack.c.bf16 %v592, %v591
      %v610 = vpack.c.bf16 %v506, %v504
      %v611 = vpack.c.bf16 %v510, %v508
      %v612 = vpack.c.bf16 %v514, %v512
      %v613 = vpack.c.bf16 %v593, %v516
      %v614 = vpack.c.bf16 %v536, %v594
      %v615 = vpack.c.bf16 %v540, %v538
      %v616 = vpack.c.bf16 %v544, %v542
      %v617 = vpack.c.bf16 %v548, %v546
      %v618 = vpack.c.bf16 %v596, %v595
      %v619 = vpack.c.bf16 %v570, %v568
      %v620 = vpack.c.bf16 %v574, %v572
      %v621 = vpack.c.bf16 %v578, %v576
      %v622 = vpack.c.bf16 %v597, %v580
      %v623 = vld [vmem:[%s1] sm:$0xf]
      %v624 = vld [vmem:[%s1 + $0x4] sm:$0xf]
      %v625 = vld [vmem:[%s1 + $0x8] sm:$0xf]
      %v626 = vld [vmem:[%s1 + $0xc] sm:$0xf]
      %v627 = vld [vmem:[%s1 + $0x10] sm:$0xf]
      %v628 = vld [vmem:[%s1 + $0x14] sm:$0xf]
      %v629 = vld [vmem:[%s1 + $0x18] sm:$0xf]
      %v630 = vld [vmem:[%s1 + $0x1c] sm:$0xf]
      %v631 = vld [vmem:[%s1 + $0x20] sm:$0xf]
      %v632 = vld [vmem:[%s1 + $0x24] sm:$0xf]
      %v633 = vld [vmem:[%s1 + $0x28] sm:$0xf]
      %v634 = vld [vmem:[%s1 + $0x2c] sm:$0xf]
      %v635 = vld [vmem:[%s1 + $0x30] sm:$0xf]
      %v636 = vld [vmem:[%s1 + $0x34] sm:$0xf]
      %v637 = vld [vmem:[%s1 + $0x38] sm:$0xf]
      %v638 = vld [vmem:[%s1 + $0x3c] sm:$0xf]
      %v655 = vunpack.c.l.b16 %v623
      %v656 = vunpack.c.l.b16 %v624
      %v657 = vunpack.c.l.b16 %v625
      %v658 = vunpack.c.l.b16 %v626
      %v659 = vunpack.c.l.b16 %v627
      %v660 = vunpack.c.l.b16 %v628
      %v661 = vunpack.c.l.b16 %v629
      %v662 = vunpack.c.l.b16 %v630
      %v663 = vunpack.c.l.b16 %v631
      %v664 = vunpack.c.l.b16 %v632
      %v665 = vunpack.c.l.b16 %v633
      %v666 = vunpack.c.l.b16 %v634
      %v667 = vunpack.c.l.b16 %v635
      %v668 = vunpack.c.l.b16 %v636
      %v669 = vunpack.c.l.b16 %v637
      %v670 = vunpack.c.l.b16 %v638
      %v671 = vpack.c.b16 %v656, %v655
      %v672 = vpack.c.b16 %v658, %v657
      %v673 = vpack.c.b16 %v660, %v659
      %v674 = vpack.c.b16 %v662, %v661
      %v675 = vpack.c.b16 %v664, %v663
      %v676 = vpack.c.b16 %v666, %v665
      %v677 = vpack.c.b16 %v668, %v667
      %v678 = vpack.c.b16 %v670, %v669
      %687 = vmatprep.subr.bf16.mxu0 0
      %688 = vmatpush1.bf16.msra.mxu0 %v678
      %689 = vmatprep.subr.bf16.mxu0 0
      %690 = vmatpush1.bf16.msra.mxu0 %v677
      %691 = vmatprep.subr.bf16.mxu0 0
      %692 = vmatpush1.bf16.msra.mxu0 %v676
      %693 = vmatprep.subr.bf16.mxu0 0
      %694 = vmatpush1.bf16.msra.mxu0 %v675
      %695 = vmatprep.subr.bf16.mxu0 0
      %696 = vmatpush1.bf16.msra.mxu0 %v674
      %697 = vmatprep.subr.bf16.mxu0 0
      %698 = vmatpush1.bf16.msra.mxu0 %v673
      %699 = vmatprep.subr.bf16.mxu0 0
      %700 = vmatpush1.bf16.msra.mxu0 %v672
      %701 = vmatprep.subr.bf16.mxu0 0
      %702 = vmatpush1.bf16.msra.mxu0 %v671
      %703 = vmatprep.subr.bf16.mxu0 0
      %704 = vmatpush2.bf16.msra.mxu0 0
      %705 = vmatprep.subr.bf16.mxu0 0
      %706 = vmatpush2.bf16.msra.mxu0 0
      %707 = vmatprep.subr.bf16.mxu0 0
      %708 = vmatpush2.bf16.msra.mxu0 0
      %709 = vmatprep.subr.bf16.mxu0 0
      %710 = vmatpush2.bf16.msra.mxu0 0
      %711 = vmatprep.subr.bf16.mxu0 0
      %712 = vmatpush2.bf16.msra.mxu0 0
      %713 = vmatprep.subr.bf16.mxu0 0
      %714 = vmatpush2.bf16.msra.mxu0 0
      %715 = vmatprep.subr.bf16.mxu0 0
      %716 = vmatpush2.bf16.msra.mxu0 0
      %717 = vmatprep.subr.bf16.mxu0 0
      %718 = vmatpush2.bf16.msra.mxu0 0
      %719 = vmatprep.mubr.bf16.mxu0 0
      %720 = vmatmul.mubr.bf16.gmra.mxu0 %v605
      %v721 = vpop.f32.mrf.mxu0
      %v722 = vadd.f32 0.0, %v721
      %v723 = vpop.f32.mrf.mxu0
      %v724 = vpop.f32.mrf.mxu0
      %v725 = vadd.f32 0.0, %v724
      %v726 = vpop.f32.mrf.mxu0
      %727 = vmatprep.mubr.bf16.mxu0 0
      %728 = vmatmul.mubr.bf16.gmra.mxu0 %v606
      %v729 = vpop.f32.mrf.mxu0
      %v730 = vadd.f32 0.0, %v729
      %v731 = vpop.f32.mrf.mxu0
      %v732 = vpop.f32.mrf.mxu0
      %v733 = vadd.f32 0.0, %v732
      %v734 = vpop.f32.mrf.mxu0
      %735 = vmatprep.mubr.bf16.mxu0 0
      %736 = vmatmul.mubr.bf16.gmra.mxu0 %v607
      %v737 = vpop.f32.mrf.mxu0
      %v738 = vadd.f32 0.0, %v737
      %v739 = vpop.f32.mrf.mxu0
      %v740 = vpop.f32.mrf.mxu0
      %v741 = vadd.f32 0.0, %v740
      %v742 = vpop.f32.mrf.mxu0
      %743 = vmatprep.mubr.bf16.mxu0 0
      %744 = vmatmul.mubr.bf16.gmra.mxu0 %v608
      %v745 = vpop.f32.mrf.mxu0
      %v746 = vadd.f32 0.0, %v745
      %v747 = vpop.f32.mrf.mxu0
      %v748 = vpop.f32.mrf.mxu0
      %v749 = vadd.f32 0.0, %v748
      %v750 = vpop.f32.mrf.mxu0
      %751 = vmatprep.mubr.bf16.mxu0 0
      %752 = vmatmul.mubr.bf16.gmra.mxu0 %v609
      %v753 = vpop.f32.mrf.mxu0
      %v754 = vadd.f32 0.0, %v753
      %v755 = vpop.f32.mrf.mxu0
      %v756 = vpop.f32.mrf.mxu0
      %v757 = vadd.f32 0.0, %v756
      %v758 = vpop.f32.mrf.mxu0
      %759 = vmatprep.mubr.bf16.mxu0 0
      %760 = vmatmul.mubr.bf16.gmra.mxu0 %v610
      %v761 = vpop.f32.mrf.mxu0
      %v762 = vadd.f32 0.0, %v761
      %v763 = vpop.f32.mrf.mxu0
      %v764 = vpop.f32.mrf.mxu0
      %v765 = vadd.f32 0.0, %v764
      %v766 = vpop.f32.mrf.mxu0
      %767 = vmatprep.mubr.bf16.mxu0 0
      %768 = vmatmul.mubr.bf16.gmra.mxu0 %v611
      %v769 = vpop.f32.mrf.mxu0
      %v770 = vadd.f32 0.0, %v769
      %v771 = vpop.f32.mrf.mxu0
      %v772 = vpop.f32.mrf.mxu0
      %v773 = vadd.f32 0.0, %v772
      %v774 = vpop.f32.mrf.mxu0
      %775 = vmatprep.mubr.bf16.mxu0 0
      %776 = vmatmul.mubr.bf16.gmra.mxu0 %v612
      %v777 = vpop.f32.mrf.mxu0
      %v778 = vadd.f32 0.0, %v777
      %v779 = vpop.f32.mrf.mxu0
      %v780 = vpop.f32.mrf.mxu0
      %v781 = vadd.f32 0.0, %v780
      %v782 = vpop.f32.mrf.mxu0
      %783 = vmatprep.mubr.bf16.mxu0 0
      %784 = vmatmul.mubr.bf16.gmra.mxu0 %v613
      %v785 = vpop.f32.mrf.mxu0
      %v786 = vadd.f32 0.0, %v785
      %v787 = vpop.f32.mrf.mxu0
      %v788 = vpop.f32.mrf.mxu0
      %v789 = vadd.f32 0.0, %v788
      %v790 = vpop.f32.mrf.mxu0
      %791 = vmatprep.mubr.bf16.mxu0 0
      %792 = vmatmul.mubr.bf16.gmra.mxu0 %v614
      %v793 = vpop.f32.mrf.mxu0
      %v794 = vadd.f32 0.0, %v793
      %v795 = vpop.f32.mrf.mxu0
      %v796 = vpop.f32.mrf.mxu0
      %v797 = vadd.f32 0.0, %v796
      %v798 = vpop.f32.mrf.mxu0
      %799 = vmatprep.mubr.bf16.mxu0 0
      %800 = vmatmul.mubr.bf16.gmra.mxu0 %v615
      %v801 = vpop.f32.mrf.mxu0
      %v802 = vadd.f32 0.0, %v801
      %v803 = vpop.f32.mrf.mxu0
      %v804 = vpop.f32.mrf.mxu0
      %v805 = vadd.f32 0.0, %v804
      %v806 = vpop.f32.mrf.mxu0
      %807 = vmatprep.mubr.bf16.mxu0 0
      %808 = vmatmul.mubr.bf16.gmra.mxu0 %v616
      %v809 = vpop.f32.mrf.mxu0
      %v810 = vadd.f32 0.0, %v809
      %v811 = vpop.f32.mrf.mxu0
      %v812 = vpop.f32.mrf.mxu0
      %v813 = vadd.f32 0.0, %v812
      %v814 = vpop.f32.mrf.mxu0
      %815 = vmatprep.mubr.bf16.mxu0 0
      %816 = vmatmul.mubr.bf16.gmra.mxu0 %v617
      %v817 = vpop.f32.mrf.mxu0
      %v818 = vadd.f32 0.0, %v817
      %v819 = vpop.f32.mrf.mxu0
      %v820 = vpop.f32.mrf.mxu0
      %v821 = vadd.f32 0.0, %v820
      %v822 = vpop.f32.mrf.mxu0
      %823 = vmatprep.mubr.bf16.mxu0 0
      %824 = vmatmul.mubr.bf16.gmra.mxu0 %v618
      %v825 = vpop.f32.mrf.mxu0
      %v826 = vadd.f32 0.0, %v825
      %v827 = vpop.f32.mrf.mxu0
      %v828 = vpop.f32.mrf.mxu0
      %v829 = vadd.f32 0.0, %v828
      %v830 = vpop.f32.mrf.mxu0
      %831 = vmatprep.mubr.bf16.mxu0 0
      %832 = vmatmul.mubr.bf16.gmra.mxu0 %v619
      %v833 = vpop.f32.mrf.mxu0
      %v834 = vadd.f32 0.0, %v833
      %v835 = vpop.f32.mrf.mxu0
      %v836 = vpop.f32.mrf.mxu0
      %v837 = vadd.f32 0.0, %v836
      %v838 = vpop.f32.mrf.mxu0
      %839 = vmatprep.mubr.bf16.mxu0 0
      %840 = vmatmul.mubr.bf16.gmra.mxu0 %v620
      %v841 = vpop.f32.mrf.mxu0
      %v842 = vadd.f32 0.0, %v841
      %v843 = vpop.f32.mrf.mxu0
      %v844 = vpop.f32.mrf.mxu0
      %v845 = vadd.f32 0.0, %v844
      %v846 = vpop.f32.mrf.mxu0
      %847 = vmatprep.mubr.bf16.mxu0 0
      %848 = vmatmul.mubr.bf16.gmra.mxu0 %v621
      %v849 = vpop.f32.mrf.mxu0
      %v850 = vadd.f32 0.0, %v849
      %v851 = vpop.f32.mrf.mxu0
      %v852 = vpop.f32.mrf.mxu0
      %v853 = vadd.f32 0.0, %v852
      %v854 = vpop.f32.mrf.mxu0
      %855 = vmatprep.mubr.bf16.mxu0 0
      %856 = vmatmul.mubr.bf16.gmra.mxu0 %v622
      %v857 = vpop.f32.mrf.mxu0
      %v858 = vadd.f32 0.0, %v857
      %v859 = vpop.f32.mrf.mxu0
      %v860 = vpop.f32.mrf.mxu0
      %v861 = vadd.f32 0.0, %v860
      %v862 = vpop.f32.mrf.mxu0
      %863 = vdwg.mxu0
      %v864 = vadd.f32 %v603, %v722
      %v865 = vadd.f32 %v603, %v725
      %v866 = vadd.f32 %v603, %v730
      %v867 = vadd.f32 %v603, %v733
      %v868 = vadd.f32 %v603, %v738
      %v869 = vadd.f32 %v603, %v741
      %v870 = vadd.f32 %v603, %v746
      %v871 = vadd.f32 %v603, %v749
      %v872 = vadd.f32 %v603, %v754
      %v873 = vadd.f32 %v603, %v757
      %v874 = vadd.f32 %v603, %v762
      %v875 = vadd.f32 %v603, %v765
      %v876 = vadd.f32 %v603, %v770
      %v877 = vadd.f32 %v603, %v773
      %v878 = vadd.f32 %v603, %v778
      %v879 = vadd.f32 %v603, %v781
      %v880 = vadd.f32 %v603, %v786
      %v881 = vadd.f32 %v603, %v789
      %v882 = vadd.f32 %v603, %v794
      %v883 = vadd.f32 %v603, %v797
      %v884 = vadd.f32 %v603, %v802
      %v885 = vadd.f32 %v603, %v805
      %v886 = vadd.f32 %v603, %v810
      %v887 = vadd.f32 %v603, %v813
      %v888 = vadd.f32 %v603, %v818
      %v889 = vadd.f32 %v603, %v821
      %v890 = vadd.f32 %v603, %v826
      %v891 = vadd.f32 %v603, %v829
      %v892 = vadd.f32 %v603, %v834
      %v893 = vadd.f32 %v603, %v837
      %v894 = vadd.f32 %v603, %v842
      %v895 = vadd.f32 %v603, %v845
      %v896 = vadd.f32 %v603, %v850
      %v897 = vadd.f32 %v603, %v853
      %v898 = vadd.f32 %v603, %v858
      %v899 = vadd.f32 %v603, %v861
      %s900 = scalar_lea.vmem %s1, 64
      %v901 = vld [vmem:[%s900] sm:$0xf]
      %v902 = vld [vmem:[%s900 + $0x4] sm:$0xf]
      %v903 = vld [vmem:[%s900 + $0x8] sm:$0xf]
      %v904 = vld [vmem:[%s900 + $0xc] sm:$0xf]
      %v905 = vld [vmem:[%s900 + $0x10] sm:$0xf]
      %v906 = vld [vmem:[%s900 + $0x14] sm:$0xf]
      %v907 = vld [vmem:[%s900 + $0x18] sm:$0xf]
      %v908 = vld [vmem:[%s900 + $0x1c] sm:$0xf]
      %v909 = vld [vmem:[%s900 + $0x20] sm:$0xf]
      %v910 = vld [vmem:[%s900 + $0x24] sm:$0xf]
      %v911 = vld [vmem:[%s900 + $0x28] sm:$0xf]
      %v912 = vld [vmem:[%s900 + $0x2c] sm:$0xf]
      %v913 = vld [vmem:[%s900 + $0x30] sm:$0xf]
      %v914 = vld [vmem:[%s900 + $0x34] sm:$0xf]
      %v915 = vld [vmem:[%s900 + $0x38] sm:$0xf]
      %v916 = vld [vmem:[%s900 + $0x3c] sm:$0xf]
      %vm917 = vsmask.f32 7424
      %v919 = vshrl.u32 %v605, 16
      %v921 = vshll.u32 %v605, 16
      %v923 = vrot.slane %v921, 1
      %v924 = vor.u32 %v919, %v923
      %v926 = vshll.u32 %v606, 16
      %v928 = vrot.slane %v926, 1
      %v929 = vsel %vm917, %v924, %v928
      %v930 = vshrl.u32 %v606, 16
      %v932 = vor.u32 %v930, %v928
      %v934 = vshll.u32 %v607, 16
      %v936 = vrot.slane %v934, 1
      %v937 = vsel %vm917, %v932, %v936
      %v938 = vshrl.u32 %v607, 16
      %v940 = vor.u32 %v938, %v936
      %v942 = vshll.u32 %v608, 16
      %v944 = vrot.slane %v942, 1
      %v945 = vsel %vm917, %v940, %v944
      %v946 = vshrl.u32 %v608, 16
      %v948 = vor.u32 %v946, %v944
      %v950 = vshll.u32 %v609, 16
      %v952 = vrot.slane %v950, 1
      %v953 = vsel %vm917, %v948, %v952
      %v954 = vshrl.u32 %v609, 16
      %v956 = vor.u32 %v954, %v952
      %v958 = vshll.u32 %v610, 16
      %v960 = vrot.slane %v958, 1
      %v961 = vsel %vm917, %v956, %v960
      %v962 = vshrl.u32 %v610, 16
      %v964 = vor.u32 %v962, %v960
      %v966 = vshll.u32 %v611, 16
      %v968 = vrot.slane %v966, 1
      %v969 = vsel %vm917, %v964, %v968
      %v970 = vshrl.u32 %v611, 16
      %v972 = vor.u32 %v970, %v968
      %v974 = vshll.u32 %v612, 16
      %v976 = vrot.slane %v974, 1
      %v977 = vsel %vm917, %v972, %v976
      %v978 = vshrl.u32 %v612, 16
      %v980 = vor.u32 %v978, %v976
      %v982 = vshll.u32 %v613, 16
      %v984 = vrot.slane %v982, 1
      %v985 = vsel %vm917, %v980, %v984
      %v986 = vshrl.u32 %v613, 16
      %v988 = vor.u32 %v986, %v984
      %v990 = vshll.u32 %v614, 16
      %v992 = vrot.slane %v990, 1
      %v993 = vsel %vm917, %v988, %v992
      %v994 = vshrl.u32 %v614, 16
      %v996 = vor.u32 %v994, %v992
      %v998 = vshll.u32 %v615, 16
      %v1000 = vrot.slane %v998, 1
      %v1001 = vsel %vm917, %v996, %v1000
      %v1002 = vshrl.u32 %v615, 16
      %v1004 = vor.u32 %v1002, %v1000
      %v1006 = vshll.u32 %v616, 16
      %v1008 = vrot.slane %v1006, 1
      %v1009 = vsel %vm917, %v1004, %v1008
      %v1010 = vshrl.u32 %v616, 16
      %v1012 = vor.u32 %v1010, %v1008
      %v1014 = vshll.u32 %v617, 16
      %v1016 = vrot.slane %v1014, 1
      %v1017 = vsel %vm917, %v1012, %v1016
      %v1018 = vshrl.u32 %v617, 16
      %v1020 = vor.u32 %v1018, %v1016
      %v1022 = vshll.u32 %v618, 16
      %v1024 = vrot.slane %v1022, 1
      %v1025 = vsel %vm917, %v1020, %v1024
      %v1026 = vshrl.u32 %v618, 16
      %v1028 = vor.u32 %v1026, %v1024
      %v1030 = vshll.u32 %v619, 16
      %v1032 = vrot.slane %v1030, 1
      %v1033 = vsel %vm917, %v1028, %v1032
      %v1034 = vshrl.u32 %v619, 16
      %v1036 = vor.u32 %v1034, %v1032
      %v1038 = vshll.u32 %v620, 16
      %v1040 = vrot.slane %v1038, 1
      %v1041 = vsel %vm917, %v1036, %v1040
      %v1042 = vshrl.u32 %v620, 16
      %v1044 = vor.u32 %v1042, %v1040
      %v1046 = vshll.u32 %v621, 16
      %v1048 = vrot.slane %v1046, 1
      %v1049 = vsel %vm917, %v1044, %v1048
      %v1050 = vshrl.u32 %v621, 16
      %v1052 = vor.u32 %v1050, %v1048
      %v1054 = vshll.u32 %v622, 16
      %v1056 = vrot.slane %v1054, 1
      %v1057 = vsel %vm917, %v1052, %v1056
      %v1058 = vshrl.u32 %v622, 16
      %v1060 = vor.u32 %v1058, %v1056
      %v1095 = vunpack.c.l.b16 %v901
      %v1096 = vunpack.c.l.b16 %v902
      %v1097 = vunpack.c.l.b16 %v903
      %v1098 = vunpack.c.l.b16 %v904
      %v1099 = vunpack.c.l.b16 %v905
      %v1100 = vunpack.c.l.b16 %v906
      %v1101 = vunpack.c.l.b16 %v907
      %v1102 = vunpack.c.l.b16 %v908
      %v1103 = vunpack.c.l.b16 %v909
      %v1104 = vunpack.c.l.b16 %v910
      %v1105 = vunpack.c.l.b16 %v911
      %v1106 = vunpack.c.l.b16 %v912
      %v1107 = vunpack.c.l.b16 %v913
      %v1108 = vunpack.c.l.b16 %v914
      %v1109 = vunpack.c.l.b16 %v915
      %v1110 = vunpack.c.l.b16 %v916
      %v1111 = vpack.c.b16 %v1096, %v1095
      %v1112 = vpack.c.b16 %v1098, %v1097
      %v1113 = vpack.c.b16 %v1100, %v1099
      %v1114 = vpack.c.b16 %v1102, %v1101
      %v1115 = vpack.c.b16 %v1104, %v1103
      %v1116 = vpack.c.b16 %v1106, %v1105
      %v1117 = vpack.c.b16 %v1108, %v1107
      %v1118 = vpack.c.b16 %v1110, %v1109
      %1127 = vmatprep.subr.bf16.mxu0 0
      %1128 = vmatpush1.bf16.msra.mxu0 %v1118
      %1129 = vmatprep.subr.bf16.mxu0 0
      %1130 = vmatpush1.bf16.msra.mxu0 %v1117
      %1131 = vmatprep.subr.bf16.mxu0 0
      %1132 = vmatpush1.bf16.msra.mxu0 %v1116
      %1133 = vmatprep.subr.bf16.mxu0 0
      %1134 = vmatpush1.bf16.msra.mxu0 %v1115
      %1135 = vmatprep.subr.bf16.mxu0 0
      %1136 = vmatpush1.bf16.msra.mxu0 %v1114
      %1137 = vmatprep.subr.bf16.mxu0 0
      %1138 = vmatpush1.bf16.msra.mxu0 %v1113
      %1139 = vmatprep.subr.bf16.mxu0 0
      %1140 = vmatpush1.bf16.msra.mxu0 %v1112
      %1141 = vmatprep.subr.bf16.mxu0 0
      %1142 = vmatpush1.bf16.msra.mxu0 %v1111
      %1143 = vmatprep.subr.bf16.mxu0 0
      %1144 = vmatpush2.bf16.msra.mxu0 0
      %1145 = vmatprep.subr.bf16.mxu0 0
      %1146 = vmatpush2.bf16.msra.mxu0 0
      %1147 = vmatprep.subr.bf16.mxu0 0
      %1148 = vmatpush2.bf16.msra.mxu0 0
      %1149 = vmatprep.subr.bf16.mxu0 0
      %1150 = vmatpush2.bf16.msra.mxu0 0
      %1151 = vmatprep.subr.bf16.mxu0 0
      %1152 = vmatpush2.bf16.msra.mxu0 0
      %1153 = vmatprep.subr.bf16.mxu0 0
      %1154 = vmatpush2.bf16.msra.mxu0 0
      %1155 = vmatprep.subr.bf16.mxu0 0
      %1156 = vmatpush2.bf16.msra.mxu0 0
      %1157 = vmatprep.subr.bf16.mxu0 0
      %1158 = vmatpush2.bf16.msra.mxu0 0
      %1159 = vmatprep.mubr.bf16.mxu0 0
      %1160 = vmatmul.mubr.bf16.gmra.mxu0 %v929
      %v1161 = vpop.f32.mrf.mxu0
      %v1162 = vadd.f32 0.0, %v1161
      %v1163 = vpop.f32.mrf.mxu0
      %v1164 = vpop.f32.mrf.mxu0
      %v1165 = vadd.f32 0.0, %v1164
      %v1166 = vpop.f32.mrf.mxu0
      %1167 = vmatprep.mubr.bf16.mxu0 0
      %1168 = vmatmul.mubr.bf16.gmra.mxu0 %v937
      %v1169 = vpop.f32.mrf.mxu0
      %v1170 = vadd.f32 0.0, %v1169
      %v1171 = vpop.f32.mrf.mxu0
      %v1172 = vpop.f32.mrf.mxu0
      %v1173 = vadd.f32 0.0, %v1172
      %v1174 = vpop.f32.mrf.mxu0
      %1175 = vmatprep.mubr.bf16.mxu0 0
      %1176 = vmatmul.mubr.bf16.gmra.mxu0 %v945
      %v1177 = vpop.f32.mrf.mxu0
      %v1178 = vadd.f32 0.0, %v1177
      %v1179 = vpop.f32.mrf.mxu0
      %v1180 = vpop.f32.mrf.mxu0
      %v1181 = vadd.f32 0.0, %v1180
      %v1182 = vpop.f32.mrf.mxu0
      %1183 = vmatprep.mubr.bf16.mxu0 0
      %1184 = vmatmul.mubr.bf16.gmra.mxu0 %v953
      %v1185 = vpop.f32.mrf.mxu0
      %v1186 = vadd.f32 0.0, %v1185
      %v1187 = vpop.f32.mrf.mxu0
      %v1188 = vpop.f32.mrf.mxu0
      %v1189 = vadd.f32 0.0, %v1188
      %v1190 = vpop.f32.mrf.mxu0
      %1191 = vmatprep.mubr.bf16.mxu0 0
      %1192 = vmatmul.mubr.bf16.gmra.mxu0 %v961
      %v1193 = vpop.f32.mrf.mxu0
      %v1194 = vadd.f32 0.0, %v1193
      %v1195 = vpop.f32.mrf.mxu0
      %v1196 = vpop.f32.mrf.mxu0
      %v1197 = vadd.f32 0.0, %v1196
      %v1198 = vpop.f32.mrf.mxu0
      %1199 = vmatprep.mubr.bf16.mxu0 0
      %1200 = vmatmul.mubr.bf16.gmra.mxu0 %v969
      %v1201 = vpop.f32.mrf.mxu0
      %v1202 = vadd.f32 0.0, %v1201
      %v1203 = vpop.f32.mrf.mxu0
      %v1204 = vpop.f32.mrf.mxu0
      %v1205 = vadd.f32 0.0, %v1204
      %v1206 = vpop.f32.mrf.mxu0
      %1207 = vmatprep.mubr.bf16.mxu0 0
      %1208 = vmatmul.mubr.bf16.gmra.mxu0 %v977
      %v1209 = vpop.f32.mrf.mxu0
      %v1210 = vadd.f32 0.0, %v1209
      %v1211 = vpop.f32.mrf.mxu0
      %v1212 = vpop.f32.mrf.mxu0
      %v1213 = vadd.f32 0.0, %v1212
      %v1214 = vpop.f32.mrf.mxu0
      %1215 = vmatprep.mubr.bf16.mxu0 0
      %1216 = vmatmul.mubr.bf16.gmra.mxu0 %v985
      %v1217 = vpop.f32.mrf.mxu0
      %v1218 = vadd.f32 0.0, %v1217
      %v1219 = vpop.f32.mrf.mxu0
      %v1220 = vpop.f32.mrf.mxu0
      %v1221 = vadd.f32 0.0, %v1220
      %v1222 = vpop.f32.mrf.mxu0
      %1223 = vmatprep.mubr.bf16.mxu0 0
      %1224 = vmatmul.mubr.bf16.gmra.mxu0 %v993
      %v1225 = vpop.f32.mrf.mxu0
      %v1226 = vadd.f32 0.0, %v1225
      %v1227 = vpop.f32.mrf.mxu0
      %v1228 = vpop.f32.mrf.mxu0
      %v1229 = vadd.f32 0.0, %v1228
      %v1230 = vpop.f32.mrf.mxu0
      %1231 = vmatprep.mubr.bf16.mxu0 0
      %1232 = vmatmul.mubr.bf16.gmra.mxu0 %v1001
      %v1233 = vpop.f32.mrf.mxu0
      %v1234 = vadd.f32 0.0, %v1233
      %v1235 = vpop.f32.mrf.mxu0
      %v1236 = vpop.f32.mrf.mxu0
      %v1237 = vadd.f32 0.0, %v1236
      %v1238 = vpop.f32.mrf.mxu0
      %1239 = vmatprep.mubr.bf16.mxu0 0
      %1240 = vmatmul.mubr.bf16.gmra.mxu0 %v1009
      %v1241 = vpop.f32.mrf.mxu0
      %v1242 = vadd.f32 0.0, %v1241
      %v1243 = vpop.f32.mrf.mxu0
      %v1244 = vpop.f32.mrf.mxu0
      %v1245 = vadd.f32 0.0, %v1244
      %v1246 = vpop.f32.mrf.mxu0
      %1247 = vmatprep.mubr.bf16.mxu0 0
      %1248 = vmatmul.mubr.bf16.gmra.mxu0 %v1017
      %v1249 = vpop.f32.mrf.mxu0
      %v1250 = vadd.f32 0.0, %v1249
      %v1251 = vpop.f32.mrf.mxu0
      %v1252 = vpop.f32.mrf.mxu0
      %v1253 = vadd.f32 0.0, %v1252
      %v1254 = vpop.f32.mrf.mxu0
      %1255 = vmatprep.mubr.bf16.mxu0 0
      %1256 = vmatmul.mubr.bf16.gmra.mxu0 %v1025
      %v1257 = vpop.f32.mrf.mxu0
      %v1258 = vadd.f32 0.0, %v1257
      %v1259 = vpop.f32.mrf.mxu0
      %v1260 = vpop.f32.mrf.mxu0
      %v1261 = vadd.f32 0.0, %v1260
      %v1262 = vpop.f32.mrf.mxu0
      %1263 = vmatprep.mubr.bf16.mxu0 0
      %1264 = vmatmul.mubr.bf16.gmra.mxu0 %v1033
      %v1265 = vpop.f32.mrf.mxu0
      %v1266 = vadd.f32 0.0, %v1265
      %v1267 = vpop.f32.mrf.mxu0
      %v1268 = vpop.f32.mrf.mxu0
      %v1269 = vadd.f32 0.0, %v1268
      %v1270 = vpop.f32.mrf.mxu0
      %1271 = vmatprep.mubr.bf16.mxu0 0
      %1272 = vmatmul.mubr.bf16.gmra.mxu0 %v1041
      %v1273 = vpop.f32.mrf.mxu0
      %v1274 = vadd.f32 0.0, %v1273
      %v1275 = vpop.f32.mrf.mxu0
      %v1276 = vpop.f32.mrf.mxu0
      %v1277 = vadd.f32 0.0, %v1276
      %v1278 = vpop.f32.mrf.mxu0
      %1279 = vmatprep.mubr.bf16.mxu0 0
      %1280 = vmatmul.mubr.bf16.gmra.mxu0 %v1049
      %v1281 = vpop.f32.mrf.mxu0
      %v1282 = vadd.f32 0.0, %v1281
      %v1283 = vpop.f32.mrf.mxu0
      %v1284 = vpop.f32.mrf.mxu0
      %v1285 = vadd.f32 0.0, %v1284
      %v1286 = vpop.f32.mrf.mxu0
      %1287 = vmatprep.mubr.bf16.mxu0 0
      %1288 = vmatmul.mubr.bf16.gmra.mxu0 %v1057
      %v1289 = vpop.f32.mrf.mxu0
      %v1290 = vadd.f32 0.0, %v1289
      %v1291 = vpop.f32.mrf.mxu0
      %v1292 = vpop.f32.mrf.mxu0
      %v1293 = vadd.f32 0.0, %v1292
      %v1294 = vpop.f32.mrf.mxu0
      %1295 = vmatprep.mubr.bf16.mxu0 0
      %1296 = vmatmul.mubr.bf16.gmra.mxu0 %v1060
      %v1297 = vpop.f32.mrf.mxu0
      %v1298 = vadd.f32 0.0, %v1297
      %v1299 = vpop.f32.mrf.mxu0
      %v1300 = vpop.f32.mrf.mxu0
      %v1301 = vadd.f32 0.0, %v1300
      %v1302 = vpop.f32.mrf.mxu0
      %1303 = vdwg.mxu0
      %v1304 = vadd.f32 %v864, %v1162
      %v1305 = vadd.f32 %v865, %v1165
      %v1306 = vadd.f32 %v866, %v1170
      %v1307 = vadd.f32 %v867, %v1173
      %v1308 = vadd.f32 %v868, %v1178
      %v1309 = vadd.f32 %v869, %v1181
      %v1310 = vadd.f32 %v870, %v1186
      %v1311 = vadd.f32 %v871, %v1189
      %v1312 = vadd.f32 %v872, %v1194
      %v1313 = vadd.f32 %v873, %v1197
      %v1314 = vadd.f32 %v874, %v1202
      %v1315 = vadd.f32 %v875, %v1205
      %v1316 = vadd.f32 %v876, %v1210
      %v1317 = vadd.f32 %v877, %v1213
      %v1318 = vadd.f32 %v878, %v1218
      %v1319 = vadd.f32 %v879, %v1221
      %v1320 = vadd.f32 %v880, %v1226
      %v1321 = vadd.f32 %v881, %v1229
      %v1322 = vadd.f32 %v882, %v1234
      %v1323 = vadd.f32 %v883, %v1237
      %v1324 = vadd.f32 %v884, %v1242
      %v1325 = vadd.f32 %v885, %v1245
      %v1326 = vadd.f32 %v886, %v1250
      %v1327 = vadd.f32 %v887, %v1253
      %v1328 = vadd.f32 %v888, %v1258
      %v1329 = vadd.f32 %v889, %v1261
      %v1330 = vadd.f32 %v890, %v1266
      %v1331 = vadd.f32 %v891, %v1269
      %v1332 = vadd.f32 %v892, %v1274
      %v1333 = vadd.f32 %v893, %v1277
      %v1334 = vadd.f32 %v894, %v1282
      %v1335 = vadd.f32 %v895, %v1285
      %v1336 = vadd.f32 %v896, %v1290
      %v1337 = vadd.f32 %v897, %v1293
      %v1338 = vadd.f32 %v898, %v1298
      %v1339 = vadd.f32 %v899, %v1301
      %s1340 = scalar_lea.vmem %s1, 128
      %v1341 = vld [vmem:[%s1340] sm:$0xf]
      %v1342 = vld [vmem:[%s1340 + $0x4] sm:$0xf]
      %v1343 = vld [vmem:[%s1340 + $0x8] sm:$0xf]
      %v1344 = vld [vmem:[%s1340 + $0xc] sm:$0xf]
      %v1345 = vld [vmem:[%s1340 + $0x10] sm:$0xf]
      %v1346 = vld [vmem:[%s1340 + $0x14] sm:$0xf]
      %v1347 = vld [vmem:[%s1340 + $0x18] sm:$0xf]
      %v1348 = vld [vmem:[%s1340 + $0x1c] sm:$0xf]
      %v1349 = vld [vmem:[%s1340 + $0x20] sm:$0xf]
      %v1350 = vld [vmem:[%s1340 + $0x24] sm:$0xf]
      %v1351 = vld [vmem:[%s1340 + $0x28] sm:$0xf]
      %v1352 = vld [vmem:[%s1340 + $0x2c] sm:$0xf]
      %v1353 = vld [vmem:[%s1340 + $0x30] sm:$0xf]
      %v1354 = vld [vmem:[%s1340 + $0x34] sm:$0xf]
      %v1355 = vld [vmem:[%s1340 + $0x38] sm:$0xf]
      %v1356 = vld [vmem:[%s1340 + $0x3c] sm:$0xf]
      %vm1375 = vcmask 1046528
      %v1376 = vrot.slane %v605, 1
      %v1377 = vrot.slane %v606, 1
      %v1378 = vsel %vm1375, %v1376, %v1377
      %v1379 = vrot.slane %v607, 1
      %v1380 = vsel %vm1375, %v1377, %v1379
      %v1381 = vrot.slane %v608, 1
      %v1382 = vsel %vm1375, %v1379, %v1381
      %v1383 = vrot.slane %v609, 1
      %v1384 = vsel %vm1375, %v1381, %v1383
      %v1385 = vrot.slane %v610, 1
      %v1386 = vsel %vm1375, %v1383, %v1385
      %v1387 = vrot.slane %v611, 1
      %v1388 = vsel %vm1375, %v1385, %v1387
      %v1389 = vrot.slane %v612, 1
      %v1390 = vsel %vm1375, %v1387, %v1389
      %v1391 = vrot.slane %v613, 1
      %v1392 = vsel %vm1375, %v1389, %v1391
      %v1393 = vrot.slane %v614, 1
      %v1394 = vsel %vm1375, %v1391, %v1393
      %v1395 = vrot.slane %v615, 1
      %v1396 = vsel %vm1375, %v1393, %v1395
      %v1397 = vrot.slane %v616, 1
      %v1398 = vsel %vm1375, %v1395, %v1397
      %v1399 = vrot.slane %v617, 1
      %v1400 = vsel %vm1375, %v1397, %v1399
      %v1401 = vrot.slane %v618, 1
      %v1402 = vsel %vm1375, %v1399, %v1401
      %v1403 = vrot.slane %v619, 1
      %v1404 = vsel %vm1375, %v1401, %v1403
      %v1405 = vrot.slane %v620, 1
      %v1406 = vsel %vm1375, %v1403, %v1405
      %v1407 = vrot.slane %v621, 1
      %v1408 = vsel %vm1375, %v1405, %v1407
      %v1409 = vrot.slane %v622, 1
      %v1410 = vsel %vm1375, %v1407, %v1409
      %v1445 = vunpack.c.l.b16 %v1341
      %v1446 = vunpack.c.l.b16 %v1342
      %v1447 = vunpack.c.l.b16 %v1343
      %v1448 = vunpack.c.l.b16 %v1344
      %v1449 = vunpack.c.l.b16 %v1345
      %v1450 = vunpack.c.l.b16 %v1346
      %v1451 = vunpack.c.l.b16 %v1347
      %v1452 = vunpack.c.l.b16 %v1348
      %v1453 = vunpack.c.l.b16 %v1349
      %v1454 = vunpack.c.l.b16 %v1350
      %v1455 = vunpack.c.l.b16 %v1351
      %v1456 = vunpack.c.l.b16 %v1352
      %v1457 = vunpack.c.l.b16 %v1353
      %v1458 = vunpack.c.l.b16 %v1354
      %v1459 = vunpack.c.l.b16 %v1355
      %v1460 = vunpack.c.l.b16 %v1356
      %v1461 = vpack.c.b16 %v1446, %v1445
      %v1462 = vpack.c.b16 %v1448, %v1447
      %v1463 = vpack.c.b16 %v1450, %v1449
      %v1464 = vpack.c.b16 %v1452, %v1451
      %v1465 = vpack.c.b16 %v1454, %v1453
      %v1466 = vpack.c.b16 %v1456, %v1455
      %v1467 = vpack.c.b16 %v1458, %v1457
      %v1468 = vpack.c.b16 %v1460, %v1459
      %1477 = vmatprep.subr.bf16.mxu0 0
      %1478 = vmatpush1.bf16.msra.mxu0 %v1468
      %1479 = vmatprep.subr.bf16.mxu0 0
      %1480 = vmatpush1.bf16.msra.mxu0 %v1467
      %1481 = vmatprep.subr.bf16.mxu0 0
      %1482 = vmatpush1.bf16.msra.mxu0 %v1466
      %1483 = vmatprep.subr.bf16.mxu0 0
      %1484 = vmatpush1.bf16.msra.mxu0 %v1465
      %1485 = vmatprep.subr.bf16.mxu0 0
      %1486 = vmatpush1.bf16.msra.mxu0 %v1464
      %1487 = vmatprep.subr.bf16.mxu0 0
      %1488 = vmatpush1.bf16.msra.mxu0 %v1463
      %1489 = vmatprep.subr.bf16.mxu0 0
      %1490 = vmatpush1.bf16.msra.mxu0 %v1462
      %1491 = vmatprep.subr.bf16.mxu0 0
      %1492 = vmatpush1.bf16.msra.mxu0 %v1461
      %1493 = vmatprep.subr.bf16.mxu0 0
      %1494 = vmatpush2.bf16.msra.mxu0 0
      %1495 = vmatprep.subr.bf16.mxu0 0
      %1496 = vmatpush2.bf16.msra.mxu0 0
      %1497 = vmatprep.subr.bf16.mxu0 0
      %1498 = vmatpush2.bf16.msra.mxu0 0
      %1499 = vmatprep.subr.bf16.mxu0 0
      %1500 = vmatpush2.bf16.msra.mxu0 0
      %1501 = vmatprep.subr.bf16.mxu0 0
      %1502 = vmatpush2.bf16.msra.mxu0 0
      %1503 = vmatprep.subr.bf16.mxu0 0
      %1504 = vmatpush2.bf16.msra.mxu0 0
      %1505 = vmatprep.subr.bf16.mxu0 0
      %1506 = vmatpush2.bf16.msra.mxu0 0
      %1507 = vmatprep.subr.bf16.mxu0 0
      %1508 = vmatpush2.bf16.msra.mxu0 0
      %1509 = vmatprep.mubr.bf16.mxu0 0
      %1510 = vmatmul.mubr.bf16.gmra.mxu0 %v1378
      %v1511 = vpop.f32.mrf.mxu0
      %v1512 = vadd.f32 0.0, %v1511
      %v1513 = vpop.f32.mrf.mxu0
      %v1514 = vpop.f32.mrf.mxu0
      %v1515 = vadd.f32 0.0, %v1514
      %v1516 = vpop.f32.mrf.mxu0
      %1517 = vmatprep.mubr.bf16.mxu0 0
      %1518 = vmatmul.mubr.bf16.gmra.mxu0 %v1380
      %v1519 = vpop.f32.mrf.mxu0
      %v1520 = vadd.f32 0.0, %v1519
      %v1521 = vpop.f32.mrf.mxu0
      %v1522 = vpop.f32.mrf.mxu0
      %v1523 = vadd.f32 0.0, %v1522
      %v1524 = vpop.f32.mrf.mxu0
      %1525 = vmatprep.mubr.bf16.mxu0 0
      %1526 = vmatmul.mubr.bf16.gmra.mxu0 %v1382
      %v1527 = vpop.f32.mrf.mxu0
      %v1528 = vadd.f32 0.0, %v1527
      %v1529 = vpop.f32.mrf.mxu0
      %v1530 = vpop.f32.mrf.mxu0
      %v1531 = vadd.f32 0.0, %v1530
      %v1532 = vpop.f32.mrf.mxu0
      %1533 = vmatprep.mubr.bf16.mxu0 0
      %1534 = vmatmul.mubr.bf16.gmra.mxu0 %v1384
      %v1535 = vpop.f32.mrf.mxu0
      %v1536 = vadd.f32 0.0, %v1535
      %v1537 = vpop.f32.mrf.mxu0
      %v1538 = vpop.f32.mrf.mxu0
      %v1539 = vadd.f32 0.0, %v1538
      %v1540 = vpop.f32.mrf.mxu0
      %1541 = vmatprep.mubr.bf16.mxu0 0
      %1542 = vmatmul.mubr.bf16.gmra.mxu0 %v1386
      %v1543 = vpop.f32.mrf.mxu0
      %v1544 = vadd.f32 0.0, %v1543
      %v1545 = vpop.f32.mrf.mxu0
      %v1546 = vpop.f32.mrf.mxu0
      %v1547 = vadd.f32 0.0, %v1546
      %v1548 = vpop.f32.mrf.mxu0
      %1549 = vmatprep.mubr.bf16.mxu0 0
      %1550 = vmatmul.mubr.bf16.gmra.mxu0 %v1388
      %v1551 = vpop.f32.mrf.mxu0
      %v1552 = vadd.f32 0.0, %v1551
      %v1553 = vpop.f32.mrf.mxu0
      %v1554 = vpop.f32.mrf.mxu0
      %v1555 = vadd.f32 0.0, %v1554
      %v1556 = vpop.f32.mrf.mxu0
      %1557 = vmatprep.mubr.bf16.mxu0 0
      %1558 = vmatmul.mubr.bf16.gmra.mxu0 %v1390
      %v1559 = vpop.f32.mrf.mxu0
      %v1560 = vadd.f32 0.0, %v1559
      %v1561 = vpop.f32.mrf.mxu0
      %v1562 = vpop.f32.mrf.mxu0
      %v1563 = vadd.f32 0.0, %v1562
      %v1564 = vpop.f32.mrf.mxu0
      %1565 = vmatprep.mubr.bf16.mxu0 0
      %1566 = vmatmul.mubr.bf16.gmra.mxu0 %v1392
      %v1567 = vpop.f32.mrf.mxu0
      %v1568 = vadd.f32 0.0, %v1567
      %v1569 = vpop.f32.mrf.mxu0
      %v1570 = vpop.f32.mrf.mxu0
      %v1571 = vadd.f32 0.0, %v1570
      %v1572 = vpop.f32.mrf.mxu0
      %1573 = vmatprep.mubr.bf16.mxu0 0
      %1574 = vmatmul.mubr.bf16.gmra.mxu0 %v1394
      %v1575 = vpop.f32.mrf.mxu0
      %v1576 = vadd.f32 0.0, %v1575
      %v1577 = vpop.f32.mrf.mxu0
      %v1578 = vpop.f32.mrf.mxu0
      %v1579 = vadd.f32 0.0, %v1578
      %v1580 = vpop.f32.mrf.mxu0
      %1581 = vmatprep.mubr.bf16.mxu0 0
      %1582 = vmatmul.mubr.bf16.gmra.mxu0 %v1396
      %v1583 = vpop.f32.mrf.mxu0
      %v1584 = vadd.f32 0.0, %v1583
      %v1585 = vpop.f32.mrf.mxu0
      %v1586 = vpop.f32.mrf.mxu0
      %v1587 = vadd.f32 0.0, %v1586
      %v1588 = vpop.f32.mrf.mxu0
      %1589 = vmatprep.mubr.bf16.mxu0 0
      %1590 = vmatmul.mubr.bf16.gmra.mxu0 %v1398
      %v1591 = vpop.f32.mrf.mxu0
      %v1592 = vadd.f32 0.0, %v1591
      %v1593 = vpop.f32.mrf.mxu0
      %v1594 = vpop.f32.mrf.mxu0
      %v1595 = vadd.f32 0.0, %v1594
      %v1596 = vpop.f32.mrf.mxu0
      %1597 = vmatprep.mubr.bf16.mxu0 0
      %1598 = vmatmul.mubr.bf16.gmra.mxu0 %v1400
      %v1599 = vpop.f32.mrf.mxu0
      %v1600 = vadd.f32 0.0, %v1599
      %v1601 = vpop.f32.mrf.mxu0
      %v1602 = vpop.f32.mrf.mxu0
      %v1603 = vadd.f32 0.0, %v1602
      %v1604 = vpop.f32.mrf.mxu0
      %1605 = vmatprep.mubr.bf16.mxu0 0
      %1606 = vmatmul.mubr.bf16.gmra.mxu0 %v1402
      %v1607 = vpop.f32.mrf.mxu0
      %v1608 = vadd.f32 0.0, %v1607
      %v1609 = vpop.f32.mrf.mxu0
      %v1610 = vpop.f32.mrf.mxu0
      %v1611 = vadd.f32 0.0, %v1610
      %v1612 = vpop.f32.mrf.mxu0
      %1613 = vmatprep.mubr.bf16.mxu0 0
      %1614 = vmatmul.mubr.bf16.gmra.mxu0 %v1404
      %v1615 = vpop.f32.mrf.mxu0
      %v1616 = vadd.f32 0.0, %v1615
      %v1617 = vpop.f32.mrf.mxu0
      %v1618 = vpop.f32.mrf.mxu0
      %v1619 = vadd.f32 0.0, %v1618
      %v1620 = vpop.f32.mrf.mxu0
      %1621 = vmatprep.mubr.bf16.mxu0 0
      %1622 = vmatmul.mubr.bf16.gmra.mxu0 %v1406
      %v1623 = vpop.f32.mrf.mxu0
      %v1624 = vadd.f32 0.0, %v1623
      %v1625 = vpop.f32.mrf.mxu0
      %v1626 = vpop.f32.mrf.mxu0
      %v1627 = vadd.f32 0.0, %v1626
      %v1628 = vpop.f32.mrf.mxu0
      %1629 = vmatprep.mubr.bf16.mxu0 0
      %1630 = vmatmul.mubr.bf16.gmra.mxu0 %v1408
      %v1631 = vpop.f32.mrf.mxu0
      %v1632 = vadd.f32 0.0, %v1631
      %v1633 = vpop.f32.mrf.mxu0
      %v1634 = vpop.f32.mrf.mxu0
      %v1635 = vadd.f32 0.0, %v1634
      %v1636 = vpop.f32.mrf.mxu0
      %1637 = vmatprep.mubr.bf16.mxu0 0
      %1638 = vmatmul.mubr.bf16.gmra.mxu0 %v1410
      %v1639 = vpop.f32.mrf.mxu0
      %v1640 = vadd.f32 0.0, %v1639
      %v1641 = vpop.f32.mrf.mxu0
      %v1642 = vpop.f32.mrf.mxu0
      %v1643 = vadd.f32 0.0, %v1642
      %v1644 = vpop.f32.mrf.mxu0
      %1645 = vmatprep.mubr.bf16.mxu0 0
      %1646 = vmatmul.mubr.bf16.gmra.mxu0 %v1409
      %v1647 = vpop.f32.mrf.mxu0
      %v1648 = vadd.f32 0.0, %v1647
      %v1649 = vpop.f32.mrf.mxu0
      %v1650 = vpop.f32.mrf.mxu0
      %v1651 = vadd.f32 0.0, %v1650
      %v1652 = vpop.f32.mrf.mxu0
      %1653 = vdwg.mxu0
      %v1654 = vadd.f32 %v1304, %v1512
      %v1655 = vadd.f32 %v1305, %v1515
      %v1656 = vadd.f32 %v1306, %v1520
      %v1657 = vadd.f32 %v1307, %v1523
      %v1658 = vadd.f32 %v1308, %v1528
      %v1659 = vadd.f32 %v1309, %v1531
      %v1660 = vadd.f32 %v1310, %v1536
      %v1661 = vadd.f32 %v1311, %v1539
      %v1662 = vadd.f32 %v1312, %v1544
      %v1663 = vadd.f32 %v1313, %v1547
      %v1664 = vadd.f32 %v1314, %v1552
      %v1665 = vadd.f32 %v1315, %v1555
      %v1666 = vadd.f32 %v1316, %v1560
      %v1667 = vadd.f32 %v1317, %v1563
      %v1668 = vadd.f32 %v1318, %v1568
      %v1669 = vadd.f32 %v1319, %v1571
      %v1670 = vadd.f32 %v1320, %v1576
      %v1671 = vadd.f32 %v1321, %v1579
      %v1672 = vadd.f32 %v1322, %v1584
      %v1673 = vadd.f32 %v1323, %v1587
      %v1674 = vadd.f32 %v1324, %v1592
      %v1675 = vadd.f32 %v1325, %v1595
      %v1676 = vadd.f32 %v1326, %v1600
      %v1677 = vadd.f32 %v1327, %v1603
      %v1678 = vadd.f32 %v1328, %v1608
      %v1679 = vadd.f32 %v1329, %v1611
      %v1680 = vadd.f32 %v1330, %v1616
      %v1681 = vadd.f32 %v1331, %v1619
      %v1682 = vadd.f32 %v1332, %v1624
      %v1683 = vadd.f32 %v1333, %v1627
      %v1684 = vadd.f32 %v1334, %v1632
      %v1685 = vadd.f32 %v1335, %v1635
      %v1686 = vadd.f32 %v1336, %v1640
      %v1687 = vadd.f32 %v1337, %v1643
      %v1688 = vadd.f32 %v1338, %v1648
      %v1689 = vadd.f32 %v1339, %v1651
      %s1690 = scalar_lea.vmem %s1, 192
      %v1691 = vld [vmem:[%s1690] sm:$0xf]
      %v1692 = vld [vmem:[%s1690 + $0x4] sm:$0xf]
      %v1693 = vld [vmem:[%s1690 + $0x8] sm:$0xf]
      %v1694 = vld [vmem:[%s1690 + $0xc] sm:$0xf]
      %v1695 = vld [vmem:[%s1690 + $0x10] sm:$0xf]
      %v1696 = vld [vmem:[%s1690 + $0x14] sm:$0xf]
      %v1697 = vld [vmem:[%s1690 + $0x18] sm:$0xf]
      %v1698 = vld [vmem:[%s1690 + $0x1c] sm:$0xf]
      %v1699 = vld [vmem:[%s1690 + $0x20] sm:$0xf]
      %v1700 = vld [vmem:[%s1690 + $0x24] sm:$0xf]
      %v1701 = vld [vmem:[%s1690 + $0x28] sm:$0xf]
      %v1702 = vld [vmem:[%s1690 + $0x2c] sm:$0xf]
      %v1703 = vld [vmem:[%s1690 + $0x30] sm:$0xf]
      %v1704 = vld [vmem:[%s1690 + $0x34] sm:$0xf]
      %v1705 = vld [vmem:[%s1690 + $0x38] sm:$0xf]
      %v1706 = vld [vmem:[%s1690 + $0x3c] sm:$0xf]
      %vm1707 = vsmask.f32 6400
      %v1708 = vrot.slane %v919, 1
      %v1709 = vrot.slane %v921, 2
      %v1710 = vor.u32 %v1708, %v1709
      %v1711 = vrot.slane %v930, 1
      %v1712 = vrot.slane %v926, 2
      %v1713 = vor.u32 %v1711, %v1712
      %v1714 = vsel %vm1707, %v1710, %v1713
      %v1715 = vrot.slane %v938, 1
      %v1716 = vrot.slane %v934, 2
      %v1717 = vor.u32 %v1715, %v1716
      %v1718 = vsel %vm1707, %v1713, %v1717
      %v1719 = vrot.slane %v946, 1
      %v1720 = vrot.slane %v942, 2
      %v1721 = vor.u32 %v1719, %v1720
      %v1722 = vsel %vm1707, %v1717, %v1721
      %v1723 = vrot.slane %v954, 1
      %v1724 = vrot.slane %v950, 2
      %v1725 = vor.u32 %v1723, %v1724
      %v1726 = vsel %vm1707, %v1721, %v1725
      %v1727 = vrot.slane %v962, 1
      %v1728 = vrot.slane %v958, 2
      %v1729 = vor.u32 %v1727, %v1728
      %v1730 = vsel %vm1707, %v1725, %v1729
      %v1731 = vrot.slane %v970, 1
      %v1732 = vrot.slane %v966, 2
      %v1733 = vor.u32 %v1731, %v1732
      %v1734 = vsel %vm1707, %v1729, %v1733
      %v1735 = vrot.slane %v978, 1
      %v1736 = vrot.slane %v974, 2
      %v1737 = vor.u32 %v1735, %v1736
      %v1738 = vsel %vm1707, %v1733, %v1737
      %v1739 = vrot.slane %v986, 1
      %v1740 = vrot.slane %v982, 2
      %v1741 = vor.u32 %v1739, %v1740
      %v1742 = vsel %vm1707, %v1737, %v1741
      %v1743 = vrot.slane %v994, 1
      %v1744 = vrot.slane %v990, 2
      %v1745 = vor.u32 %v1743, %v1744
      %v1746 = vsel %vm1707, %v1741, %v1745
      %v1747 = vrot.slane %v1002, 1
      %v1748 = vrot.slane %v998, 2
      %v1749 = vor.u32 %v1747, %v1748
      %v1750 = vsel %vm1707, %v1745, %v1749
      %v1751 = vrot.slane %v1010, 1
      %v1752 = vrot.slane %v1006, 2
      %v1753 = vor.u32 %v1751, %v1752
      %v1754 = vsel %vm1707, %v1749, %v1753
      %v1755 = vrot.slane %v1018, 1
      %v1756 = vrot.slane %v1014, 2
      %v1757 = vor.u32 %v1755, %v1756
      %v1758 = vsel %vm1707, %v1753, %v1757
      %v1759 = vrot.slane %v1026, 1
      %v1760 = vrot.slane %v1022, 2
      %v1761 = vor.u32 %v1759, %v1760
      %v1762 = vsel %vm1707, %v1757, %v1761
      %v1763 = vrot.slane %v1034, 1
      %v1764 = vrot.slane %v1030, 2
      %v1765 = vor.u32 %v1763, %v1764
      %v1766 = vsel %vm1707, %v1761, %v1765
      %v1767 = vrot.slane %v1042, 1
      %v1768 = vrot.slane %v1038, 2
      %v1769 = vor.u32 %v1767, %v1768
      %v1770 = vsel %vm1707, %v1765, %v1769
      %v1771 = vrot.slane %v1050, 1
      %v1772 = vrot.slane %v1046, 2
      %v1773 = vor.u32 %v1771, %v1772
      %v1774 = vsel %vm1707, %v1769, %v1773
      %v1775 = vrot.slane %v1058, 1
      %v1776 = vrot.slane %v1054, 2
      %v1777 = vor.u32 %v1775, %v1776
      %v1778 = vsel %vm1707, %v1773, %v1777
      %v1813 = vunpack.c.l.b16 %v1691
      %v1814 = vunpack.c.l.b16 %v1692
      %v1815 = vunpack.c.l.b16 %v1693
      %v1816 = vunpack.c.l.b16 %v1694
      %v1817 = vunpack.c.l.b16 %v1695
      %v1818 = vunpack.c.l.b16 %v1696
      %v1819 = vunpack.c.l.b16 %v1697
      %v1820 = vunpack.c.l.b16 %v1698
      %v1821 = vunpack.c.l.b16 %v1699
      %v1822 = vunpack.c.l.b16 %v1700
      %v1823 = vunpack.c.l.b16 %v1701
      %v1824 = vunpack.c.l.b16 %v1702
      %v1825 = vunpack.c.l.b16 %v1703
      %v1826 = vunpack.c.l.b16 %v1704
      %v1827 = vunpack.c.l.b16 %v1705
      %v1828 = vunpack.c.l.b16 %v1706
      %v1829 = vpack.c.b16 %v1814, %v1813
      %v1830 = vpack.c.b16 %v1816, %v1815
      %v1831 = vpack.c.b16 %v1818, %v1817
      %v1832 = vpack.c.b16 %v1820, %v1819
      %v1833 = vpack.c.b16 %v1822, %v1821
      %v1834 = vpack.c.b16 %v1824, %v1823
      %v1835 = vpack.c.b16 %v1826, %v1825
      %v1836 = vpack.c.b16 %v1828, %v1827
      %1845 = vmatprep.subr.bf16.mxu0 0
      %1846 = vmatpush1.bf16.msra.mxu0 %v1836
      %1847 = vmatprep.subr.bf16.mxu0 0
      %1848 = vmatpush1.bf16.msra.mxu0 %v1835
      %1849 = vmatprep.subr.bf16.mxu0 0
      %1850 = vmatpush1.bf16.msra.mxu0 %v1834
      %1851 = vmatprep.subr.bf16.mxu0 0
      %1852 = vmatpush1.bf16.msra.mxu0 %v1833
      %1853 = vmatprep.subr.bf16.mxu0 0
      %1854 = vmatpush1.bf16.msra.mxu0 %v1832
      %1855 = vmatprep.subr.bf16.mxu0 0
      %1856 = vmatpush1.bf16.msra.mxu0 %v1831
      %1857 = vmatprep.subr.bf16.mxu0 0
      %1858 = vmatpush1.bf16.msra.mxu0 %v1830
      %1859 = vmatprep.subr.bf16.mxu0 0
      %1860 = vmatpush1.bf16.msra.mxu0 %v1829
      %1861 = vmatprep.subr.bf16.mxu0 0
      %1862 = vmatpush2.bf16.msra.mxu0 0
      %1863 = vmatprep.subr.bf16.mxu0 0
      %1864 = vmatpush2.bf16.msra.mxu0 0
      %1865 = vmatprep.subr.bf16.mxu0 0
      %1866 = vmatpush2.bf16.msra.mxu0 0
      %1867 = vmatprep.subr.bf16.mxu0 0
      %1868 = vmatpush2.bf16.msra.mxu0 0
      %1869 = vmatprep.subr.bf16.mxu0 0
      %1870 = vmatpush2.bf16.msra.mxu0 0
      %1871 = vmatprep.subr.bf16.mxu0 0
      %1872 = vmatpush2.bf16.msra.mxu0 0
      %1873 = vmatprep.subr.bf16.mxu0 0
      %1874 = vmatpush2.bf16.msra.mxu0 0
      %1875 = vmatprep.subr.bf16.mxu0 0
      %1876 = vmatpush2.bf16.msra.mxu0 0
      %1877 = vmatprep.mubr.bf16.mxu0 0
      %1878 = vmatmul.mubr.bf16.gmra.mxu0 %v1714
      %v1879 = vpop.f32.mrf.mxu0
      %v1880 = vadd.f32 0.0, %v1879
      %v1881 = vpop.f32.mrf.mxu0
      %v1882 = vpop.f32.mrf.mxu0
      %v1883 = vadd.f32 0.0, %v1882
      %v1884 = vpop.f32.mrf.mxu0
      %1885 = vmatprep.mubr.bf16.mxu0 0
      %1886 = vmatmul.mubr.bf16.gmra.mxu0 %v1718
      %v1887 = vpop.f32.mrf.mxu0
      %v1888 = vadd.f32 0.0, %v1887
      %v1889 = vpop.f32.mrf.mxu0
      %v1890 = vpop.f32.mrf.mxu0
      %v1891 = vadd.f32 0.0, %v1890
      %v1892 = vpop.f32.mrf.mxu0
      %1893 = vmatprep.mubr.bf16.mxu0 0
      %1894 = vmatmul.mubr.bf16.gmra.mxu0 %v1722
      %v1895 = vpop.f32.mrf.mxu0
      %v1896 = vadd.f32 0.0, %v1895
      %v1897 = vpop.f32.mrf.mxu0
      %v1898 = vpop.f32.mrf.mxu0
      %v1899 = vadd.f32 0.0, %v1898
      %v1900 = vpop.f32.mrf.mxu0
      %1901 = vmatprep.mubr.bf16.mxu0 0
      %1902 = vmatmul.mubr.bf16.gmra.mxu0 %v1726
      %v1903 = vpop.f32.mrf.mxu0
      %v1904 = vadd.f32 0.0, %v1903
      %v1905 = vpop.f32.mrf.mxu0
      %v1906 = vpop.f32.mrf.mxu0
      %v1907 = vadd.f32 0.0, %v1906
      %v1908 = vpop.f32.mrf.mxu0
      %1909 = vmatprep.mubr.bf16.mxu0 0
      %1910 = vmatmul.mubr.bf16.gmra.mxu0 %v1730
      %v1911 = vpop.f32.mrf.mxu0
      %v1912 = vadd.f32 0.0, %v1911
      %v1913 = vpop.f32.mrf.mxu0
      %v1914 = vpop.f32.mrf.mxu0
      %v1915 = vadd.f32 0.0, %v1914
      %v1916 = vpop.f32.mrf.mxu0
      %1917 = vmatprep.mubr.bf16.mxu0 0
      %1918 = vmatmul.mubr.bf16.gmra.mxu0 %v1734
      %v1919 = vpop.f32.mrf.mxu0
      %v1920 = vadd.f32 0.0, %v1919
      %v1921 = vpop.f32.mrf.mxu0
      %v1922 = vpop.f32.mrf.mxu0
      %v1923 = vadd.f32 0.0, %v1922
      %v1924 = vpop.f32.mrf.mxu0
      %1925 = vmatprep.mubr.bf16.mxu0 0
      %1926 = vmatmul.mubr.bf16.gmra.mxu0 %v1738
      %v1927 = vpop.f32.mrf.mxu0
      %v1928 = vadd.f32 0.0, %v1927
      %v1929 = vpop.f32.mrf.mxu0
      %v1930 = vpop.f32.mrf.mxu0
      %v1931 = vadd.f32 0.0, %v1930
      %v1932 = vpop.f32.mrf.mxu0
      %1933 = vmatprep.mubr.bf16.mxu0 0
      %1934 = vmatmul.mubr.bf16.gmra.mxu0 %v1742
      %v1935 = vpop.f32.mrf.mxu0
      %v1936 = vadd.f32 0.0, %v1935
      %v1937 = vpop.f32.mrf.mxu0
      %v1938 = vpop.f32.mrf.mxu0
      %v1939 = vadd.f32 0.0, %v1938
      %v1940 = vpop.f32.mrf.mxu0
      %1941 = vmatprep.mubr.bf16.mxu0 0
      %1942 = vmatmul.mubr.bf16.gmra.mxu0 %v1746
      %v1943 = vpop.f32.mrf.mxu0
      %v1944 = vadd.f32 0.0, %v1943
      %v1945 = vpop.f32.mrf.mxu0
      %v1946 = vpop.f32.mrf.mxu0
      %v1947 = vadd.f32 0.0, %v1946
      %v1948 = vpop.f32.mrf.mxu0
      %1949 = vmatprep.mubr.bf16.mxu0 0
      %1950 = vmatmul.mubr.bf16.gmra.mxu0 %v1750
      %v1951 = vpop.f32.mrf.mxu0
      %v1952 = vadd.f32 0.0, %v1951
      %v1953 = vpop.f32.mrf.mxu0
      %v1954 = vpop.f32.mrf.mxu0
      %v1955 = vadd.f32 0.0, %v1954
      %v1956 = vpop.f32.mrf.mxu0
      %1957 = vmatprep.mubr.bf16.mxu0 0
      %1958 = vmatmul.mubr.bf16.gmra.mxu0 %v1754
      %v1959 = vpop.f32.mrf.mxu0
      %v1960 = vadd.f32 0.0, %v1959
      %v1961 = vpop.f32.mrf.mxu0
      %v1962 = vpop.f32.mrf.mxu0
      %v1963 = vadd.f32 0.0, %v1962
      %v1964 = vpop.f32.mrf.mxu0
      %1965 = vmatprep.mubr.bf16.mxu0 0
      %1966 = vmatmul.mubr.bf16.gmra.mxu0 %v1758
      %v1967 = vpop.f32.mrf.mxu0
      %v1968 = vadd.f32 0.0, %v1967
      %v1969 = vpop.f32.mrf.mxu0
      %v1970 = vpop.f32.mrf.mxu0
      %v1971 = vadd.f32 0.0, %v1970
      %v1972 = vpop.f32.mrf.mxu0
      %1973 = vmatprep.mubr.bf16.mxu0 0
      %1974 = vmatmul.mubr.bf16.gmra.mxu0 %v1762
      %v1975 = vpop.f32.mrf.mxu0
      %v1976 = vadd.f32 0.0, %v1975
      %v1977 = vpop.f32.mrf.mxu0
      %v1978 = vpop.f32.mrf.mxu0
      %v1979 = vadd.f32 0.0, %v1978
      %v1980 = vpop.f32.mrf.mxu0
      %1981 = vmatprep.mubr.bf16.mxu0 0
      %1982 = vmatmul.mubr.bf16.gmra.mxu0 %v1766
      %v1983 = vpop.f32.mrf.mxu0
      %v1984 = vadd.f32 0.0, %v1983
      %v1985 = vpop.f32.mrf.mxu0
      %v1986 = vpop.f32.mrf.mxu0
      %v1987 = vadd.f32 0.0, %v1986
      %v1988 = vpop.f32.mrf.mxu0
      %1989 = vmatprep.mubr.bf16.mxu0 0
      %1990 = vmatmul.mubr.bf16.gmra.mxu0 %v1770
      %v1991 = vpop.f32.mrf.mxu0
      %v1992 = vadd.f32 0.0, %v1991
      %v1993 = vpop.f32.mrf.mxu0
      %v1994 = vpop.f32.mrf.mxu0
      %v1995 = vadd.f32 0.0, %v1994
      %v1996 = vpop.f32.mrf.mxu0
      %1997 = vmatprep.mubr.bf16.mxu0 0
      %1998 = vmatmul.mubr.bf16.gmra.mxu0 %v1774
      %v1999 = vpop.f32.mrf.mxu0
      %v2000 = vadd.f32 0.0, %v1999
      %v2001 = vpop.f32.mrf.mxu0
      %v2002 = vpop.f32.mrf.mxu0
      %v2003 = vadd.f32 0.0, %v2002
      %v2004 = vpop.f32.mrf.mxu0
      %2005 = vmatprep.mubr.bf16.mxu0 0
      %2006 = vmatmul.mubr.bf16.gmra.mxu0 %v1778
      %v2007 = vpop.f32.mrf.mxu0
      %v2008 = vadd.f32 0.0, %v2007
      %v2009 = vpop.f32.mrf.mxu0
      %v2010 = vpop.f32.mrf.mxu0
      %v2011 = vadd.f32 0.0, %v2010
      %v2012 = vpop.f32.mrf.mxu0
      %2013 = vmatprep.mubr.bf16.mxu0 0
      %2014 = vmatmul.mubr.bf16.gmra.mxu0 %v1777
      %v2015 = vpop.f32.mrf.mxu0
      %v2016 = vadd.f32 0.0, %v2015
      %v2017 = vpop.f32.mrf.mxu0
      %v2018 = vpop.f32.mrf.mxu0
      %v2019 = vadd.f32 0.0, %v2018
      %v2020 = vpop.f32.mrf.mxu0
      %2021 = vdwg.mxu0
      %v2022 = vadd.f32 %v1654, %v1880
      %v2023 = vadd.f32 %v1655, %v1883
      %v2024 = vadd.f32 %v1656, %v1888
      %v2025 = vadd.f32 %v1657, %v1891
      %v2026 = vadd.f32 %v1658, %v1896
      %v2027 = vadd.f32 %v1659, %v1899
      %v2028 = vadd.f32 %v1660, %v1904
      %v2029 = vadd.f32 %v1661, %v1907
      %v2030 = vadd.f32 %v1662, %v1912
      %v2031 = vadd.f32 %v1663, %v1915
      %v2032 = vadd.f32 %v1664, %v1920
      %v2033 = vadd.f32 %v1665, %v1923
      %v2034 = vadd.f32 %v1666, %v1928
      %v2035 = vadd.f32 %v1667, %v1931
      %v2036 = vadd.f32 %v1668, %v1936
      %v2037 = vadd.f32 %v1669, %v1939
      %v2038 = vadd.f32 %v1670, %v1944
      %v2039 = vadd.f32 %v1671, %v1947
      %v2040 = vadd.f32 %v1672, %v1952
      %v2041 = vadd.f32 %v1673, %v1955
      %v2042 = vadd.f32 %v1674, %v1960
      %v2043 = vadd.f32 %v1675, %v1963
      %v2044 = vadd.f32 %v1676, %v1968
      %v2045 = vadd.f32 %v1677, %v1971
      %v2046 = vadd.f32 %v1678, %v1976
      %v2047 = vadd.f32 %v1679, %v1979
      %v2048 = vadd.f32 %v1680, %v1984
      %v2049 = vadd.f32 %v1681, %v1987
      %v2050 = vadd.f32 %v1682, %v1992
      %v2051 = vadd.f32 %v1683, %v1995
      %v2052 = vadd.f32 %v1684, %v2000
      %v2053 = vadd.f32 %v1685, %v2003
      %v2054 = vadd.f32 %v1686, %v2008
      %v2055 = vadd.f32 %v1687, %v2011
      %v2056 = vadd.f32 %v1688, %v2016
      %v2057 = vadd.f32 %v1689, %v2019
      %s2058 = scalar_lea.vmem %s1, 256
      %v2059 = vld [vmem:[%s2058] sm:$0xf]
      %v2060 = vld [vmem:[%s2058 + $0x4] sm:$0xf]
      %v2061 = vld [vmem:[%s2058 + $0x8] sm:$0xf]
      %v2062 = vld [vmem:[%s2058 + $0xc] sm:$0xf]
      %v2063 = vld [vmem:[%s2058 + $0x10] sm:$0xf]
      %v2064 = vld [vmem:[%s2058 + $0x14] sm:$0xf]
      %v2065 = vld [vmem:[%s2058 + $0x18] sm:$0xf]
      %v2066 = vld [vmem:[%s2058 + $0x1c] sm:$0xf]
      %v2067 = vld [vmem:[%s2058 + $0x20] sm:$0xf]
      %v2068 = vld [vmem:[%s2058 + $0x24] sm:$0xf]
      %v2069 = vld [vmem:[%s2058 + $0x28] sm:$0xf]
      %v2070 = vld [vmem:[%s2058 + $0x2c] sm:$0xf]
      %v2071 = vld [vmem:[%s2058 + $0x30] sm:$0xf]
      %v2072 = vld [vmem:[%s2058 + $0x34] sm:$0xf]
      %v2073 = vld [vmem:[%s2058 + $0x38] sm:$0xf]
      %v2074 = vld [vmem:[%s2058 + $0x3c] sm:$0xf]
      %vm2075 = vcmask 1045504
      %v2076 = vrot.slane %v605, 2
      %v2077 = vrot.slane %v606, 2
      %v2078 = vsel %vm2075, %v2076, %v2077
      %v2079 = vrot.slane %v607, 2
      %v2080 = vsel %vm2075, %v2077, %v2079
      %v2081 = vrot.slane %v608, 2
      %v2082 = vsel %vm2075, %v2079, %v2081
      %v2083 = vrot.slane %v609, 2
      %v2084 = vsel %vm2075, %v2081, %v2083
      %v2085 = vrot.slane %v610, 2
      %v2086 = vsel %vm2075, %v2083, %v2085
      %v2087 = vrot.slane %v611, 2
      %v2088 = vsel %vm2075, %v2085, %v2087
      %v2089 = vrot.slane %v612, 2
      %v2090 = vsel %vm2075, %v2087, %v2089
      %v2091 = vrot.slane %v613, 2
      %v2092 = vsel %vm2075, %v2089, %v2091
      %v2093 = vrot.slane %v614, 2
      %v2094 = vsel %vm2075, %v2091, %v2093
      %v2095 = vrot.slane %v615, 2
      %v2096 = vsel %vm2075, %v2093, %v2095
      %v2097 = vrot.slane %v616, 2
      %v2098 = vsel %vm2075, %v2095, %v2097
      %v2099 = vrot.slane %v617, 2
      %v2100 = vsel %vm2075, %v2097, %v2099
      %v2101 = vrot.slane %v618, 2
      %v2102 = vsel %vm2075, %v2099, %v2101
      %v2103 = vrot.slane %v619, 2
      %v2104 = vsel %vm2075, %v2101, %v2103
      %v2105 = vrot.slane %v620, 2
      %v2106 = vsel %vm2075, %v2103, %v2105
      %v2107 = vrot.slane %v621, 2
      %v2108 = vsel %vm2075, %v2105, %v2107
      %v2109 = vrot.slane %v622, 2
      %v2110 = vsel %vm2075, %v2107, %v2109
      %v2145 = vunpack.c.l.b16 %v2059
      %v2146 = vunpack.c.l.b16 %v2060
      %v2147 = vunpack.c.l.b16 %v2061
      %v2148 = vunpack.c.l.b16 %v2062
      %v2149 = vunpack.c.l.b16 %v2063
      %v2150 = vunpack.c.l.b16 %v2064
      %v2151 = vunpack.c.l.b16 %v2065
      %v2152 = vunpack.c.l.b16 %v2066
      %v2153 = vunpack.c.l.b16 %v2067
      %v2154 = vunpack.c.l.b16 %v2068
      %v2155 = vunpack.c.l.b16 %v2069
      %v2156 = vunpack.c.l.b16 %v2070
      %v2157 = vunpack.c.l.b16 %v2071
      %v2158 = vunpack.c.l.b16 %v2072
      %v2159 = vunpack.c.l.b16 %v2073
      %v2160 = vunpack.c.l.b16 %v2074
      %v2161 = vpack.c.b16 %v2146, %v2145
      %v2162 = vpack.c.b16 %v2148, %v2147
      %v2163 = vpack.c.b16 %v2150, %v2149
      %v2164 = vpack.c.b16 %v2152, %v2151
      %v2165 = vpack.c.b16 %v2154, %v2153
      %v2166 = vpack.c.b16 %v2156, %v2155
      %v2167 = vpack.c.b16 %v2158, %v2157
      %v2168 = vpack.c.b16 %v2160, %v2159
      %2177 = vmatprep.subr.bf16.mxu0 0
      %2178 = vmatpush1.bf16.msra.mxu0 %v2168
      %2179 = vmatprep.subr.bf16.mxu0 0
      %2180 = vmatpush1.bf16.msra.mxu0 %v2167
      %2181 = vmatprep.subr.bf16.mxu0 0
      %2182 = vmatpush1.bf16.msra.mxu0 %v2166
      %2183 = vmatprep.subr.bf16.mxu0 0
      %2184 = vmatpush1.bf16.msra.mxu0 %v2165
      %2185 = vmatprep.subr.bf16.mxu0 0
      %2186 = vmatpush1.bf16.msra.mxu0 %v2164
      %2187 = vmatprep.subr.bf16.mxu0 0
      %2188 = vmatpush1.bf16.msra.mxu0 %v2163
      %2189 = vmatprep.subr.bf16.mxu0 0
      %2190 = vmatpush1.bf16.msra.mxu0 %v2162
      %2191 = vmatprep.subr.bf16.mxu0 0
      %2192 = vmatpush1.bf16.msra.mxu0 %v2161
      %2193 = vmatprep.subr.bf16.mxu0 0
      %2194 = vmatpush2.bf16.msra.mxu0 0
      %2195 = vmatprep.subr.bf16.mxu0 0
      %2196 = vmatpush2.bf16.msra.mxu0 0
      %2197 = vmatprep.subr.bf16.mxu0 0
      %2198 = vmatpush2.bf16.msra.mxu0 0
      %2199 = vmatprep.subr.bf16.mxu0 0
      %2200 = vmatpush2.bf16.msra.mxu0 0
      %2201 = vmatprep.subr.bf16.mxu0 0
      %2202 = vmatpush2.bf16.msra.mxu0 0
      %2203 = vmatprep.subr.bf16.mxu0 0
      %2204 = vmatpush2.bf16.msra.mxu0 0
      %2205 = vmatprep.subr.bf16.mxu0 0
      %2206 = vmatpush2.bf16.msra.mxu0 0
      %2207 = vmatprep.subr.bf16.mxu0 0
      %2208 = vmatpush2.bf16.msra.mxu0 0
      %2209 = vmatprep.mubr.bf16.mxu0 0
      %2210 = vmatmul.mubr.bf16.gmra.mxu0 %v2078
      %v2211 = vpop.f32.mrf.mxu0
      %v2212 = vadd.f32 0.0, %v2211
      %v2213 = vpop.f32.mrf.mxu0
      %v2214 = vpop.f32.mrf.mxu0
      %v2215 = vadd.f32 0.0, %v2214
      %v2216 = vpop.f32.mrf.mxu0
      %2217 = vmatprep.mubr.bf16.mxu0 0
      %2218 = vmatmul.mubr.bf16.gmra.mxu0 %v2080
      %v2219 = vpop.f32.mrf.mxu0
      %v2220 = vadd.f32 0.0, %v2219
      %v2221 = vpop.f32.mrf.mxu0
      %v2222 = vpop.f32.mrf.mxu0
      %v2223 = vadd.f32 0.0, %v2222
      %v2224 = vpop.f32.mrf.mxu0
      %2225 = vmatprep.mubr.bf16.mxu0 0
      %2226 = vmatmul.mubr.bf16.gmra.mxu0 %v2082
      %v2227 = vpop.f32.mrf.mxu0
      %v2228 = vadd.f32 0.0, %v2227
      %v2229 = vpop.f32.mrf.mxu0
      %v2230 = vpop.f32.mrf.mxu0
      %v2231 = vadd.f32 0.0, %v2230
      %v2232 = vpop.f32.mrf.mxu0
      %2233 = vmatprep.mubr.bf16.mxu0 0
      %2234 = vmatmul.mubr.bf16.gmra.mxu0 %v2084
      %v2235 = vpop.f32.mrf.mxu0
      %v2236 = vadd.f32 0.0, %v2235
      %v2237 = vpop.f32.mrf.mxu0
      %v2238 = vpop.f32.mrf.mxu0
      %v2239 = vadd.f32 0.0, %v2238
      %v2240 = vpop.f32.mrf.mxu0
      %2241 = vmatprep.mubr.bf16.mxu0 0
      %2242 = vmatmul.mubr.bf16.gmra.mxu0 %v2086
      %v2243 = vpop.f32.mrf.mxu0
      %v2244 = vadd.f32 0.0, %v2243
      %v2245 = vpop.f32.mrf.mxu0
      %v2246 = vpop.f32.mrf.mxu0
      %v2247 = vadd.f32 0.0, %v2246
      %v2248 = vpop.f32.mrf.mxu0
      %2249 = vmatprep.mubr.bf16.mxu0 0
      %2250 = vmatmul.mubr.bf16.gmra.mxu0 %v2088
      %v2251 = vpop.f32.mrf.mxu0
      %v2252 = vadd.f32 0.0, %v2251
      %v2253 = vpop.f32.mrf.mxu0
      %v2254 = vpop.f32.mrf.mxu0
      %v2255 = vadd.f32 0.0, %v2254
      %v2256 = vpop.f32.mrf.mxu0
      %2257 = vmatprep.mubr.bf16.mxu0 0
      %2258 = vmatmul.mubr.bf16.gmra.mxu0 %v2090
      %v2259 = vpop.f32.mrf.mxu0
      %v2260 = vadd.f32 0.0, %v2259
      %v2261 = vpop.f32.mrf.mxu0
      %v2262 = vpop.f32.mrf.mxu0
      %v2263 = vadd.f32 0.0, %v2262
      %v2264 = vpop.f32.mrf.mxu0
      %2265 = vmatprep.mubr.bf16.mxu0 0
      %2266 = vmatmul.mubr.bf16.gmra.mxu0 %v2092
      %v2267 = vpop.f32.mrf.mxu0
      %v2268 = vadd.f32 0.0, %v2267
      %v2269 = vpop.f32.mrf.mxu0
      %v2270 = vpop.f32.mrf.mxu0
      %v2271 = vadd.f32 0.0, %v2270
      %v2272 = vpop.f32.mrf.mxu0
      %2273 = vmatprep.mubr.bf16.mxu0 0
      %2274 = vmatmul.mubr.bf16.gmra.mxu0 %v2094
      %v2275 = vpop.f32.mrf.mxu0
      %v2276 = vadd.f32 0.0, %v2275
      %v2277 = vpop.f32.mrf.mxu0
      %v2278 = vpop.f32.mrf.mxu0
      %v2279 = vadd.f32 0.0, %v2278
      %v2280 = vpop.f32.mrf.mxu0
      %2281 = vmatprep.mubr.bf16.mxu0 0
      %2282 = vmatmul.mubr.bf16.gmra.mxu0 %v2096
      %v2283 = vpop.f32.mrf.mxu0
      %v2284 = vadd.f32 0.0, %v2283
      %v2285 = vpop.f32.mrf.mxu0
      %v2286 = vpop.f32.mrf.mxu0
      %v2287 = vadd.f32 0.0, %v2286
      %v2288 = vpop.f32.mrf.mxu0
      %2289 = vmatprep.mubr.bf16.mxu0 0
      %2290 = vmatmul.mubr.bf16.gmra.mxu0 %v2098
      %v2291 = vpop.f32.mrf.mxu0
      %v2292 = vadd.f32 0.0, %v2291
      %v2293 = vpop.f32.mrf.mxu0
      %v2294 = vpop.f32.mrf.mxu0
      %v2295 = vadd.f32 0.0, %v2294
      %v2296 = vpop.f32.mrf.mxu0
      %2297 = vmatprep.mubr.bf16.mxu0 0
      %2298 = vmatmul.mubr.bf16.gmra.mxu0 %v2100
      %v2299 = vpop.f32.mrf.mxu0
      %v2300 = vadd.f32 0.0, %v2299
      %v2301 = vpop.f32.mrf.mxu0
      %v2302 = vpop.f32.mrf.mxu0
      %v2303 = vadd.f32 0.0, %v2302
      %v2304 = vpop.f32.mrf.mxu0
      %2305 = vmatprep.mubr.bf16.mxu0 0
      %2306 = vmatmul.mubr.bf16.gmra.mxu0 %v2102
      %v2307 = vpop.f32.mrf.mxu0
      %v2308 = vadd.f32 0.0, %v2307
      %v2309 = vpop.f32.mrf.mxu0
      %v2310 = vpop.f32.mrf.mxu0
      %v2311 = vadd.f32 0.0, %v2310
      %v2312 = vpop.f32.mrf.mxu0
      %2313 = vmatprep.mubr.bf16.mxu0 0
      %2314 = vmatmul.mubr.bf16.gmra.mxu0 %v2104
      %v2315 = vpop.f32.mrf.mxu0
      %v2316 = vadd.f32 0.0, %v2315
      %v2317 = vpop.f32.mrf.mxu0
      %v2318 = vpop.f32.mrf.mxu0
      %v2319 = vadd.f32 0.0, %v2318
      %v2320 = vpop.f32.mrf.mxu0
      %2321 = vmatprep.mubr.bf16.mxu0 0
      %2322 = vmatmul.mubr.bf16.gmra.mxu0 %v2106
      %v2323 = vpop.f32.mrf.mxu0
      %v2324 = vadd.f32 0.0, %v2323
      %v2325 = vpop.f32.mrf.mxu0
      %v2326 = vpop.f32.mrf.mxu0
      %v2327 = vadd.f32 0.0, %v2326
      %v2328 = vpop.f32.mrf.mxu0
      %2329 = vmatprep.mubr.bf16.mxu0 0
      %2330 = vmatmul.mubr.bf16.gmra.mxu0 %v2108
      %v2331 = vpop.f32.mrf.mxu0
      %v2332 = vadd.f32 0.0, %v2331
      %v2333 = vpop.f32.mrf.mxu0
      %v2334 = vpop.f32.mrf.mxu0
      %v2335 = vadd.f32 0.0, %v2334
      %v2336 = vpop.f32.mrf.mxu0
      %2337 = vmatprep.mubr.bf16.mxu0 0
      %2338 = vmatmul.mubr.bf16.gmra.mxu0 %v2110
      %v2339 = vpop.f32.mrf.mxu0
      %v2340 = vadd.f32 0.0, %v2339
      %v2341 = vpop.f32.mrf.mxu0
      %v2342 = vpop.f32.mrf.mxu0
      %v2343 = vadd.f32 0.0, %v2342
      %v2344 = vpop.f32.mrf.mxu0
      %2345 = vmatprep.mubr.bf16.mxu0 0
      %2346 = vmatmul.mubr.bf16.gmra.mxu0 %v2109
      %v2347 = vpop.f32.mrf.mxu0
      %v2348 = vadd.f32 0.0, %v2347
      %v2349 = vpop.f32.mrf.mxu0
      %v2350 = vpop.f32.mrf.mxu0
      %v2351 = vadd.f32 0.0, %v2350
      %v2352 = vpop.f32.mrf.mxu0
      %2353 = vdwg.mxu0
      %v2354 = vadd.f32 %v2022, %v2212
      %v2355 = vadd.f32 %v2023, %v2215
      %v2356 = vadd.f32 %v2024, %v2220
      %v2357 = vadd.f32 %v2025, %v2223
      %v2358 = vadd.f32 %v2026, %v2228
      %v2359 = vadd.f32 %v2027, %v2231
      %v2360 = vadd.f32 %v2028, %v2236
      %v2361 = vadd.f32 %v2029, %v2239
      %v2362 = vadd.f32 %v2030, %v2244
      %v2363 = vadd.f32 %v2031, %v2247
      %v2364 = vadd.f32 %v2032, %v2252
      %v2365 = vadd.f32 %v2033, %v2255
      %v2366 = vadd.f32 %v2034, %v2260
      %v2367 = vadd.f32 %v2035, %v2263
      %v2368 = vadd.f32 %v2036, %v2268
      %v2369 = vadd.f32 %v2037, %v2271
      %v2370 = vadd.f32 %v2038, %v2276
      %v2371 = vadd.f32 %v2039, %v2279
      %v2372 = vadd.f32 %v2040, %v2284
      %v2373 = vadd.f32 %v2041, %v2287
      %v2374 = vadd.f32 %v2042, %v2292
      %v2375 = vadd.f32 %v2043, %v2295
      %v2376 = vadd.f32 %v2044, %v2300
      %v2377 = vadd.f32 %v2045, %v2303
      %v2378 = vadd.f32 %v2046, %v2308
      %v2379 = vadd.f32 %v2047, %v2311
      %v2380 = vadd.f32 %v2048, %v2316
      %v2381 = vadd.f32 %v2049, %v2319
      %v2382 = vadd.f32 %v2050, %v2324
      %v2383 = vadd.f32 %v2051, %v2327
      %v2384 = vadd.f32 %v2052, %v2332
      %v2385 = vadd.f32 %v2053, %v2335
      %v2386 = vadd.f32 %v2054, %v2340
      %v2387 = vadd.f32 %v2055, %v2343
      %v2388 = vadd.f32 %v2056, %v2348
      %v2389 = vadd.f32 %v2057, %v2351
      %v2390 = vmul.f32 %v2354, 0.01
      %v2391 = vmul.f32 %v2355, 0.01
      %v2392 = vmul.f32 %v2356, 0.01
      %v2393 = vmul.f32 %v2357, 0.01
      %v2394 = vmul.f32 %v2358, 0.01
      %v2395 = vmul.f32 %v2359, 0.01
      %v2396 = vmul.f32 %v2360, 0.01
      %v2397 = vmul.f32 %v2361, 0.01
      %v2398 = vmul.f32 %v2362, 0.01
      %v2399 = vmul.f32 %v2363, 0.01
      %v2400 = vmul.f32 %v2364, 0.01
      %v2401 = vmul.f32 %v2365, 0.01
      %v2402 = vmul.f32 %v2366, 0.01
      %v2403 = vmul.f32 %v2367, 0.01
      %v2404 = vmul.f32 %v2368, 0.01
      %v2405 = vmul.f32 %v2369, 0.01
      %v2406 = vmul.f32 %v2370, 0.01
      %v2407 = vmul.f32 %v2371, 0.01
      %v2408 = vmul.f32 %v2372, 0.01
      %v2409 = vmul.f32 %v2373, 0.01
      %v2410 = vmul.f32 %v2374, 0.01
      %v2411 = vmul.f32 %v2375, 0.01
      %v2412 = vmul.f32 %v2376, 0.01
      %v2413 = vmul.f32 %v2377, 0.01
      %v2414 = vmul.f32 %v2378, 0.01
      %v2415 = vmul.f32 %v2379, 0.01
      %v2416 = vmul.f32 %v2380, 0.01
      %v2417 = vmul.f32 %v2381, 0.01
      %v2418 = vmul.f32 %v2382, 0.01
      %v2419 = vmul.f32 %v2383, 0.01
      %v2420 = vmul.f32 %v2384, 0.01
      %v2421 = vmul.f32 %v2385, 0.01
      %v2422 = vmul.f32 %v2386, 0.01
      %v2423 = vmul.f32 %v2387, 0.01
      %v2424 = vmul.f32 %v2388, 0.01
      %v2425 = vmul.f32 %v2389, 0.01
      %v2426 = vmax.f32 %v2354, %v2390
      %v2427 = vmax.f32 %v2355, %v2391
      %v2428 = vmax.f32 %v2356, %v2392
      %v2429 = vmax.f32 %v2357, %v2393
      %v2430 = vmax.f32 %v2358, %v2394
      %v2431 = vmax.f32 %v2359, %v2395
      %v2432 = vmax.f32 %v2360, %v2396
      %v2433 = vmax.f32 %v2361, %v2397
      %v2434 = vmax.f32 %v2362, %v2398
      %v2435 = vmax.f32 %v2363, %v2399
      %v2436 = vmax.f32 %v2364, %v2400
      %v2437 = vmax.f32 %v2365, %v2401
      %v2438 = vmax.f32 %v2366, %v2402
      %v2439 = vmax.f32 %v2367, %v2403
      %v2440 = vmax.f32 %v2368, %v2404
      %v2441 = vmax.f32 %v2369, %v2405
      %v2442 = vmax.f32 %v2370, %v2406
      %v2443 = vmax.f32 %v2371, %v2407
      %v2444 = vmax.f32 %v2372, %v2408
      %v2445 = vmax.f32 %v2373, %v2409
      %v2446 = vmax.f32 %v2374, %v2410
      %v2447 = vmax.f32 %v2375, %v2411
      %v2448 = vmax.f32 %v2376, %v2412
      %v2449 = vmax.f32 %v2377, %v2413
      %v2450 = vmax.f32 %v2378, %v2414
      %v2451 = vmax.f32 %v2379, %v2415
      %v2452 = vmax.f32 %v2380, %v2416
      %v2453 = vmax.f32 %v2381, %v2417
      %v2454 = vmax.f32 %v2382, %v2418
      %v2455 = vmax.f32 %v2383, %v2419
      %v2456 = vmax.f32 %v2384, %v2420
      %v2457 = vmax.f32 %v2385, %v2421
      %v2458 = vmax.f32 %v2386, %v2422
      %v2459 = vmax.f32 %v2387, %v2423
      %v2460 = vmax.f32 %v2388, %v2424
      %v2461 = vmax.f32 %v2389, %v2425
      %v2462 = vld [vmem:[%s4] sm:$0x1]
      %v2464 = vlaneseq
      %v2465 = vshrl.u32 %v2464, 7
      %v2466 = vsub.s32 0, %v2465
      %v2467 = vrot.slane %v2462, %v2466
      %v2469 = vpack.c.bf16 %v2427, %v2426
      %v2470 = vpack.c.bf16 %v2429, %v2428
      %v2471 = vpack.c.bf16 %v2431, %v2430
      %v2472 = vpack.c.bf16 %v2433, %v2432
      %v2473 = vpack.c.bf16 %v2435, %v2434
      %v2474 = vpack.c.bf16 %v2437, %v2436
      %v2475 = vpack.c.bf16 %v2439, %v2438
      %v2476 = vpack.c.bf16 %v2441, %v2440
      %v2477 = vpack.c.bf16 %v2443, %v2442
      %v2478 = vpack.c.bf16 %v2445, %v2444
      %v2479 = vpack.c.bf16 %v2447, %v2446
      %v2480 = vpack.c.bf16 %v2449, %v2448
      %v2481 = vpack.c.bf16 %v2451, %v2450
      %v2482 = vpack.c.bf16 %v2453, %v2452
      %v2483 = vpack.c.bf16 %v2455, %v2454
      %v2484 = vpack.c.bf16 %v2457, %v2456
      %v2485 = vpack.c.bf16 %v2459, %v2458
      %v2486 = vpack.c.bf16 %v2460, %v2460
      %v2487 = vld [vmem:[%s3] sm:$0xf]
      %v2488 = vld [vmem:[%s3 + $0x4] sm:$0xf]
      %v2489 = vld [vmem:[%s3 + $0x8] sm:$0xf]
      %v2490 = vld [vmem:[%s3 + $0xc] sm:$0xf]
      %v2491 = vld [vmem:[%s3 + $0x10] sm:$0xf]
      %v2492 = vld [vmem:[%s3 + $0x14] sm:$0xf]
      %v2493 = vld [vmem:[%s3 + $0x18] sm:$0xf]
      %v2494 = vld [vmem:[%s3 + $0x1c] sm:$0xf]
      %v2495 = vld [vmem:[%s3 + $0x20] sm:$0xf]
      %v2496 = vld [vmem:[%s3 + $0x24] sm:$0xf]
      %v2497 = vld [vmem:[%s3 + $0x28] sm:$0xf]
      %v2498 = vld [vmem:[%s3 + $0x2c] sm:$0xf]
      %v2499 = vld [vmem:[%s3 + $0x30] sm:$0xf]
      %v2500 = vld [vmem:[%s3 + $0x34] sm:$0xf]
      %v2501 = vld [vmem:[%s3 + $0x38] sm:$0xf]
      %v2502 = vld [vmem:[%s3 + $0x3c] sm:$0xf]
      %v2519 = vunpack.c.l.b16 %v2487
      %v2520 = vunpack.c.l.b16 %v2488
      %v2521 = vunpack.c.l.b16 %v2489
      %v2522 = vunpack.c.l.b16 %v2490
      %v2523 = vunpack.c.l.b16 %v2491
      %v2524 = vunpack.c.l.b16 %v2492
      %v2525 = vunpack.c.l.b16 %v2493
      %v2526 = vunpack.c.l.b16 %v2494
      %v2527 = vunpack.c.l.b16 %v2495
      %v2528 = vunpack.c.l.b16 %v2496
      %v2529 = vunpack.c.l.b16 %v2497
      %v2530 = vunpack.c.l.b16 %v2498
      %v2531 = vunpack.c.l.b16 %v2499
      %v2532 = vunpack.c.l.b16 %v2500
      %v2533 = vunpack.c.l.b16 %v2501
      %v2534 = vunpack.c.l.b16 %v2502
      %v2535 = vpack.c.b16 %v2520, %v2519
      %v2536 = vpack.c.b16 %v2522, %v2521
      %v2537 = vpack.c.b16 %v2524, %v2523
      %v2538 = vpack.c.b16 %v2526, %v2525
      %v2539 = vpack.c.b16 %v2528, %v2527
      %v2540 = vpack.c.b16 %v2530, %v2529
      %v2541 = vpack.c.b16 %v2532, %v2531
      %v2542 = vpack.c.b16 %v2534, %v2533
      %2551 = vmatprep.subr.bf16.mxu0 0
      %2552 = vmatpush1.bf16.msra.mxu0 %v2542
      %2553 = vmatprep.subr.bf16.mxu0 0
      %2554 = vmatpush1.bf16.msra.mxu0 %v2541
      %2555 = vmatprep.subr.bf16.mxu0 0
      %2556 = vmatpush1.bf16.msra.mxu0 %v2540
      %2557 = vmatprep.subr.bf16.mxu0 0
      %2558 = vmatpush1.bf16.msra.mxu0 %v2539
      %2559 = vmatprep.subr.bf16.mxu0 0
      %2560 = vmatpush1.bf16.msra.mxu0 %v2538
      %2561 = vmatprep.subr.bf16.mxu0 0
      %2562 = vmatpush1.bf16.msra.mxu0 %v2537
      %2563 = vmatprep.subr.bf16.mxu0 0
      %2564 = vmatpush1.bf16.msra.mxu0 %v2536
      %2565 = vmatprep.subr.bf16.mxu0 0
      %2566 = vmatpush1.bf16.msra.mxu0 %v2535
      %2567 = vmatprep.subr.bf16.mxu0 0
      %2568 = vmatpush2.bf16.msra.mxu0 0
      %2569 = vmatprep.subr.bf16.mxu0 0
      %2570 = vmatpush2.bf16.msra.mxu0 0
      %2571 = vmatprep.subr.bf16.mxu0 0
      %2572 = vmatpush2.bf16.msra.mxu0 0
      %2573 = vmatprep.subr.bf16.mxu0 0
      %2574 = vmatpush2.bf16.msra.mxu0 0
      %2575 = vmatprep.subr.bf16.mxu0 0
      %2576 = vmatpush2.bf16.msra.mxu0 0
      %2577 = vmatprep.subr.bf16.mxu0 0
      %2578 = vmatpush2.bf16.msra.mxu0 0
      %2579 = vmatprep.subr.bf16.mxu0 0
      %2580 = vmatpush2.bf16.msra.mxu0 0
      %2581 = vmatprep.subr.bf16.mxu0 0
      %2582 = vmatpush2.bf16.msra.mxu0 0
      %2583 = vmatprep.mubr.bf16.mxu0 0
      %2584 = vmatmul.mubr.bf16.gmra.mxu0 %v2469
      %v2585 = vpop.f32.mrf.mxu0
      %v2586 = vadd.f32 0.0, %v2585
      %v2587 = vpop.f32.mrf.mxu0
      %v2588 = vpop.f32.mrf.mxu0
      %v2589 = vadd.f32 0.0, %v2588
      %v2590 = vpop.f32.mrf.mxu0
      %2591 = vmatprep.mubr.bf16.mxu0 0
      %2592 = vmatmul.mubr.bf16.gmra.mxu0 %v2470
      %v2593 = vpop.f32.mrf.mxu0
      %v2594 = vadd.f32 0.0, %v2593
      %v2595 = vpop.f32.mrf.mxu0
      %v2596 = vpop.f32.mrf.mxu0
      %v2597 = vadd.f32 0.0, %v2596
      %v2598 = vpop.f32.mrf.mxu0
      %2599 = vmatprep.mubr.bf16.mxu0 0
      %2600 = vmatmul.mubr.bf16.gmra.mxu0 %v2471
      %v2601 = vpop.f32.mrf.mxu0
      %v2602 = vadd.f32 0.0, %v2601
      %v2603 = vpop.f32.mrf.mxu0
      %v2604 = vpop.f32.mrf.mxu0
      %v2605 = vadd.f32 0.0, %v2604
      %v2606 = vpop.f32.mrf.mxu0
      %2607 = vmatprep.mubr.bf16.mxu0 0
      %2608 = vmatmul.mubr.bf16.gmra.mxu0 %v2472
      %v2609 = vpop.f32.mrf.mxu0
      %v2610 = vadd.f32 0.0, %v2609
      %v2611 = vpop.f32.mrf.mxu0
      %v2612 = vpop.f32.mrf.mxu0
      %v2613 = vadd.f32 0.0, %v2612
      %v2614 = vpop.f32.mrf.mxu0
      %2615 = vmatprep.mubr.bf16.mxu0 0
      %2616 = vmatmul.mubr.bf16.gmra.mxu0 %v2473
      %v2617 = vpop.f32.mrf.mxu0
      %v2618 = vpop.f32.mrf.mxu0
      %v2619 = vpop.f32.mrf.mxu0
      %v2620 = vadd.f32 0.0, %v2619
      %v2621 = vpop.f32.mrf.mxu0
      %2622 = vmatprep.mubr.bf16.mxu0 0
      %2623 = vmatmul.mubr.bf16.gmra.mxu0 %v2474
      %v2624 = vpop.f32.mrf.mxu0
      %v2625 = vadd.f32 0.0, %v2624
      %v2626 = vpop.f32.mrf.mxu0
      %v2627 = vpop.f32.mrf.mxu0
      %v2628 = vadd.f32 0.0, %v2627
      %v2629 = vpop.f32.mrf.mxu0
      %2630 = vmatprep.mubr.bf16.mxu0 0
      %2631 = vmatmul.mubr.bf16.gmra.mxu0 %v2475
      %v2632 = vpop.f32.mrf.mxu0
      %v2633 = vadd.f32 0.0, %v2632
      %v2634 = vpop.f32.mrf.mxu0
      %v2635 = vpop.f32.mrf.mxu0
      %v2636 = vadd.f32 0.0, %v2635
      %v2637 = vpop.f32.mrf.mxu0
      %2638 = vmatprep.mubr.bf16.mxu0 0
      %2639 = vmatmul.mubr.bf16.gmra.mxu0 %v2476
      %v2640 = vpop.f32.mrf.mxu0
      %v2641 = vadd.f32 0.0, %v2640
      %v2642 = vpop.f32.mrf.mxu0
      %v2643 = vpop.f32.mrf.mxu0
      %v2644 = vadd.f32 0.0, %v2643
      %v2645 = vpop.f32.mrf.mxu0
      %2646 = vmatprep.mubr.bf16.mxu0 0
      %2647 = vmatmul.mubr.bf16.gmra.mxu0 %v2477
      %v2648 = vpop.f32.mrf.mxu0
      %v2649 = vadd.f32 0.0, %v2648
      %v2650 = vpop.f32.mrf.mxu0
      %v2651 = vpop.f32.mrf.mxu0
      %v2652 = vpop.f32.mrf.mxu0
      %2653 = vmatprep.mubr.bf16.mxu0 0
      %2654 = vmatmul.mubr.bf16.gmra.mxu0 %v2478
      %v2655 = vpop.f32.mrf.mxu0
      %v2656 = vadd.f32 0.0, %v2655
      %v2657 = vpop.f32.mrf.mxu0
      %v2658 = vpop.f32.mrf.mxu0
      %v2659 = vadd.f32 0.0, %v2658
      %v2660 = vpop.f32.mrf.mxu0
      %2661 = vmatprep.mubr.bf16.mxu0 0
      %2662 = vmatmul.mubr.bf16.gmra.mxu0 %v2479
      %v2663 = vpop.f32.mrf.mxu0
      %v2664 = vadd.f32 0.0, %v2663
      %v2665 = vpop.f32.mrf.mxu0
      %v2666 = vpop.f32.mrf.mxu0
      %v2667 = vadd.f32 0.0, %v2666
      %v2668 = vpop.f32.mrf.mxu0
      %2669 = vmatprep.mubr.bf16.mxu0 0
      %2670 = vmatmul.mubr.bf16.gmra.mxu0 %v2480
      %v2671 = vpop.f32.mrf.mxu0
      %v2672 = vadd.f32 0.0, %v2671
      %v2673 = vpop.f32.mrf.mxu0
      %v2674 = vpop.f32.mrf.mxu0
      %v2675 = vadd.f32 0.0, %v2674
      %v2676 = vpop.f32.mrf.mxu0
      %2677 = vmatprep.mubr.bf16.mxu0 0
      %2678 = vmatmul.mubr.bf16.gmra.mxu0 %v2481
      %v2679 = vpop.f32.mrf.mxu0
      %v2680 = vadd.f32 0.0, %v2679
      %v2681 = vpop.f32.mrf.mxu0
      %v2682 = vpop.f32.mrf.mxu0
      %v2683 = vadd.f32 0.0, %v2682
      %v2684 = vpop.f32.mrf.mxu0
      %2685 = vmatprep.mubr.bf16.mxu0 0
      %2686 = vmatmul.mubr.bf16.gmra.mxu0 %v2482
      %v2687 = vpop.f32.mrf.mxu0
      %v2688 = vpop.f32.mrf.mxu0
      %v2689 = vpop.f32.mrf.mxu0
      %v2690 = vadd.f32 0.0, %v2689
      %v2691 = vpop.f32.mrf.mxu0
      %2692 = vmatprep.mubr.bf16.mxu0 0
      %2693 = vmatmul.mubr.bf16.gmra.mxu0 %v2483
      %v2694 = vpop.f32.mrf.mxu0
      %v2695 = vadd.f32 0.0, %v2694
      %v2696 = vpop.f32.mrf.mxu0
      %v2697 = vpop.f32.mrf.mxu0
      %v2698 = vadd.f32 0.0, %v2697
      %v2699 = vpop.f32.mrf.mxu0
      %2700 = vmatprep.mubr.bf16.mxu0 0
      %2701 = vmatmul.mubr.bf16.gmra.mxu0 %v2484
      %v2702 = vpop.f32.mrf.mxu0
      %v2703 = vadd.f32 0.0, %v2702
      %v2704 = vpop.f32.mrf.mxu0
      %v2705 = vpop.f32.mrf.mxu0
      %v2706 = vadd.f32 0.0, %v2705
      %v2707 = vpop.f32.mrf.mxu0
      %2708 = vmatprep.mubr.bf16.mxu0 0
      %2709 = vmatmul.mubr.bf16.gmra.mxu0 %v2485
      %v2710 = vpop.f32.mrf.mxu0
      %v2711 = vadd.f32 0.0, %v2710
      %v2712 = vpop.f32.mrf.mxu0
      %v2713 = vpop.f32.mrf.mxu0
      %v2714 = vadd.f32 0.0, %v2713
      %v2715 = vpop.f32.mrf.mxu0
      %2716 = vmatprep.mubr.bf16.mxu0 0
      %2717 = vmatmul.mubr.bf16.gmra.mxu0 %v2486
      %v2718 = vpop.f32.mrf.mxu0
      %v2719 = vadd.f32 0.0, %v2718
      %v2720 = vpop.f32.mrf.mxu0
      %v2721 = vpop.f32.mrf.mxu0
      %v2722 = vpop.f32.mrf.mxu0
      %2723 = vdwg.mxu0
      %v2724 = vadd.f32 %v2467, %v2586
      %v2725 = vadd.f32 %v2467, %v2589
      %v2726 = vadd.f32 %v2467, %v2594
      %v2727 = vadd.f32 %v2467, %v2597
      %v2728 = vadd.f32 %v2467, %v2602
      %v2729 = vadd.f32 %v2467, %v2605
      %v2730 = vadd.f32 %v2467, %v2610
      %v2731 = vadd.f32 %v2467, %v2613
      %v2732 = vadd.f32 %v2467, %v2620
      %v2733 = vadd.f32 %v2467, %v2625
      %v2734 = vadd.f32 %v2467, %v2628
      %v2735 = vadd.f32 %v2467, %v2633
      %v2736 = vadd.f32 %v2467, %v2636
      %v2737 = vadd.f32 %v2467, %v2641
      %v2738 = vadd.f32 %v2467, %v2644
      %v2739 = vadd.f32 %v2467, %v2649
      %v2740 = vadd.f32 %v2467, %v2656
      %v2741 = vadd.f32 %v2467, %v2659
      %v2742 = vadd.f32 %v2467, %v2664
      %v2743 = vadd.f32 %v2467, %v2667
      %v2744 = vadd.f32 %v2467, %v2672
      %v2745 = vadd.f32 %v2467, %v2675
      %v2746 = vadd.f32 %v2467, %v2680
      %v2747 = vadd.f32 %v2467, %v2683
      %v2748 = vadd.f32 %v2467, %v2690
      %v2749 = vadd.f32 %v2467, %v2695
      %v2750 = vadd.f32 %v2467, %v2698
      %v2751 = vadd.f32 %v2467, %v2703
      %v2752 = vadd.f32 %v2467, %v2706
      %v2753 = vadd.f32 %v2467, %v2711
      %v2754 = vadd.f32 %v2467, %v2714
      %v2755 = vadd.f32 %v2467, %v2719
      %v2756 = vpack.c.bf16 %v2461, %v2460
      %s2757 = scalar_lea.vmem %s3, 64
      %v2758 = vld [vmem:[%s2757] sm:$0xf]
      %v2759 = vld [vmem:[%s2757 + $0x4] sm:$0xf]
      %v2760 = vld [vmem:[%s2757 + $0x8] sm:$0xf]
      %v2761 = vld [vmem:[%s2757 + $0xc] sm:$0xf]
      %v2762 = vld [vmem:[%s2757 + $0x10] sm:$0xf]
      %v2763 = vld [vmem:[%s2757 + $0x14] sm:$0xf]
      %v2764 = vld [vmem:[%s2757 + $0x18] sm:$0xf]
      %v2765 = vld [vmem:[%s2757 + $0x1c] sm:$0xf]
      %v2766 = vld [vmem:[%s2757 + $0x20] sm:$0xf]
      %v2767 = vld [vmem:[%s2757 + $0x24] sm:$0xf]
      %v2768 = vld [vmem:[%s2757 + $0x28] sm:$0xf]
      %v2769 = vld [vmem:[%s2757 + $0x2c] sm:$0xf]
      %v2770 = vld [vmem:[%s2757 + $0x30] sm:$0xf]
      %v2771 = vld [vmem:[%s2757 + $0x34] sm:$0xf]
      %v2772 = vld [vmem:[%s2757 + $0x38] sm:$0xf]
      %v2773 = vld [vmem:[%s2757 + $0x3c] sm:$0xf]
      %v2775 = vshrl.u32 %v2469, 16
      %v2777 = vshll.u32 %v2469, 16
      %v2779 = vrot.slane %v2777, 1
      %v2780 = vor.u32 %v2775, %v2779
      %v2782 = vshll.u32 %v2470, 16
      %v2784 = vrot.slane %v2782, 1
      %v2785 = vsel %vm917, %v2780, %v2784
      %v2786 = vshrl.u32 %v2470, 16
      %v2788 = vor.u32 %v2786, %v2784
      %v2790 = vshll.u32 %v2471, 16
      %v2792 = vrot.slane %v2790, 1
      %v2793 = vsel %vm917, %v2788, %v2792
      %v2794 = vshrl.u32 %v2471, 16
      %v2796 = vor.u32 %v2794, %v2792
      %v2798 = vshll.u32 %v2472, 16
      %v2800 = vrot.slane %v2798, 1
      %v2801 = vsel %vm917, %v2796, %v2800
      %v2802 = vshrl.u32 %v2472, 16
      %v2804 = vor.u32 %v2802, %v2800
      %v2806 = vshll.u32 %v2473, 16
      %v2808 = vrot.slane %v2806, 1
      %v2809 = vsel %vm917, %v2804, %v2808
      %v2810 = vshrl.u32 %v2473, 16
      %v2812 = vor.u32 %v2810, %v2808
      %v2814 = vshll.u32 %v2474, 16
      %v2816 = vrot.slane %v2814, 1
      %v2817 = vsel %vm917, %v2812, %v2816
      %v2818 = vshrl.u32 %v2474, 16
      %v2820 = vor.u32 %v2818, %v2816
      %v2822 = vshll.u32 %v2475, 16
      %v2824 = vrot.slane %v2822, 1
      %v2825 = vsel %vm917, %v2820, %v2824
      %v2826 = vshrl.u32 %v2475, 16
      %v2828 = vor.u32 %v2826, %v2824
      %v2830 = vshll.u32 %v2476, 16
      %v2832 = vrot.slane %v2830, 1
      %v2833 = vsel %vm917, %v2828, %v2832
      %v2834 = vshrl.u32 %v2476, 16
      %v2836 = vor.u32 %v2834, %v2832
      %v2838 = vshll.u32 %v2477, 16
      %v2840 = vrot.slane %v2838, 1
      %v2841 = vsel %vm917, %v2836, %v2840
      %v2842 = vshrl.u32 %v2477, 16
      %v2844 = vor.u32 %v2842, %v2840
      %v2846 = vshll.u32 %v2478, 16
      %v2848 = vrot.slane %v2846, 1
      %v2849 = vsel %vm917, %v2844, %v2848
      %v2850 = vshrl.u32 %v2478, 16
      %v2852 = vor.u32 %v2850, %v2848
      %v2854 = vshll.u32 %v2479, 16
      %v2856 = vrot.slane %v2854, 1
      %v2857 = vsel %vm917, %v2852, %v2856
      %v2858 = vshrl.u32 %v2479, 16
      %v2860 = vor.u32 %v2858, %v2856
      %v2862 = vshll.u32 %v2480, 16
      %v2864 = vrot.slane %v2862, 1
      %v2865 = vsel %vm917, %v2860, %v2864
      %v2866 = vshrl.u32 %v2480, 16
      %v2868 = vor.u32 %v2866, %v2864
      %v2870 = vshll.u32 %v2481, 16
      %v2872 = vrot.slane %v2870, 1
      %v2873 = vsel %vm917, %v2868, %v2872
      %v2874 = vshrl.u32 %v2481, 16
      %v2876 = vor.u32 %v2874, %v2872
      %v2878 = vshll.u32 %v2482, 16
      %v2880 = vrot.slane %v2878, 1
      %v2881 = vsel %vm917, %v2876, %v2880
      %v2882 = vshrl.u32 %v2482, 16
      %v2884 = vor.u32 %v2882, %v2880
      %v2886 = vshll.u32 %v2483, 16
      %v2888 = vrot.slane %v2886, 1
      %v2889 = vsel %vm917, %v2884, %v2888
      %v2890 = vshrl.u32 %v2483, 16
      %v2892 = vor.u32 %v2890, %v2888
      %v2894 = vshll.u32 %v2484, 16
      %v2896 = vrot.slane %v2894, 1
      %v2897 = vsel %vm917, %v2892, %v2896
      %v2898 = vshrl.u32 %v2484, 16
      %v2900 = vor.u32 %v2898, %v2896
      %v2902 = vshll.u32 %v2485, 16
      %v2904 = vrot.slane %v2902, 1
      %v2905 = vsel %vm917, %v2900, %v2904
      %v2906 = vshrl.u32 %v2485, 16
      %v2908 = vor.u32 %v2906, %v2904
      %v2910 = vshll.u32 %v2756, 16
      %v2912 = vrot.slane %v2910, 1
      %v2913 = vsel %vm917, %v2908, %v2912
      %v2914 = vshrl.u32 %v2756, 16
      %v2916 = vor.u32 %v2914, %v2912
      %v2951 = vunpack.c.l.b16 %v2758
      %v2952 = vunpack.c.l.b16 %v2759
      %v2953 = vunpack.c.l.b16 %v2760
      %v2954 = vunpack.c.l.b16 %v2761
      %v2955 = vunpack.c.l.b16 %v2762
      %v2956 = vunpack.c.l.b16 %v2763
      %v2957 = vunpack.c.l.b16 %v2764
      %v2958 = vunpack.c.l.b16 %v2765
      %v2959 = vunpack.c.l.b16 %v2766
      %v2960 = vunpack.c.l.b16 %v2767
      %v2961 = vunpack.c.l.b16 %v2768
      %v2962 = vunpack.c.l.b16 %v2769
      %v2963 = vunpack.c.l.b16 %v2770
      %v2964 = vunpack.c.l.b16 %v2771
      %v2965 = vunpack.c.l.b16 %v2772
      %v2966 = vunpack.c.l.b16 %v2773
      %v2967 = vpack.c.b16 %v2952, %v2951
      %v2968 = vpack.c.b16 %v2954, %v2953
      %v2969 = vpack.c.b16 %v2956, %v2955
      %v2970 = vpack.c.b16 %v2958, %v2957
      %v2971 = vpack.c.b16 %v2960, %v2959
      %v2972 = vpack.c.b16 %v2962, %v2961
      %v2973 = vpack.c.b16 %v2964, %v2963
      %v2974 = vpack.c.b16 %v2966, %v2965
      %2983 = vmatprep.subr.bf16.mxu0 0
      %2984 = vmatpush1.bf16.msra.mxu0 %v2974
      %2985 = vmatprep.subr.bf16.mxu0 0
      %2986 = vmatpush1.bf16.msra.mxu0 %v2973
      %2987 = vmatprep.subr.bf16.mxu0 0
      %2988 = vmatpush1.bf16.msra.mxu0 %v2972
      %2989 = vmatprep.subr.bf16.mxu0 0
      %2990 = vmatpush1.bf16.msra.mxu0 %v2971
      %2991 = vmatprep.subr.bf16.mxu0 0
      %2992 = vmatpush1.bf16.msra.mxu0 %v2970
      %2993 = vmatprep.subr.bf16.mxu0 0
      %2994 = vmatpush1.bf16.msra.mxu0 %v2969
      %2995 = vmatprep.subr.bf16.mxu0 0
      %2996 = vmatpush1.bf16.msra.mxu0 %v2968
      %2997 = vmatprep.subr.bf16.mxu0 0
      %2998 = vmatpush1.bf16.msra.mxu0 %v2967
      %2999 = vmatprep.subr.bf16.mxu0 0
      %3000 = vmatpush2.bf16.msra.mxu0 0
      %3001 = vmatprep.subr.bf16.mxu0 0
      %3002 = vmatpush2.bf16.msra.mxu0 0
      %3003 = vmatprep.subr.bf16.mxu0 0
      %3004 = vmatpush2.bf16.msra.mxu0 0
      %3005 = vmatprep.subr.bf16.mxu0 0
      %3006 = vmatpush2.bf16.msra.mxu0 0
      %3007 = vmatprep.subr.bf16.mxu0 0
      %3008 = vmatpush2.bf16.msra.mxu0 0
      %3009 = vmatprep.subr.bf16.mxu0 0
      %3010 = vmatpush2.bf16.msra.mxu0 0
      %3011 = vmatprep.subr.bf16.mxu0 0
      %3012 = vmatpush2.bf16.msra.mxu0 0
      %3013 = vmatprep.subr.bf16.mxu0 0
      %3014 = vmatpush2.bf16.msra.mxu0 0
      %3015 = vmatprep.mubr.bf16.mxu0 0
      %3016 = vmatmul.mubr.bf16.gmra.mxu0 %v2785
      %v3017 = vpop.f32.mrf.mxu0
      %v3018 = vadd.f32 0.0, %v3017
      %v3019 = vpop.f32.mrf.mxu0
      %v3020 = vpop.f32.mrf.mxu0
      %v3021 = vadd.f32 0.0, %v3020
      %v3022 = vpop.f32.mrf.mxu0
      %3023 = vmatprep.mubr.bf16.mxu0 0
      %3024 = vmatmul.mubr.bf16.gmra.mxu0 %v2793
      %v3025 = vpop.f32.mrf.mxu0
      %v3026 = vadd.f32 0.0, %v3025
      %v3027 = vpop.f32.mrf.mxu0
      %v3028 = vpop.f32.mrf.mxu0
      %v3029 = vadd.f32 0.0, %v3028
      %v3030 = vpop.f32.mrf.mxu0
      %3031 = vmatprep.mubr.bf16.mxu0 0
      %3032 = vmatmul.mubr.bf16.gmra.mxu0 %v2801
      %v3033 = vpop.f32.mrf.mxu0
      %v3034 = vadd.f32 0.0, %v3033
      %v3035 = vpop.f32.mrf.mxu0
      %v3036 = vpop.f32.mrf.mxu0
      %v3037 = vadd.f32 0.0, %v3036
      %v3038 = vpop.f32.mrf.mxu0
      %3039 = vmatprep.mubr.bf16.mxu0 0
      %3040 = vmatmul.mubr.bf16.gmra.mxu0 %v2809
      %v3041 = vpop.f32.mrf.mxu0
      %v3042 = vadd.f32 0.0, %v3041
      %v3043 = vpop.f32.mrf.mxu0
      %v3044 = vpop.f32.mrf.mxu0
      %v3045 = vadd.f32 0.0, %v3044
      %v3046 = vpop.f32.mrf.mxu0
      %3047 = vmatprep.mubr.bf16.mxu0 0
      %3048 = vmatmul.mubr.bf16.gmra.mxu0 %v2817
      %v3049 = vpop.f32.mrf.mxu0
      %v3050 = vpop.f32.mrf.mxu0
      %v3051 = vpop.f32.mrf.mxu0
      %v3052 = vadd.f32 0.0, %v3051
      %v3053 = vpop.f32.mrf.mxu0
      %3054 = vmatprep.mubr.bf16.mxu0 0
      %3055 = vmatmul.mubr.bf16.gmra.mxu0 %v2825
      %v3056 = vpop.f32.mrf.mxu0
      %v3057 = vadd.f32 0.0, %v3056
      %v3058 = vpop.f32.mrf.mxu0
      %v3059 = vpop.f32.mrf.mxu0
      %v3060 = vadd.f32 0.0, %v3059
      %v3061 = vpop.f32.mrf.mxu0
      %3062 = vmatprep.mubr.bf16.mxu0 0
      %3063 = vmatmul.mubr.bf16.gmra.mxu0 %v2833
      %v3064 = vpop.f32.mrf.mxu0
      %v3065 = vadd.f32 0.0, %v3064
      %v3066 = vpop.f32.mrf.mxu0
      %v3067 = vpop.f32.mrf.mxu0
      %v3068 = vadd.f32 0.0, %v3067
      %v3069 = vpop.f32.mrf.mxu0
      %3070 = vmatprep.mubr.bf16.mxu0 0
      %3071 = vmatmul.mubr.bf16.gmra.mxu0 %v2841
      %v3072 = vpop.f32.mrf.mxu0
      %v3073 = vadd.f32 0.0, %v3072
      %v3074 = vpop.f32.mrf.mxu0
      %v3075 = vpop.f32.mrf.mxu0
      %v3076 = vadd.f32 0.0, %v3075
      %v3077 = vpop.f32.mrf.mxu0
      %3078 = vmatprep.mubr.bf16.mxu0 0
      %3079 = vmatmul.mubr.bf16.gmra.mxu0 %v2849
      %v3080 = vpop.f32.mrf.mxu0
      %v3081 = vadd.f32 0.0, %v3080
      %v3082 = vpop.f32.mrf.mxu0
      %v3083 = vpop.f32.mrf.mxu0
      %v3084 = vpop.f32.mrf.mxu0
      %3085 = vmatprep.mubr.bf16.mxu0 0
      %3086 = vmatmul.mubr.bf16.gmra.mxu0 %v2857
      %v3087 = vpop.f32.mrf.mxu0
      %v3088 = vadd.f32 0.0, %v3087
      %v3089 = vpop.f32.mrf.mxu0
      %v3090 = vpop.f32.mrf.mxu0
      %v3091 = vadd.f32 0.0, %v3090
      %v3092 = vpop.f32.mrf.mxu0
      %3093 = vmatprep.mubr.bf16.mxu0 0
      %3094 = vmatmul.mubr.bf16.gmra.mxu0 %v2865
      %v3095 = vpop.f32.mrf.mxu0
      %v3096 = vadd.f32 0.0, %v3095
      %v3097 = vpop.f32.mrf.mxu0
      %v3098 = vpop.f32.mrf.mxu0
      %v3099 = vadd.f32 0.0, %v3098
      %v3100 = vpop.f32.mrf.mxu0
      %3101 = vmatprep.mubr.bf16.mxu0 0
      %3102 = vmatmul.mubr.bf16.gmra.mxu0 %v2873
      %v3103 = vpop.f32.mrf.mxu0
      %v3104 = vadd.f32 0.0, %v3103
      %v3105 = vpop.f32.mrf.mxu0
      %v3106 = vpop.f32.mrf.mxu0
      %v3107 = vadd.f32 0.0, %v3106
      %v3108 = vpop.f32.mrf.mxu0
      %3109 = vmatprep.mubr.bf16.mxu0 0
      %3110 = vmatmul.mubr.bf16.gmra.mxu0 %v2881
      %v3111 = vpop.f32.mrf.mxu0
      %v3112 = vadd.f32 0.0, %v3111
      %v3113 = vpop.f32.mrf.mxu0
      %v3114 = vpop.f32.mrf.mxu0
      %v3115 = vadd.f32 0.0, %v3114
      %v3116 = vpop.f32.mrf.mxu0
      %3117 = vmatprep.mubr.bf16.mxu0 0
      %3118 = vmatmul.mubr.bf16.gmra.mxu0 %v2889
      %v3119 = vpop.f32.mrf.mxu0
      %v3120 = vpop.f32.mrf.mxu0
      %v3121 = vpop.f32.mrf.mxu0
      %v3122 = vadd.f32 0.0, %v3121
      %v3123 = vpop.f32.mrf.mxu0
      %3124 = vmatprep.mubr.bf16.mxu0 0
      %3125 = vmatmul.mubr.bf16.gmra.mxu0 %v2897
      %v3126 = vpop.f32.mrf.mxu0
      %v3127 = vadd.f32 0.0, %v3126
      %v3128 = vpop.f32.mrf.mxu0
      %v3129 = vpop.f32.mrf.mxu0
      %v3130 = vadd.f32 0.0, %v3129
      %v3131 = vpop.f32.mrf.mxu0
      %3132 = vmatprep.mubr.bf16.mxu0 0
      %3133 = vmatmul.mubr.bf16.gmra.mxu0 %v2905
      %v3134 = vpop.f32.mrf.mxu0
      %v3135 = vadd.f32 0.0, %v3134
      %v3136 = vpop.f32.mrf.mxu0
      %v3137 = vpop.f32.mrf.mxu0
      %v3138 = vadd.f32 0.0, %v3137
      %v3139 = vpop.f32.mrf.mxu0
      %3140 = vmatprep.mubr.bf16.mxu0 0
      %3141 = vmatmul.mubr.bf16.gmra.mxu0 %v2913
      %v3142 = vpop.f32.mrf.mxu0
      %v3143 = vadd.f32 0.0, %v3142
      %v3144 = vpop.f32.mrf.mxu0
      %v3145 = vpop.f32.mrf.mxu0
      %v3146 = vadd.f32 0.0, %v3145
      %v3147 = vpop.f32.mrf.mxu0
      %3148 = vmatprep.mubr.bf16.mxu0 0
      %3149 = vmatmul.mubr.bf16.gmra.mxu0 %v2916
      %v3150 = vpop.f32.mrf.mxu0
      %v3151 = vadd.f32 0.0, %v3150
      %v3152 = vpop.f32.mrf.mxu0
      %v3153 = vpop.f32.mrf.mxu0
      %v3154 = vpop.f32.mrf.mxu0
      %3155 = vdwg.mxu0
      %v3156 = vadd.f32 %v2724, %v3018
      %v3157 = vadd.f32 %v2725, %v3021
      %v3158 = vadd.f32 %v2726, %v3026
      %v3159 = vadd.f32 %v2727, %v3029
      %v3160 = vadd.f32 %v2728, %v3034
      %v3161 = vadd.f32 %v2729, %v3037
      %v3162 = vadd.f32 %v2730, %v3042
      %v3163 = vadd.f32 %v2731, %v3045
      %v3164 = vadd.f32 %v2732, %v3052
      %v3165 = vadd.f32 %v2733, %v3057
      %v3166 = vadd.f32 %v2734, %v3060
      %v3167 = vadd.f32 %v2735, %v3065
      %v3168 = vadd.f32 %v2736, %v3068
      %v3169 = vadd.f32 %v2737, %v3073
      %v3170 = vadd.f32 %v2738, %v3076
      %v3171 = vadd.f32 %v2739, %v3081
      %v3172 = vadd.f32 %v2740, %v3088
      %v3173 = vadd.f32 %v2741, %v3091
      %v3174 = vadd.f32 %v2742, %v3096
      %v3175 = vadd.f32 %v2743, %v3099
      %v3176 = vadd.f32 %v2744, %v3104
      %v3177 = vadd.f32 %v2745, %v3107
      %v3178 = vadd.f32 %v2746, %v3112
      %v3179 = vadd.f32 %v2747, %v3115
      %v3180 = vadd.f32 %v2748, %v3122
      %v3181 = vadd.f32 %v2749, %v3127
      %v3182 = vadd.f32 %v2750, %v3130
      %v3183 = vadd.f32 %v2751, %v3135
      %v3184 = vadd.f32 %v2752, %v3138
      %v3185 = vadd.f32 %v2753, %v3143
      %v3186 = vadd.f32 %v2754, %v3146
      %v3187 = vadd.f32 %v2755, %v3151
      %s3188 = scalar_lea.vmem %s3, 128
      %v3189 = vld [vmem:[%s3188] sm:$0xf]
      %v3190 = vld [vmem:[%s3188 + $0x4] sm:$0xf]
      %v3191 = vld [vmem:[%s3188 + $0x8] sm:$0xf]
      %v3192 = vld [vmem:[%s3188 + $0xc] sm:$0xf]
      %v3193 = vld [vmem:[%s3188 + $0x10] sm:$0xf]
      %v3194 = vld [vmem:[%s3188 + $0x14] sm:$0xf]
      %v3195 = vld [vmem:[%s3188 + $0x18] sm:$0xf]
      %v3196 = vld [vmem:[%s3188 + $0x1c] sm:$0xf]
      %v3197 = vld [vmem:[%s3188 + $0x20] sm:$0xf]
      %v3198 = vld [vmem:[%s3188 + $0x24] sm:$0xf]
      %v3199 = vld [vmem:[%s3188 + $0x28] sm:$0xf]
      %v3200 = vld [vmem:[%s3188 + $0x2c] sm:$0xf]
      %v3201 = vld [vmem:[%s3188 + $0x30] sm:$0xf]
      %v3202 = vld [vmem:[%s3188 + $0x34] sm:$0xf]
      %v3203 = vld [vmem:[%s3188 + $0x38] sm:$0xf]
      %v3204 = vld [vmem:[%s3188 + $0x3c] sm:$0xf]
      %v3223 = vrot.slane %v2469, 1
      %v3224 = vrot.slane %v2470, 1
      %v3225 = vsel %vm1375, %v3223, %v3224
      %v3226 = vrot.slane %v2471, 1
      %v3227 = vsel %vm1375, %v3224, %v3226
      %v3228 = vrot.slane %v2472, 1
      %v3229 = vsel %vm1375, %v3226, %v3228
      %v3230 = vrot.slane %v2473, 1
      %v3231 = vsel %vm1375, %v3228, %v3230
      %v3232 = vrot.slane %v2474, 1
      %v3233 = vsel %vm1375, %v3230, %v3232
      %v3234 = vrot.slane %v2475, 1
      %v3235 = vsel %vm1375, %v3232, %v3234
      %v3236 = vrot.slane %v2476, 1
      %v3237 = vsel %vm1375, %v3234, %v3236
      %v3238 = vrot.slane %v2477, 1
      %v3239 = vsel %vm1375, %v3236, %v3238
      %v3240 = vrot.slane %v2478, 1
      %v3241 = vsel %vm1375, %v3238, %v3240
      %v3242 = vrot.slane %v2479, 1
      %v3243 = vsel %vm1375, %v3240, %v3242
      %v3244 = vrot.slane %v2480, 1
      %v3245 = vsel %vm1375, %v3242, %v3244
      %v3246 = vrot.slane %v2481, 1
      %v3247 = vsel %vm1375, %v3244, %v3246
      %v3248 = vrot.slane %v2482, 1
      %v3249 = vsel %vm1375, %v3246, %v3248
      %v3250 = vrot.slane %v2483, 1
      %v3251 = vsel %vm1375, %v3248, %v3250
      %v3252 = vrot.slane %v2484, 1
      %v3253 = vsel %vm1375, %v3250, %v3252
      %v3254 = vrot.slane %v2485, 1
      %v3255 = vsel %vm1375, %v3252, %v3254
      %v3256 = vrot.slane %v2756, 1
      %v3257 = vsel %vm1375, %v3254, %v3256
      %v3292 = vunpack.c.l.b16 %v3189
      %v3293 = vunpack.c.l.b16 %v3190
      %v3294 = vunpack.c.l.b16 %v3191
      %v3295 = vunpack.c.l.b16 %v3192
      %v3296 = vunpack.c.l.b16 %v3193
      %v3297 = vunpack.c.l.b16 %v3194
      %v3298 = vunpack.c.l.b16 %v3195
      %v3299 = vunpack.c.l.b16 %v3196
      %v3300 = vunpack.c.l.b16 %v3197
      %v3301 = vunpack.c.l.b16 %v3198
      %v3302 = vunpack.c.l.b16 %v3199
      %v3303 = vunpack.c.l.b16 %v3200
      %v3304 = vunpack.c.l.b16 %v3201
      %v3305 = vunpack.c.l.b16 %v3202
      %v3306 = vunpack.c.l.b16 %v3203
      %v3307 = vunpack.c.l.b16 %v3204
      %v3308 = vpack.c.b16 %v3293, %v3292
      %v3309 = vpack.c.b16 %v3295, %v3294
      %v3310 = vpack.c.b16 %v3297, %v3296
      %v3311 = vpack.c.b16 %v3299, %v3298
      %v3312 = vpack.c.b16 %v3301, %v3300
      %v3313 = vpack.c.b16 %v3303, %v3302
      %v3314 = vpack.c.b16 %v3305, %v3304
      %v3315 = vpack.c.b16 %v3307, %v3306
      %3324 = vmatprep.subr.bf16.mxu0 0
      %3325 = vmatpush1.bf16.msra.mxu0 %v3315
      %3326 = vmatprep.subr.bf16.mxu0 0
      %3327 = vmatpush1.bf16.msra.mxu0 %v3314
      %3328 = vmatprep.subr.bf16.mxu0 0
      %3329 = vmatpush1.bf16.msra.mxu0 %v3313
      %3330 = vmatprep.subr.bf16.mxu0 0
      %3331 = vmatpush1.bf16.msra.mxu0 %v3312
      %3332 = vmatprep.subr.bf16.mxu0 0
      %3333 = vmatpush1.bf16.msra.mxu0 %v3311
      %3334 = vmatprep.subr.bf16.mxu0 0
      %3335 = vmatpush1.bf16.msra.mxu0 %v3310
      %3336 = vmatprep.subr.bf16.mxu0 0
      %3337 = vmatpush1.bf16.msra.mxu0 %v3309
      %3338 = vmatprep.subr.bf16.mxu0 0
      %3339 = vmatpush1.bf16.msra.mxu0 %v3308
      %3340 = vmatprep.subr.bf16.mxu0 0
      %3341 = vmatpush2.bf16.msra.mxu0 0
      %3342 = vmatprep.subr.bf16.mxu0 0
      %3343 = vmatpush2.bf16.msra.mxu0 0
      %3344 = vmatprep.subr.bf16.mxu0 0
      %3345 = vmatpush2.bf16.msra.mxu0 0
      %3346 = vmatprep.subr.bf16.mxu0 0
      %3347 = vmatpush2.bf16.msra.mxu0 0
      %3348 = vmatprep.subr.bf16.mxu0 0
      %3349 = vmatpush2.bf16.msra.mxu0 0
      %3350 = vmatprep.subr.bf16.mxu0 0
      %3351 = vmatpush2.bf16.msra.mxu0 0
      %3352 = vmatprep.subr.bf16.mxu0 0
      %3353 = vmatpush2.bf16.msra.mxu0 0
      %3354 = vmatprep.subr.bf16.mxu0 0
      %3355 = vmatpush2.bf16.msra.mxu0 0
      %3356 = vmatprep.mubr.bf16.mxu0 0
      %3357 = vmatmul.mubr.bf16.gmra.mxu0 %v3225
      %v3358 = vpop.f32.mrf.mxu0
      %v3359 = vadd.f32 0.0, %v3358
      %v3360 = vpop.f32.mrf.mxu0
      %v3361 = vpop.f32.mrf.mxu0
      %v3362 = vadd.f32 0.0, %v3361
      %v3363 = vpop.f32.mrf.mxu0
      %3364 = vmatprep.mubr.bf16.mxu0 0
      %3365 = vmatmul.mubr.bf16.gmra.mxu0 %v3227
      %v3366 = vpop.f32.mrf.mxu0
      %v3367 = vadd.f32 0.0, %v3366
      %v3368 = vpop.f32.mrf.mxu0
      %v3369 = vpop.f32.mrf.mxu0
      %v3370 = vadd.f32 0.0, %v3369
      %v3371 = vpop.f32.mrf.mxu0
      %3372 = vmatprep.mubr.bf16.mxu0 0
      %3373 = vmatmul.mubr.bf16.gmra.mxu0 %v3229
      %v3374 = vpop.f32.mrf.mxu0
      %v3375 = vadd.f32 0.0, %v3374
      %v3376 = vpop.f32.mrf.mxu0
      %v3377 = vpop.f32.mrf.mxu0
      %v3378 = vadd.f32 0.0, %v3377
      %v3379 = vpop.f32.mrf.mxu0
      %3380 = vmatprep.mubr.bf16.mxu0 0
      %3381 = vmatmul.mubr.bf16.gmra.mxu0 %v3231
      %v3382 = vpop.f32.mrf.mxu0
      %v3383 = vadd.f32 0.0, %v3382
      %v3384 = vpop.f32.mrf.mxu0
      %v3385 = vpop.f32.mrf.mxu0
      %v3386 = vadd.f32 0.0, %v3385
      %v3387 = vpop.f32.mrf.mxu0
      %3388 = vmatprep.mubr.bf16.mxu0 0
      %3389 = vmatmul.mubr.bf16.gmra.mxu0 %v3233
      %v3390 = vpop.f32.mrf.mxu0
      %v3391 = vpop.f32.mrf.mxu0
      %v3392 = vpop.f32.mrf.mxu0
      %v3393 = vadd.f32 0.0, %v3392
      %v3394 = vpop.f32.mrf.mxu0
      %3395 = vmatprep.mubr.bf16.mxu0 0
      %3396 = vmatmul.mubr.bf16.gmra.mxu0 %v3235
      %v3397 = vpop.f32.mrf.mxu0
      %v3398 = vadd.f32 0.0, %v3397
      %v3399 = vpop.f32.mrf.mxu0
      %v3400 = vpop.f32.mrf.mxu0
      %v3401 = vadd.f32 0.0, %v3400
      %v3402 = vpop.f32.mrf.mxu0
      %3403 = vmatprep.mubr.bf16.mxu0 0
      %3404 = vmatmul.mubr.bf16.gmra.mxu0 %v3237
      %v3405 = vpop.f32.mrf.mxu0
      %v3406 = vadd.f32 0.0, %v3405
      %v3407 = vpop.f32.mrf.mxu0
      %v3408 = vpop.f32.mrf.mxu0
      %v3409 = vadd.f32 0.0, %v3408
      %v3410 = vpop.f32.mrf.mxu0
      %3411 = vmatprep.mubr.bf16.mxu0 0
      %3412 = vmatmul.mubr.bf16.gmra.mxu0 %v3239
      %v3413 = vpop.f32.mrf.mxu0
      %v3414 = vadd.f32 0.0, %v3413
      %v3415 = vpop.f32.mrf.mxu0
      %v3416 = vpop.f32.mrf.mxu0
      %v3417 = vadd.f32 0.0, %v3416
      %v3418 = vpop.f32.mrf.mxu0
      %3419 = vmatprep.mubr.bf16.mxu0 0
      %3420 = vmatmul.mubr.bf16.gmra.mxu0 %v3241
      %v3421 = vpop.f32.mrf.mxu0
      %v3422 = vadd.f32 0.0, %v3421
      %v3423 = vpop.f32.mrf.mxu0
      %v3424 = vpop.f32.mrf.mxu0
      %v3425 = vpop.f32.mrf.mxu0
      %3426 = vmatprep.mubr.bf16.mxu0 0
      %3427 = vmatmul.mubr.bf16.gmra.mxu0 %v3243
      %v3428 = vpop.f32.mrf.mxu0
      %v3429 = vadd.f32 0.0, %v3428
      %v3430 = vpop.f32.mrf.mxu0
      %v3431 = vpop.f32.mrf.mxu0
      %v3432 = vadd.f32 0.0, %v3431
      %v3433 = vpop.f32.mrf.mxu0
      %3434 = vmatprep.mubr.bf16.mxu0 0
      %3435 = vmatmul.mubr.bf16.gmra.mxu0 %v3245
      %v3436 = vpop.f32.mrf.mxu0
      %v3437 = vadd.f32 0.0, %v3436
      %v3438 = vpop.f32.mrf.mxu0
      %v3439 = vpop.f32.mrf.mxu0
      %v3440 = vadd.f32 0.0, %v3439
      %v3441 = vpop.f32.mrf.mxu0
      %3442 = vmatprep.mubr.bf16.mxu0 0
      %3443 = vmatmul.mubr.bf16.gmra.mxu0 %v3247
      %v3444 = vpop.f32.mrf.mxu0
      %v3445 = vadd.f32 0.0, %v3444
      %v3446 = vpop.f32.mrf.mxu0
      %v3447 = vpop.f32.mrf.mxu0
      %v3448 = vadd.f32 0.0, %v3447
      %v3449 = vpop.f32.mrf.mxu0
      %3450 = vmatprep.mubr.bf16.mxu0 0
      %3451 = vmatmul.mubr.bf16.gmra.mxu0 %v3249
      %v3452 = vpop.f32.mrf.mxu0
      %v3453 = vadd.f32 0.0, %v3452
      %v3454 = vpop.f32.mrf.mxu0
      %v3455 = vpop.f32.mrf.mxu0
      %v3456 = vadd.f32 0.0, %v3455
      %v3457 = vpop.f32.mrf.mxu0
      %3458 = vmatprep.mubr.bf16.mxu0 0
      %3459 = vmatmul.mubr.bf16.gmra.mxu0 %v3251
      %v3460 = vpop.f32.mrf.mxu0
      %v3461 = vpop.f32.mrf.mxu0
      %v3462 = vpop.f32.mrf.mxu0
      %v3463 = vadd.f32 0.0, %v3462
      %v3464 = vpop.f32.mrf.mxu0
      %3465 = vmatprep.mubr.bf16.mxu0 0
      %3466 = vmatmul.mubr.bf16.gmra.mxu0 %v3253
      %v3467 = vpop.f32.mrf.mxu0
      %v3468 = vadd.f32 0.0, %v3467
      %v3469 = vpop.f32.mrf.mxu0
      %v3470 = vpop.f32.mrf.mxu0
      %v3471 = vadd.f32 0.0, %v3470
      %v3472 = vpop.f32.mrf.mxu0
      %3473 = vmatprep.mubr.bf16.mxu0 0
      %3474 = vmatmul.mubr.bf16.gmra.mxu0 %v3255
      %v3475 = vpop.f32.mrf.mxu0
      %v3476 = vadd.f32 0.0, %v3475
      %v3477 = vpop.f32.mrf.mxu0
      %v3478 = vpop.f32.mrf.mxu0
      %v3479 = vadd.f32 0.0, %v3478
      %v3480 = vpop.f32.mrf.mxu0
      %3481 = vmatprep.mubr.bf16.mxu0 0
      %3482 = vmatmul.mubr.bf16.gmra.mxu0 %v3257
      %v3483 = vpop.f32.mrf.mxu0
      %v3484 = vadd.f32 0.0, %v3483
      %v3485 = vpop.f32.mrf.mxu0
      %v3486 = vpop.f32.mrf.mxu0
      %v3487 = vadd.f32 0.0, %v3486
      %v3488 = vpop.f32.mrf.mxu0
      %3489 = vmatprep.mubr.bf16.mxu0 0
      %3490 = vmatmul.mubr.bf16.gmra.mxu0 %v3256
      %v3491 = vpop.f32.mrf.mxu0
      %v3492 = vadd.f32 0.0, %v3491
      %v3493 = vpop.f32.mrf.mxu0
      %v3494 = vpop.f32.mrf.mxu0
      %v3495 = vpop.f32.mrf.mxu0
      %3496 = vdwg.mxu0
      %v3497 = vadd.f32 %v3156, %v3359
      %v3498 = vadd.f32 %v3157, %v3362
      %v3499 = vadd.f32 %v3158, %v3367
      %v3500 = vadd.f32 %v3159, %v3370
      %v3501 = vadd.f32 %v3160, %v3375
      %v3502 = vadd.f32 %v3161, %v3378
      %v3503 = vadd.f32 %v3162, %v3383
      %v3504 = vadd.f32 %v3163, %v3386
      %v3505 = vadd.f32 %v3164, %v3393
      %v3506 = vadd.f32 %v3165, %v3398
      %v3507 = vadd.f32 %v3166, %v3401
      %v3508 = vadd.f32 %v3167, %v3406
      %v3509 = vadd.f32 %v3168, %v3409
      %v3510 = vadd.f32 %v3169, %v3414
      %v3511 = vadd.f32 %v3170, %v3417
      %v3512 = vadd.f32 %v3171, %v3422
      %v3513 = vadd.f32 %v3172, %v3429
      %v3514 = vadd.f32 %v3173, %v3432
      %v3515 = vadd.f32 %v3174, %v3437
      %v3516 = vadd.f32 %v3175, %v3440
      %v3517 = vadd.f32 %v3176, %v3445
      %v3518 = vadd.f32 %v3177, %v3448
      %v3519 = vadd.f32 %v3178, %v3453
      %v3520 = vadd.f32 %v3179, %v3456
      %v3521 = vadd.f32 %v3180, %v3463
      %v3522 = vadd.f32 %v3181, %v3468
      %v3523 = vadd.f32 %v3182, %v3471
      %v3524 = vadd.f32 %v3183, %v3476
      %v3525 = vadd.f32 %v3184, %v3479
      %v3526 = vadd.f32 %v3185, %v3484
      %v3527 = vadd.f32 %v3186, %v3487
      %v3528 = vadd.f32 %v3187, %v3492
      %s3529 = scalar_lea.vmem %s3, 192
      %v3530 = vld [vmem:[%s3529] sm:$0xf]
      %v3531 = vld [vmem:[%s3529 + $0x4] sm:$0xf]
      %v3532 = vld [vmem:[%s3529 + $0x8] sm:$0xf]
      %v3533 = vld [vmem:[%s3529 + $0xc] sm:$0xf]
      %v3534 = vld [vmem:[%s3529 + $0x10] sm:$0xf]
      %v3535 = vld [vmem:[%s3529 + $0x14] sm:$0xf]
      %v3536 = vld [vmem:[%s3529 + $0x18] sm:$0xf]
      %v3537 = vld [vmem:[%s3529 + $0x1c] sm:$0xf]
      %v3538 = vld [vmem:[%s3529 + $0x20] sm:$0xf]
      %v3539 = vld [vmem:[%s3529 + $0x24] sm:$0xf]
      %v3540 = vld [vmem:[%s3529 + $0x28] sm:$0xf]
      %v3541 = vld [vmem:[%s3529 + $0x2c] sm:$0xf]
      %v3542 = vld [vmem:[%s3529 + $0x30] sm:$0xf]
      %v3543 = vld [vmem:[%s3529 + $0x34] sm:$0xf]
      %v3544 = vld [vmem:[%s3529 + $0x38] sm:$0xf]
      %v3545 = vld [vmem:[%s3529 + $0x3c] sm:$0xf]
      %v3546 = vrot.slane %v2775, 1
      %v3547 = vrot.slane %v2777, 2
      %v3548 = vor.u32 %v3546, %v3547
      %v3549 = vrot.slane %v2786, 1
      %v3550 = vrot.slane %v2782, 2
      %v3551 = vor.u32 %v3549, %v3550
      %v3552 = vsel %vm1707, %v3548, %v3551
      %v3553 = vrot.slane %v2794, 1
      %v3554 = vrot.slane %v2790, 2
      %v3555 = vor.u32 %v3553, %v3554
      %v3556 = vsel %vm1707, %v3551, %v3555
      %v3557 = vrot.slane %v2802, 1
      %v3558 = vrot.slane %v2798, 2
      %v3559 = vor.u32 %v3557, %v3558
      %v3560 = vsel %vm1707, %v3555, %v3559
      %v3561 = vrot.slane %v2810, 1
      %v3562 = vrot.slane %v2806, 2
      %v3563 = vor.u32 %v3561, %v3562
      %v3564 = vsel %vm1707, %v3559, %v3563
      %v3565 = vrot.slane %v2818, 1
      %v3566 = vrot.slane %v2814, 2
      %v3567 = vor.u32 %v3565, %v3566
      %v3568 = vsel %vm1707, %v3563, %v3567
      %v3569 = vrot.slane %v2826, 1
      %v3570 = vrot.slane %v2822, 2
      %v3571 = vor.u32 %v3569, %v3570
      %v3572 = vsel %vm1707, %v3567, %v3571
      %v3573 = vrot.slane %v2834, 1
      %v3574 = vrot.slane %v2830, 2
      %v3575 = vor.u32 %v3573, %v3574
      %v3576 = vsel %vm1707, %v3571, %v3575
      %v3577 = vrot.slane %v2842, 1
      %v3578 = vrot.slane %v2838, 2
      %v3579 = vor.u32 %v3577, %v3578
      %v3580 = vsel %vm1707, %v3575, %v3579
      %v3581 = vrot.slane %v2850, 1
      %v3582 = vrot.slane %v2846, 2
      %v3583 = vor.u32 %v3581, %v3582
      %v3584 = vsel %vm1707, %v3579, %v3583
      %v3585 = vrot.slane %v2858, 1
      %v3586 = vrot.slane %v2854, 2
      %v3587 = vor.u32 %v3585, %v3586
      %v3588 = vsel %vm1707, %v3583, %v3587
      %v3589 = vrot.slane %v2866, 1
      %v3590 = vrot.slane %v2862, 2
      %v3591 = vor.u32 %v3589, %v3590
      %v3592 = vsel %vm1707, %v3587, %v3591
      %v3593 = vrot.slane %v2874, 1
      %v3594 = vrot.slane %v2870, 2
      %v3595 = vor.u32 %v3593, %v3594
      %v3596 = vsel %vm1707, %v3591, %v3595
      %v3597 = vrot.slane %v2882, 1
      %v3598 = vrot.slane %v2878, 2
      %v3599 = vor.u32 %v3597, %v3598
      %v3600 = vsel %vm1707, %v3595, %v3599
      %v3601 = vrot.slane %v2890, 1
      %v3602 = vrot.slane %v2886, 2
      %v3603 = vor.u32 %v3601, %v3602
      %v3604 = vsel %vm1707, %v3599, %v3603
      %v3605 = vrot.slane %v2898, 1
      %v3606 = vrot.slane %v2894, 2
      %v3607 = vor.u32 %v3605, %v3606
      %v3608 = vsel %vm1707, %v3603, %v3607
      %v3609 = vrot.slane %v2906, 1
      %v3610 = vrot.slane %v2902, 2
      %v3611 = vor.u32 %v3609, %v3610
      %v3612 = vsel %vm1707, %v3607, %v3611
      %v3613 = vrot.slane %v2914, 1
      %v3614 = vrot.slane %v2910, 2
      %v3615 = vor.u32 %v3613, %v3614
      %v3616 = vsel %vm1707, %v3611, %v3615
      %v3651 = vunpack.c.l.b16 %v3530
      %v3652 = vunpack.c.l.b16 %v3531
      %v3653 = vunpack.c.l.b16 %v3532
      %v3654 = vunpack.c.l.b16 %v3533
      %v3655 = vunpack.c.l.b16 %v3534
      %v3656 = vunpack.c.l.b16 %v3535
      %v3657 = vunpack.c.l.b16 %v3536
      %v3658 = vunpack.c.l.b16 %v3537
      %v3659 = vunpack.c.l.b16 %v3538
      %v3660 = vunpack.c.l.b16 %v3539
      %v3661 = vunpack.c.l.b16 %v3540
      %v3662 = vunpack.c.l.b16 %v3541
      %v3663 = vunpack.c.l.b16 %v3542
      %v3664 = vunpack.c.l.b16 %v3543
      %v3665 = vunpack.c.l.b16 %v3544
      %v3666 = vunpack.c.l.b16 %v3545
      %v3667 = vpack.c.b16 %v3652, %v3651
      %v3668 = vpack.c.b16 %v3654, %v3653
      %v3669 = vpack.c.b16 %v3656, %v3655
      %v3670 = vpack.c.b16 %v3658, %v3657
      %v3671 = vpack.c.b16 %v3660, %v3659
      %v3672 = vpack.c.b16 %v3662, %v3661
      %v3673 = vpack.c.b16 %v3664, %v3663
      %v3674 = vpack.c.b16 %v3666, %v3665
      %3683 = vmatprep.subr.bf16.mxu0 0
      %3684 = vmatpush1.bf16.msra.mxu0 %v3674
      %3685 = vmatprep.subr.bf16.mxu0 0
      %3686 = vmatpush1.bf16.msra.mxu0 %v3673
      %3687 = vmatprep.subr.bf16.mxu0 0
      %3688 = vmatpush1.bf16.msra.mxu0 %v3672
      %3689 = vmatprep.subr.bf16.mxu0 0
      %3690 = vmatpush1.bf16.msra.mxu0 %v3671
      %3691 = vmatprep.subr.bf16.mxu0 0
      %3692 = vmatpush1.bf16.msra.mxu0 %v3670
      %3693 = vmatprep.subr.bf16.mxu0 0
      %3694 = vmatpush1.bf16.msra.mxu0 %v3669
      %3695 = vmatprep.subr.bf16.mxu0 0
      %3696 = vmatpush1.bf16.msra.mxu0 %v3668
      %3697 = vmatprep.subr.bf16.mxu0 0
      %3698 = vmatpush1.bf16.msra.mxu0 %v3667
      %3699 = vmatprep.subr.bf16.mxu0 0
      %3700 = vmatpush2.bf16.msra.mxu0 0
      %3701 = vmatprep.subr.bf16.mxu0 0
      %3702 = vmatpush2.bf16.msra.mxu0 0
      %3703 = vmatprep.subr.bf16.mxu0 0
      %3704 = vmatpush2.bf16.msra.mxu0 0
      %3705 = vmatprep.subr.bf16.mxu0 0
      %3706 = vmatpush2.bf16.msra.mxu0 0
      %3707 = vmatprep.subr.bf16.mxu0 0
      %3708 = vmatpush2.bf16.msra.mxu0 0
      %3709 = vmatprep.subr.bf16.mxu0 0
      %3710 = vmatpush2.bf16.msra.mxu0 0
      %3711 = vmatprep.subr.bf16.mxu0 0
      %3712 = vmatpush2.bf16.msra.mxu0 0
      %3713 = vmatprep.subr.bf16.mxu0 0
      %3714 = vmatpush2.bf16.msra.mxu0 0
      %3715 = vmatprep.mubr.bf16.mxu0 0
      %3716 = vmatmul.mubr.bf16.gmra.mxu0 %v3552
      %v3717 = vpop.f32.mrf.mxu0
      %v3718 = vadd.f32 0.0, %v3717
      %v3719 = vpop.f32.mrf.mxu0
      %v3720 = vpop.f32.mrf.mxu0
      %v3721 = vadd.f32 0.0, %v3720
      %v3722 = vpop.f32.mrf.mxu0
      %3723 = vmatprep.mubr.bf16.mxu0 0
      %3724 = vmatmul.mubr.bf16.gmra.mxu0 %v3556
      %v3725 = vpop.f32.mrf.mxu0
      %v3726 = vadd.f32 0.0, %v3725
      %v3727 = vpop.f32.mrf.mxu0
      %v3728 = vpop.f32.mrf.mxu0
      %v3729 = vadd.f32 0.0, %v3728
      %v3730 = vpop.f32.mrf.mxu0
      %3731 = vmatprep.mubr.bf16.mxu0 0
      %3732 = vmatmul.mubr.bf16.gmra.mxu0 %v3560
      %v3733 = vpop.f32.mrf.mxu0
      %v3734 = vadd.f32 0.0, %v3733
      %v3735 = vpop.f32.mrf.mxu0
      %v3736 = vpop.f32.mrf.mxu0
      %v3737 = vadd.f32 0.0, %v3736
      %v3738 = vpop.f32.mrf.mxu0
      %3739 = vmatprep.mubr.bf16.mxu0 0
      %3740 = vmatmul.mubr.bf16.gmra.mxu0 %v3564
      %v3741 = vpop.f32.mrf.mxu0
      %v3742 = vadd.f32 0.0, %v3741
      %v3743 = vpop.f32.mrf.mxu0
      %v3744 = vpop.f32.mrf.mxu0
      %v3745 = vadd.f32 0.0, %v3744
      %v3746 = vpop.f32.mrf.mxu0
      %3747 = vmatprep.mubr.bf16.mxu0 0
      %3748 = vmatmul.mubr.bf16.gmra.mxu0 %v3568
      %v3749 = vpop.f32.mrf.mxu0
      %v3750 = vpop.f32.mrf.mxu0
      %v3751 = vpop.f32.mrf.mxu0
      %v3752 = vadd.f32 0.0, %v3751
      %v3753 = vpop.f32.mrf.mxu0
      %3754 = vmatprep.mubr.bf16.mxu0 0
      %3755 = vmatmul.mubr.bf16.gmra.mxu0 %v3572
      %v3756 = vpop.f32.mrf.mxu0
      %v3757 = vadd.f32 0.0, %v3756
      %v3758 = vpop.f32.mrf.mxu0
      %v3759 = vpop.f32.mrf.mxu0
      %v3760 = vadd.f32 0.0, %v3759
      %v3761 = vpop.f32.mrf.mxu0
      %3762 = vmatprep.mubr.bf16.mxu0 0
      %3763 = vmatmul.mubr.bf16.gmra.mxu0 %v3576
      %v3764 = vpop.f32.mrf.mxu0
      %v3765 = vadd.f32 0.0, %v3764
      %v3766 = vpop.f32.mrf.mxu0
      %v3767 = vpop.f32.mrf.mxu0
      %v3768 = vadd.f32 0.0, %v3767
      %v3769 = vpop.f32.mrf.mxu0
      %3770 = vmatprep.mubr.bf16.mxu0 0
      %3771 = vmatmul.mubr.bf16.gmra.mxu0 %v3580
      %v3772 = vpop.f32.mrf.mxu0
      %v3773 = vadd.f32 0.0, %v3772
      %v3774 = vpop.f32.mrf.mxu0
      %v3775 = vpop.f32.mrf.mxu0
      %v3776 = vadd.f32 0.0, %v3775
      %v3777 = vpop.f32.mrf.mxu0
      %3778 = vmatprep.mubr.bf16.mxu0 0
      %3779 = vmatmul.mubr.bf16.gmra.mxu0 %v3584
      %v3780 = vpop.f32.mrf.mxu0
      %v3781 = vadd.f32 0.0, %v3780
      %v3782 = vpop.f32.mrf.mxu0
      %v3783 = vpop.f32.mrf.mxu0
      %v3784 = vpop.f32.mrf.mxu0
      %3785 = vmatprep.mubr.bf16.mxu0 0
      %3786 = vmatmul.mubr.bf16.gmra.mxu0 %v3588
      %v3787 = vpop.f32.mrf.mxu0
      %v3788 = vadd.f32 0.0, %v3787
      %v3789 = vpop.f32.mrf.mxu0
      %v3790 = vpop.f32.mrf.mxu0
      %v3791 = vadd.f32 0.0, %v3790
      %v3792 = vpop.f32.mrf.mxu0
      %3793 = vmatprep.mubr.bf16.mxu0 0
      %3794 = vmatmul.mubr.bf16.gmra.mxu0 %v3592
      %v3795 = vpop.f32.mrf.mxu0
      %v3796 = vadd.f32 0.0, %v3795
      %v3797 = vpop.f32.mrf.mxu0
      %v3798 = vpop.f32.mrf.mxu0
      %v3799 = vadd.f32 0.0, %v3798
      %v3800 = vpop.f32.mrf.mxu0
      %3801 = vmatprep.mubr.bf16.mxu0 0
      %3802 = vmatmul.mubr.bf16.gmra.mxu0 %v3596
      %v3803 = vpop.f32.mrf.mxu0
      %v3804 = vadd.f32 0.0, %v3803
      %v3805 = vpop.f32.mrf.mxu0
      %v3806 = vpop.f32.mrf.mxu0
      %v3807 = vadd.f32 0.0, %v3806
      %v3808 = vpop.f32.mrf.mxu0
      %3809 = vmatprep.mubr.bf16.mxu0 0
      %3810 = vmatmul.mubr.bf16.gmra.mxu0 %v3600
      %v3811 = vpop.f32.mrf.mxu0
      %v3812 = vadd.f32 0.0, %v3811
      %v3813 = vpop.f32.mrf.mxu0
      %v3814 = vpop.f32.mrf.mxu0
      %v3815 = vadd.f32 0.0, %v3814
      %v3816 = vpop.f32.mrf.mxu0
      %3817 = vmatprep.mubr.bf16.mxu0 0
      %3818 = vmatmul.mubr.bf16.gmra.mxu0 %v3604
      %v3819 = vpop.f32.mrf.mxu0
      %v3820 = vpop.f32.mrf.mxu0
      %v3821 = vpop.f32.mrf.mxu0
      %v3822 = vadd.f32 0.0, %v3821
      %v3823 = vpop.f32.mrf.mxu0
      %3824 = vmatprep.mubr.bf16.mxu0 0
      %3825 = vmatmul.mubr.bf16.gmra.mxu0 %v3608
      %v3826 = vpop.f32.mrf.mxu0
      %v3827 = vadd.f32 0.0, %v3826
      %v3828 = vpop.f32.mrf.mxu0
      %v3829 = vpop.f32.mrf.mxu0
      %v3830 = vadd.f32 0.0, %v3829
      %v3831 = vpop.f32.mrf.mxu0
      %3832 = vmatprep.mubr.bf16.mxu0 0
      %3833 = vmatmul.mubr.bf16.gmra.mxu0 %v3612
      %v3834 = vpop.f32.mrf.mxu0
      %v3835 = vadd.f32 0.0, %v3834
      %v3836 = vpop.f32.mrf.mxu0
      %v3837 = vpop.f32.mrf.mxu0
      %v3838 = vadd.f32 0.0, %v3837
      %v3839 = vpop.f32.mrf.mxu0
      %3840 = vmatprep.mubr.bf16.mxu0 0
      %3841 = vmatmul.mubr.bf16.gmra.mxu0 %v3616
      %v3842 = vpop.f32.mrf.mxu0
      %v3843 = vadd.f32 0.0, %v3842
      %v3844 = vpop.f32.mrf.mxu0
      %v3845 = vpop.f32.mrf.mxu0
      %v3846 = vadd.f32 0.0, %v3845
      %v3847 = vpop.f32.mrf.mxu0
      %3848 = vmatprep.mubr.bf16.mxu0 0
      %3849 = vmatmul.mubr.bf16.gmra.mxu0 %v3615
      %v3850 = vpop.f32.mrf.mxu0
      %v3851 = vadd.f32 0.0, %v3850
      %v3852 = vpop.f32.mrf.mxu0
      %v3853 = vpop.f32.mrf.mxu0
      %v3854 = vpop.f32.mrf.mxu0
      %3855 = vdwg.mxu0
      %v3856 = vadd.f32 %v3497, %v3718
      %v3857 = vadd.f32 %v3498, %v3721
      %v3858 = vadd.f32 %v3499, %v3726
      %v3859 = vadd.f32 %v3500, %v3729
      %v3860 = vadd.f32 %v3501, %v3734
      %v3861 = vadd.f32 %v3502, %v3737
      %v3862 = vadd.f32 %v3503, %v3742
      %v3863 = vadd.f32 %v3504, %v3745
      %v3864 = vadd.f32 %v3505, %v3752
      %v3865 = vadd.f32 %v3506, %v3757
      %v3866 = vadd.f32 %v3507, %v3760
      %v3867 = vadd.f32 %v3508, %v3765
      %v3868 = vadd.f32 %v3509, %v3768
      %v3869 = vadd.f32 %v3510, %v3773
      %v3870 = vadd.f32 %v3511, %v3776
      %v3871 = vadd.f32 %v3512, %v3781
      %v3872 = vadd.f32 %v3513, %v3788
      %v3873 = vadd.f32 %v3514, %v3791
      %v3874 = vadd.f32 %v3515, %v3796
      %v3875 = vadd.f32 %v3516, %v3799
      %v3876 = vadd.f32 %v3517, %v3804
      %v3877 = vadd.f32 %v3518, %v3807
      %v3878 = vadd.f32 %v3519, %v3812
      %v3879 = vadd.f32 %v3520, %v3815
      %v3880 = vadd.f32 %v3521, %v3822
      %v3881 = vadd.f32 %v3522, %v3827
      %v3882 = vadd.f32 %v3523, %v3830
      %v3883 = vadd.f32 %v3524, %v3835
      %v3884 = vadd.f32 %v3525, %v3838
      %v3885 = vadd.f32 %v3526, %v3843
      %v3886 = vadd.f32 %v3527, %v3846
      %v3887 = vadd.f32 %v3528, %v3851
      %s3888 = scalar_lea.vmem %s3, 256
      %v3889 = vld [vmem:[%s3888] sm:$0xf]
      %v3890 = vld [vmem:[%s3888 + $0x4] sm:$0xf]
      %v3891 = vld [vmem:[%s3888 + $0x8] sm:$0xf]
      %v3892 = vld [vmem:[%s3888 + $0xc] sm:$0xf]
      %v3893 = vld [vmem:[%s3888 + $0x10] sm:$0xf]
      %v3894 = vld [vmem:[%s3888 + $0x14] sm:$0xf]
      %v3895 = vld [vmem:[%s3888 + $0x18] sm:$0xf]
      %v3896 = vld [vmem:[%s3888 + $0x1c] sm:$0xf]
      %v3897 = vld [vmem:[%s3888 + $0x20] sm:$0xf]
      %v3898 = vld [vmem:[%s3888 + $0x24] sm:$0xf]
      %v3899 = vld [vmem:[%s3888 + $0x28] sm:$0xf]
      %v3900 = vld [vmem:[%s3888 + $0x2c] sm:$0xf]
      %v3901 = vld [vmem:[%s3888 + $0x30] sm:$0xf]
      %v3902 = vld [vmem:[%s3888 + $0x34] sm:$0xf]
      %v3903 = vld [vmem:[%s3888 + $0x38] sm:$0xf]
      %v3904 = vld [vmem:[%s3888 + $0x3c] sm:$0xf]
      %v3905 = vrot.slane %v2469, 2
      %v3906 = vrot.slane %v2470, 2
      %v3907 = vsel %vm2075, %v3905, %v3906
      %v3908 = vrot.slane %v2471, 2
      %v3909 = vsel %vm2075, %v3906, %v3908
      %v3910 = vrot.slane %v2472, 2
      %v3911 = vsel %vm2075, %v3908, %v3910
      %v3912 = vrot.slane %v2473, 2
      %v3913 = vsel %vm2075, %v3910, %v3912
      %v3914 = vrot.slane %v2474, 2
      %v3915 = vsel %vm2075, %v3912, %v3914
      %v3916 = vrot.slane %v2475, 2
      %v3917 = vsel %vm2075, %v3914, %v3916
      %v3918 = vrot.slane %v2476, 2
      %v3919 = vsel %vm2075, %v3916, %v3918
      %v3920 = vrot.slane %v2477, 2
      %v3921 = vsel %vm2075, %v3918, %v3920
      %v3922 = vrot.slane %v2478, 2
      %v3923 = vsel %vm2075, %v3920, %v3922
      %v3924 = vrot.slane %v2479, 2
      %v3925 = vsel %vm2075, %v3922, %v3924
      %v3926 = vrot.slane %v2480, 2
      %v3927 = vsel %vm2075, %v3924, %v3926
      %v3928 = vrot.slane %v2481, 2
      %v3929 = vsel %vm2075, %v3926, %v3928
      %v3930 = vrot.slane %v2482, 2
      %v3931 = vsel %vm2075, %v3928, %v3930
      %v3932 = vrot.slane %v2483, 2
      %v3933 = vsel %vm2075, %v3930, %v3932
      %v3934 = vrot.slane %v2484, 2
      %v3935 = vsel %vm2075, %v3932, %v3934
      %v3936 = vrot.slane %v2485, 2
      %v3937 = vsel %vm2075, %v3934, %v3936
      %v3938 = vrot.slane %v2756, 2
      %v3939 = vsel %vm2075, %v3936, %v3938
      %v3974 = vunpack.c.l.b16 %v3889
      %v3975 = vunpack.c.l.b16 %v3890
      %v3976 = vunpack.c.l.b16 %v3891
      %v3977 = vunpack.c.l.b16 %v3892
      %v3978 = vunpack.c.l.b16 %v3893
      %v3979 = vunpack.c.l.b16 %v3894
      %v3980 = vunpack.c.l.b16 %v3895
      %v3981 = vunpack.c.l.b16 %v3896
      %v3982 = vunpack.c.l.b16 %v3897
      %v3983 = vunpack.c.l.b16 %v3898
      %v3984 = vunpack.c.l.b16 %v3899
      %v3985 = vunpack.c.l.b16 %v3900
      %v3986 = vunpack.c.l.b16 %v3901
      %v3987 = vunpack.c.l.b16 %v3902
      %v3988 = vunpack.c.l.b16 %v3903
      %v3989 = vunpack.c.l.b16 %v3904
      %v3990 = vpack.c.b16 %v3975, %v3974
      %v3991 = vpack.c.b16 %v3977, %v3976
      %v3992 = vpack.c.b16 %v3979, %v3978
      %v3993 = vpack.c.b16 %v3981, %v3980
      %v3994 = vpack.c.b16 %v3983, %v3982
      %v3995 = vpack.c.b16 %v3985, %v3984
      %v3996 = vpack.c.b16 %v3987, %v3986
      %v3997 = vpack.c.b16 %v3989, %v3988
      %4006 = vmatprep.subr.bf16.mxu0 0
      %4007 = vmatpush1.bf16.msra.mxu0 %v3997
      %4008 = vmatprep.subr.bf16.mxu0 0
      %4009 = vmatpush1.bf16.msra.mxu0 %v3996
      %4010 = vmatprep.subr.bf16.mxu0 0
      %4011 = vmatpush1.bf16.msra.mxu0 %v3995
      %4012 = vmatprep.subr.bf16.mxu0 0
      %4013 = vmatpush1.bf16.msra.mxu0 %v3994
      %4014 = vmatprep.subr.bf16.mxu0 0
      %4015 = vmatpush1.bf16.msra.mxu0 %v3993
      %4016 = vmatprep.subr.bf16.mxu0 0
      %4017 = vmatpush1.bf16.msra.mxu0 %v3992
      %4018 = vmatprep.subr.bf16.mxu0 0
      %4019 = vmatpush1.bf16.msra.mxu0 %v3991
      %4020 = vmatprep.subr.bf16.mxu0 0
      %4021 = vmatpush1.bf16.msra.mxu0 %v3990
      %4022 = vmatprep.subr.bf16.mxu0 0
      %4023 = vmatpush2.bf16.msra.mxu0 0
      %4024 = vmatprep.subr.bf16.mxu0 0
      %4025 = vmatpush2.bf16.msra.mxu0 0
      %4026 = vmatprep.subr.bf16.mxu0 0
      %4027 = vmatpush2.bf16.msra.mxu0 0
      %4028 = vmatprep.subr.bf16.mxu0 0
      %4029 = vmatpush2.bf16.msra.mxu0 0
      %4030 = vmatprep.subr.bf16.mxu0 0
      %4031 = vmatpush2.bf16.msra.mxu0 0
      %4032 = vmatprep.subr.bf16.mxu0 0
      %4033 = vmatpush2.bf16.msra.mxu0 0
      %4034 = vmatprep.subr.bf16.mxu0 0
      %4035 = vmatpush2.bf16.msra.mxu0 0
      %4036 = vmatprep.subr.bf16.mxu0 0
      %4037 = vmatpush2.bf16.msra.mxu0 0
      %4038 = vmatprep.mubr.bf16.mxu0 0
      %4039 = vmatmul.mubr.bf16.gmra.mxu0 %v3907
      %v4040 = vpop.f32.mrf.mxu0
      %v4041 = vadd.f32 0.0, %v4040
      %v4042 = vpop.f32.mrf.mxu0
      %v4043 = vpop.f32.mrf.mxu0
      %v4044 = vadd.f32 0.0, %v4043
      %v4045 = vpop.f32.mrf.mxu0
      %4046 = vmatprep.mubr.bf16.mxu0 0
      %4047 = vmatmul.mubr.bf16.gmra.mxu0 %v3909
      %v4048 = vpop.f32.mrf.mxu0
      %v4049 = vadd.f32 0.0, %v4048
      %v4050 = vpop.f32.mrf.mxu0
      %v4051 = vpop.f32.mrf.mxu0
      %v4052 = vadd.f32 0.0, %v4051
      %v4053 = vpop.f32.mrf.mxu0
      %4054 = vmatprep.mubr.bf16.mxu0 0
      %4055 = vmatmul.mubr.bf16.gmra.mxu0 %v3911
      %v4056 = vpop.f32.mrf.mxu0
      %v4057 = vadd.f32 0.0, %v4056
      %v4058 = vpop.f32.mrf.mxu0
      %v4059 = vpop.f32.mrf.mxu0
      %v4060 = vadd.f32 0.0, %v4059
      %v4061 = vpop.f32.mrf.mxu0
      %4062 = vmatprep.mubr.bf16.mxu0 0
      %4063 = vmatmul.mubr.bf16.gmra.mxu0 %v3913
      %v4064 = vpop.f32.mrf.mxu0
      %v4065 = vadd.f32 0.0, %v4064
      %v4066 = vpop.f32.mrf.mxu0
      %v4067 = vpop.f32.mrf.mxu0
      %v4068 = vadd.f32 0.0, %v4067
      %v4069 = vpop.f32.mrf.mxu0
      %4070 = vmatprep.mubr.bf16.mxu0 0
      %4071 = vmatmul.mubr.bf16.gmra.mxu0 %v3915
      %v4072 = vpop.f32.mrf.mxu0
      %v4073 = vpop.f32.mrf.mxu0
      %v4074 = vpop.f32.mrf.mxu0
      %v4075 = vadd.f32 0.0, %v4074
      %v4076 = vpop.f32.mrf.mxu0
      %4077 = vmatprep.mubr.bf16.mxu0 0
      %4078 = vmatmul.mubr.bf16.gmra.mxu0 %v3917
      %v4079 = vpop.f32.mrf.mxu0
      %v4080 = vadd.f32 0.0, %v4079
      %v4081 = vpop.f32.mrf.mxu0
      %v4082 = vpop.f32.mrf.mxu0
      %v4083 = vadd.f32 0.0, %v4082
      %v4084 = vpop.f32.mrf.mxu0
      %4085 = vmatprep.mubr.bf16.mxu0 0
      %4086 = vmatmul.mubr.bf16.gmra.mxu0 %v3919
      %v4087 = vpop.f32.mrf.mxu0
      %v4088 = vadd.f32 0.0, %v4087
      %v4089 = vpop.f32.mrf.mxu0
      %v4090 = vpop.f32.mrf.mxu0
      %v4091 = vadd.f32 0.0, %v4090
      %v4092 = vpop.f32.mrf.mxu0
      %4093 = vmatprep.mubr.bf16.mxu0 0
      %4094 = vmatmul.mubr.bf16.gmra.mxu0 %v3921
      %v4095 = vpop.f32.mrf.mxu0
      %v4096 = vadd.f32 0.0, %v4095
      %v4097 = vpop.f32.mrf.mxu0
      %v4098 = vpop.f32.mrf.mxu0
      %v4099 = vadd.f32 0.0, %v4098
      %v4100 = vpop.f32.mrf.mxu0
      %4101 = vmatprep.mubr.bf16.mxu0 0
      %4102 = vmatmul.mubr.bf16.gmra.mxu0 %v3923
      %v4103 = vpop.f32.mrf.mxu0
      %v4104 = vadd.f32 0.0, %v4103
      %v4105 = vpop.f32.mrf.mxu0
      %v4106 = vpop.f32.mrf.mxu0
      %v4107 = vpop.f32.mrf.mxu0
      %4108 = vmatprep.mubr.bf16.mxu0 0
      %4109 = vmatmul.mubr.bf16.gmra.mxu0 %v3925
      %v4110 = vpop.f32.mrf.mxu0
      %v4111 = vadd.f32 0.0, %v4110
      %v4112 = vpop.f32.mrf.mxu0
      %v4113 = vpop.f32.mrf.mxu0
      %v4114 = vadd.f32 0.0, %v4113
      %v4115 = vpop.f32.mrf.mxu0
      %4116 = vmatprep.mubr.bf16.mxu0 0
      %4117 = vmatmul.mubr.bf16.gmra.mxu0 %v3927
      %v4118 = vpop.f32.mrf.mxu0
      %v4119 = vadd.f32 0.0, %v4118
      %v4120 = vpop.f32.mrf.mxu0
      %v4121 = vpop.f32.mrf.mxu0
      %v4122 = vadd.f32 0.0, %v4121
      %v4123 = vpop.f32.mrf.mxu0
      %4124 = vmatprep.mubr.bf16.mxu0 0
      %4125 = vmatmul.mubr.bf16.gmra.mxu0 %v3929
      %v4126 = vpop.f32.mrf.mxu0
      %v4127 = vadd.f32 0.0, %v4126
      %v4128 = vpop.f32.mrf.mxu0
      %v4129 = vpop.f32.mrf.mxu0
      %v4130 = vadd.f32 0.0, %v4129
      %v4131 = vpop.f32.mrf.mxu0
      %4132 = vmatprep.mubr.bf16.mxu0 0
      %4133 = vmatmul.mubr.bf16.gmra.mxu0 %v3931
      %v4134 = vpop.f32.mrf.mxu0
      %v4135 = vadd.f32 0.0, %v4134
      %v4136 = vpop.f32.mrf.mxu0
      %v4137 = vpop.f32.mrf.mxu0
      %v4138 = vadd.f32 0.0, %v4137
      %v4139 = vpop.f32.mrf.mxu0
      %4140 = vmatprep.mubr.bf16.mxu0 0
      %4141 = vmatmul.mubr.bf16.gmra.mxu0 %v3933
      %v4142 = vpop.f32.mrf.mxu0
      %v4143 = vpop.f32.mrf.mxu0
      %v4144 = vpop.f32.mrf.mxu0
      %v4145 = vadd.f32 0.0, %v4144
      %v4146 = vpop.f32.mrf.mxu0
      %4147 = vmatprep.mubr.bf16.mxu0 0
      %4148 = vmatmul.mubr.bf16.gmra.mxu0 %v3935
      %v4149 = vpop.f32.mrf.mxu0
      %v4150 = vadd.f32 0.0, %v4149
      %v4151 = vpop.f32.mrf.mxu0
      %v4152 = vpop.f32.mrf.mxu0
      %v4153 = vadd.f32 0.0, %v4152
      %v4154 = vpop.f32.mrf.mxu0
      %4155 = vmatprep.mubr.bf16.mxu0 0
      %4156 = vmatmul.mubr.bf16.gmra.mxu0 %v3937
      %v4157 = vpop.f32.mrf.mxu0
      %v4158 = vadd.f32 0.0, %v4157
      %v4159 = vpop.f32.mrf.mxu0
      %v4160 = vpop.f32.mrf.mxu0
      %v4161 = vadd.f32 0.0, %v4160
      %v4162 = vpop.f32.mrf.mxu0
      %4163 = vmatprep.mubr.bf16.mxu0 0
      %4164 = vmatmul.mubr.bf16.gmra.mxu0 %v3939
      %v4165 = vpop.f32.mrf.mxu0
      %v4166 = vadd.f32 0.0, %v4165
      %v4167 = vpop.f32.mrf.mxu0
      %v4168 = vpop.f32.mrf.mxu0
      %v4169 = vadd.f32 0.0, %v4168
      %v4170 = vpop.f32.mrf.mxu0
      %4171 = vmatprep.mubr.bf16.mxu0 0
      %4172 = vmatmul.mubr.bf16.gmra.mxu0 %v3938
      %v4173 = vpop.f32.mrf.mxu0
      %v4174 = vadd.f32 0.0, %v4173
      %v4175 = vpop.f32.mrf.mxu0
      %v4176 = vpop.f32.mrf.mxu0
      %v4177 = vpop.f32.mrf.mxu0
      %4178 = vdwg.mxu0
      %v4179 = vadd.f32 %v3856, %v4041
      %v4180 = vadd.f32 %v3857, %v4044
      %v4181 = vadd.f32 %v3858, %v4049
      %v4182 = vadd.f32 %v3859, %v4052
      %v4183 = vadd.f32 %v3860, %v4057
      %v4184 = vadd.f32 %v3861, %v4060
      %v4185 = vadd.f32 %v3862, %v4065
      %v4186 = vadd.f32 %v3863, %v4068
      %v4187 = vadd.f32 %v3864, %v4075
      %v4188 = vadd.f32 %v3865, %v4080
      %v4189 = vadd.f32 %v3866, %v4083
      %v4190 = vadd.f32 %v3867, %v4088
      %v4191 = vadd.f32 %v3868, %v4091
      %v4192 = vadd.f32 %v3869, %v4096
      %v4193 = vadd.f32 %v3870, %v4099
      %v4194 = vadd.f32 %v3871, %v4104
      %v4195 = vadd.f32 %v3872, %v4111
      %v4196 = vadd.f32 %v3873, %v4114
      %v4197 = vadd.f32 %v3874, %v4119
      %v4198 = vadd.f32 %v3875, %v4122
      %v4199 = vadd.f32 %v3876, %v4127
      %v4200 = vadd.f32 %v3877, %v4130
      %v4201 = vadd.f32 %v3878, %v4135
      %v4202 = vadd.f32 %v3879, %v4138
      %v4203 = vadd.f32 %v3880, %v4145
      %v4204 = vadd.f32 %v3881, %v4150
      %v4205 = vadd.f32 %v3882, %v4153
      %v4206 = vadd.f32 %v3883, %v4158
      %v4207 = vadd.f32 %v3884, %v4161
      %v4208 = vadd.f32 %v3885, %v4166
      %v4209 = vadd.f32 %v3886, %v4169
      %v4210 = vadd.f32 %v3887, %v4174
      %v4211 = vtanh.pop %v4179
      %v4212 = vtanh.pop %v4180
      %v4213 = vtanh.pop %v4181
      %v4214 = vtanh.pop %v4182
      %v4215 = vtanh.pop %v4183
      %v4216 = vtanh.pop %v4184
      %v4217 = vtanh.pop %v4185
      %v4218 = vtanh.pop %v4186
      %v4219 = vtanh.pop %v4187
      %v4220 = vtanh.pop %v4188
      %v4221 = vtanh.pop %v4189
      %v4222 = vtanh.pop %v4190
      %v4223 = vtanh.pop %v4191
      %v4224 = vtanh.pop %v4192
      %v4225 = vtanh.pop %v4193
      %v4226 = vtanh.pop %v4194
      %v4227 = vtanh.pop %v4195
      %v4228 = vtanh.pop %v4196
      %v4229 = vtanh.pop %v4197
      %v4230 = vtanh.pop %v4198
      %v4231 = vtanh.pop %v4199
      %v4232 = vtanh.pop %v4200
      %v4233 = vtanh.pop %v4201
      %v4234 = vtanh.pop %v4202
      %v4235 = vtanh.pop %v4203
      %v4236 = vtanh.pop %v4204
      %v4237 = vtanh.pop %v4205
      %v4238 = vtanh.pop %v4206
      %v4239 = vtanh.pop %v4207
      %v4240 = vtanh.pop %v4208
      %v4241 = vtanh.pop %v4209
      %v4242 = vtanh.pop %v4210
      %4243 = vxpose.xlu0.b32.start [1/16] %v4211, 128
      %4244 = vxpose.xlu0.b32.cont [2/16] %v4212, 128
      %4245 = vxpose.xlu0.b32.cont [3/16] %v4213, 128
      %4246 = vxpose.xlu0.b32.cont [4/16] %v4214, 128
      %4247 = vxpose.xlu0.b32.cont [5/16] %v4215, 128
      %4248 = vxpose.xlu0.b32.cont [6/16] %v4216, 128
      %4249 = vxpose.xlu0.b32.cont [7/16] %v4217, 128
      %4250 = vxpose.xlu0.b32.cont [8/16] %v4218, 128
      %4251 = vxpose.xlu0.b32.cont [9/16] 0.0, 128
      %4252 = vxpose.xlu0.b32.cont [10/16] 0.0, 128
      %4253 = vxpose.xlu0.b32.cont [11/16] 0.0, 128
      %4254 = vxpose.xlu0.b32.cont [12/16] 0.0, 128
      %4255 = vxpose.xlu0.b32.cont [13/16] 0.0, 128
      %4256 = vxpose.xlu0.b32.cont [14/16] 0.0, 128
      %4257 = vxpose.xlu0.b32.cont [15/16] 0.0, 128
      %4258 = vxpose.xlu0.b32.end [16/16] 0.0, 128
      %v4259 = vpop.trf.xlu0
      %v4260 = vpop.trf.xlu0
      %v4261 = vpop.trf.xlu0
      %v4262 = vpop.trf.xlu0
      %v4263 = vpop.trf.xlu0
      %v4264 = vpop.trf.xlu0
      %v4265 = vpop.trf.xlu0
      %v4266 = vpop.trf.xlu0
      %v4267 = vpop.trf.xlu0
      %v4268 = vpop.trf.xlu0
      %v4269 = vpop.trf.xlu0
      %v4270 = vpop.trf.xlu0
      %v4271 = vpop.trf.xlu0
      %v4272 = vpop.trf.xlu0
      %v4273 = vpop.trf.xlu0
      %v4274 = vpop.trf.xlu0
      %vm4275 = vcmask 523264
      %4276 = vst.msk [vmem:[%s231] sm:$0xff] %vm4275, %v4259
      %4277 = vst.msk [vmem:[%s231 + $0x8] sm:$0xff] %vm4275, %v4260
      %4278 = vst.msk [vmem:[%s231 + $0x10] sm:$0xff] %vm4275, %v4261
      %4279 = vst.msk [vmem:[%s231 + $0x18] sm:$0xff] %vm4275, %v4262
      %4280 = vst.msk [vmem:[%s231 + $0x20] sm:$0xff] %vm4275, %v4263
      %4281 = vst.msk [vmem:[%s231 + $0x28] sm:$0xff] %vm4275, %v4264
      %4282 = vst.msk [vmem:[%s231 + $0x30] sm:$0xff] %vm4275, %v4265
      %4283 = vst.msk [vmem:[%s231 + $0x38] sm:$0xff] %vm4275, %v4266
      %4284 = vst.msk [vmem:[%s231 + $0x40] sm:$0xff] %vm4275, %v4267
      %4285 = vst.msk [vmem:[%s231 + $0x48] sm:$0xff] %vm4275, %v4268
      %4286 = vst.msk [vmem:[%s231 + $0x50] sm:$0xff] %vm4275, %v4269
      %4287 = vst.msk [vmem:[%s231 + $0x58] sm:$0xff] %vm4275, %v4270
      %4288 = vst.msk [vmem:[%s231 + $0x60] sm:$0xff] %vm4275, %v4271
      %4289 = vst.msk [vmem:[%s231 + $0x68] sm:$0xff] %vm4275, %v4272
      %4290 = vst.msk [vmem:[%s231 + $0x70] sm:$0xff] %vm4275, %v4273
      %4291 = vst.msk [vmem:[%s231 + $0x78] sm:$0xff] %vm4275, %v4274
      %4292 = vxpose.xlu0.b32.start [1/16] %v4219, 128
      %4293 = vxpose.xlu0.b32.cont [2/16] %v4220, 128
      %4294 = vxpose.xlu0.b32.cont [3/16] %v4221, 128
      %4295 = vxpose.xlu0.b32.cont [4/16] %v4222, 128
      %4296 = vxpose.xlu0.b32.cont [5/16] %v4223, 128
      %4297 = vxpose.xlu0.b32.cont [6/16] %v4224, 128
      %4298 = vxpose.xlu0.b32.cont [7/16] %v4225, 128
      %4299 = vxpose.xlu0.b32.cont [8/16] %v4226, 128
      %4300 = vxpose.xlu0.b32.cont [9/16] 0.0, 128
      %4301 = vxpose.xlu0.b32.cont [10/16] 0.0, 128
      %4302 = vxpose.xlu0.b32.cont [11/16] 0.0, 128
      %4303 = vxpose.xlu0.b32.cont [12/16] 0.0, 128
      %4304 = vxpose.xlu0.b32.cont [13/16] 0.0, 128
      %4305 = vxpose.xlu0.b32.cont [14/16] 0.0, 128
      %4306 = vxpose.xlu0.b32.cont [15/16] 0.0, 128
      %4307 = vxpose.xlu0.b32.end [16/16] 0.0, 128
      %v4308 = vpop.trf.xlu0
      %v4309 = vpop.trf.xlu0
      %v4310 = vpop.trf.xlu0
      %v4311 = vpop.trf.xlu0
      %v4312 = vpop.trf.xlu0
      %v4313 = vpop.trf.xlu0
      %v4314 = vpop.trf.xlu0
      %v4315 = vpop.trf.xlu0
      %v4316 = vpop.trf.xlu0
      %v4317 = vpop.trf.xlu0
      %v4318 = vpop.trf.xlu0
      %v4319 = vpop.trf.xlu0
      %v4320 = vpop.trf.xlu0
      %v4321 = vpop.trf.xlu0
      %v4322 = vpop.trf.xlu0
      %v4323 = vpop.trf.xlu0
      %s4324 = scalar_lea.vmem %s231, 128
      %4325 = vst.msk [vmem:[%s4324] sm:$0xff] %vm4275, %v4308
      %4326 = vst.msk [vmem:[%s4324 + $0x8] sm:$0xff] %vm4275, %v4309
      %4327 = vst.msk [vmem:[%s4324 + $0x10] sm:$0xff] %vm4275, %v4310
      %4328 = vst.msk [vmem:[%s4324 + $0x18] sm:$0xff] %vm4275, %v4311
      %4329 = vst.msk [vmem:[%s4324 + $0x20] sm:$0xff] %vm4275, %v4312
      %4330 = vst.msk [vmem:[%s4324 + $0x28] sm:$0xff] %vm4275, %v4313
      %4331 = vst.msk [vmem:[%s4324 + $0x30] sm:$0xff] %vm4275, %v4314
      %4332 = vst.msk [vmem:[%s4324 + $0x38] sm:$0xff] %vm4275, %v4315
      %4333 = vst.msk [vmem:[%s4324 + $0x40] sm:$0xff] %vm4275, %v4316
      %4334 = vst.msk [vmem:[%s4324 + $0x48] sm:$0xff] %vm4275, %v4317
      %4335 = vst.msk [vmem:[%s4324 + $0x50] sm:$0xff] %vm4275, %v4318
      %4336 = vst.msk [vmem:[%s4324 + $0x58] sm:$0xff] %vm4275, %v4319
      %4337 = vst.msk [vmem:[%s4324 + $0x60] sm:$0xff] %vm4275, %v4320
      %4338 = vst.msk [vmem:[%s4324 + $0x68] sm:$0xff] %vm4275, %v4321
      %4339 = vst.msk [vmem:[%s4324 + $0x70] sm:$0xff] %vm4275, %v4322
      %4340 = vst.msk [vmem:[%s4324 + $0x78] sm:$0xff] %vm4275, %v4323
      %4341 = vxpose.xlu0.b32.start [1/16] %v4227, 128
      %4342 = vxpose.xlu0.b32.cont [2/16] %v4228, 128
      %4343 = vxpose.xlu0.b32.cont [3/16] %v4229, 128
      %4344 = vxpose.xlu0.b32.cont [4/16] %v4230, 128
      %4345 = vxpose.xlu0.b32.cont [5/16] %v4231, 128
      %4346 = vxpose.xlu0.b32.cont [6/16] %v4232, 128
      %4347 = vxpose.xlu0.b32.cont [7/16] %v4233, 128
      %4348 = vxpose.xlu0.b32.cont [8/16] %v4234, 128
      %4349 = vxpose.xlu0.b32.cont [9/16] 0.0, 128
      %4350 = vxpose.xlu0.b32.cont [10/16] 0.0, 128
      %4351 = vxpose.xlu0.b32.cont [11/16] 0.0, 128
      %4352 = vxpose.xlu0.b32.cont [12/16] 0.0, 128
      %4353 = vxpose.xlu0.b32.cont [13/16] 0.0, 128
      %4354 = vxpose.xlu0.b32.cont [14/16] 0.0, 128
      %4355 = vxpose.xlu0.b32.cont [15/16] 0.0, 128
      %4356 = vxpose.xlu0.b32.end [16/16] 0.0, 128
      %v4357 = vpop.trf.xlu0
      %v4358 = vpop.trf.xlu0
      %v4359 = vpop.trf.xlu0
      %v4360 = vpop.trf.xlu0
      %v4361 = vpop.trf.xlu0
      %v4362 = vpop.trf.xlu0
      %v4363 = vpop.trf.xlu0
      %v4364 = vpop.trf.xlu0
      %v4365 = vpop.trf.xlu0
      %v4366 = vpop.trf.xlu0
      %v4367 = vpop.trf.xlu0
      %v4368 = vpop.trf.xlu0
      %v4369 = vpop.trf.xlu0
      %v4370 = vpop.trf.xlu0
      %v4371 = vpop.trf.xlu0
      %v4372 = vpop.trf.xlu0
      %s4373 = scalar_lea.vmem %s231, 256
      %4374 = vst.msk [vmem:[%s4373] sm:$0xff] %vm4275, %v4357
      %4375 = vst.msk [vmem:[%s4373 + $0x8] sm:$0xff] %vm4275, %v4358
      %4376 = vst.msk [vmem:[%s4373 + $0x10] sm:$0xff] %vm4275, %v4359
      %4377 = vst.msk [vmem:[%s4373 + $0x18] sm:$0xff] %vm4275, %v4360
      %4378 = vst.msk [vmem:[%s4373 + $0x20] sm:$0xff] %vm4275, %v4361
      %4379 = vst.msk [vmem:[%s4373 + $0x28] sm:$0xff] %vm4275, %v4362
      %4380 = vst.msk [vmem:[%s4373 + $0x30] sm:$0xff] %vm4275, %v4363
      %4381 = vst.msk [vmem:[%s4373 + $0x38] sm:$0xff] %vm4275, %v4364
      %4382 = vst.msk [vmem:[%s4373 + $0x40] sm:$0xff] %vm4275, %v4365
      %4383 = vst.msk [vmem:[%s4373 + $0x48] sm:$0xff] %vm4275, %v4366
      %4384 = vst.msk [vmem:[%s4373 + $0x50] sm:$0xff] %vm4275, %v4367
      %4385 = vst.msk [vmem:[%s4373 + $0x58] sm:$0xff] %vm4275, %v4368
      %4386 = vst.msk [vmem:[%s4373 + $0x60] sm:$0xff] %vm4275, %v4369
      %4387 = vst.msk [vmem:[%s4373 + $0x68] sm:$0xff] %vm4275, %v4370
      %4388 = vst.msk [vmem:[%s4373 + $0x70] sm:$0xff] %vm4275, %v4371
      %4389 = vst.msk [vmem:[%s4373 + $0x78] sm:$0xff] %vm4275, %v4372
      %4390 = vxpose.xlu0.b32.start [1/16] %v4235, 128
      %4391 = vxpose.xlu0.b32.cont [2/16] %v4236, 128
      %4392 = vxpose.xlu0.b32.cont [3/16] %v4237, 128
      %4393 = vxpose.xlu0.b32.cont [4/16] %v4238, 128
      %4394 = vxpose.xlu0.b32.cont [5/16] %v4239, 128
      %4395 = vxpose.xlu0.b32.cont [6/16] %v4240, 128
      %4396 = vxpose.xlu0.b32.cont [7/16] %v4241, 128
      %4397 = vxpose.xlu0.b32.cont [8/16] %v4242, 128
      %4398 = vxpose.xlu0.b32.cont [9/16] 0.0, 128
      %4399 = vxpose.xlu0.b32.cont [10/16] 0.0, 128
      %4400 = vxpose.xlu0.b32.cont [11/16] 0.0, 128
      %4401 = vxpose.xlu0.b32.cont [12/16] 0.0, 128
      %4402 = vxpose.xlu0.b32.cont [13/16] 0.0, 128
      %4403 = vxpose.xlu0.b32.cont [14/16] 0.0, 128
      %4404 = vxpose.xlu0.b32.cont [15/16] 0.0, 128
      %4405 = vxpose.xlu0.b32.end [16/16] 0.0, 128
      %v4406 = vpop.trf.xlu0
      %v4407 = vpop.trf.xlu0
      %v4408 = vpop.trf.xlu0
      %v4409 = vpop.trf.xlu0
      %v4410 = vpop.trf.xlu0
      %v4411 = vpop.trf.xlu0
      %v4412 = vpop.trf.xlu0
      %v4413 = vpop.trf.xlu0
      %v4414 = vpop.trf.xlu0
      %v4415 = vpop.trf.xlu0
      %v4416 = vpop.trf.xlu0
      %v4417 = vpop.trf.xlu0
      %v4418 = vpop.trf.xlu0
      %v4419 = vpop.trf.xlu0
      %v4420 = vpop.trf.xlu0
      %v4421 = vpop.trf.xlu0
      %s4422 = scalar_lea.vmem %s231, 384
      %4423 = vst.msk [vmem:[%s4422] sm:$0xff] %vm4275, %v4406
      %4424 = vst.msk [vmem:[%s4422 + $0x8] sm:$0xff] %vm4275, %v4407
      %4425 = vst.msk [vmem:[%s4422 + $0x10] sm:$0xff] %vm4275, %v4408
      %4426 = vst.msk [vmem:[%s4422 + $0x18] sm:$0xff] %vm4275, %v4409
      %4427 = vst.msk [vmem:[%s4422 + $0x20] sm:$0xff] %vm4275, %v4410
      %4428 = vst.msk [vmem:[%s4422 + $0x28] sm:$0xff] %vm4275, %v4411
      %4429 = vst.msk [vmem:[%s4422 + $0x30] sm:$0xff] %vm4275, %v4412
      %4430 = vst.msk [vmem:[%s4422 + $0x38] sm:$0xff] %vm4275, %v4413
      %4431 = vst.msk [vmem:[%s4422 + $0x40] sm:$0xff] %vm4275, %v4414
      %4432 = vst.msk [vmem:[%s4422 + $0x48] sm:$0xff] %vm4275, %v4415
      %4433 = vst.msk [vmem:[%s4422 + $0x50] sm:$0xff] %vm4275, %v4416
      %4434 = vst.msk [vmem:[%s4422 + $0x58] sm:$0xff] %vm4275, %v4417
      %4435 = vst.msk [vmem:[%s4422 + $0x60] sm:$0xff] %vm4275, %v4418
      %4436 = vst.msk [vmem:[%s4422 + $0x68] sm:$0xff] %vm4275, %v4419
      %4437 = vst.msk [vmem:[%s4422 + $0x70] sm:$0xff] %vm4275, %v4420
      %4438 = vst.msk [vmem:[%s4422 + $0x78] sm:$0xff] %vm4275, %v4421
      %s4439 = smul.u32 4, %s16
      %p4440 = scmp.lt.s32.totalorder %s4439, 15
      %s4441 = scalar_select %p4440, %s4439, 15
      %s4442 = smul.addr %s4441, 16
      %s4443 = smul.addr %s4442, 8
      %s4444 = scalar_lea.vmem %s5, %s4443
      // Predicated region
      $region41: #{causal_conv_block.1} parent=39 // pred_check
        %p4445 = pneg %p144
      $region42: #{causal_conv_block.1} parent=39 // pred_check_branch
        %4447 = sbr.rel (%p4445) target = $region44
      $region43: #{causal_conv_block.1} parent=39 // pred_region
        %s4448 = smul.u32 4, %s16
      $region44: #{causal_conv_block.1} parent=39 // pred_fallthru
        _
    $region40: #{causal_conv_block.1} parent=5 // pred_fallthru
      _
    %p4449 = scmp.le.s32.totalorder 2, %s11
    // Predicated region
    $region45: #{causal_conv_block.1} parent=5 // pred_check
      %p4450 = pneg %p4449
    $region46: #{causal_conv_block.1} parent=5 // pred_check_branch
      %4452 = sbr.rel (%p4450) target = $region48
    $region47: #{causal_conv_block.1} parent=5 // pred_region
      %s4453 = ssub.s32 %s11, 2
      // Predicated region
      $region49: #{causal_conv_block.1} parent=47 // pred_check
        %p4454 = pneg %p150
      $region50: #{causal_conv_block.1} parent=47 // pred_check_branch
        %4456 = sbr.rel (%p4454) target = $region52
      $region51: #{causal_conv_block.1} parent=47 // pred_region
        %s4457 = smul.u32 4, %s17
        %p4458 = scmp.lt.s32.totalorder %s4457, 15
        %s4459 = scalar_select %p4458, %s4457, 15
        %s4460 = smul.addr %s4459, 16
        %s4461 = smul.addr %s4460, 8
        %s4462 = scalar_lea.vmem %s5, %s4461
      $region52: #{causal_conv_block.1} parent=47 // pred_fallthru
        _
    $region48: #{causal_conv_block.1} parent=5 // pred_fallthru
      _
  $region6: #{causal_conv_block.1} parent=0 // loop_footer
    %s15 = sadd.s32 1, %s11
  $region7: #{causal_conv_block.1} parent=0 // loop_footer_branch
    %10 = sbr.rel target = $region3
  $region8: #{causal_conv_block.1} parent=0 // loop_exit
    _

// kernel: causal_conv_block.1
$region0: #{causal_conv_block.1}
  #allocation0 [shape = 'u32[]', space=smem, size = 0x4, offset = 0x4, fixed_abs, tag = 'smem constant byte address 0x4 - core index']
  #allocation1 [shape = 'u32[144,128]{1,0:T(1,128)}', space=vmem, size = 0x12000, scoped, tag = 'internal scratch']
  %s0 = inlined_call_operand.vmem [shape: f32[16,128,64], index: 0, kind: input, shape index: {}]
  %s1 = inlined_call_operand.vmem [shape: bf16[5,128,128], index: 1, kind: input, shape index: {}]
  %s2 = inlined_call_operand.vmem [shape: f32[1,128], index: 2, kind: input, shape index: {}]
  %s3 = inlined_call_operand.vmem [shape: bf16[5,128,128], index: 3, kind: input, shape index: {}]
  %s4 = inlined_call_operand.vmem [shape: f32[1,128], index: 4, kind: input, shape index: {}]
  %s5 = inlined_call_operand.vmem [shape: f32[16,128,64], index: 5, kind: output, shape index: {}]
  %s6 = sld [smem:[#allocation0]]
  $region53: #{causal_conv_block.1} parent=0
    _
  %s8 = ssub.s32 1, %s6
  %s9 = scalar_select 0, %s8, %s6
  loop: start=0, step=1, limit=6
  $region2: #{causal_conv_block.1} parent=0 // loop_pre_header
    _
  $region3: #{causal_conv_block.1} parent=0 // loop_header
    %s11 = sphi 0, %s15
    %p12 = scmp.ge.s32.totalorder %s11, 6
    %s21 = sphi 0, %s23
    %s24 = sphi 0, %s21
    %s25 = sphi 0, %s24
    %s41 = sphi 0, %s25
    %s45 = sphi 0, %s45
    %s47 = sphi 0, %s45
    %s48 = sphi 0, %s47
    %s62 = sphi 0, %s48
    %s66 = sphi 0, %s66
    %s68 = sphi 0, %s66
    %s69 = sphi 0, %s68
    %s83 = sphi 0, %s69
    %s87 = sphi 0, %s87
    %s89 = sphi 0, %s87
    %s90 = sphi 0, %s89
    %s104 = sphi 0, %s90
    %s108 = sphi 0, %s108
    %s110 = sphi 0, %s108
    %s111 = sphi 0, %s110
    %s125 = sphi 0, %s111
    %s131 = sphi 0, %s133
    %s134 = sphi 0, %s131
    %s135 = sphi 0, %s134
    %s151 = sphi 0, %s135
  $region4: #{causal_conv_block.1} parent=0 // loop_header_branch
    %14 = sbr.rel (%p12) target = $region8
  $region5: #{causal_conv_block.1} parent=0 // loop_body
    %s16 = ssub.s32 %s11, 1
    %s17 = ssub.s32 %s11, 2
    %s18 = sadd.s32 %s11, 1
    %s19 = ssub.s32 %s11, %s18
    %p20 = scmp.eq.s32.totalorder %s19, 0
    %s22 = sadd.s32 %s21, 1
    %s23 = scalar_select %p20, %s21, %s22
    %p26 = pneg %p20
    %p27 = scmp.eq.s32.totalorder %s11, 3
    %p28 = por %p26, %p27
    %p29 = scmp.ne.s32.totalorder %s21, %s24
    %p30 = scmp.eq.s32.totalorder %s11, 0
    %p31 = por %p29, %p30
    %p32 = scmp.ne.s32.totalorder %s21, %s24
    %p33 = scmp.eq.s32.totalorder %s16, 3
    %p34 = por %p32, %p33
    %p35 = scmp.ne.s32.totalorder %s24, %s25
    %p36 = scmp.eq.s32.totalorder %s16, 0
    %p37 = por %p35, %p36
    %p38 = scmp.ne.s32.totalorder %s24, %s25
    %p39 = scmp.eq.s32.totalorder %s17, 3
    %p40 = por %p38, %p39
    %p42 = scmp.ne.s32.totalorder %s25, %s41
    %p43 = scmp.eq.s32.totalorder %s17, 0
    %p44 = por %p42, %p43
    %s46 = sadd.s32 %s45, 1
    %p49 = scmp.eq.s32.totalorder %s11, 3
    %p50 = scmp.ne.s32.totalorder %s45, %s47
    %p51 = scmp.eq.s32.totalorder %s11, 0
    %p52 = por %p50, %p51
    %p53 = scmp.ne.s32.totalorder %s45, %s47
    %p54 = scmp.eq.s32.totalorder %s16, 3
    %p55 = por %p53, %p54
    %p56 = scmp.ne.s32.totalorder %s47, %s48
    %p57 = scmp.eq.s32.totalorder %s16, 0
    %p58 = por %p56, %p57
    %p59 = scmp.ne.s32.totalorder %s47, %s48
    %p60 = scmp.eq.s32.totalorder %s17, 3
    %p61 = por %p59, %p60
    %p63 = scmp.ne.s32.totalorder %s48, %s62
    %p64 = scmp.eq.s32.totalorder %s17, 0
    %p65 = por %p63, %p64
    %s67 = sadd.s32 %s66, 1
    %p70 = scmp.eq.s32.totalorder %s11, 3
    %p71 = scmp.ne.s32.totalorder %s66, %s68
    %p72 = scmp.eq.s32.totalorder %s11, 0
    %p73 = por %p71, %p72
    %p74 = scmp.ne.s32.totalorder %s66, %s68
    %p75 = scmp.eq.s32.totalorder %s16, 3
    %p76 = por %p74, %p75
    %p77 = scmp.ne.s32.totalorder %s68, %s69
    %p78 = scmp.eq.s32.totalorder %s16, 0
    %p79 = por %p77, %p78
    %p80 = scmp.ne.s32.totalorder %s68, %s69
    %p81 = scmp.eq.s32.totalorder %s17, 3
    %p82 = por %p80, %p81
    %p84 = scmp.ne.s32.totalorder %s69, %s83
    %p85 = scmp.eq.s32.totalorder %s17, 0
    %p86 = por %p84, %p85
    %s88 = sadd.s32 %s87, 1
    %p91 = scmp.eq.s32.totalorder %s11, 3
    %p92 = scmp.ne.s32.totalorder %s87, %s89
    %p93 = scmp.eq.s32.totalorder %s11, 0
    %p94 = por %p92, %p93
    %p95 = scmp.ne.s32.totalorder %s87, %s89
    %p96 = scmp.eq.s32.totalorder %s16, 3
    %p97 = por %p95, %p96
    %p98 = scmp.ne.s32.totalorder %s89, %s90
    %p99 = scmp.eq.s32.totalorder %s16, 0
    %p100 = por %p98, %p99
    %p101 = scmp.ne.s32.totalorder %s89, %s90
    %p102 = scmp.eq.s32.totalorder %s17, 3
    %p103 = por %p101, %p102
    %p105 = scmp.ne.s32.totalorder %s90, %s104
    %p106 = scmp.eq.s32.totalorder %s17, 0
    %p107 = por %p105, %p106
    %s109 = sadd.s32 %s108, 1
    %p112 = scmp.eq.s32.totalorder %s11, 3
    %p113 = scmp.ne.s32.totalorder %s108, %s110
    %p114 = scmp.eq.s32.totalorder %s11, 0
    %p115 = por %p113, %p114
    %p116 = scmp.ne.s32.totalorder %s108, %s110
    %p117 = scmp.eq.s32.totalorder %s16, 3
    %p118 = por %p116, %p117
    %p119 = scmp.ne.s32.totalorder %s110, %s111
    %p120 = scmp.eq.s32.totalorder %s16, 0
    %p121 = por %p119, %p120
    %p122 = scmp.ne.s32.totalorder %s110, %s111
    %p123 = scmp.eq.s32.totalorder %s17, 3
    %p124 = por %p122, %p123
    %p126 = scmp.ne.s32.totalorder %s111, %s125
    %p127 = scmp.eq.s32.totalorder %s17, 0
    %p128 = por %p126, %p127
    %s129 = ssub.s32 %s11, %s18
    %p130 = scmp.eq.s32.totalorder %s129, 0
    %s132 = sadd.s32 %s131, 1
    %s133 = scalar_select %p130, %s131, %s132
    %p136 = pneg %p130
    %p137 = scmp.eq.s32.totalorder %s11, 3
    %p138 = por %p136, %p137
    %p139 = scmp.ne.s32.totalorder %s131, %s134
    %p140 = scmp.eq.s32.totalorder %s11, 0
    %p141 = por %p139, %p140
    %p142 = scmp.ne.s32.totalorder %s131, %s134
    %p143 = scmp.eq.s32.totalorder %s16, 3
    %p144 = por %p142, %p143
    %p145 = scmp.ne.s32.totalorder %s134, %s135
    %p146 = scmp.eq.s32.totalorder %s16, 0
    %p147 = por %p145, %p146
    %p148 = scmp.ne.s32.totalorder %s134, %s135
    %p149 = scmp.eq.s32.totalorder %s17, 3
    %p150 = por %p148, %p149
    %p152 = scmp.ne.s32.totalorder %s135, %s151
    %p153 = scmp.eq.s32.totalorder %s17, 0
    %p154 = por %p152, %p153
    %p155 = scmp.le.s32.totalorder 1, %s11
    %p156 = scmp.lt.s32.totalorder %s11, 5
    %p157 = pnand %p155, %p156
    %p158 = pneg %p157
    // Predicated region
    $region9: #{causal_conv_block.1} parent=5 // pred_check
      _
    $region10: #{causal_conv_block.1} parent=5 // pred_check_branch
      %160 = sbr.rel (%p157) target = $region12
    $region11: #{causal_conv_block.1} parent=5 // pred_region
      %s161 = ssub.s32 %s11, 1
      // Predicated region
      $region13: #{causal_conv_block.1} parent=11 // pred_check
        %p162 = pneg %p58
      $region14: #{causal_conv_block.1} parent=11 // pred_check_branch
        %164 = sbr.rel (%p162) target = $region16
      $region15: #{causal_conv_block.1} parent=11 // pred_region
        _
      $region16: #{causal_conv_block.1} parent=11 // pred_fallthru
        _
      // Predicated region
      $region17: #{causal_conv_block.1} parent=11 // pred_check
        %p165 = pneg %p79
      $region18: #{causal_conv_block.1} parent=11 // pred_check_branch
        %167 = sbr.rel (%p165) target = $region20
      $region19: #{causal_conv_block.1} parent=11 // pred_region
        _
      $region20: #{causal_conv_block.1} parent=11 // pred_fallthru
        _
      // Predicated region
      $region21: #{causal_conv_block.1} parent=11 // pred_check
        %p168 = pneg %p100
      $region22: #{causal_conv_block.1} parent=11 // pred_check_branch
        %170 = sbr.rel (%p168) target = $region24
      $region23: #{causal_conv_block.1} parent=11 // pred_region
        _
      $region24: #{causal_conv_block.1} parent=11 // pred_fallthru
        _
      // Predicated region
      $region25: #{causal_conv_block.1} parent=11 // pred_check
        %p171 = pneg %p121
      $region26: #{causal_conv_block.1} parent=11 // pred_check_branch
        %173 = sbr.rel (%p171) target = $region28
      $region27: #{causal_conv_block.1} parent=11 // pred_region
        _
      $region28: #{causal_conv_block.1} parent=11 // pred_fallthru
        _
    $region12: #{causal_conv_block.1} parent=5 // pred_fallthru
      _
    %p174 = scmp.lt.s32.totalorder %s11, 4
    // Predicated region
    $region29: #{causal_conv_block.1} parent=5 // pred_check
      %p175 = pneg %p174
    $region30: #{causal_conv_block.1} parent=5 // pred_check_branch
      %177 = sbr.rel (%p175) target = $region32
    $region31: #{causal_conv_block.1} parent=5 // pred_region
      // Predicated region
      $region33: #{causal_conv_block.1} parent=31 // pred_check
        %p178 = pneg %p31
      $region34: #{causal_conv_block.1} parent=31 // pred_check_branch
        %180 = sbr.rel (%p178) target = $region36
      $region35: #{causal_conv_block.1} parent=31 // pred_region
        %s181 = smul.u32 4, %s11
        %p182 = scmp.lt.s32.totalorder %s181, 15
        %s183 = scalar_select %p182, %s181, 15
        %s184 = smul.addr %s183, 16
        %s185 = smul.addr %s184, 8
        %s186 = scalar_lea.vmem %s0, %s185
        %s187 = smul.u32 4, %s11
      $region36: #{causal_conv_block.1} parent=31 // pred_fallthru
        _
    $region32: #{causal_conv_block.1} parent=5 // pred_fallthru
      _
    %p188 = scmp.le.s32.totalorder 1, %s11
    %p189 = scmp.lt.s32.totalorder %s11, 5
    %p190 = pnand %p188, %p189
    %p191 = pneg %p190
    // Predicated region
    $region37: #{causal_conv_block.1} parent=5 // pred_check
      _
    $region38: #{causal_conv_block.1} parent=5 // pred_check_branch
      %193 = sbr.rel (%p190) target = $region40
    $region39: #{causal_conv_block.1} parent=5 // pred_region
      %s194 = ssub.s32 %s11, 1
      %s195 = smul.u32 4, %s16
      %p196 = scmp.lt.s32.totalorder %s195, 15
      %s197 = scalar_select %p196, %s195, 15
      %s198 = smul.addr %s197, 16
      %s199 = smul.addr %s198, 8
      %s200 = scalar_lea.vmem %s0, %s199
      %p201 = pneg %p37
      %p202 = pneg %p34
      %p203 = pneg %p58
      %p204 = pneg %p55
      %p205 = pneg %p79
      %p206 = pneg %p76
      %p207 = pneg %p100
      %p208 = pneg %p97
      %p209 = pneg %p121
      %p210 = pneg %p118
      %p211 = pneg %p147
      %p212 = pneg %p144
      %s213 = smul.u32 4, %s16
      %p214 = scmp.lt.s32.totalorder %s213, 15
      %s215 = scalar_select %p214, %s213, 15
      %s216 = smul.addr %s215, 16
      %s217 = smul.addr %s216, 8
      %s218 = scalar_lea.vmem %s5, %s217
      %s219 = smul.u32 4, %s16
      %p220 = scmp.lt.s32.totalorder %s219, 15
      %s221 = scalar_select %p220, %s219, 15
      %s222 = smul.addr %s221, 16
      %s223 = smul.addr %s222, 8
      %s224 = scalar_lea.vmem %s0, %s223
      %s225 = smul.u32 4, %s16
      %s226 = smul.u32 4, %s16
      %p227 = scmp.lt.s32.totalorder %s226, 15
      %s228 = scalar_select %p227, %s226, 15
      %s229 = smul.addr %s228, 16
      %s230 = smul.addr %s229, 8
      %s231 = scalar_lea.vmem %s5, %s230
      %s232 = smul.u32 4, %s16
      %v234 = vld [vmem:[%s224] sm:$0xff]
      %v235 = vld [vmem:[%s224 + $0x8] sm:$0xff]
      %v236 = vld [vmem:[%s224 + $0x10] sm:$0xff]
      %v237 = vld [vmem:[%s224 + $0x18] sm:$0xff]
      %v238 = vld [vmem:[%s224 + $0x20] sm:$0xff]
      %v239 = vld [vmem:[%s224 + $0x28] sm:$0xff]
      %v240 = vld [vmem:[%s224 + $0x30] sm:$0xff]
      %v241 = vld [vmem:[%s224 + $0x38] sm:$0xff]
      %v242 = vld [vmem:[%s224 + $0x40] sm:$0xff]
      %v243 = vld [vmem:[%s224 + $0x48] sm:$0xff]
      %v244 = vld [vmem:[%s224 + $0x50] sm:$0xff]
      %v245 = vld [vmem:[%s224 + $0x58] sm:$0xff]
      %v246 = vld [vmem:[%s224 + $0x60] sm:$0xff]
      %v247 = vld [vmem:[%s224 + $0x68] sm:$0xff]
      %v248 = vld [vmem:[%s224 + $0x70] sm:$0xff]
      %v249 = vld [vmem:[%s224 + $0x78] sm:$0xff]
      %250 = vxpose.xlu0.b32.start [1/16] %v234, 128
      %251 = vxpose.xlu0.b32.cont [2/16] %v235, 128
      %252 = vxpose.xlu0.b32.cont [3/16] %v236, 128
      %253 = vxpose.xlu0.b32.cont [4/16] %v237, 128
      %254 = vxpose.xlu0.b32.cont [5/16] %v238, 128
      %255 = vxpose.xlu0.b32.cont [6/16] %v239, 128
      %256 = vxpose.xlu0.b32.cont [7/16] %v240, 128
      %257 = vxpose.xlu0.b32.cont [8/16] %v241, 128
      %258 = vxpose.xlu0.b32.cont [9/16] %v242, 128
      %259 = vxpose.xlu0.b32.cont [10/16] %v243, 128
      %260 = vxpose.xlu0.b32.cont [11/16] %v244, 128
      %261 = vxpose.xlu0.b32.cont [12/16] %v245, 128
      %262 = vxpose.xlu0.b32.cont [13/16] %v246, 128
      %263 = vxpose.xlu0.b32.cont [14/16] %v247, 128
      %264 = vxpose.xlu0.b32.cont [15/16] %v248, 128
      %265 = vxpose.xlu0.b32.end [16/16] %v249, 128
      %v266 = vpop.trf.xlu0
      %v267 = vpop.trf.xlu0
      %v268 = vpop.trf.xlu0
      %v269 = vpop.trf.xlu0
      %v270 = vpop.trf.xlu0
      %v271 = vpop.trf.xlu0
      %v272 = vpop.trf.xlu0
      %v273 = vpop.trf.xlu0
      %v274 = vpop.trf.xlu0
      %v275 = vpop.trf.xlu0
      %v276 = vpop.trf.xlu0
      %v277 = vpop.trf.xlu0
      %v278 = vpop.trf.xlu0
      %v279 = vpop.trf.xlu0
      %v280 = vpop.trf.xlu0
      %v281 = vpop.trf.xlu0
      %v282 = vlaneseq
      %v283 = vshrl.u32 %v282, 7
      %v284 = vsub.s32 0, %v283
      %v285 = vrot.slane %v266, %v284
      %v286 = vlaneseq
      %v287 = vshrl.u32 %v286, 7
      %v288 = vsub.s32 7, %v287
      %v289 = vrot.slane %v273, %v288
      %s290 = scalar_lea.vmem %s224, 128
      %v291 = vld [vmem:[%s290] sm:$0xff]
      %v292 = vld [vmem:[%s290 + $0x8] sm:$0xff]
      %v293 = vld [vmem:[%s290 + $0x10] sm:$0xff]
      %v294 = vld [vmem:[%s290 + $0x18] sm:$0xff]
      %v295 = vld [vmem:[%s290 + $0x20] sm:$0xff]
      %v296 = vld [vmem:[%s290 + $0x28] sm:$0xff]
      %v297 = vld [vmem:[%s290 + $0x30] sm:$0xff]
      %v298 = vld [vmem:[%s290 + $0x38] sm:$0xff]
      %v299 = vld [vmem:[%s290 + $0x40] sm:$0xff]
      %v300 = vld [vmem:[%s290 + $0x48] sm:$0xff]
      %v301 = vld [vmem:[%s290 + $0x50] sm:$0xff]
      %v302 = vld [vmem:[%s290 + $0x58] sm:$0xff]
      %v303 = vld [vmem:[%s290 + $0x60] sm:$0xff]
      %v304 = vld [vmem:[%s290 + $0x68] sm:$0xff]
      %v305 = vld [vmem:[%s290 + $0x70] sm:$0xff]
      %v306 = vld [vmem:[%s290 + $0x78] sm:$0xff]
      %307 = vxpose.xlu0.b32.start [1/16] %v291, 128
      %308 = vxpose.xlu0.b32.cont [2/16] %v292, 128
      %309 = vxpose.xlu0.b32.cont [3/16] %v293, 128
      %310 = vxpose.xlu0.b32.cont [4/16] %v294, 128
      %311 = vxpose.xlu0.b32.cont [5/16] %v295, 128
      %312 = vxpose.xlu0.b32.cont [6/16] %v296, 128
      %313 = vxpose.xlu0.b32.cont [7/16] %v297, 128
      %314 = vxpose.xlu0.b32.cont [8/16] %v298, 128
      %315 = vxpose.xlu0.b32.cont [9/16] %v299, 128
      %316 = vxpose.xlu0.b32.cont [10/16] %v300, 128
      %317 = vxpose.xlu0.b32.cont [11/16] %v301, 128
      %318 = vxpose.xlu0.b32.cont [12/16] %v302, 128
      %319 = vxpose.xlu0.b32.cont [13/16] %v303, 128
      %320 = vxpose.xlu0.b32.cont [14/16] %v304, 128
      %321 = vxpose.xlu0.b32.cont [15/16] %v305, 128
      %322 = vxpose.xlu0.b32.end [16/16] %v306, 128
      %v323 = vpop.trf.xlu0
      %v324 = vpop.trf.xlu0
      %v325 = vpop.trf.xlu0
      %v326 = vpop.trf.xlu0
      %v327 = vpop.trf.xlu0
      %v328 = vpop.trf.xlu0
      %v329 = vpop.trf.xlu0
      %v330 = vpop.trf.xlu0
      %v331 = vpop.trf.xlu0
      %v332 = vpop.trf.xlu0
      %v333 = vpop.trf.xlu0
      %v334 = vpop.trf.xlu0
      %v335 = vpop.trf.xlu0
      %v336 = vpop.trf.xlu0
      %v337 = vpop.trf.xlu0
      %v338 = vpop.trf.xlu0
      %v339 = vlaneseq
      %v340 = vshrl.u32 %v339, 7
      %v341 = vsub.s32 0, %v340
      %v342 = vrot.slane %v323, %v341
      %v343 = vlaneseq
      %v344 = vshrl.u32 %v343, 7
      %v345 = vsub.s32 7, %v344
      %v346 = vrot.slane %v330, %v345
      %s347 = scalar_lea.vmem %s224, 256
      %v348 = vld [vmem:[%s347] sm:$0xff]
      %v349 = vld [vmem:[%s347 + $0x8] sm:$0xff]
      %v350 = vld [vmem:[%s347 + $0x10] sm:$0xff]
      %v351 = vld [vmem:[%s347 + $0x18] sm:$0xff]
      %v352 = vld [vmem:[%s347 + $0x20] sm:$0xff]
      %v353 = vld [vmem:[%s347 + $0x28] sm:$0xff]
      %v354 = vld [vmem:[%s347 + $0x30] sm:$0xff]
      %v355 = vld [vmem:[%s347 + $0x38] sm:$0xff]
      %v356 = vld [vmem:[%s347 + $0x40] sm:$0xff]
      %v357 = vld [vmem:[%s347 + $0x48] sm:$0xff]
      %v358 = vld [vmem:[%s347 + $0x50] sm:$0xff]
      %v359 = vld [vmem:[%s347 + $0x58] sm:$0xff]
      %v360 = vld [vmem:[%s347 + $0x60] sm:$0xff]
      %v361 = vld [vmem:[%s347 + $0x68] sm:$0xff]
      %v362 = vld [vmem:[%s347 + $0x70] sm:$0xff]
      %v363 = vld [vmem:[%s347 + $0x78] sm:$0xff]
      %364 = vxpose.xlu0.b32.start [1/16] %v348, 128
      %365 = vxpose.xlu0.b32.cont [2/16] %v349, 128
      %366 = vxpose.xlu0.b32.cont [3/16] %v350, 128
      %367 = vxpose.xlu0.b32.cont [4/16] %v351, 128
      %368 = vxpose.xlu0.b32.cont [5/16] %v352, 128
      %369 = vxpose.xlu0.b32.cont [6/16] %v353, 128
      %370 = vxpose.xlu0.b32.cont [7/16] %v354, 128
      %371 = vxpose.xlu0.b32.cont [8/16] %v355, 128
      %372 = vxpose.xlu0.b32.cont [9/16] %v356, 128
      %373 = vxpose.xlu0.b32.cont [10/16] %v357, 128
      %374 = vxpose.xlu0.b32.cont [11/16] %v358, 128
      %375 = vxpose.xlu0.b32.cont [12/16] %v359, 128
      %376 = vxpose.xlu0.b32.cont [13/16] %v360, 128
      %377 = vxpose.xlu0.b32.cont [14/16] %v361, 128
      %378 = vxpose.xlu0.b32.cont [15/16] %v362, 128
      %379 = vxpose.xlu0.b32.end [16/16] %v363, 128
      %v380 = vpop.trf.xlu0
      %v381 = vpop.trf.xlu0
      %v382 = vpop.trf.xlu0
      %v383 = vpop.trf.xlu0
      %v384 = vpop.trf.xlu0
      %v385 = vpop.trf.xlu0
      %v386 = vpop.trf.xlu0
      %v387 = vpop.trf.xlu0
      %v388 = vpop.trf.xlu0
      %v389 = vpop.trf.xlu0
      %v390 = vpop.trf.xlu0
      %v391 = vpop.trf.xlu0
      %v392 = vpop.trf.xlu0
      %v393 = vpop.trf.xlu0
      %v394 = vpop.trf.xlu0
      %v395 = vpop.trf.xlu0
      %v396 = vlaneseq
      %v397 = vshrl.u32 %v396, 7
      %v398 = vsub.s32 0, %v397
      %v399 = vrot.slane %v380, %v398
      %v400 = vlaneseq
      %v401 = vshrl.u32 %v400, 7
      %v402 = vsub.s32 7, %v401
      %v403 = vrot.slane %v387, %v402
      %s404 = scalar_lea.vmem %s224, 384
      %v405 = vld [vmem:[%s404] sm:$0xff]
      %v406 = vld [vmem:[%s404 + $0x8] sm:$0xff]
      %v407 = vld [vmem:[%s404 + $0x10] sm:$0xff]
      %v408 = vld [vmem:[%s404 + $0x18] sm:$0xff]
      %v409 = vld [vmem:[%s404 + $0x20] sm:$0xff]
      %v410 = vld [vmem:[%s404 + $0x28] sm:$0xff]
      %v411 = vld [vmem:[%s404 + $0x30] sm:$0xff]
      %v412 = vld [vmem:[%s404 + $0x38] sm:$0xff]
      %v413 = vld [vmem:[%s404 + $0x40] sm:$0xff]
      %v414 = vld [vmem:[%s404 + $0x48] sm:$0xff]
      %v415 = vld [vmem:[%s404 + $0x50] sm:$0xff]
      %v416 = vld [vmem:[%s404 + $0x58] sm:$0xff]
      %v417 = vld [vmem:[%s404 + $0x60] sm:$0xff]
      %v418 = vld [vmem:[%s404 + $0x68] sm:$0xff]
      %v419 = vld [vmem:[%s404 + $0x70] sm:$0xff]
      %v420 = vld [vmem:[%s404 + $0x78] sm:$0xff]
      %421 = vxpose.xlu0.b32.start [1/16] %v405, 128
      %422 = vxpose.xlu0.b32.cont [2/16] %v406, 128
      %423 = vxpose.xlu0.b32.cont [3/16] %v407, 128
      %424 = vxpose.xlu0.b32.cont [4/16] %v408, 128
      %425 = vxpose.xlu0.b32.cont [5/16] %v409, 128
      %426 = vxpose.xlu0.b32.cont [6/16] %v410, 128
      %427 = vxpose.xlu0.b32.cont [7/16] %v411, 128
      %428 = vxpose.xlu0.b32.cont [8/16] %v412, 128
      %429 = vxpose.xlu0.b32.cont [9/16] %v413, 128
      %430 = vxpose.xlu0.b32.cont [10/16] %v414, 128
      %431 = vxpose.xlu0.b32.cont [11/16] %v415, 128
      %432 = vxpose.xlu0.b32.cont [12/16] %v416, 128
      %433 = vxpose.xlu0.b32.cont [13/16] %v417, 128
      %434 = vxpose.xlu0.b32.cont [14/16] %v418, 128
      %435 = vxpose.xlu0.b32.cont [15/16] %v419, 128
      %436 = vxpose.xlu0.b32.end [16/16] %v420, 128
      %v437 = vpop.trf.xlu0
      %v438 = vpop.trf.xlu0
      %v439 = vpop.trf.xlu0
      %v440 = vpop.trf.xlu0
      %v441 = vpop.trf.xlu0
      %v442 = vpop.trf.xlu0
      %v443 = vpop.trf.xlu0
      %v444 = vpop.trf.xlu0
      %v445 = vpop.trf.xlu0
      %v446 = vpop.trf.xlu0
      %v447 = vpop.trf.xlu0
      %v448 = vpop.trf.xlu0
      %v449 = vpop.trf.xlu0
      %v450 = vpop.trf.xlu0
      %v451 = vpop.trf.xlu0
      %v452 = vpop.trf.xlu0
      %v453 = vlaneseq
      %v454 = vshrl.u32 %v453, 7
      %v455 = vsub.s32 0, %v454
      %v456 = vrot.slane %v437, %v455
      %v457 = vlaneseq
      %v458 = vshrl.u32 %v457, 7
      %v459 = vsub.s32 7, %v458
      %v460 = vrot.slane %v444, %v459
      %vm469 = vcmask 1043456
      %v470 = vrot.slane %v266, 4
      %v471 = vrot.slane %v267, 4
      %v472 = vsel %vm469, %v470, %v471
      %v473 = vrot.slane %v268, 4
      %v474 = vsel %vm469, %v471, %v473
      %v475 = vrot.slane %v269, 4
      %v476 = vsel %vm469, %v473, %v475
      %v477 = vrot.slane %v270, 4
      %v478 = vsel %vm469, %v475, %v477
      %v479 = vrot.slane %v271, 4
      %v480 = vsel %vm469, %v477, %v479
      %v481 = vrot.slane %v272, 4
      %v482 = vsel %vm469, %v479, %v481
      %v483 = vrot.slane %v273, 4
      %v484 = vsel %vm469, %v481, %v483
      %v502 = vrot.slane %v323, 4
      %v503 = vrot.slane %v324, 4
      %v504 = vsel %vm469, %v502, %v503
      %v505 = vrot.slane %v325, 4
      %v506 = vsel %vm469, %v503, %v505
      %v507 = vrot.slane %v326, 4
      %v508 = vsel %vm469, %v505, %v507
      %v509 = vrot.slane %v327, 4
      %v510 = vsel %vm469, %v507, %v509
      %v511 = vrot.slane %v328, 4
      %v512 = vsel %vm469, %v509, %v511
      %v513 = vrot.slane %v329, 4
      %v514 = vsel %vm469, %v511, %v513
      %v515 = vrot.slane %v330, 4
      %v516 = vsel %vm469, %v513, %v515
      %v534 = vrot.slane %v380, 4
      %v535 = vrot.slane %v381, 4
      %v536 = vsel %vm469, %v534, %v535
      %v537 = vrot.slane %v382, 4
      %v538 = vsel %vm469, %v535, %v537
      %v539 = vrot.slane %v383, 4
      %v540 = vsel %vm469, %v537, %v539
      %v541 = vrot.slane %v384, 4
      %v542 = vsel %vm469, %v539, %v541
      %v543 = vrot.slane %v385, 4
      %v544 = vsel %vm469, %v541, %v543
      %v545 = vrot.slane %v386, 4
      %v546 = vsel %vm469, %v543, %v545
      %v547 = vrot.slane %v387, 4
      %v548 = vsel %vm469, %v545, %v547
      %v566 = vrot.slane %v437, 4
      %v567 = vrot.slane %v438, 4
      %v568 = vsel %vm469, %v566, %v567
      %v569 = vrot.slane %v439, 4
      %v570 = vsel %vm469, %v567, %v569
      %v571 = vrot.slane %v440, 4
      %v572 = vsel %vm469, %v569, %v571
      %v573 = vrot.slane %v441, 4
      %v574 = vsel %vm469, %v571, %v573
      %v575 = vrot.slane %v442, 4
      %v576 = vsel %vm469, %v573, %v575
      %v577 = vrot.slane %v443, 4
      %v578 = vsel %vm469, %v575, %v577
      %v579 = vrot.slane %v444, 4
      %v580 = vsel %vm469, %v577, %v579
      %v590 = vsel %vm469, %v285, %v470
      %v591 = vsel %vm469, %v483, %v289
      %v592 = vsel %vm469, %v342, %v502
      %v593 = vsel %vm469, %v515, %v346
      %v594 = vsel %vm469, %v399, %v534
      %v595 = vsel %vm469, %v547, %v403
      %v596 = vsel %vm469, %v456, %v566
      %v597 = vsel %vm469, %v579, %v460
      %v598 = vld [vmem:[%s2] sm:$0x1]
      %v600 = vlaneseq
      %v601 = vshrl.u32 %v600, 7
      %v602 = vsub.s32 0, %v601
      %v603 = vrot.slane %v598, %v602
      %v605 = vpack.c.bf16 %v472, %v590
      %v606 = vpack.c.bf16 %v476, %v474
      %v607 = vpack.c.bf16 %v480, %v478
      %v608 = vpack.c.bf16 %v484, %v482
      %v609 = vpack.c.bf16 %v592, %v591
      %v610 = vpack.c.bf16 %v506, %v504
      %v611 = vpack.c.bf16 %v510, %v508
      %v612 = vpack.c.bf16 %v514, %v512
      %v613 = vpack.c.bf16 %v593, %v516
      %v614 = vpack.c.bf16 %v536, %v594
      %v615 = vpack.c.bf16 %v540, %v538
      %v616 = vpack.c.bf16 %v544, %v542
      %v617 = vpack.c.bf16 %v548, %v546
      %v618 = vpack.c.bf16 %v596, %v595
      %v619 = vpack.c.bf16 %v570, %v568
      %v620 = vpack.c.bf16 %v574, %v572
      %v621 = vpack.c.bf16 %v578, %v576
      %v622 = vpack.c.bf16 %v597, %v580
      %v623 = vld [vmem:[%s1] sm:$0xf]
      %v624 = vld [vmem:[%s1 + $0x4] sm:$0xf]
      %v625 = vld [vmem:[%s1 + $0x8] sm:$0xf]
      %v626 = vld [vmem:[%s1 + $0xc] sm:$0xf]
      %v627 = vld [vmem:[%s1 + $0x10] sm:$0xf]
      %v628 = vld [vmem:[%s1 + $0x14] sm:$0xf]
      %v629 = vld [vmem:[%s1 + $0x18] sm:$0xf]
      %v630 = vld [vmem:[%s1 + $0x1c] sm:$0xf]
      %v631 = vld [vmem:[%s1 + $0x20] sm:$0xf]
      %v632 = vld [vmem:[%s1 + $0x24] sm:$0xf]
      %v633 = vld [vmem:[%s1 + $0x28] sm:$0xf]
      %v634 = vld [vmem:[%s1 + $0x2c] sm:$0xf]
      %v635 = vld [vmem:[%s1 + $0x30] sm:$0xf]
      %v636 = vld [vmem:[%s1 + $0x34] sm:$0xf]
      %v637 = vld [vmem:[%s1 + $0x38] sm:$0xf]
      %v638 = vld [vmem:[%s1 + $0x3c] sm:$0xf]
      %v655 = vunpack.c.l.b16 %v623
      %v656 = vunpack.c.l.b16 %v624
      %v657 = vunpack.c.l.b16 %v625
      %v658 = vunpack.c.l.b16 %v626
      %v659 = vunpack.c.l.b16 %v627
      %v660 = vunpack.c.l.b16 %v628
      %v661 = vunpack.c.l.b16 %v629
      %v662 = vunpack.c.l.b16 %v630
      %v663 = vunpack.c.l.b16 %v631
      %v664 = vunpack.c.l.b16 %v632
      %v665 = vunpack.c.l.b16 %v633
      %v666 = vunpack.c.l.b16 %v634
      %v667 = vunpack.c.l.b16 %v635
      %v668 = vunpack.c.l.b16 %v636
      %v669 = vunpack.c.l.b16 %v637
      %v670 = vunpack.c.l.b16 %v638
      %v671 = vpack.c.b16 %v656, %v655
      %v672 = vpack.c.b16 %v658, %v657
      %v673 = vpack.c.b16 %v660, %v659
      %v674 = vpack.c.b16 %v662, %v661
      %v675 = vpack.c.b16 %v664, %v663
      %v676 = vpack.c.b16 %v666, %v665
      %v677 = vpack.c.b16 %v668, %v667
      %v678 = vpack.c.b16 %v670, %v669
      %687 = vmatprep.subr.bf16.mxu0 0
      %688 = vmatpush1.bf16.msra.mxu0 %v678
      %689 = vmatprep.subr.bf16.mxu0 0
      %690 = vmatpush1.bf16.msra.mxu0 %v677
      %691 = vmatprep.subr.bf16.mxu0 0
      %692 = vmatpush1.bf16.msra.mxu0 %v676
      %693 = vmatprep.subr.bf16.mxu0 0
      %694 = vmatpush1.bf16.msra.mxu0 %v675
      %695 = vmatprep.subr.bf16.mxu0 0
      %696 = vmatpush1.bf16.msra.mxu0 %v674
      %697 = vmatprep.subr.bf16.mxu0 0
      %698 = vmatpush1.bf16.msra.mxu0 %v673
      %699 = vmatprep.subr.bf16.mxu0 0
      %700 = vmatpush1.bf16.msra.mxu0 %v672
      %701 = vmatprep.subr.bf16.mxu0 0
      %702 = vmatpush1.bf16.msra.mxu0 %v671
      %703 = vmatprep.subr.bf16.mxu0 0
      %704 = vmatpush2.bf16.msra.mxu0 0
      %705 = vmatprep.subr.bf16.mxu0 0
      %706 = vmatpush2.bf16.msra.mxu0 0
      %707 = vmatprep.subr.bf16.mxu0 0
      %708 = vmatpush2.bf16.msra.mxu0 0
      %709 = vmatprep.subr.bf16.mxu0 0
      %710 = vmatpush2.bf16.msra.mxu0 0
      %711 = vmatprep.subr.bf16.mxu0 0
      %712 = vmatpush2.bf16.msra.mxu0 0
      %713 = vmatprep.subr.bf16.mxu0 0
      %714 = vmatpush2.bf16.msra.mxu0 0
      %715 = vmatprep.subr.bf16.mxu0 0
      %716 = vmatpush2.bf16.msra.mxu0 0
      %717 = vmatprep.subr.bf16.mxu0 0
      %718 = vmatpush2.bf16.msra.mxu0 0
      %719 = vmatprep.mubr.bf16.mxu0 0
      %720 = vmatmul.mubr.bf16.gmra.mxu0 %v605
      %v721 = vpop.f32.mrf.mxu0
      %v722 = vadd.f32 0.0, %v721
      %v723 = vpop.f32.mrf.mxu0
      %v724 = vpop.f32.mrf.mxu0
      %v725 = vadd.f32 0.0, %v724
      %v726 = vpop.f32.mrf.mxu0
      %727 = vmatprep.mubr.bf16.mxu0 0
      %728 = vmatmul.mubr.bf16.gmra.mxu0 %v606
      %v729 = vpop.f32.mrf.mxu0
      %v730 = vadd.f32 0.0, %v729
      %v731 = vpop.f32.mrf.mxu0
      %v732 = vpop.f32.mrf.mxu0
      %v733 = vadd.f32 0.0, %v732
      %v734 = vpop.f32.mrf.mxu0
      %735 = vmatprep.mubr.bf16.mxu0 0
      %736 = vmatmul.mubr.bf16.gmra.mxu0 %v607
      %v737 = vpop.f32.mrf.mxu0
      %v738 = vadd.f32 0.0, %v737
      %v739 = vpop.f32.mrf.mxu0
      %v740 = vpop.f32.mrf.mxu0
      %v741 = vadd.f32 0.0, %v740
      %v742 = vpop.f32.mrf.mxu0
      %743 = vmatprep.mubr.bf16.mxu0 0
      %744 = vmatmul.mubr.bf16.gmra.mxu0 %v608
      %v745 = vpop.f32.mrf.mxu0
      %v746 = vadd.f32 0.0, %v745
      %v747 = vpop.f32.mrf.mxu0
      %v748 = vpop.f32.mrf.mxu0
      %v749 = vadd.f32 0.0, %v748
      %v750 = vpop.f32.mrf.mxu0
      %751 = vmatprep.mubr.bf16.mxu0 0
      %752 = vmatmul.mubr.bf16.gmra.mxu0 %v609
      %v753 = vpop.f32.mrf.mxu0
      %v754 = vadd.f32 0.0, %v753
      %v755 = vpop.f32.mrf.mxu0
      %v756 = vpop.f32.mrf.mxu0
      %v757 = vadd.f32 0.0, %v756
      %v758 = vpop.f32.mrf.mxu0
      %759 = vmatprep.mubr.bf16.mxu0 0
      %760 = vmatmul.mubr.bf16.gmra.mxu0 %v610
      %v761 = vpop.f32.mrf.mxu0
      %v762 = vadd.f32 0.0, %v761
      %v763 = vpop.f32.mrf.mxu0
      %v764 = vpop.f32.mrf.mxu0
      %v765 = vadd.f32 0.0, %v764
      %v766 = vpop.f32.mrf.mxu0
      %767 = vmatprep.mubr.bf16.mxu0 0
      %768 = vmatmul.mubr.bf16.gmra.mxu0 %v611
      %v769 = vpop.f32.mrf.mxu0
      %v770 = vadd.f32 0.0, %v769
      %v771 = vpop.f32.mrf.mxu0
      %v772 = vpop.f32.mrf.mxu0
      %v773 = vadd.f32 0.0, %v772
      %v774 = vpop.f32.mrf.mxu0
      %775 = vmatprep.mubr.bf16.mxu0 0
      %776 = vmatmul.mubr.bf16.gmra.mxu0 %v612
      %v777 = vpop.f32.mrf.mxu0
      %v778 = vadd.f32 0.0, %v777
      %v779 = vpop.f32.mrf.mxu0
      %v780 = vpop.f32.mrf.mxu0
      %v781 = vadd.f32 0.0, %v780
      %v782 = vpop.f32.mrf.mxu0
      %783 = vmatprep.mubr.bf16.mxu0 0
      %784 = vmatmul.mubr.bf16.gmra.mxu0 %v613
      %v785 = vpop.f32.mrf.mxu0
      %v786 = vadd.f32 0.0, %v785
      %v787 = vpop.f32.mrf.mxu0
      %v788 = vpop.f32.mrf.mxu0
      %v789 = vadd.f32 0.0, %v788
      %v790 = vpop.f32.mrf.mxu0
      %791 = vmatprep.mubr.bf16.mxu0 0
      %792 = vmatmul.mubr.bf16.gmra.mxu0 %v614
      %v793 = vpop.f32.mrf.mxu0
      %v794 = vadd.f32 0.0, %v793
      %v795 = vpop.f32.mrf.mxu0
      %v796 = vpop.f32.mrf.mxu0
      %v797 = vadd.f32 0.0, %v796
      %v798 = vpop.f32.mrf.mxu0
      %799 = vmatprep.mubr.bf16.mxu0 0
      %800 = vmatmul.mubr.bf16.gmra.mxu0 %v615
      %v801 = vpop.f32.mrf.mxu0
      %v802 = vadd.f32 0.0, %v801
      %v803 = vpop.f32.mrf.mxu0
      %v804 = vpop.f32.mrf.mxu0
      %v805 = vadd.f32 0.0, %v804
      %v806 = vpop.f32.mrf.mxu0
      %807 = vmatprep.mubr.bf16.mxu0 0
      %808 = vmatmul.mubr.bf16.gmra.mxu0 %v616
      %v809 = vpop.f32.mrf.mxu0
      %v810 = vadd.f32 0.0, %v809
      %v811 = vpop.f32.mrf.mxu0
      %v812 = vpop.f32.mrf.mxu0
      %v813 = vadd.f32 0.0, %v812
      %v814 = vpop.f32.mrf.mxu0
      %815 = vmatprep.mubr.bf16.mxu0 0
      %816 = vmatmul.mubr.bf16.gmra.mxu0 %v617
      %v817 = vpop.f32.mrf.mxu0
      %v818 = vadd.f32 0.0, %v817
      %v819 = vpop.f32.mrf.mxu0
      %v820 = vpop.f32.mrf.mxu0
      %v821 = vadd.f32 0.0, %v820
      %v822 = vpop.f32.mrf.mxu0
      %823 = vmatprep.mubr.bf16.mxu0 0
      %824 = vmatmul.mubr.bf16.gmra.mxu0 %v618
      %v825 = vpop.f32.mrf.mxu0
      %v826 = vadd.f32 0.0, %v825
      %v827 = vpop.f32.mrf.mxu0
      %v828 = vpop.f32.mrf.mxu0
      %v829 = vadd.f32 0.0, %v828
      %v830 = vpop.f32.mrf.mxu0
      %831 = vmatprep.mubr.bf16.mxu0 0
      %832 = vmatmul.mubr.bf16.gmra.mxu0 %v619
      %v833 = vpop.f32.mrf.mxu0
      %v834 = vadd.f32 0.0, %v833
      %v835 = vpop.f32.mrf.mxu0
      %v836 = vpop.f32.mrf.mxu0
      %v837 = vadd.f32 0.0, %v836
      %v838 = vpop.f32.mrf.mxu0
      %839 = vmatprep.mubr.bf16.mxu0 0
      %840 = vmatmul.mubr.bf16.gmra.mxu0 %v620
      %v841 = vpop.f32.mrf.mxu0
      %v842 = vadd.f32 0.0, %v841
      %v843 = vpop.f32.mrf.mxu0
      %v844 = vpop.f32.mrf.mxu0
      %v845 = vadd.f32 0.0, %v844
      %v846 = vpop.f32.mrf.mxu0
      %847 = vmatprep.mubr.bf16.mxu0 0
      %848 = vmatmul.mubr.bf16.gmra.mxu0 %v621
      %v849 = vpop.f32.mrf.mxu0
      %v850 = vadd.f32 0.0, %v849
      %v851 = vpop.f32.mrf.mxu0
      %v852 = vpop.f32.mrf.mxu0
      %v853 = vadd.f32 0.0, %v852
      %v854 = vpop.f32.mrf.mxu0
      %855 = vmatprep.mubr.bf16.mxu0 0
      %856 = vmatmul.mubr.bf16.gmra.mxu0 %v622
      %v857 = vpop.f32.mrf.mxu0
      %v858 = vadd.f32 0.0, %v857
      %v859 = vpop.f32.mrf.mxu0
      %v860 = vpop.f32.mrf.mxu0
      %v861 = vadd.f32 0.0, %v860
      %v862 = vpop.f32.mrf.mxu0
      %863 = vdwg.mxu0
      %v864 = vadd.f32 %v603, %v722
      %v865 = vadd.f32 %v603, %v725
      %v866 = vadd.f32 %v603, %v730
      %v867 = vadd.f32 %v603, %v733
      %v868 = vadd.f32 %v603, %v738
      %v869 = vadd.f32 %v603, %v741
      %v870 = vadd.f32 %v603, %v746
      %v871 = vadd.f32 %v603, %v749
      %v872 = vadd.f32 %v603, %v754
      %v873 = vadd.f32 %v603, %v757
      %v874 = vadd.f32 %v603, %v762
      %v875 = vadd.f32 %v603, %v765
      %v876 = vadd.f32 %v603, %v770
      %v877 = vadd.f32 %v603, %v773
      %v878 = vadd.f32 %v603, %v778
      %v879 = vadd.f32 %v603, %v781
      %v880 = vadd.f32 %v603, %v786
      %v881 = vadd.f32 %v603, %v789
      %v882 = vadd.f32 %v603, %v794
      %v883 = vadd.f32 %v603, %v797
      %v884 = vadd.f32 %v603, %v802
      %v885 = vadd.f32 %v603, %v805
      %v886 = vadd.f32 %v603, %v810
      %v887 = vadd.f32 %v603, %v813
      %v888 = vadd.f32 %v603, %v818
      %v889 = vadd.f32 %v603, %v821
      %v890 = vadd.f32 %v603, %v826
      %v891 = vadd.f32 %v603, %v829
      %v892 = vadd.f32 %v603, %v834
      %v893 = vadd.f32 %v603, %v837
      %v894 = vadd.f32 %v603, %v842
      %v895 = vadd.f32 %v603, %v845
      %v896 = vadd.f32 %v603, %v850
      %v897 = vadd.f32 %v603, %v853
      %v898 = vadd.f32 %v603, %v858
      %v899 = vadd.f32 %v603, %v861
      %s900 = scalar_lea.vmem %s1, 64
      %v901 = vld [vmem:[%s900] sm:$0xf]
      %v902 = vld [vmem:[%s900 + $0x4] sm:$0xf]
      %v903 = vld [vmem:[%s900 + $0x8] sm:$0xf]
      %v904 = vld [vmem:[%s900 + $0xc] sm:$0xf]
      %v905 = vld [vmem:[%s900 + $0x10] sm:$0xf]
      %v906 = vld [vmem:[%s900 + $0x14] sm:$0xf]
      %v907 = vld [vmem:[%s900 + $0x18] sm:$0xf]
      %v908 = vld [vmem:[%s900 + $0x1c] sm:$0xf]
      %v909 = vld [vmem:[%s900 + $0x20] sm:$0xf]
      %v910 = vld [vmem:[%s900 + $0x24] sm:$0xf]
      %v911 = vld [vmem:[%s900 + $0x28] sm:$0xf]
      %v912 = vld [vmem:[%s900 + $0x2c] sm:$0xf]
      %v913 = vld [vmem:[%s900 + $0x30] sm:$0xf]
      %v914 = vld [vmem:[%s900 + $0x34] sm:$0xf]
      %v915 = vld [vmem:[%s900 + $0x38] sm:$0xf]
      %v916 = vld [vmem:[%s900 + $0x3c] sm:$0xf]
      %vm917 = vsmask.f32 7424
      %v919 = vshrl.u32 %v605, 16
      %v921 = vshll.u32 %v605, 16
      %v923 = vrot.slane %v921, 1
      %v924 = vor.u32 %v919, %v923
      %v926 = vshll.u32 %v606, 16
      %v928 = vrot.slane %v926, 1
      %v929 = vsel %vm917, %v924, %v928
      %v930 = vshrl.u32 %v606, 16
      %v932 = vor.u32 %v930, %v928
      %v934 = vshll.u32 %v607, 16
      %v936 = vrot.slane %v934, 1
      %v937 = vsel %vm917, %v932, %v936
      %v938 = vshrl.u32 %v607, 16
      %v940 = vor.u32 %v938, %v936
      %v942 = vshll.u32 %v608, 16
      %v944 = vrot.slane %v942, 1
      %v945 = vsel %vm917, %v940, %v944
      %v946 = vshrl.u32 %v608, 16
      %v948 = vor.u32 %v946, %v944
      %v950 = vshll.u32 %v609, 16
      %v952 = vrot.slane %v950, 1
      %v953 = vsel %vm917, %v948, %v952
      %v954 = vshrl.u32 %v609, 16
      %v956 = vor.u32 %v954, %v952
      %v958 = vshll.u32 %v610, 16
      %v960 = vrot.slane %v958, 1
      %v961 = vsel %vm917, %v956, %v960
      %v962 = vshrl.u32 %v610, 16
      %v964 = vor.u32 %v962, %v960
      %v966 = vshll.u32 %v611, 16
      %v968 = vrot.slane %v966, 1
      %v969 = vsel %vm917, %v964, %v968
      %v970 = vshrl.u32 %v611, 16
      %v972 = vor.u32 %v970, %v968
      %v974 = vshll.u32 %v612, 16
      %v976 = vrot.slane %v974, 1
      %v977 = vsel %vm917, %v972, %v976
      %v978 = vshrl.u32 %v612, 16
      %v980 = vor.u32 %v978, %v976
      %v982 = vshll.u32 %v613, 16
      %v984 = vrot.slane %v982, 1
      %v985 = vsel %vm917, %v980, %v984
      %v986 = vshrl.u32 %v613, 16
      %v988 = vor.u32 %v986, %v984
      %v990 = vshll.u32 %v614, 16
      %v992 = vrot.slane %v990, 1
      %v993 = vsel %vm917, %v988, %v992
      %v994 = vshrl.u32 %v614, 16
      %v996 = vor.u32 %v994, %v992
      %v998 = vshll.u32 %v615, 16
      %v1000 = vrot.slane %v998, 1
      %v1001 = vsel %vm917, %v996, %v1000
      %v1002 = vshrl.u32 %v615, 16
      %v1004 = vor.u32 %v1002, %v1000
      %v1006 = vshll.u32 %v616, 16
      %v1008 = vrot.slane %v1006, 1
      %v1009 = vsel %vm917, %v1004, %v1008
      %v1010 = vshrl.u32 %v616, 16
      %v1012 = vor.u32 %v1010, %v1008
      %v1014 = vshll.u32 %v617, 16
      %v1016 = vrot.slane %v1014, 1
      %v1017 = vsel %vm917, %v1012, %v1016
      %v1018 = vshrl.u32 %v617, 16
      %v1020 = vor.u32 %v1018, %v1016
      %v1022 = vshll.u32 %v618, 16
      %v1024 = vrot.slane %v1022, 1
      %v1025 = vsel %vm917, %v1020, %v1024
      %v1026 = vshrl.u32 %v618, 16
      %v1028 = vor.u32 %v1026, %v1024
      %v1030 = vshll.u32 %v619, 16
      %v1032 = vrot.slane %v1030, 1
      %v1033 = vsel %vm917, %v1028, %v1032
      %v1034 = vshrl.u32 %v619, 16
      %v1036 = vor.u32 %v1034, %v1032
      %v1038 = vshll.u32 %v620, 16
      %v1040 = vrot.slane %v1038, 1
      %v1041 = vsel %vm917, %v1036, %v1040
      %v1042 = vshrl.u32 %v620, 16
      %v1044 = vor.u32 %v1042, %v1040
      %v1046 = vshll.u32 %v621, 16
      %v1048 = vrot.slane %v1046, 1
      %v1049 = vsel %vm917, %v1044, %v1048
      %v1050 = vshrl.u32 %v621, 16
      %v1052 = vor.u32 %v1050, %v1048
      %v1054 = vshll.u32 %v622, 16
      %v1056 = vrot.slane %v1054, 1
      %v1057 = vsel %vm917, %v1052, %v1056
      %v1058 = vshrl.u32 %v622, 16
      %v1060 = vor.u32 %v1058, %v1056
      %v1095 = vunpack.c.l.b16 %v901
      %v1096 = vunpack.c.l.b16 %v902
      %v1097 = vunpack.c.l.b16 %v903
      %v1098 = vunpack.c.l.b16 %v904
      %v1099 = vunpack.c.l.b16 %v905
      %v1100 = vunpack.c.l.b16 %v906
      %v1101 = vunpack.c.l.b16 %v907
      %v1102 = vunpack.c.l.b16 %v908
      %v1103 = vunpack.c.l.b16 %v909
      %v1104 = vunpack.c.l.b16 %v910
      %v1105 = vunpack.c.l.b16 %v911
      %v1106 = vunpack.c.l.b16 %v912
      %v1107 = vunpack.c.l.b16 %v913
      %v1108 = vunpack.c.l.b16 %v914
      %v1109 = vunpack.c.l.b16 %v915
      %v1110 = vunpack.c.l.b16 %v916
      %v1111 = vpack.c.b16 %v1096, %v1095
      %v1112 = vpack.c.b16 %v1098, %v1097
      %v1113 = vpack.c.b16 %v1100, %v1099
      %v1114 = vpack.c.b16 %v1102, %v1101
      %v1115 = vpack.c.b16 %v1104, %v1103
      %v1116 = vpack.c.b16 %v1106, %v1105
      %v1117 = vpack.c.b16 %v1108, %v1107
      %v1118 = vpack.c.b16 %v1110, %v1109
      %1127 = vmatprep.subr.bf16.mxu0 0
      %1128 = vmatpush1.bf16.msra.mxu0 %v1118
      %1129 = vmatprep.subr.bf16.mxu0 0
      %1130 = vmatpush1.bf16.msra.mxu0 %v1117
      %1131 = vmatprep.subr.bf16.mxu0 0
      %1132 = vmatpush1.bf16.msra.mxu0 %v1116
      %1133 = vmatprep.subr.bf16.mxu0 0
      %1134 = vmatpush1.bf16.msra.mxu0 %v1115
      %1135 = vmatprep.subr.bf16.mxu0 0
      %1136 = vmatpush1.bf16.msra.mxu0 %v1114
      %1137 = vmatprep.subr.bf16.mxu0 0
      %1138 = vmatpush1.bf16.msra.mxu0 %v1113
      %1139 = vmatprep.subr.bf16.mxu0 0
      %1140 = vmatpush1.bf16.msra.mxu0 %v1112
      %1141 = vmatprep.subr.bf16.mxu0 0
      %1142 = vmatpush1.bf16.msra.mxu0 %v1111
      %1143 = vmatprep.subr.bf16.mxu0 0
      %1144 = vmatpush2.bf16.msra.mxu0 0
      %1145 = vmatprep.subr.bf16.mxu0 0
      %1146 = vmatpush2.bf16.msra.mxu0 0
      %1147 = vmatprep.subr.bf16.mxu0 0
      %1148 = vmatpush2.bf16.msra.mxu0 0
      %1149 = vmatprep.subr.bf16.mxu0 0
      %1150 = vmatpush2.bf16.msra.mxu0 0
      %1151 = vmatprep.subr.bf16.mxu0 0
      %1152 = vmatpush2.bf16.msra.mxu0 0
      %1153 = vmatprep.subr.bf16.mxu0 0
      %1154 = vmatpush2.bf16.msra.mxu0 0
      %1155 = vmatprep.subr.bf16.mxu0 0
      %1156 = vmatpush2.bf16.msra.mxu0 0
      %1157 = vmatprep.subr.bf16.mxu0 0
      %1158 = vmatpush2.bf16.msra.mxu0 0
      %1159 = vmatprep.mubr.bf16.mxu0 0
      %1160 = vmatmul.mubr.bf16.gmra.mxu0 %v929
      %v1161 = vpop.f32.mrf.mxu0
      %v1162 = vadd.f32 0.0, %v1161
      %v1163 = vpop.f32.mrf.mxu0
      %v1164 = vpop.f32.mrf.mxu0
      %v1165 = vadd.f32 0.0, %v1164
      %v1166 = vpop.f32.mrf.mxu0
      %1167 = vmatprep.mubr.bf16.mxu0 0
      %1168 = vmatmul.mubr.bf16.gmra.mxu0 %v937
      %v1169 = vpop.f32.mrf.mxu0
      %v1170 = vadd.f32 0.0, %v1169
      %v1171 = vpop.f32.mrf.mxu0
      %v1172 = vpop.f32.mrf.mxu0
      %v1173 = vadd.f32 0.0, %v1172
      %v1174 = vpop.f32.mrf.mxu0
      %1175 = vmatprep.mubr.bf16.mxu0 0
      %1176 = vmatmul.mubr.bf16.gmra.mxu0 %v945
      %v1177 = vpop.f32.mrf.mxu0
      %v1178 = vadd.f32 0.0, %v1177
      %v1179 = vpop.f32.mrf.mxu0
      %v1180 = vpop.f32.mrf.mxu0
      %v1181 = vadd.f32 0.0, %v1180
      %v1182 = vpop.f32.mrf.mxu0
      %1183 = vmatprep.mubr.bf16.mxu0 0
      %1184 = vmatmul.mubr.bf16.gmra.mxu0 %v953
      %v1185 = vpop.f32.mrf.mxu0
      %v1186 = vadd.f32 0.0, %v1185
      %v1187 = vpop.f32.mrf.mxu0
      %v1188 = vpop.f32.mrf.mxu0
      %v1189 = vadd.f32 0.0, %v1188
      %v1190 = vpop.f32.mrf.mxu0
      %1191 = vmatprep.mubr.bf16.mxu0 0
      %1192 = vmatmul.mubr.bf16.gmra.mxu0 %v961
      %v1193 = vpop.f32.mrf.mxu0
      %v1194 = vadd.f32 0.0, %v1193
      %v1195 = vpop.f32.mrf.mxu0
      %v1196 = vpop.f32.mrf.mxu0
      %v1197 = vadd.f32 0.0, %v1196
      %v1198 = vpop.f32.mrf.mxu0
      %1199 = vmatprep.mubr.bf16.mxu0 0
      %1200 = vmatmul.mubr.bf16.gmra.mxu0 %v969
      %v1201 = vpop.f32.mrf.mxu0
      %v1202 = vadd.f32 0.0, %v1201
      %v1203 = vpop.f32.mrf.mxu0
      %v1204 = vpop.f32.mrf.mxu0
      %v1205 = vadd.f32 0.0, %v1204
      %v1206 = vpop.f32.mrf.mxu0
      %1207 = vmatprep.mubr.bf16.mxu0 0
      %1208 = vmatmul.mubr.bf16.gmra.mxu0 %v977
      %v1209 = vpop.f32.mrf.mxu0
      %v1210 = vadd.f32 0.0, %v1209
      %v1211 = vpop.f32.mrf.mxu0
      %v1212 = vpop.f32.mrf.mxu0
      %v1213 = vadd.f32 0.0, %v1212
      %v1214 = vpop.f32.mrf.mxu0
      %1215 = vmatprep.mubr.bf16.mxu0 0
      %1216 = vmatmul.mubr.bf16.gmra.mxu0 %v985
      %v1217 = vpop.f32.mrf.mxu0
      %v1218 = vadd.f32 0.0, %v1217
      %v1219 = vpop.f32.mrf.mxu0
      %v1220 = vpop.f32.mrf.mxu0
      %v1221 = vadd.f32 0.0, %v1220
      %v1222 = vpop.f32.mrf.mxu0
      %1223 = vmatprep.mubr.bf16.mxu0 0
      %1224 = vmatmul.mubr.bf16.gmra.mxu0 %v993
      %v1225 = vpop.f32.mrf.mxu0
      %v1226 = vadd.f32 0.0, %v1225
      %v1227 = vpop.f32.mrf.mxu0
      %v1228 = vpop.f32.mrf.mxu0
      %v1229 = vadd.f32 0.0, %v1228
      %v1230 = vpop.f32.mrf.mxu0
      %1231 = vmatprep.mubr.bf16.mxu0 0
      %1232 = vmatmul.mubr.bf16.gmra.mxu0 %v1001
      %v1233 = vpop.f32.mrf.mxu0
      %v1234 = vadd.f32 0.0, %v1233
      %v1235 = vpop.f32.mrf.mxu0
      %v1236 = vpop.f32.mrf.mxu0
      %v1237 = vadd.f32 0.0, %v1236
      %v1238 = vpop.f32.mrf.mxu0
      %1239 = vmatprep.mubr.bf16.mxu0 0
      %1240 = vmatmul.mubr.bf16.gmra.mxu0 %v1009
      %v1241 = vpop.f32.mrf.mxu0
      %v1242 = vadd.f32 0.0, %v1241
      %v1243 = vpop.f32.mrf.mxu0
      %v1244 = vpop.f32.mrf.mxu0
      %v1245 = vadd.f32 0.0, %v1244
      %v1246 = vpop.f32.mrf.mxu0
      %1247 = vmatprep.mubr.bf16.mxu0 0
      %1248 = vmatmul.mubr.bf16.gmra.mxu0 %v1017
      %v1249 = vpop.f32.mrf.mxu0
      %v1250 = vadd.f32 0.0, %v1249
      %v1251 = vpop.f32.mrf.mxu0
      %v1252 = vpop.f32.mrf.mxu0
      %v1253 = vadd.f32 0.0, %v1252
      %v1254 = vpop.f32.mrf.mxu0
      %1255 = vmatprep.mubr.bf16.mxu0 0
      %1256 = vmatmul.mubr.bf16.gmra.mxu0 %v1025
      %v1257 = vpop.f32.mrf.mxu0
      %v1258 = vadd.f32 0.0, %v1257
      %v1259 = vpop.f32.mrf.mxu0
      %v1260 = vpop.f32.mrf.mxu0
      %v1261 = vadd.f32 0.0, %v1260
      %v1262 = vpop.f32.mrf.mxu0
      %1263 = vmatprep.mubr.bf16.mxu0 0
      %1264 = vmatmul.mubr.bf16.gmra.mxu0 %v1033
      %v1265 = vpop.f32.mrf.mxu0
      %v1266 = vadd.f32 0.0, %v1265
      %v1267 = vpop.f32.mrf.mxu0
      %v1268 = vpop.f32.mrf.mxu0
      %v1269 = vadd.f32 0.0, %v1268
      %v1270 = vpop.f32.mrf.mxu0
      %1271 = vmatprep.mubr.bf16.mxu0 0
      %1272 = vmatmul.mubr.bf16.gmra.mxu0 %v1041
      %v1273 = vpop.f32.mrf.mxu0
      %v1274 = vadd.f32 0.0, %v1273
      %v1275 = vpop.f32.mrf.mxu0
      %v1276 = vpop.f32.mrf.mxu0
      %v1277 = vadd.f32 0.0, %v1276
      %v1278 = vpop.f32.mrf.mxu0
      %1279 = vmatprep.mubr.bf16.mxu0 0
      %1280 = vmatmul.mubr.bf16.gmra.mxu0 %v1049
      %v1281 = vpop.f32.mrf.mxu0
      %v1282 = vadd.f32 0.0, %v1281
      %v1283 = vpop.f32.mrf.mxu0
      %v1284 = vpop.f32.mrf.mxu0
      %v1285 = vadd.f32 0.0, %v1284
      %v1286 = vpop.f32.mrf.mxu0
      %1287 = vmatprep.mubr.bf16.mxu0 0
      %1288 = vmatmul.mubr.bf16.gmra.mxu0 %v1057
      %v1289 = vpop.f32.mrf.mxu0
      %v1290 = vadd.f32 0.0, %v1289
      %v1291 = vpop.f32.mrf.mxu0
      %v1292 = vpop.f32.mrf.mxu0
      %v1293 = vadd.f32 0.0, %v1292
      %v1294 = vpop.f32.mrf.mxu0
      %1295 = vmatprep.mubr.bf16.mxu0 0
      %1296 = vmatmul.mubr.bf16.gmra.mxu0 %v1060
      %v1297 = vpop.f32.mrf.mxu0
      %v1298 = vadd.f32 0.0, %v1297
      %v1299 = vpop.f32.mrf.mxu0
      %v1300 = vpop.f32.mrf.mxu0
      %v1301 = vadd.f32 0.0, %v1300
      %v1302 = vpop.f32.mrf.mxu0
      %1303 = vdwg.mxu0
      %v1304 = vadd.f32 %v864, %v1162
      %v1305 = vadd.f32 %v865, %v1165
      %v1306 = vadd.f32 %v866, %v1170
      %v1307 = vadd.f32 %v867, %v1173
      %v1308 = vadd.f32 %v868, %v1178
      %v1309 = vadd.f32 %v869, %v1181
      %v1310 = vadd.f32 %v870, %v1186
      %v1311 = vadd.f32 %v871, %v1189
      %v1312 = vadd.f32 %v872, %v1194
      %v1313 = vadd.f32 %v873, %v1197
      %v1314 = vadd.f32 %v874, %v1202
      %v1315 = vadd.f32 %v875, %v1205
      %v1316 = vadd.f32 %v876, %v1210
      %v1317 = vadd.f32 %v877, %v1213
      %v1318 = vadd.f32 %v878, %v1218
      %v1319 = vadd.f32 %v879, %v1221
      %v1320 = vadd.f32 %v880, %v1226
      %v1321 = vadd.f32 %v881, %v1229
      %v1322 = vadd.f32 %v882, %v1234
      %v1323 = vadd.f32 %v883, %v1237
      %v1324 = vadd.f32 %v884, %v1242
      %v1325 = vadd.f32 %v885, %v1245
      %v1326 = vadd.f32 %v886, %v1250
      %v1327 = vadd.f32 %v887, %v1253
      %v1328 = vadd.f32 %v888, %v1258
      %v1329 = vadd.f32 %v889, %v1261
      %v1330 = vadd.f32 %v890, %v1266
      %v1331 = vadd.f32 %v891, %v1269
      %v1332 = vadd.f32 %v892, %v1274
      %v1333 = vadd.f32 %v893, %v1277
      %v1334 = vadd.f32 %v894, %v1282
      %v1335 = vadd.f32 %v895, %v1285
      %v1336 = vadd.f32 %v896, %v1290
      %v1337 = vadd.f32 %v897, %v1293
      %v1338 = vadd.f32 %v898, %v1298
      %v1339 = vadd.f32 %v899, %v1301
      %s1340 = scalar_lea.vmem %s1, 128
      %v1341 = vld [vmem:[%s1340] sm:$0xf]
      %v1342 = vld [vmem:[%s1340 + $0x4] sm:$0xf]
      %v1343 = vld [vmem:[%s1340 + $0x8] sm:$0xf]
      %v1344 = vld [vmem:[%s1340 + $0xc] sm:$0xf]
      %v1345 = vld [vmem:[%s1340 + $0x10] sm:$0xf]
      %v1346 = vld [vmem:[%s1340 + $0x14] sm:$0xf]
      %v1347 = vld [vmem:[%s1340 + $0x18] sm:$0xf]
      %v1348 = vld [vmem:[%s1340 + $0x1c] sm:$0xf]
      %v1349 = vld [vmem:[%s1340 + $0x20] sm:$0xf]
      %v1350 = vld [vmem:[%s1340 + $0x24] sm:$0xf]
      %v1351 = vld [vmem:[%s1340 + $0x28] sm:$0xf]
      %v1352 = vld [vmem:[%s1340 + $0x2c] sm:$0xf]
      %v1353 = vld [vmem:[%s1340 + $0x30] sm:$0xf]
      %v1354 = vld [vmem:[%s1340 + $0x34] sm:$0xf]
      %v1355 = vld [vmem:[%s1340 + $0x38] sm:$0xf]
      %v1356 = vld [vmem:[%s1340 + $0x3c] sm:$0xf]
      %vm1375 = vcmask 1046528
      %v1376 = vrot.slane %v605, 1
      %v1377 = vrot.slane %v606, 1
      %v1378 = vsel %vm1375, %v1376, %v1377
      %v1379 = vrot.slane %v607, 1
      %v1380 = vsel %vm1375, %v1377, %v1379
      %v1381 = vrot.slane %v608, 1
      %v1382 = vsel %vm1375, %v1379, %v1381
      %v1383 = vrot.slane %v609, 1
      %v1384 = vsel %vm1375, %v1381, %v1383
      %v1385 = vrot.slane %v610, 1
      %v1386 = vsel %vm1375, %v1383, %v1385
      %v1387 = vrot.slane %v611, 1
      %v1388 = vsel %vm1375, %v1385, %v1387
      %v1389 = vrot.slane %v612, 1
      %v1390 = vsel %vm1375, %v1387, %v1389
      %v1391 = vrot.slane %v613, 1
      %v1392 = vsel %vm1375, %v1389, %v1391
      %v1393 = vrot.slane %v614, 1
      %v1394 = vsel %vm1375, %v1391, %v1393
      %v1395 = vrot.slane %v615, 1
      %v1396 = vsel %vm1375, %v1393, %v1395
      %v1397 = vrot.slane %v616, 1
      %v1398 = vsel %vm1375, %v1395, %v1397
      %v1399 = vrot.slane %v617, 1
      %v1400 = vsel %vm1375, %v1397, %v1399
      %v1401 = vrot.slane %v618, 1
      %v1402 = vsel %vm1375, %v1399, %v1401
      %v1403 = vrot.slane %v619, 1
      %v1404 = vsel %vm1375, %v1401, %v1403
      %v1405 = vrot.slane %v620, 1
      %v1406 = vsel %vm1375, %v1403, %v1405
      %v1407 = vrot.slane %v621, 1
      %v1408 = vsel %vm1375, %v1405, %v1407
      %v1409 = vrot.slane %v622, 1
      %v1410 = vsel %vm1375, %v1407, %v1409
      %v1445 = vunpack.c.l.b16 %v1341
      %v1446 = vunpack.c.l.b16 %v1342
      %v1447 = vunpack.c.l.b16 %v1343
      %v1448 = vunpack.c.l.b16 %v1344
      %v1449 = vunpack.c.l.b16 %v1345
      %v1450 = vunpack.c.l.b16 %v1346
      %v1451 = vunpack.c.l.b16 %v1347
      %v1452 = vunpack.c.l.b16 %v1348
      %v1453 = vunpack.c.l.b16 %v1349
      %v1454 = vunpack.c.l.b16 %v1350
      %v1455 = vunpack.c.l.b16 %v1351
      %v1456 = vunpack.c.l.b16 %v1352
      %v1457 = vunpack.c.l.b16 %v1353
      %v1458 = vunpack.c.l.b16 %v1354
      %v1459 = vunpack.c.l.b16 %v1355
      %v1460 = vunpack.c.l.b16 %v1356
      %v1461 = vpack.c.b16 %v1446, %v1445
      %v1462 = vpack.c.b16 %v1448, %v1447
      %v1463 = vpack.c.b16 %v1450, %v1449
      %v1464 = vpack.c.b16 %v1452, %v1451
      %v1465 = vpack.c.b16 %v1454, %v1453
      %v1466 = vpack.c.b16 %v1456, %v1455
      %v1467 = vpack.c.b16 %v1458, %v1457
      %v1468 = vpack.c.b16 %v1460, %v1459
      %1477 = vmatprep.subr.bf16.mxu0 0
      %1478 = vmatpush1.bf16.msra.mxu0 %v1468
      %1479 = vmatprep.subr.bf16.mxu0 0
      %1480 = vmatpush1.bf16.msra.mxu0 %v1467
      %1481 = vmatprep.subr.bf16.mxu0 0
      %1482 = vmatpush1.bf16.msra.mxu0 %v1466
      %1483 = vmatprep.subr.bf16.mxu0 0
      %1484 = vmatpush1.bf16.msra.mxu0 %v1465
      %1485 = vmatprep.subr.bf16.mxu0 0
      %1486 = vmatpush1.bf16.msra.mxu0 %v1464
      %1487 = vmatprep.subr.bf16.mxu0 0
      %1488 = vmatpush1.bf16.msra.mxu0 %v1463
      %1489 = vmatprep.subr.bf16.mxu0 0
      %1490 = vmatpush1.bf16.msra.mxu0 %v1462
      %1491 = vmatprep.subr.bf16.mxu0 0
      %1492 = vmatpush1.bf16.msra.mxu0 %v1461
      %1493 = vmatprep.subr.bf16.mxu0 0
      %1494 = vmatpush2.bf16.msra.mxu0 0
      %1495 = vmatprep.subr.bf16.mxu0 0
      %1496 = vmatpush2.bf16.msra.mxu0 0
      %1497 = vmatprep.subr.bf16.mxu0 0
      %1498 = vmatpush2.bf16.msra.mxu0 0
      %1499 = vmatprep.subr.bf16.mxu0 0
      %1500 = vmatpush2.bf16.msra.mxu0 0
      %1501 = vmatprep.subr.bf16.mxu0 0
      %1502 = vmatpush2.bf16.msra.mxu0 0
      %1503 = vmatprep.subr.bf16.mxu0 0
      %1504 = vmatpush2.bf16.msra.mxu0 0
      %1505 = vmatprep.subr.bf16.mxu0 0
      %1506 = vmatpush2.bf16.msra.mxu0 0
      %1507 = vmatprep.subr.bf16.mxu0 0
      %1508 = vmatpush2.bf16.msra.mxu0 0
      %1509 = vmatprep.mubr.bf16.mxu0 0
      %1510 = vmatmul.mubr.bf16.gmra.mxu0 %v1378
      %v1511 = vpop.f32.mrf.mxu0
      %v1512 = vadd.f32 0.0, %v1511
      %v1513 = vpop.f32.mrf.mxu0
      %v1514 = vpop.f32.mrf.mxu0
      %v1515 = vadd.f32 0.0, %v1514
      %v1516 = vpop.f32.mrf.mxu0
      %1517 = vmatprep.mubr.bf16.mxu0 0
      %1518 = vmatmul.mubr.bf16.gmra.mxu0 %v1380
      %v1519 = vpop.f32.mrf.mxu0
      %v1520 = vadd.f32 0.0, %v1519
      %v1521 = vpop.f32.mrf.mxu0
      %v1522 = vpop.f32.mrf.mxu0
      %v1523 = vadd.f32 0.0, %v1522
      %v1524 = vpop.f32.mrf.mxu0
      %1525 = vmatprep.mubr.bf16.mxu0 0
      %1526 = vmatmul.mubr.bf16.gmra.mxu0 %v1382
      %v1527 = vpop.f32.mrf.mxu0
      %v1528 = vadd.f32 0.0, %v1527
      %v1529 = vpop.f32.mrf.mxu0
      %v1530 = vpop.f32.mrf.mxu0
      %v1531 = vadd.f32 0.0, %v1530
      %v1532 = vpop.f32.mrf.mxu0
      %1533 = vmatprep.mubr.bf16.mxu0 0
      %1534 = vmatmul.mubr.bf16.gmra.mxu0 %v1384
      %v1535 = vpop.f32.mrf.mxu0
      %v1536 = vadd.f32 0.0, %v1535
      %v1537 = vpop.f32.mrf.mxu0
      %v1538 = vpop.f32.mrf.mxu0
      %v1539 = vadd.f32 0.0, %v1538
      %v1540 = vpop.f32.mrf.mxu0
      %1541 = vmatprep.mubr.bf16.mxu0 0
      %1542 = vmatmul.mubr.bf16.gmra.mxu0 %v1386
      %v1543 = vpop.f32.mrf.mxu0
      %v1544 = vadd.f32 0.0, %v1543
      %v1545 = vpop.f32.mrf.mxu0
      %v1546 = vpop.f32.mrf.mxu0
      %v1547 = vadd.f32 0.0, %v1546
      %v1548 = vpop.f32.mrf.mxu0
      %1549 = vmatprep.mubr.bf16.mxu0 0
      %1550 = vmatmul.mubr.bf16.gmra.mxu0 %v1388
      %v1551 = vpop.f32.mrf.mxu0
      %v1552 = vadd.f32 0.0, %v1551
      %v1553 = vpop.f32.mrf.mxu0
      %v1554 = vpop.f32.mrf.mxu0
      %v1555 = vadd.f32 0.0, %v1554
      %v1556 = vpop.f32.mrf.mxu0
      %1557 = vmatprep.mubr.bf16.mxu0 0
      %1558 = vmatmul.mubr.bf16.gmra.mxu0 %v1390
      %v1559 = vpop.f32.mrf.mxu0
      %v1560 = vadd.f32 0.0, %v1559
      %v1561 = vpop.f32.mrf.mxu0
      %v1562 = vpop.f32.mrf.mxu0
      %v1563 = vadd.f32 0.0, %v1562
      %v1564 = vpop.f32.mrf.mxu0
      %1565 = vmatprep.mubr.bf16.mxu0 0
      %1566 = vmatmul.mubr.bf16.gmra.mxu0 %v1392
      %v1567 = vpop.f32.mrf.mxu0
      %v1568 = vadd.f32 0.0, %v1567
      %v1569 = vpop.f32.mrf.mxu0
      %v1570 = vpop.f32.mrf.mxu0
      %v1571 = vadd.f32 0.0, %v1570
      %v1572 = vpop.f32.mrf.mxu0
      %1573 = vmatprep.mubr.bf16.mxu0 0
      %1574 = vmatmul.mubr.bf16.gmra.mxu0 %v1394
      %v1575 = vpop.f32.mrf.mxu0
      %v1576 = vadd.f32 0.0, %v1575
      %v1577 = vpop.f32.mrf.mxu0
      %v1578 = vpop.f32.mrf.mxu0
      %v1579 = vadd.f32 0.0, %v1578
      %v1580 = vpop.f32.mrf.mxu0
      %1581 = vmatprep.mubr.bf16.mxu0 0
      %1582 = vmatmul.mubr.bf16.gmra.mxu0 %v1396
      %v1583 = vpop.f32.mrf.mxu0
      %v1584 = vadd.f32 0.0, %v1583
      %v1585 = vpop.f32.mrf.mxu0
      %v1586 = vpop.f32.mrf.mxu0
      %v1587 = vadd.f32 0.0, %v1586
      %v1588 = vpop.f32.mrf.mxu0
      %1589 = vmatprep.mubr.bf16.mxu0 0
      %1590 = vmatmul.mubr.bf16.gmra.mxu0 %v1398
      %v1591 = vpop.f32.mrf.mxu0
      %v1592 = vadd.f32 0.0, %v1591
      %v1593 = vpop.f32.mrf.mxu0
      %v1594 = vpop.f32.mrf.mxu0
      %v1595 = vadd.f32 0.0, %v1594
      %v1596 = vpop.f32.mrf.mxu0
      %1597 = vmatprep.mubr.bf16.mxu0 0
      %1598 = vmatmul.mubr.bf16.gmra.mxu0 %v1400
      %v1599 = vpop.f32.mrf.mxu0
      %v1600 = vadd.f32 0.0, %v1599
      %v1601 = vpop.f32.mrf.mxu0
      %v1602 = vpop.f32.mrf.mxu0
      %v1603 = vadd.f32 0.0, %v1602
      %v1604 = vpop.f32.mrf.mxu0
      %1605 = vmatprep.mubr.bf16.mxu0 0
      %1606 = vmatmul.mubr.bf16.gmra.mxu0 %v1402
      %v1607 = vpop.f32.mrf.mxu0
      %v1608 = vadd.f32 0.0, %v1607
      %v1609 = vpop.f32.mrf.mxu0
      %v1610 = vpop.f32.mrf.mxu0
      %v1611 = vadd.f32 0.0, %v1610
      %v1612 = vpop.f32.mrf.mxu0
      %1613 = vmatprep.mubr.bf16.mxu0 0
      %1614 = vmatmul.mubr.bf16.gmra.mxu0 %v1404
      %v1615 = vpop.f32.mrf.mxu0
      %v1616 = vadd.f32 0.0, %v1615
      %v1617 = vpop.f32.mrf.mxu0
      %v1618 = vpop.f32.mrf.mxu0
      %v1619 = vadd.f32 0.0, %v1618
      %v1620 = vpop.f32.mrf.mxu0
      %1621 = vmatprep.mubr.bf16.mxu0 0
      %1622 = vmatmul.mubr.bf16.gmra.mxu0 %v1406
      %v1623 = vpop.f32.mrf.mxu0
      %v1624 = vadd.f32 0.0, %v1623
      %v1625 = vpop.f32.mrf.mxu0
      %v1626 = vpop.f32.mrf.mxu0
      %v1627 = vadd.f32 0.0, %v1626
      %v1628 = vpop.f32.mrf.mxu0
      %1629 = vmatprep.mubr.bf16.mxu0 0
      %1630 = vmatmul.mubr.bf16.gmra.mxu0 %v1408
      %v1631 = vpop.f32.mrf.mxu0
      %v1632 = vadd.f32 0.0, %v1631
      %v1633 = vpop.f32.mrf.mxu0
      %v1634 = vpop.f32.mrf.mxu0
      %v1635 = vadd.f32 0.0, %v1634
      %v1636 = vpop.f32.mrf.mxu0
      %1637 = vmatprep.mubr.bf16.mxu0 0
      %1638 = vmatmul.mubr.bf16.gmra.mxu0 %v1410
      %v1639 = vpop.f32.mrf.mxu0
      %v1640 = vadd.f32 0.0, %v1639
      %v1641 = vpop.f32.mrf.mxu0
      %v1642 = vpop.f32.mrf.mxu0
      %v1643 = vadd.f32 0.0, %v1642
      %v1644 = vpop.f32.mrf.mxu0
      %1645 = vmatprep.mubr.bf16.mxu0 0
      %1646 = vmatmul.mubr.bf16.gmra.mxu0 %v1409
      %v1647 = vpop.f32.mrf.mxu0
      %v1648 = vadd.f32 0.0, %v1647
      %v1649 = vpop.f32.mrf.mxu0
      %v1650 = vpop.f32.mrf.mxu0
      %v1651 = vadd.f32 0.0, %v1650
      %v1652 = vpop.f32.mrf.mxu0
      %1653 = vdwg.mxu0
      %v1654 = vadd.f32 %v1304, %v1512
      %v1655 = vadd.f32 %v1305, %v1515
      %v1656 = vadd.f32 %v1306, %v1520
      %v1657 = vadd.f32 %v1307, %v1523
      %v1658 = vadd.f32 %v1308, %v1528
      %v1659 = vadd.f32 %v1309, %v1531
      %v1660 = vadd.f32 %v1310, %v1536
      %v1661 = vadd.f32 %v1311, %v1539
      %v1662 = vadd.f32 %v1312, %v1544
      %v1663 = vadd.f32 %v1313, %v1547
      %v1664 = vadd.f32 %v1314, %v1552
      %v1665 = vadd.f32 %v1315, %v1555
      %v1666 = vadd.f32 %v1316, %v1560
      %v1667 = vadd.f32 %v1317, %v1563
      %v1668 = vadd.f32 %v1318, %v1568
      %v1669 = vadd.f32 %v1319, %v1571
      %v1670 = vadd.f32 %v1320, %v1576
      %v1671 = vadd.f32 %v1321, %v1579
      %v1672 = vadd.f32 %v1322, %v1584
      %v1673 = vadd.f32 %v1323, %v1587
      %v1674 = vadd.f32 %v1324, %v1592
      %v1675 = vadd.f32 %v1325, %v1595
      %v1676 = vadd.f32 %v1326, %v1600
      %v1677 = vadd.f32 %v1327, %v1603
      %v1678 = vadd.f32 %v1328, %v1608
      %v1679 = vadd.f32 %v1329, %v1611
      %v1680 = vadd.f32 %v1330, %v1616
      %v1681 = vadd.f32 %v1331, %v1619
      %v1682 = vadd.f32 %v1332, %v1624
      %v1683 = vadd.f32 %v1333, %v1627
      %v1684 = vadd.f32 %v1334, %v1632
      %v1685 = vadd.f32 %v1335, %v1635
      %v1686 = vadd.f32 %v1336, %v1640
      %v1687 = vadd.f32 %v1337, %v1643
      %v1688 = vadd.f32 %v1338, %v1648
      %v1689 = vadd.f32 %v1339, %v1651
      %s1690 = scalar_lea.vmem %s1, 192
      %v1691 = vld [vmem:[%s1690] sm:$0xf]
      %v1692 = vld [vmem:[%s1690 + $0x4] sm:$0xf]
      %v1693 = vld [vmem:[%s1690 + $0x8] sm:$0xf]
      %v1694 = vld [vmem:[%s1690 + $0xc] sm:$0xf]
      %v1695 = vld [vmem:[%s1690 + $0x10] sm:$0xf]
      %v1696 = vld [vmem:[%s1690 + $0x14] sm:$0xf]
      %v1697 = vld [vmem:[%s1690 + $0x18] sm:$0xf]
      %v1698 = vld [vmem:[%s1690 + $0x1c] sm:$0xf]
      %v1699 = vld [vmem:[%s1690 + $0x20] sm:$0xf]
      %v1700 = vld [vmem:[%s1690 + $0x24] sm:$0xf]
      %v1701 = vld [vmem:[%s1690 + $0x28] sm:$0xf]
      %v1702 = vld [vmem:[%s1690 + $0x2c] sm:$0xf]
      %v1703 = vld [vmem:[%s1690 + $0x30] sm:$0xf]
      %v1704 = vld [vmem:[%s1690 + $0x34] sm:$0xf]
      %v1705 = vld [vmem:[%s1690 + $0x38] sm:$0xf]
      %v1706 = vld [vmem:[%s1690 + $0x3c] sm:$0xf]
      %vm1707 = vsmask.f32 6400
      %v1708 = vrot.slane %v919, 1
      %v1709 = vrot.slane %v921, 2
      %v1710 = vor.u32 %v1708, %v1709
      %v1711 = vrot.slane %v930, 1
      %v1712 = vrot.slane %v926, 2
      %v1713 = vor.u32 %v1711, %v1712
      %v1714 = vsel %vm1707, %v1710, %v1713
      %v1715 = vrot.slane %v938, 1
      %v1716 = vrot.slane %v934, 2
      %v1717 = vor.u32 %v1715, %v1716
      %v1718 = vsel %vm1707, %v1713, %v1717
      %v1719 = vrot.slane %v946, 1
      %v1720 = vrot.slane %v942, 2
      %v1721 = vor.u32 %v1719, %v1720
      %v1722 = vsel %vm1707, %v1717, %v1721
      %v1723 = vrot.slane %v954, 1
      %v1724 = vrot.slane %v950, 2
      %v1725 = vor.u32 %v1723, %v1724
      %v1726 = vsel %vm1707, %v1721, %v1725
      %v1727 = vrot.slane %v962, 1
      %v1728 = vrot.slane %v958, 2
      %v1729 = vor.u32 %v1727, %v1728
      %v1730 = vsel %vm1707, %v1725, %v1729
      %v1731 = vrot.slane %v970, 1
      %v1732 = vrot.slane %v966, 2
      %v1733 = vor.u32 %v1731, %v1732
      %v1734 = vsel %vm1707, %v1729, %v1733
      %v1735 = vrot.slane %v978, 1
      %v1736 = vrot.slane %v974, 2
      %v1737 = vor.u32 %v1735, %v1736
      %v1738 = vsel %vm1707, %v1733, %v1737
      %v1739 = vrot.slane %v986, 1
      %v1740 = vrot.slane %v982, 2
      %v1741 = vor.u32 %v1739, %v1740
      %v1742 = vsel %vm1707, %v1737, %v1741
      %v1743 = vrot.slane %v994, 1
      %v1744 = vrot.slane %v990, 2
      %v1745 = vor.u32 %v1743, %v1744
      %v1746 = vsel %vm1707, %v1741, %v1745
      %v1747 = vrot.slane %v1002, 1
      %v1748 = vrot.slane %v998, 2
      %v1749 = vor.u32 %v1747, %v1748
      %v1750 = vsel %vm1707, %v1745, %v1749
      %v1751 = vrot.slane %v1010, 1
      %v1752 = vrot.slane %v1006, 2
      %v1753 = vor.u32 %v1751, %v1752
      %v1754 = vsel %vm1707, %v1749, %v1753
      %v1755 = vrot.slane %v1018, 1
      %v1756 = vrot.slane %v1014, 2
      %v1757 = vor.u32 %v1755, %v1756
      %v1758 = vsel %vm1707, %v1753, %v1757
      %v1759 = vrot.slane %v1026, 1
      %v1760 = vrot.slane %v1022, 2
      %v1761 = vor.u32 %v1759, %v1760
      %v1762 = vsel %vm1707, %v1757, %v1761
      %v1763 = vrot.slane %v1034, 1
      %v1764 = vrot.slane %v1030, 2
      %v1765 = vor.u32 %v1763, %v1764
      %v1766 = vsel %vm1707, %v1761, %v1765
      %v1767 = vrot.slane %v1042, 1
      %v1768 = vrot.slane %v1038, 2
      %v1769 = vor.u32 %v1767, %v1768
      %v1770 = vsel %vm1707, %v1765, %v1769
      %v1771 = vrot.slane %v1050, 1
      %v1772 = vrot.slane %v1046, 2
      %v1773 = vor.u32 %v1771, %v1772
      %v1774 = vsel %vm1707, %v1769, %v1773
      %v1775 = vrot.slane %v1058, 1
      %v1776 = vrot.slane %v1054, 2
      %v1777 = vor.u32 %v1775, %v1776
      %v1778 = vsel %vm1707, %v1773, %v1777
      %v1813 = vunpack.c.l.b16 %v1691
      %v1814 = vunpack.c.l.b16 %v1692
      %v1815 = vunpack.c.l.b16 %v1693
      %v1816 = vunpack.c.l.b16 %v1694
      %v1817 = vunpack.c.l.b16 %v1695
      %v1818 = vunpack.c.l.b16 %v1696
      %v1819 = vunpack.c.l.b16 %v1697
      %v1820 = vunpack.c.l.b16 %v1698
      %v1821 = vunpack.c.l.b16 %v1699
      %v1822 = vunpack.c.l.b16 %v1700
      %v1823 = vunpack.c.l.b16 %v1701
      %v1824 = vunpack.c.l.b16 %v1702
      %v1825 = vunpack.c.l.b16 %v1703
      %v1826 = vunpack.c.l.b16 %v1704
      %v1827 = vunpack.c.l.b16 %v1705
      %v1828 = vunpack.c.l.b16 %v1706
      %v1829 = vpack.c.b16 %v1814, %v1813
      %v1830 = vpack.c.b16 %v1816, %v1815
      %v1831 = vpack.c.b16 %v1818, %v1817
      %v1832 = vpack.c.b16 %v1820, %v1819
      %v1833 = vpack.c.b16 %v1822, %v1821
      %v1834 = vpack.c.b16 %v1824, %v1823
      %v1835 = vpack.c.b16 %v1826, %v1825
      %v1836 = vpack.c.b16 %v1828, %v1827
      %1845 = vmatprep.subr.bf16.mxu0 0
      %1846 = vmatpush1.bf16.msra.mxu0 %v1836
      %1847 = vmatprep.subr.bf16.mxu0 0
      %1848 = vmatpush1.bf16.msra.mxu0 %v1835
      %1849 = vmatprep.subr.bf16.mxu0 0
      %1850 = vmatpush1.bf16.msra.mxu0 %v1834
      %1851 = vmatprep.subr.bf16.mxu0 0
      %1852 = vmatpush1.bf16.msra.mxu0 %v1833
      %1853 = vmatprep.subr.bf16.mxu0 0
      %1854 = vmatpush1.bf16.msra.mxu0 %v1832
      %1855 = vmatprep.subr.bf16.mxu0 0
      %1856 = vmatpush1.bf16.msra.mxu0 %v1831
      %1857 = vmatprep.subr.bf16.mxu0 0
      %1858 = vmatpush1.bf16.msra.mxu0 %v1830
      %1859 = vmatprep.subr.bf16.mxu0 0
      %1860 = vmatpush1.bf16.msra.mxu0 %v1829
      %1861 = vmatprep.subr.bf16.mxu0 0
      %1862 = vmatpush2.bf16.msra.mxu0 0
      %1863 = vmatprep.subr.bf16.mxu0 0
      %1864 = vmatpush2.bf16.msra.mxu0 0
      %1865 = vmatprep.subr.bf16.mxu0 0
      %1866 = vmatpush2.bf16.msra.mxu0 0
      %1867 = vmatprep.subr.bf16.mxu0 0
      %1868 = vmatpush2.bf16.msra.mxu0 0
      %1869 = vmatprep.subr.bf16.mxu0 0
      %1870 = vmatpush2.bf16.msra.mxu0 0
      %1871 = vmatprep.subr.bf16.mxu0 0
      %1872 = vmatpush2.bf16.msra.mxu0 0
      %1873 = vmatprep.subr.bf16.mxu0 0
      %1874 = vmatpush2.bf16.msra.mxu0 0
      %1875 = vmatprep.subr.bf16.mxu0 0
      %1876 = vmatpush2.bf16.msra.mxu0 0
      %1877 = vmatprep.mubr.bf16.mxu0 0
      %1878 = vmatmul.mubr.bf16.gmra.mxu0 %v1714
      %v1879 = vpop.f32.mrf.mxu0
      %v1880 = vadd.f32 0.0, %v1879
      %v1881 = vpop.f32.mrf.mxu0
      %v1882 = vpop.f32.mrf.mxu0
      %v1883 = vadd.f32 0.0, %v1882
      %v1884 = vpop.f32.mrf.mxu0
      %1885 = vmatprep.mubr.bf16.mxu0 0
      %1886 = vmatmul.mubr.bf16.gmra.mxu0 %v1718
      %v1887 = vpop.f32.mrf.mxu0
      %v1888 = vadd.f32 0.0, %v1887
      %v1889 = vpop.f32.mrf.mxu0
      %v1890 = vpop.f32.mrf.mxu0
      %v1891 = vadd.f32 0.0, %v1890
      %v1892 = vpop.f32.mrf.mxu0
      %1893 = vmatprep.mubr.bf16.mxu0 0
      %1894 = vmatmul.mubr.bf16.gmra.mxu0 %v1722
      %v1895 = vpop.f32.mrf.mxu0
      %v1896 = vadd.f32 0.0, %v1895
      %v1897 = vpop.f32.mrf.mxu0
      %v1898 = vpop.f32.mrf.mxu0
      %v1899 = vadd.f32 0.0, %v1898
      %v1900 = vpop.f32.mrf.mxu0
      %1901 = vmatprep.mubr.bf16.mxu0 0
      %1902 = vmatmul.mubr.bf16.gmra.mxu0 %v1726
      %v1903 = vpop.f32.mrf.mxu0
      %v1904 = vadd.f32 0.0, %v1903
      %v1905 = vpop.f32.mrf.mxu0
      %v1906 = vpop.f32.mrf.mxu0
      %v1907 = vadd.f32 0.0, %v1906
      %v1908 = vpop.f32.mrf.mxu0
      %1909 = vmatprep.mubr.bf16.mxu0 0
      %1910 = vmatmul.mubr.bf16.gmra.mxu0 %v1730
      %v1911 = vpop.f32.mrf.mxu0
      %v1912 = vadd.f32 0.0, %v1911
      %v1913 = vpop.f32.mrf.mxu0
      %v1914 = vpop.f32.mrf.mxu0
      %v1915 = vadd.f32 0.0, %v1914
      %v1916 = vpop.f32.mrf.mxu0
      %1917 = vmatprep.mubr.bf16.mxu0 0
      %1918 = vmatmul.mubr.bf16.gmra.mxu0 %v1734
      %v1919 = vpop.f32.mrf.mxu0
      %v1920 = vadd.f32 0.0, %v1919
      %v1921 = vpop.f32.mrf.mxu0
      %v1922 = vpop.f32.mrf.mxu0
      %v1923 = vadd.f32 0.0, %v1922
      %v1924 = vpop.f32.mrf.mxu0
      %1925 = vmatprep.mubr.bf16.mxu0 0
      %1926 = vmatmul.mubr.bf16.gmra.mxu0 %v1738
      %v1927 = vpop.f32.mrf.mxu0
      %v1928 = vadd.f32 0.0, %v1927
      %v1929 = vpop.f32.mrf.mxu0
      %v1930 = vpop.f32.mrf.mxu0
      %v1931 = vadd.f32 0.0, %v1930
      %v1932 = vpop.f32.mrf.mxu0
      %1933 = vmatprep.mubr.bf16.mxu0 0
      %1934 = vmatmul.mubr.bf16.gmra.mxu0 %v1742
      %v1935 = vpop.f32.mrf.mxu0
      %v1936 = vadd.f32 0.0, %v1935
      %v1937 = vpop.f32.mrf.mxu0
      %v1938 = vpop.f32.mrf.mxu0
      %v1939 = vadd.f32 0.0, %v1938
      %v1940 = vpop.f32.mrf.mxu0
      %1941 = vmatprep.mubr.bf16.mxu0 0
      %1942 = vmatmul.mubr.bf16.gmra.mxu0 %v1746
      %v1943 = vpop.f32.mrf.mxu0
      %v1944 = vadd.f32 0.0, %v1943
      %v1945 = vpop.f32.mrf.mxu0
      %v1946 = vpop.f32.mrf.mxu0
      %v1947 = vadd.f32 0.0, %v1946
      %v1948 = vpop.f32.mrf.mxu0
      %1949 = vmatprep.mubr.bf16.mxu0 0
      %1950 = vmatmul.mubr.bf16.gmra.mxu0 %v1750
      %v1951 = vpop.f32.mrf.mxu0
      %v1952 = vadd.f32 0.0, %v1951
      %v1953 = vpop.f32.mrf.mxu0
      %v1954 = vpop.f32.mrf.mxu0
      %v1955 = vadd.f32 0.0, %v1954
      %v1956 = vpop.f32.mrf.mxu0
      %1957 = vmatprep.mubr.bf16.mxu0 0
      %1958 = vmatmul.mubr.bf16.gmra.mxu0 %v1754
      %v1959 = vpop.f32.mrf.mxu0
      %v1960 = vadd.f32 0.0, %v1959
      %v1961 = vpop.f32.mrf.mxu0
      %v1962 = vpop.f32.mrf.mxu0
      %v1963 = vadd.f32 0.0, %v1962
      %v1964 = vpop.f32.mrf.mxu0
      %1965 = vmatprep.mubr.bf16.mxu0 0
      %1966 = vmatmul.mubr.bf16.gmra.mxu0 %v1758
      %v1967 = vpop.f32.mrf.mxu0
      %v1968 = vadd.f32 0.0, %v1967
      %v1969 = vpop.f32.mrf.mxu0
      %v1970 = vpop.f32.mrf.mxu0
      %v1971 = vadd.f32 0.0, %v1970
      %v1972 = vpop.f32.mrf.mxu0
      %1973 = vmatprep.mubr.bf16.mxu0 0
      %1974 = vmatmul.mubr.bf16.gmra.mxu0 %v1762
      %v1975 = vpop.f32.mrf.mxu0
      %v1976 = vadd.f32 0.0, %v1975
      %v1977 = vpop.f32.mrf.mxu0
      %v1978 = vpop.f32.mrf.mxu0
      %v1979 = vadd.f32 0.0, %v1978
      %v1980 = vpop.f32.mrf.mxu0
      %1981 = vmatprep.mubr.bf16.mxu0 0
      %1982 = vmatmul.mubr.bf16.gmra.mxu0 %v1766
      %v1983 = vpop.f32.mrf.mxu0
      %v1984 = vadd.f32 0.0, %v1983
      %v1985 = vpop.f32.mrf.mxu0
      %v1986 = vpop.f32.mrf.mxu0
      %v1987 = vadd.f32 0.0, %v1986
      %v1988 = vpop.f32.mrf.mxu0
      %1989 = vmatprep.mubr.bf16.mxu0 0
      %1990 = vmatmul.mubr.bf16.gmra.mxu0 %v1770
      %v1991 = vpop.f32.mrf.mxu0
      %v1992 = vadd.f32 0.0, %v1991
      %v1993 = vpop.f32.mrf.mxu0
      %v1994 = vpop.f32.mrf.mxu0
      %v1995 = vadd.f32 0.0, %v1994
      %v1996 = vpop.f32.mrf.mxu0
      %1997 = vmatprep.mubr.bf16.mxu0 0
      %1998 = vmatmul.mubr.bf16.gmra.mxu0 %v1774
      %v1999 = vpop.f32.mrf.mxu0
      %v2000 = vadd.f32 0.0, %v1999
      %v2001 = vpop.f32.mrf.mxu0
      %v2002 = vpop.f32.mrf.mxu0
      %v2003 = vadd.f32 0.0, %v2002
      %v2004 = vpop.f32.mrf.mxu0
      %2005 = vmatprep.mubr.bf16.mxu0 0
      %2006 = vmatmul.mubr.bf16.gmra.mxu0 %v1778
      %v2007 = vpop.f32.mrf.mxu0
      %v2008 = vadd.f32 0.0, %v2007
      %v2009 = vpop.f32.mrf.mxu0
      %v2010 = vpop.f32.mrf.mxu0
      %v2011 = vadd.f32 0.0, %v2010
      %v2012 = vpop.f32.mrf.mxu0
      %2013 = vmatprep.mubr.bf16.mxu0 0
      %2014 = vmatmul.mubr.bf16.gmra.mxu0 %v1777
      %v2015 = vpop.f32.mrf.mxu0
      %v2016 = vadd.f32 0.0, %v2015
      %v2017 = vpop.f32.mrf.mxu0
      %v2018 = vpop.f32.mrf.mxu0
      %v2019 = vadd.f32 0.0, %v2018
      %v2020 = vpop.f32.mrf.mxu0
      %2021 = vdwg.mxu0
      %v2022 = vadd.f32 %v1654, %v1880
      %v2023 = vadd.f32 %v1655, %v1883
      %v2024 = vadd.f32 %v1656, %v1888
      %v2025 = vadd.f32 %v1657, %v1891
      %v2026 = vadd.f32 %v1658, %v1896
      %v2027 = vadd.f32 %v1659, %v1899
      %v2028 = vadd.f32 %v1660, %v1904
      %v2029 = vadd.f32 %v1661, %v1907
      %v2030 = vadd.f32 %v1662, %v1912
      %v2031 = vadd.f32 %v1663, %v1915
      %v2032 = vadd.f32 %v1664, %v1920
      %v2033 = vadd.f32 %v1665, %v1923
      %v2034 = vadd.f32 %v1666, %v1928
      %v2035 = vadd.f32 %v1667, %v1931
      %v2036 = vadd.f32 %v1668, %v1936
      %v2037 = vadd.f32 %v1669, %v1939
      %v2038 = vadd.f32 %v1670, %v1944
      %v2039 = vadd.f32 %v1671, %v1947
      %v2040 = vadd.f32 %v1672, %v1952
      %v2041 = vadd.f32 %v1673, %v1955
      %v2042 = vadd.f32 %v1674, %v1960
      %v2043 = vadd.f32 %v1675, %v1963
      %v2044 = vadd.f32 %v1676, %v1968
      %v2045 = vadd.f32 %v1677, %v1971
      %v2046 = vadd.f32 %v1678, %v1976
      %v2047 = vadd.f32 %v1679, %v1979
      %v2048 = vadd.f32 %v1680, %v1984
      %v2049 = vadd.f32 %v1681, %v1987
      %v2050 = vadd.f32 %v1682, %v1992
      %v2051 = vadd.f32 %v1683, %v1995
      %v2052 = vadd.f32 %v1684, %v2000
      %v2053 = vadd.f32 %v1685, %v2003
      %v2054 = vadd.f32 %v1686, %v2008
      %v2055 = vadd.f32 %v1687, %v2011
      %v2056 = vadd.f32 %v1688, %v2016
      %v2057 = vadd.f32 %v1689, %v2019
      %s2058 = scalar_lea.vmem %s1, 256
      %v2059 = vld [vmem:[%s2058] sm:$0xf]
      %v2060 = vld [vmem:[%s2058 + $0x4] sm:$0xf]
      %v2061 = vld [vmem:[%s2058 + $0x8] sm:$0xf]
      %v2062 = vld [vmem:[%s2058 + $0xc] sm:$0xf]
      %v2063 = vld [vmem:[%s2058 + $0x10] sm:$0xf]
      %v2064 = vld [vmem:[%s2058 + $0x14] sm:$0xf]
      %v2065 = vld [vmem:[%s2058 + $0x18] sm:$0xf]
      %v2066 = vld [vmem:[%s2058 + $0x1c] sm:$0xf]
      %v2067 = vld [vmem:[%s2058 + $0x20] sm:$0xf]
      %v2068 = vld [vmem:[%s2058 + $0x24] sm:$0xf]
      %v2069 = vld [vmem:[%s2058 + $0x28] sm:$0xf]
      %v2070 = vld [vmem:[%s2058 + $0x2c] sm:$0xf]
      %v2071 = vld [vmem:[%s2058 + $0x30] sm:$0xf]
      %v2072 = vld [vmem:[%s2058 + $0x34] sm:$0xf]
      %v2073 = vld [vmem:[%s2058 + $0x38] sm:$0xf]
      %v2074 = vld [vmem:[%s2058 + $0x3c] sm:$0xf]
      %vm2075 = vcmask 1045504
      %v2076 = vrot.slane %v605, 2
      %v2077 = vrot.slane %v606, 2
      %v2078 = vsel %vm2075, %v2076, %v2077
      %v2079 = vrot.slane %v607, 2
      %v2080 = vsel %vm2075, %v2077, %v2079
      %v2081 = vrot.slane %v608, 2
      %v2082 = vsel %vm2075, %v2079, %v2081
      %v2083 = vrot.slane %v609, 2
      %v2084 = vsel %vm2075, %v2081, %v2083
      %v2085 = vrot.slane %v610, 2
      %v2086 = vsel %vm2075, %v2083, %v2085
      %v2087 = vrot.slane %v611, 2
      %v2088 = vsel %vm2075, %v2085, %v2087
      %v2089 = vrot.slane %v612, 2
      %v2090 = vsel %vm2075, %v2087, %v2089
      %v2091 = vrot.slane %v613, 2
      %v2092 = vsel %vm2075, %v2089, %v2091
      %v2093 = vrot.slane %v614, 2
      %v2094 = vsel %vm2075, %v2091, %v2093
      %v2095 = vrot.slane %v615, 2
      %v2096 = vsel %vm2075, %v2093, %v2095
      %v2097 = vrot.slane %v616, 2
      %v2098 = vsel %vm2075, %v2095, %v2097
      %v2099 = vrot.slane %v617, 2
      %v2100 = vsel %vm2075, %v2097, %v2099
      %v2101 = vrot.slane %v618, 2
      %v2102 = vsel %vm2075, %v2099, %v2101
      %v2103 = vrot.slane %v619, 2
      %v2104 = vsel %vm2075, %v2101, %v2103
      %v2105 = vrot.slane %v620, 2
      %v2106 = vsel %vm2075, %v2103, %v2105
      %v2107 = vrot.slane %v621, 2
      %v2108 = vsel %vm2075, %v2105, %v2107
      %v2109 = vrot.slane %v622, 2
      %v2110 = vsel %vm2075, %v2107, %v2109
      %v2145 = vunpack.c.l.b16 %v2059
      %v2146 = vunpack.c.l.b16 %v2060
      %v2147 = vunpack.c.l.b16 %v2061
      %v2148 = vunpack.c.l.b16 %v2062
      %v2149 = vunpack.c.l.b16 %v2063
      %v2150 = vunpack.c.l.b16 %v2064
      %v2151 = vunpack.c.l.b16 %v2065
      %v2152 = vunpack.c.l.b16 %v2066
      %v2153 = vunpack.c.l.b16 %v2067
      %v2154 = vunpack.c.l.b16 %v2068
      %v2155 = vunpack.c.l.b16 %v2069
      %v2156 = vunpack.c.l.b16 %v2070
      %v2157 = vunpack.c.l.b16 %v2071
      %v2158 = vunpack.c.l.b16 %v2072
      %v2159 = vunpack.c.l.b16 %v2073
      %v2160 = vunpack.c.l.b16 %v2074
      %v2161 = vpack.c.b16 %v2146, %v2145
      %v2162 = vpack.c.b16 %v2148, %v2147
      %v2163 = vpack.c.b16 %v2150, %v2149
      %v2164 = vpack.c.b16 %v2152, %v2151
      %v2165 = vpack.c.b16 %v2154, %v2153
      %v2166 = vpack.c.b16 %v2156, %v2155
      %v2167 = vpack.c.b16 %v2158, %v2157
      %v2168 = vpack.c.b16 %v2160, %v2159
      %2177 = vmatprep.subr.bf16.mxu0 0
      %2178 = vmatpush1.bf16.msra.mxu0 %v2168
      %2179 = vmatprep.subr.bf16.mxu0 0
      %2180 = vmatpush1.bf16.msra.mxu0 %v2167
      %2181 = vmatprep.subr.bf16.mxu0 0
      %2182 = vmatpush1.bf16.msra.mxu0 %v2166
      %2183 = vmatprep.subr.bf16.mxu0 0
      %2184 = vmatpush1.bf16.msra.mxu0 %v2165
      %2185 = vmatprep.subr.bf16.mxu0 0
      %2186 = vmatpush1.bf16.msra.mxu0 %v2164
      %2187 = vmatprep.subr.bf16.mxu0 0
      %2188 = vmatpush1.bf16.msra.mxu0 %v2163
      %2189 = vmatprep.subr.bf16.mxu0 0
      %2190 = vmatpush1.bf16.msra.mxu0 %v2162
      %2191 = vmatprep.subr.bf16.mxu0 0
      %2192 = vmatpush1.bf16.msra.mxu0 %v2161
      %2193 = vmatprep.subr.bf16.mxu0 0
      %2194 = vmatpush2.bf16.msra.mxu0 0
      %2195 = vmatprep.subr.bf16.mxu0 0
      %2196 = vmatpush2.bf16.msra.mxu0 0
      %2197 = vmatprep.subr.bf16.mxu0 0
      %2198 = vmatpush2.bf16.msra.mxu0 0
      %2199 = vmatprep.subr.bf16.mxu0 0
      %2200 = vmatpush2.bf16.msra.mxu0 0
      %2201 = vmatprep.subr.bf16.mxu0 0
      %2202 = vmatpush2.bf16.msra.mxu0 0
      %2203 = vmatprep.subr.bf16.mxu0 0
      %2204 = vmatpush2.bf16.msra.mxu0 0
      %2205 = vmatprep.subr.bf16.mxu0 0
      %2206 = vmatpush2.bf16.msra.mxu0 0
      %2207 = vmatprep.subr.bf16.mxu0 0
      %2208 = vmatpush2.bf16.msra.mxu0 0
      %2209 = vmatprep.mubr.bf16.mxu0 0
      %2210 = vmatmul.mubr.bf16.gmra.mxu0 %v2078
      %v2211 = vpop.f32.mrf.mxu0
      %v2212 = vadd.f32 0.0, %v2211
      %v2213 = vpop.f32.mrf.mxu0
      %v2214 = vpop.f32.mrf.mxu0
      %v2215 = vadd.f32 0.0, %v2214
      %v2216 = vpop.f32.mrf.mxu0
      %2217 = vmatprep.mubr.bf16.mxu0 0
      %2218 = vmatmul.mubr.bf16.gmra.mxu0 %v2080
      %v2219 = vpop.f32.mrf.mxu0
      %v2220 = vadd.f32 0.0, %v2219
      %v2221 = vpop.f32.mrf.mxu0
      %v2222 = vpop.f32.mrf.mxu0
      %v2223 = vadd.f32 0.0, %v2222
      %v2224 = vpop.f32.mrf.mxu0
      %2225 = vmatprep.mubr.bf16.mxu0 0
      %2226 = vmatmul.mubr.bf16.gmra.mxu0 %v2082
      %v2227 = vpop.f32.mrf.mxu0
      %v2228 = vadd.f32 0.0, %v2227
      %v2229 = vpop.f32.mrf.mxu0
      %v2230 = vpop.f32.mrf.mxu0
      %v2231 = vadd.f32 0.0, %v2230
      %v2232 = vpop.f32.mrf.mxu0
      %2233 = vmatprep.mubr.bf16.mxu0 0
      %2234 = vmatmul.mubr.bf16.gmra.mxu0 %v2084
      %v2235 = vpop.f32.mrf.mxu0
      %v2236 = vadd.f32 0.0, %v2235
      %v2237 = vpop.f32.mrf.mxu0
      %v2238 = vpop.f32.mrf.mxu0
      %v2239 = vadd.f32 0.0, %v2238
      %v2240 = vpop.f32.mrf.mxu0
      %2241 = vmatprep.mubr.bf16.mxu0 0
      %2242 = vmatmul.mubr.bf16.gmra.mxu0 %v2086
      %v2243 = vpop.f32.mrf.mxu0
      %v2244 = vadd.f32 0.0, %v2243
      %v2245 = vpop.f32.mrf.mxu0
      %v2246 = vpop.f32.mrf.mxu0
      %v2247 = vadd.f32 0.0, %v2246
      %v2248 = vpop.f32.mrf.mxu0
      %2249 = vmatprep.mubr.bf16.mxu0 0
      %2250 = vmatmul.mubr.bf16.gmra.mxu0 %v2088
      %v2251 = vpop.f32.mrf.mxu0
      %v2252 = vadd.f32 0.0, %v2251
      %v2253 = vpop.f32.mrf.mxu0
      %v2254 = vpop.f32.mrf.mxu0
      %v2255 = vadd.f32 0.0, %v2254
      %v2256 = vpop.f32.mrf.mxu0
      %2257 = vmatprep.mubr.bf16.mxu0 0
      %2258 = vmatmul.mubr.bf16.gmra.mxu0 %v2090
      %v2259 = vpop.f32.mrf.mxu0
      %v2260 = vadd.f32 0.0, %v2259
      %v2261 = vpop.f32.mrf.mxu0
      %v2262 = vpop.f32.mrf.mxu0
      %v2263 = vadd.f32 0.0, %v2262
      %v2264 = vpop.f32.mrf.mxu0
      %2265 = vmatprep.mubr.bf16.mxu0 0
      %2266 = vmatmul.mubr.bf16.gmra.mxu0 %v2092
      %v2267 = vpop.f32.mrf.mxu0
      %v2268 = vadd.f32 0.0, %v2267
      %v2269 = vpop.f32.mrf.mxu0
      %v2270 = vpop.f32.mrf.mxu0
      %v2271 = vadd.f32 0.0, %v2270
      %v2272 = vpop.f32.mrf.mxu0
      %2273 = vmatprep.mubr.bf16.mxu0 0
      %2274 = vmatmul.mubr.bf16.gmra.mxu0 %v2094
      %v2275 = vpop.f32.mrf.mxu0
      %v2276 = vadd.f32 0.0, %v2275
      %v2277 = vpop.f32.mrf.mxu0
      %v2278 = vpop.f32.mrf.mxu0
      %v2279 = vadd.f32 0.0, %v2278
      %v2280 = vpop.f32.mrf.mxu0
      %2281 = vmatprep.mubr.bf16.mxu0 0
      %2282 = vmatmul.mubr.bf16.gmra.mxu0 %v2096
      %v2283 = vpop.f32.mrf.mxu0
      %v2284 = vadd.f32 0.0, %v2283
      %v2285 = vpop.f32.mrf.mxu0
      %v2286 = vpop.f32.mrf.mxu0
      %v2287 = vadd.f32 0.0, %v2286
      %v2288 = vpop.f32.mrf.mxu0
      %2289 = vmatprep.mubr.bf16.mxu0 0
      %2290 = vmatmul.mubr.bf16.gmra.mxu0 %v2098
      %v2291 = vpop.f32.mrf.mxu0
      %v2292 = vadd.f32 0.0, %v2291
      %v2293 = vpop.f32.mrf.mxu0
      %v2294 = vpop.f32.mrf.mxu0
      %v2295 = vadd.f32 0.0, %v2294
      %v2296 = vpop.f32.mrf.mxu0
      %2297 = vmatprep.mubr.bf16.mxu0 0
      %2298 = vmatmul.mubr.bf16.gmra.mxu0 %v2100
      %v2299 = vpop.f32.mrf.mxu0
      %v2300 = vadd.f32 0.0, %v2299
      %v2301 = vpop.f32.mrf.mxu0
      %v2302 = vpop.f32.mrf.mxu0
      %v2303 = vadd.f32 0.0, %v2302
      %v2304 = vpop.f32.mrf.mxu0
      %2305 = vmatprep.mubr.bf16.mxu0 0
      %2306 = vmatmul.mubr.bf16.gmra.mxu0 %v2102
      %v2307 = vpop.f32.mrf.mxu0
      %v2308 = vadd.f32 0.0, %v2307
      %v2309 = vpop.f32.mrf.mxu0
      %v2310 = vpop.f32.mrf.mxu0
      %v2311 = vadd.f32 0.0, %v2310
      %v2312 = vpop.f32.mrf.mxu0
      %2313 = vmatprep.mubr.bf16.mxu0 0
      %2314 = vmatmul.mubr.bf16.gmra.mxu0 %v2104
      %v2315 = vpop.f32.mrf.mxu0
      %v2316 = vadd.f32 0.0, %v2315
      %v2317 = vpop.f32.mrf.mxu0
      %v2318 = vpop.f32.mrf.mxu0
      %v2319 = vadd.f32 0.0, %v2318
      %v2320 = vpop.f32.mrf.mxu0
      %2321 = vmatprep.mubr.bf16.mxu0 0
      %2322 = vmatmul.mubr.bf16.gmra.mxu0 %v2106
      %v2323 = vpop.f32.mrf.mxu0
      %v2324 = vadd.f32 0.0, %v2323
      %v2325 = vpop.f32.mrf.mxu0
      %v2326 = vpop.f32.mrf.mxu0
      %v2327 = vadd.f32 0.0, %v2326
      %v2328 = vpop.f32.mrf.mxu0
      %2329 = vmatprep.mubr.bf16.mxu0 0
      %2330 = vmatmul.mubr.bf16.gmra.mxu0 %v2108
      %v2331 = vpop.f32.mrf.mxu0
      %v2332 = vadd.f32 0.0, %v2331
      %v2333 = vpop.f32.mrf.mxu0
      %v2334 = vpop.f32.mrf.mxu0
      %v2335 = vadd.f32 0.0, %v2334
      %v2336 = vpop.f32.mrf.mxu0
      %2337 = vmatprep.mubr.bf16.mxu0 0
      %2338 = vmatmul.mubr.bf16.gmra.mxu0 %v2110
      %v2339 = vpop.f32.mrf.mxu0
      %v2340 = vadd.f32 0.0, %v2339
      %v2341 = vpop.f32.mrf.mxu0
      %v2342 = vpop.f32.mrf.mxu0
      %v2343 = vadd.f32 0.0, %v2342
      %v2344 = vpop.f32.mrf.mxu0
      %2345 = vmatprep.mubr.bf16.mxu0 0
      %2346 = vmatmul.mubr.bf16.gmra.mxu0 %v2109
      %v2347 = vpop.f32.mrf.mxu0
      %v2348 = vadd.f32 0.0, %v2347
      %v2349 = vpop.f32.mrf.mxu0
      %v2350 = vpop.f32.mrf.mxu0
      %v2351 = vadd.f32 0.0, %v2350
      %v2352 = vpop.f32.mrf.mxu0
      %2353 = vdwg.mxu0
      %v2354 = vadd.f32 %v2022, %v2212
      %v2355 = vadd.f32 %v2023, %v2215
      %v2356 = vadd.f32 %v2024, %v2220
      %v2357 = vadd.f32 %v2025, %v2223
      %v2358 = vadd.f32 %v2026, %v2228
      %v2359 = vadd.f32 %v2027, %v2231
      %v2360 = vadd.f32 %v2028, %v2236
      %v2361 = vadd.f32 %v2029, %v2239
      %v2362 = vadd.f32 %v2030, %v2244
      %v2363 = vadd.f32 %v2031, %v2247
      %v2364 = vadd.f32 %v2032, %v2252
      %v2365 = vadd.f32 %v2033, %v2255
      %v2366 = vadd.f32 %v2034, %v2260
      %v2367 = vadd.f32 %v2035, %v2263
      %v2368 = vadd.f32 %v2036, %v2268
      %v2369 = vadd.f32 %v2037, %v2271
      %v2370 = vadd.f32 %v2038, %v2276
      %v2371 = vadd.f32 %v2039, %v2279
      %v2372 = vadd.f32 %v2040, %v2284
      %v2373 = vadd.f32 %v2041, %v2287
      %v2374 = vadd.f32 %v2042, %v2292
      %v2375 = vadd.f32 %v2043, %v2295
      %v2376 = vadd.f32 %v2044, %v2300
      %v2377 = vadd.f32 %v2045, %v2303
      %v2378 = vadd.f32 %v2046, %v2308
      %v2379 = vadd.f32 %v2047, %v2311
      %v2380 = vadd.f32 %v2048, %v2316
      %v2381 = vadd.f32 %v2049, %v2319
      %v2382 = vadd.f32 %v2050, %v2324
      %v2383 = vadd.f32 %v2051, %v2327
      %v2384 = vadd.f32 %v2052, %v2332
      %v2385 = vadd.f32 %v2053, %v2335
      %v2386 = vadd.f32 %v2054, %v2340
      %v2387 = vadd.f32 %v2055, %v2343
      %v2388 = vadd.f32 %v2056, %v2348
      %v2389 = vadd.f32 %v2057, %v2351
      %v2390 = vmul.f32 %v2354, 0.01
      %v2391 = vmul.f32 %v2355, 0.01
      %v2392 = vmul.f32 %v2356, 0.01
      %v2393 = vmul.f32 %v2357, 0.01
      %v2394 = vmul.f32 %v2358, 0.01
      %v2395 = vmul.f32 %v2359, 0.01
      %v2396 = vmul.f32 %v2360, 0.01
      %v2397 = vmul.f32 %v2361, 0.01
      %v2398 = vmul.f32 %v2362, 0.01
      %v2399 = vmul.f32 %v2363, 0.01
      %v2400 = vmul.f32 %v2364, 0.01
      %v2401 = vmul.f32 %v2365, 0.01
      %v2402 = vmul.f32 %v2366, 0.01
      %v2403 = vmul.f32 %v2367, 0.01
      %v2404 = vmul.f32 %v2368, 0.01
      %v2405 = vmul.f32 %v2369, 0.01
      %v2406 = vmul.f32 %v2370, 0.01
      %v2407 = vmul.f32 %v2371, 0.01
      %v2408 = vmul.f32 %v2372, 0.01
      %v2409 = vmul.f32 %v2373, 0.01
      %v2410 = vmul.f32 %v2374, 0.01
      %v2411 = vmul.f32 %v2375, 0.01
      %v2412 = vmul.f32 %v2376, 0.01
      %v2413 = vmul.f32 %v2377, 0.01
      %v2414 = vmul.f32 %v2378, 0.01
      %v2415 = vmul.f32 %v2379, 0.01
      %v2416 = vmul.f32 %v2380, 0.01
      %v2417 = vmul.f32 %v2381, 0.01
      %v2418 = vmul.f32 %v2382, 0.01
      %v2419 = vmul.f32 %v2383, 0.01
      %v2420 = vmul.f32 %v2384, 0.01
      %v2421 = vmul.f32 %v2385, 0.01
      %v2422 = vmul.f32 %v2386, 0.01
      %v2423 = vmul.f32 %v2387, 0.01
      %v2424 = vmul.f32 %v2388, 0.01
      %v2425 = vmul.f32 %v2389, 0.01
      %v2426 = vmax.f32 %v2354, %v2390
      %v2427 = vmax.f32 %v2355, %v2391
      %v2428 = vmax.f32 %v2356, %v2392
      %v2429 = vmax.f32 %v2357, %v2393
      %v2430 = vmax.f32 %v2358, %v2394
      %v2431 = vmax.f32 %v2359, %v2395
      %v2432 = vmax.f32 %v2360, %v2396
      %v2433 = vmax.f32 %v2361, %v2397
      %v2434 = vmax.f32 %v2362, %v2398
      %v2435 = vmax.f32 %v2363, %v2399
      %v2436 = vmax.f32 %v2364, %v2400
      %v2437 = vmax.f32 %v2365, %v2401
      %v2438 = vmax.f32 %v2366, %v2402
      %v2439 = vmax.f32 %v2367, %v2403
      %v2440 = vmax.f32 %v2368, %v2404
      %v2441 = vmax.f32 %v2369, %v2405
      %v2442 = vmax.f32 %v2370, %v2406
      %v2443 = vmax.f32 %v2371, %v2407
      %v2444 = vmax.f32 %v2372, %v2408
      %v2445 = vmax.f32 %v2373, %v2409
      %v2446 = vmax.f32 %v2374, %v2410
      %v2447 = vmax.f32 %v2375, %v2411
      %v2448 = vmax.f32 %v2376, %v2412
      %v2449 = vmax.f32 %v2377, %v2413
      %v2450 = vmax.f32 %v2378, %v2414
      %v2451 = vmax.f32 %v2379, %v2415
      %v2452 = vmax.f32 %v2380, %v2416
      %v2453 = vmax.f32 %v2381, %v2417
      %v2454 = vmax.f32 %v2382, %v2418
      %v2455 = vmax.f32 %v2383, %v2419
      %v2456 = vmax.f32 %v2384, %v2420
      %v2457 = vmax.f32 %v2385, %v2421
      %v2458 = vmax.f32 %v2386, %v2422
      %v2459 = vmax.f32 %v2387, %v2423
      %v2460 = vmax.f32 %v2388, %v2424
      %v2461 = vmax.f32 %v2389, %v2425
      %v2462 = vld [vmem:[%s4] sm:$0x1]
      %v2464 = vlaneseq
      %v2465 = vshrl.u32 %v2464, 7
      %v2466 = vsub.s32 0, %v2465
      %v2467 = vrot.slane %v2462, %v2466
      %v2469 = vpack.c.bf16 %v2427, %v2426
      %v2470 = vpack.c.bf16 %v2429, %v2428
      %v2471 = vpack.c.bf16 %v2431, %v2430
      %v2472 = vpack.c.bf16 %v2433, %v2432
      %v2473 = vpack.c.bf16 %v2435, %v2434
      %v2474 = vpack.c.bf16 %v2437, %v2436
      %v2475 = vpack.c.bf16 %v2439, %v2438
      %v2476 = vpack.c.bf16 %v2441, %v2440
      %v2477 = vpack.c.bf16 %v2443, %v2442
      %v2478 = vpack.c.bf16 %v2445, %v2444
      %v2479 = vpack.c.bf16 %v2447, %v2446
      %v2480 = vpack.c.bf16 %v2449, %v2448
      %v2481 = vpack.c.bf16 %v2451, %v2450
      %v2482 = vpack.c.bf16 %v2453, %v2452
      %v2483 = vpack.c.bf16 %v2455, %v2454
      %v2484 = vpack.c.bf16 %v2457, %v2456
      %v2485 = vpack.c.bf16 %v2459, %v2458
      %v2486 = vpack.c.bf16 %v2460, %v2460
      %v2487 = vld [vmem:[%s3] sm:$0xf]
      %v2488 = vld [vmem:[%s3 + $0x4] sm:$0xf]
      %v2489 = vld [vmem:[%s3 + $0x8] sm:$0xf]
      %v2490 = vld [vmem:[%s3 + $0xc] sm:$0xf]
      %v2491 = vld [vmem:[%s3 + $0x10] sm:$0xf]
      %v2492 = vld [vmem:[%s3 + $0x14] sm:$0xf]
      %v2493 = vld [vmem:[%s3 + $0x18] sm:$0xf]
      %v2494 = vld [vmem:[%s3 + $0x1c] sm:$0xf]
      %v2495 = vld [vmem:[%s3 + $0x20] sm:$0xf]
      %v2496 = vld [vmem:[%s3 + $0x24] sm:$0xf]
      %v2497 = vld [vmem:[%s3 + $0x28] sm:$0xf]
      %v2498 = vld [vmem:[%s3 + $0x2c] sm:$0xf]
      %v2499 = vld [vmem:[%s3 + $0x30] sm:$0xf]
      %v2500 = vld [vmem:[%s3 + $0x34] sm:$0xf]
      %v2501 = vld [vmem:[%s3 + $0x38] sm:$0xf]
      %v2502 = vld [vmem:[%s3 + $0x3c] sm:$0xf]
      %v2519 = vunpack.c.l.b16 %v2487
      %v2520 = vunpack.c.l.b16 %v2488
      %v2521 = vunpack.c.l.b16 %v2489
      %v2522 = vunpack.c.l.b16 %v2490
      %v2523 = vunpack.c.l.b16 %v2491
      %v2524 = vunpack.c.l.b16 %v2492
      %v2525 = vunpack.c.l.b16 %v2493
      %v2526 = vunpack.c.l.b16 %v2494
      %v2527 = vunpack.c.l.b16 %v2495
      %v2528 = vunpack.c.l.b16 %v2496
      %v2529 = vunpack.c.l.b16 %v2497
      %v2530 = vunpack.c.l.b16 %v2498
      %v2531 = vunpack.c.l.b16 %v2499
      %v2532 = vunpack.c.l.b16 %v2500
      %v2533 = vunpack.c.l.b16 %v2501
      %v2534 = vunpack.c.l.b16 %v2502
      %v2535 = vpack.c.b16 %v2520, %v2519
      %v2536 = vpack.c.b16 %v2522, %v2521
      %v2537 = vpack.c.b16 %v2524, %v2523
      %v2538 = vpack.c.b16 %v2526, %v2525
      %v2539 = vpack.c.b16 %v2528, %v2527
      %v2540 = vpack.c.b16 %v2530, %v2529
      %v2541 = vpack.c.b16 %v2532, %v2531
      %v2542 = vpack.c.b16 %v2534, %v2533
      %2551 = vmatprep.subr.bf16.mxu0 0
      %2552 = vmatpush1.bf16.msra.mxu0 %v2542
      %2553 = vmatprep.subr.bf16.mxu0 0
      %2554 = vmatpush1.bf16.msra.mxu0 %v2541
      %2555 = vmatprep.subr.bf16.mxu0 0
      %2556 = vmatpush1.bf16.msra.mxu0 %v2540
      %2557 = vmatprep.subr.bf16.mxu0 0
      %2558 = vmatpush1.bf16.msra.mxu0 %v2539
      %2559 = vmatprep.subr.bf16.mxu0 0
      %2560 = vmatpush1.bf16.msra.mxu0 %v2538
      %2561 = vmatprep.subr.bf16.mxu0 0
      %2562 = vmatpush1.bf16.msra.mxu0 %v2537
      %2563 = vmatprep.subr.bf16.mxu0 0
      %2564 = vmatpush1.bf16.msra.mxu0 %v2536
      %2565 = vmatprep.subr.bf16.mxu0 0
      %2566 = vmatpush1.bf16.msra.mxu0 %v2535
      %2567 = vmatprep.subr.bf16.mxu0 0
      %2568 = vmatpush2.bf16.msra.mxu0 0
      %2569 = vmatprep.subr.bf16.mxu0 0
      %2570 = vmatpush2.bf16.msra.mxu0 0
      %2571 = vmatprep.subr.bf16.mxu0 0
      %2572 = vmatpush2.bf16.msra.mxu0 0
      %2573 = vmatprep.subr.bf16.mxu0 0
      %2574 = vmatpush2.bf16.msra.mxu0 0
      %2575 = vmatprep.subr.bf16.mxu0 0
      %2576 = vmatpush2.bf16.msra.mxu0 0
      %2577 = vmatprep.subr.bf16.mxu0 0
      %2578 = vmatpush2.bf16.msra.mxu0 0
      %2579 = vmatprep.subr.bf16.mxu0 0
      %2580 = vmatpush2.bf16.msra.mxu0 0
      %2581 = vmatprep.subr.bf16.mxu0 0
      %2582 = vmatpush2.bf16.msra.mxu0 0
      %2583 = vmatprep.mubr.bf16.mxu0 0
      %2584 = vmatmul.mubr.bf16.gmra.mxu0 %v2469
      %v2585 = vpop.f32.mrf.mxu0
      %v2586 = vadd.f32 0.0, %v2585
      %v2587 = vpop.f32.mrf.mxu0
      %v2588 = vpop.f32.mrf.mxu0
      %v2589 = vadd.f32 0.0, %v2588
      %v2590 = vpop.f32.mrf.mxu0
      %2591 = vmatprep.mubr.bf16.mxu0 0
      %2592 = vmatmul.mubr.bf16.gmra.mxu0 %v2470
      %v2593 = vpop.f32.mrf.mxu0
      %v2594 = vadd.f32 0.0, %v2593
      %v2595 = vpop.f32.mrf.mxu0
      %v2596 = vpop.f32.mrf.mxu0
      %v2597 = vadd.f32 0.0, %v2596
      %v2598 = vpop.f32.mrf.mxu0
      %2599 = vmatprep.mubr.bf16.mxu0 0
      %2600 = vmatmul.mubr.bf16.gmra.mxu0 %v2471
      %v2601 = vpop.f32.mrf.mxu0
      %v2602 = vadd.f32 0.0, %v2601
      %v2603 = vpop.f32.mrf.mxu0
      %v2604 = vpop.f32.mrf.mxu0
      %v2605 = vadd.f32 0.0, %v2604
      %v2606 = vpop.f32.mrf.mxu0
      %2607 = vmatprep.mubr.bf16.mxu0 0
      %2608 = vmatmul.mubr.bf16.gmra.mxu0 %v2472
      %v2609 = vpop.f32.mrf.mxu0
      %v2610 = vadd.f32 0.0, %v2609
      %v2611 = vpop.f32.mrf.mxu0
      %v2612 = vpop.f32.mrf.mxu0
      %v2613 = vadd.f32 0.0, %v2612
      %v2614 = vpop.f32.mrf.mxu0
      %2615 = vmatprep.mubr.bf16.mxu0 0
      %2616 = vmatmul.mubr.bf16.gmra.mxu0 %v2473
      %v2617 = vpop.f32.mrf.mxu0
      %v2618 = vpop.f32.mrf.mxu0
      %v2619 = vpop.f32.mrf.mxu0
      %v2620 = vadd.f32 0.0, %v2619
      %v2621 = vpop.f32.mrf.mxu0
      %2622 = vmatprep.mubr.bf16.mxu0 0
      %2623 = vmatmul.mubr.bf16.gmra.mxu0 %v2474
      %v2624 = vpop.f32.mrf.mxu0
      %v2625 = vadd.f32 0.0, %v2624
      %v2626 = vpop.f32.mrf.mxu0
      %v2627 = vpop.f32.mrf.mxu0
      %v2628 = vadd.f32 0.0, %v2627
      %v2629 = vpop.f32.mrf.mxu0
      %2630 = vmatprep.mubr.bf16.mxu0 0
      %2631 = vmatmul.mubr.bf16.gmra.mxu0 %v2475
      %v2632 = vpop.f32.mrf.mxu0
      %v2633 = vadd.f32 0.0, %v2632
      %v2634 = vpop.f32.mrf.mxu0
      %v2635 = vpop.f32.mrf.mxu0
      %v2636 = vadd.f32 0.0, %v2635
      %v2637 = vpop.f32.mrf.mxu0
      %2638 = vmatprep.mubr.bf16.mxu0 0
      %2639 = vmatmul.mubr.bf16.gmra.mxu0 %v2476
      %v2640 = vpop.f32.mrf.mxu0
      %v2641 = vadd.f32 0.0, %v2640
      %v2642 = vpop.f32.mrf.mxu0
      %v2643 = vpop.f32.mrf.mxu0
      %v2644 = vadd.f32 0.0, %v2643
      %v2645 = vpop.f32.mrf.mxu0
      %2646 = vmatprep.mubr.bf16.mxu0 0
      %2647 = vmatmul.mubr.bf16.gmra.mxu0 %v2477
      %v2648 = vpop.f32.mrf.mxu0
      %v2649 = vadd.f32 0.0, %v2648
      %v2650 = vpop.f32.mrf.mxu0
      %v2651 = vpop.f32.mrf.mxu0
      %v2652 = vpop.f32.mrf.mxu0
      %2653 = vmatprep.mubr.bf16.mxu0 0
      %2654 = vmatmul.mubr.bf16.gmra.mxu0 %v2478
      %v2655 = vpop.f32.mrf.mxu0
      %v2656 = vadd.f32 0.0, %v2655
      %v2657 = vpop.f32.mrf.mxu0
      %v2658 = vpop.f32.mrf.mxu0
      %v2659 = vadd.f32 0.0, %v2658
      %v2660 = vpop.f32.mrf.mxu0
      %2661 = vmatprep.mubr.bf16.mxu0 0
      %2662 = vmatmul.mubr.bf16.gmra.mxu0 %v2479
      %v2663 = vpop.f32.mrf.mxu0
      %v2664 = vadd.f32 0.0, %v2663
      %v2665 = vpop.f32.mrf.mxu0
      %v2666 = vpop.f32.mrf.mxu0
      %v2667 = vadd.f32 0.0, %v2666
      %v2668 = vpop.f32.mrf.mxu0
      %2669 = vmatprep.mubr.bf16.mxu0 0
      %2670 = vmatmul.mubr.bf16.gmra.mxu0 %v2480
      %v2671 = vpop.f32.mrf.mxu0
      %v2672 = vadd.f32 0.0, %v2671
      %v2673 = vpop.f32.mrf.mxu0
      %v2674 = vpop.f32.mrf.mxu0
      %v2675 = vadd.f32 0.0, %v2674
      %v2676 = vpop.f32.mrf.mxu0
      %2677 = vmatprep.mubr.bf16.mxu0 0
      %2678 = vmatmul.mubr.bf16.gmra.mxu0 %v2481
      %v2679 = vpop.f32.mrf.mxu0
      %v2680 = vadd.f32 0.0, %v2679
      %v2681 = vpop.f32.mrf.mxu0
      %v2682 = vpop.f32.mrf.mxu0
      %v2683 = vadd.f32 0.0, %v2682
      %v2684 = vpop.f32.mrf.mxu0
      %2685 = vmatprep.mubr.bf16.mxu0 0
      %2686 = vmatmul.mubr.bf16.gmra.mxu0 %v2482
      %v2687 = vpop.f32.mrf.mxu0
      %v2688 = vpop.f32.mrf.mxu0
      %v2689 = vpop.f32.mrf.mxu0
      %v2690 = vadd.f32 0.0, %v2689
      %v2691 = vpop.f32.mrf.mxu0
      %2692 = vmatprep.mubr.bf16.mxu0 0
      %2693 = vmatmul.mubr.bf16.gmra.mxu0 %v2483
      %v2694 = vpop.f32.mrf.mxu0
      %v2695 = vadd.f32 0.0, %v2694
      %v2696 = vpop.f32.mrf.mxu0
      %v2697 = vpop.f32.mrf.mxu0
      %v2698 = vadd.f32 0.0, %v2697
      %v2699 = vpop.f32.mrf.mxu0
      %2700 = vmatprep.mubr.bf16.mxu0 0
      %2701 = vmatmul.mubr.bf16.gmra.mxu0 %v2484
      %v2702 = vpop.f32.mrf.mxu0
      %v2703 = vadd.f32 0.0, %v2702
      %v2704 = vpop.f32.mrf.mxu0
      %v2705 = vpop.f32.mrf.mxu0
      %v2706 = vadd.f32 0.0, %v2705
      %v2707 = vpop.f32.mrf.mxu0
      %2708 = vmatprep.mubr.bf16.mxu0 0
      %2709 = vmatmul.mubr.bf16.gmra.mxu0 %v2485
      %v2710 = vpop.f32.mrf.mxu0
      %v2711 = vadd.f32 0.0, %v2710
      %v2712 = vpop.f32.mrf.mxu0
      %v2713 = vpop.f32.mrf.mxu0
      %v2714 = vadd.f32 0.0, %v2713
      %v2715 = vpop.f32.mrf.mxu0
      %2716 = vmatprep.mubr.bf16.mxu0 0
      %2717 = vmatmul.mubr.bf16.gmra.mxu0 %v2486
      %v2718 = vpop.f32.mrf.mxu0
      %v2719 = vadd.f32 0.0, %v2718
      %v2720 = vpop.f32.mrf.mxu0
      %v2721 = vpop.f32.mrf.mxu0
      %v2722 = vpop.f32.mrf.mxu0
      %2723 = vdwg.mxu0
      %v2724 = vadd.f32 %v2467, %v2586
      %v2725 = vadd.f32 %v2467, %v2589
      %v2726 = vadd.f32 %v2467, %v2594
      %v2727 = vadd.f32 %v2467, %v2597
      %v2728 = vadd.f32 %v2467, %v2602
      %v2729 = vadd.f32 %v2467, %v2605
      %v2730 = vadd.f32 %v2467, %v2610
      %v2731 = vadd.f32 %v2467, %v2613
      %v2732 = vadd.f32 %v2467, %v2620
      %v2733 = vadd.f32 %v2467, %v2625
      %v2734 = vadd.f32 %v2467, %v2628
      %v2735 = vadd.f32 %v2467, %v2633
      %v2736 = vadd.f32 %v2467, %v2636
      %v2737 = vadd.f32 %v2467, %v2641
      %v2738 = vadd.f32 %v2467, %v2644
      %v2739 = vadd.f32 %v2467, %v2649
      %v2740 = vadd.f32 %v2467, %v2656
      %v2741 = vadd.f32 %v2467, %v2659
      %v2742 = vadd.f32 %v2467, %v2664
      %v2743 = vadd.f32 %v2467, %v2667
      %v2744 = vadd.f32 %v2467, %v2672
      %v2745 = vadd.f32 %v2467, %v2675
      %v2746 = vadd.f32 %v2467, %v2680
      %v2747 = vadd.f32 %v2467, %v2683
      %v2748 = vadd.f32 %v2467, %v2690
      %v2749 = vadd.f32 %v2467, %v2695
      %v2750 = vadd.f32 %v2467, %v2698
      %v2751 = vadd.f32 %v2467, %v2703
      %v2752 = vadd.f32 %v2467, %v2706
      %v2753 = vadd.f32 %v2467, %v2711
      %v2754 = vadd.f32 %v2467, %v2714
      %v2755 = vadd.f32 %v2467, %v2719
      %v2756 = vpack.c.bf16 %v2461, %v2460
      %s2757 = scalar_lea.vmem %s3, 64
      %v2758 = vld [vmem:[%s2757] sm:$0xf]
      %v2759 = vld [vmem:[%s2757 + $0x4] sm:$0xf]
      %v2760 = vld [vmem:[%s2757 + $0x8] sm:$0xf]
      %v2761 = vld [vmem:[%s2757 + $0xc] sm:$0xf]
      %v2762 = vld [vmem:[%s2757 + $0x10] sm:$0xf]
      %v2763 = vld [vmem:[%s2757 + $0x14] sm:$0xf]
      %v2764 = vld [vmem:[%s2757 + $0x18] sm:$0xf]
      %v2765 = vld [vmem:[%s2757 + $0x1c] sm:$0xf]
      %v2766 = vld [vmem:[%s2757 + $0x20] sm:$0xf]
      %v2767 = vld [vmem:[%s2757 + $0x24] sm:$0xf]
      %v2768 = vld [vmem:[%s2757 + $0x28] sm:$0xf]
      %v2769 = vld [vmem:[%s2757 + $0x2c] sm:$0xf]
      %v2770 = vld [vmem:[%s2757 + $0x30] sm:$0xf]
      %v2771 = vld [vmem:[%s2757 + $0x34] sm:$0xf]
      %v2772 = vld [vmem:[%s2757 + $0x38] sm:$0xf]
      %v2773 = vld [vmem:[%s2757 + $0x3c] sm:$0xf]
      %v2775 = vshrl.u32 %v2469, 16
      %v2777 = vshll.u32 %v2469, 16
      %v2779 = vrot.slane %v2777, 1
      %v2780 = vor.u32 %v2775, %v2779
      %v2782 = vshll.u32 %v2470, 16
      %v2784 = vrot.slane %v2782, 1
      %v2785 = vsel %vm917, %v2780, %v2784
      %v2786 = vshrl.u32 %v2470, 16
      %v2788 = vor.u32 %v2786, %v2784
      %v2790 = vshll.u32 %v2471, 16
      %v2792 = vrot.slane %v2790, 1
      %v2793 = vsel %vm917, %v2788, %v2792
      %v2794 = vshrl.u32 %v2471, 16
      %v2796 = vor.u32 %v2794, %v2792
      %v2798 = vshll.u32 %v2472, 16
      %v2800 = vrot.slane %v2798, 1
      %v2801 = vsel %vm917, %v2796, %v2800
      %v2802 = vshrl.u32 %v2472, 16
      %v2804 = vor.u32 %v2802, %v2800
      %v2806 = vshll.u32 %v2473, 16
      %v2808 = vrot.slane %v2806, 1
      %v2809 = vsel %vm917, %v2804, %v2808
      %v2810 = vshrl.u32 %v2473, 16
      %v2812 = vor.u32 %v2810, %v2808
      %v2814 = vshll.u32 %v2474, 16
      %v2816 = vrot.slane %v2814, 1
      %v2817 = vsel %vm917, %v2812, %v2816
      %v2818 = vshrl.u32 %v2474, 16
      %v2820 = vor.u32 %v2818, %v2816
      %v2822 = vshll.u32 %v2475, 16
      %v2824 = vrot.slane %v2822, 1
      %v2825 = vsel %vm917, %v2820, %v2824
      %v2826 = vshrl.u32 %v2475, 16
      %v2828 = vor.u32 %v2826, %v2824
      %v2830 = vshll.u32 %v2476, 16
      %v2832 = vrot.slane %v2830, 1
      %v2833 = vsel %vm917, %v2828, %v2832
      %v2834 = vshrl.u32 %v2476, 16
      %v2836 = vor.u32 %v2834, %v2832
      %v2838 = vshll.u32 %v2477, 16
      %v2840 = vrot.slane %v2838, 1
      %v2841 = vsel %vm917, %v2836, %v2840
      %v2842 = vshrl.u32 %v2477, 16
      %v2844 = vor.u32 %v2842, %v2840
      %v2846 = vshll.u32 %v2478, 16
      %v2848 = vrot.slane %v2846, 1
      %v2849 = vsel %vm917, %v2844, %v2848
      %v2850 = vshrl.u32 %v2478, 16
      %v2852 = vor.u32 %v2850, %v2848
      %v2854 = vshll.u32 %v2479, 16
      %v2856 = vrot.slane %v2854, 1
      %v2857 = vsel %vm917, %v2852, %v2856
      %v2858 = vshrl.u32 %v2479, 16
      %v2860 = vor.u32 %v2858, %v2856
      %v2862 = vshll.u32 %v2480, 16
      %v2864 = vrot.slane %v2862, 1
      %v2865 = vsel %vm917, %v2860, %v2864
      %v2866 = vshrl.u32 %v2480, 16
      %v2868 = vor.u32 %v2866, %v2864
      %v2870 = vshll.u32 %v2481, 16
      %v2872 = vrot.slane %v2870, 1
      %v2873 = vsel %vm917, %v2868, %v2872
      %v2874 = vshrl.u32 %v2481, 16
      %v2876 = vor.u32 %v2874, %v2872
      %v2878 = vshll.u32 %v2482, 16
      %v2880 = vrot.slane %v2878, 1
      %v2881 = vsel %vm917, %v2876, %v2880
      %v2882 = vshrl.u32 %v2482, 16
      %v2884 = vor.u32 %v2882, %v2880
      %v2886 = vshll.u32 %v2483, 16
      %v2888 = vrot.slane %v2886, 1
      %v2889 = vsel %vm917, %v2884, %v2888
      %v2890 = vshrl.u32 %v2483, 16
      %v2892 = vor.u32 %v2890, %v2888
      %v2894 = vshll.u32 %v2484, 16
      %v2896 = vrot.slane %v2894, 1
      %v2897 = vsel %vm917, %v2892, %v2896
      %v2898 = vshrl.u32 %v2484, 16
      %v2900 = vor.u32 %v2898, %v2896
      %v2902 = vshll.u32 %v2485, 16
      %v2904 = vrot.slane %v2902, 1
      %v2905 = vsel %vm917, %v2900, %v2904
      %v2906 = vshrl.u32 %v2485, 16
      %v2908 = vor.u32 %v2906, %v2904
      %v2910 = vshll.u32 %v2756, 16
      %v2912 = vrot.slane %v2910, 1
      %v2913 = vsel %vm917, %v2908, %v2912
      %v2914 = vshrl.u32 %v2756, 16
      %v2916 = vor.u32 %v2914, %v2912
      %v2951 = vunpack.c.l.b16 %v2758
      %v2952 = vunpack.c.l.b16 %v2759
      %v2953 = vunpack.c.l.b16 %v2760
      %v2954 = vunpack.c.l.b16 %v2761
      %v2955 = vunpack.c.l.b16 %v2762
      %v2956 = vunpack.c.l.b16 %v2763
      %v2957 = vunpack.c.l.b16 %v2764
      %v2958 = vunpack.c.l.b16 %v2765
      %v2959 = vunpack.c.l.b16 %v2766
      %v2960 = vunpack.c.l.b16 %v2767
      %v2961 = vunpack.c.l.b16 %v2768
      %v2962 = vunpack.c.l.b16 %v2769
      %v2963 = vunpack.c.l.b16 %v2770
      %v2964 = vunpack.c.l.b16 %v2771
      %v2965 = vunpack.c.l.b16 %v2772
      %v2966 = vunpack.c.l.b16 %v2773
      %v2967 = vpack.c.b16 %v2952, %v2951
      %v2968 = vpack.c.b16 %v2954, %v2953
      %v2969 = vpack.c.b16 %v2956, %v2955
      %v2970 = vpack.c.b16 %v2958, %v2957
      %v2971 = vpack.c.b16 %v2960, %v2959
      %v2972 = vpack.c.b16 %v2962, %v2961
      %v2973 = vpack.c.b16 %v2964, %v2963
      %v2974 = vpack.c.b16 %v2966, %v2965
      %2983 = vmatprep.subr.bf16.mxu0 0
      %2984 = vmatpush1.bf16.msra.mxu0 %v2974
      %2985 = vmatprep.subr.bf16.mxu0 0
      %2986 = vmatpush1.bf16.msra.mxu0 %v2973
      %2987 = vmatprep.subr.bf16.mxu0 0
      %2988 = vmatpush1.bf16.msra.mxu0 %v2972
      %2989 = vmatprep.subr.bf16.mxu0 0
      %2990 = vmatpush1.bf16.msra.mxu0 %v2971
      %2991 = vmatprep.subr.bf16.mxu0 0
      %2992 = vmatpush1.bf16.msra.mxu0 %v2970
      %2993 = vmatprep.subr.bf16.mxu0 0
      %2994 = vmatpush1.bf16.msra.mxu0 %v2969
      %2995 = vmatprep.subr.bf16.mxu0 0
      %2996 = vmatpush1.bf16.msra.mxu0 %v2968
      %2997 = vmatprep.subr.bf16.mxu0 0
      %2998 = vmatpush1.bf16.msra.mxu0 %v2967
      %2999 = vmatprep.subr.bf16.mxu0 0
      %3000 = vmatpush2.bf16.msra.mxu0 0
      %3001 = vmatprep.subr.bf16.mxu0 0
      %3002 = vmatpush2.bf16.msra.mxu0 0
      %3003 = vmatprep.subr.bf16.mxu0 0
      %3004 = vmatpush2.bf16.msra.mxu0 0
      %3005 = vmatprep.subr.bf16.mxu0 0
      %3006 = vmatpush2.bf16.msra.mxu0 0
      %3007 = vmatprep.subr.bf16.mxu0 0
      %3008 = vmatpush2.bf16.msra.mxu0 0
      %3009 = vmatprep.subr.bf16.mxu0 0
      %3010 = vmatpush2.bf16.msra.mxu0 0
      %3011 = vmatprep.subr.bf16.mxu0 0
      %3012 = vmatpush2.bf16.msra.mxu0 0
      %3013 = vmatprep.subr.bf16.mxu0 0
      %3014 = vmatpush2.bf16.msra.mxu0 0
      %3015 = vmatprep.mubr.bf16.mxu0 0
      %3016 = vmatmul.mubr.bf16.gmra.mxu0 %v2785
      %v3017 = vpop.f32.mrf.mxu0
      %v3018 = vadd.f32 0.0, %v3017
      %v3019 = vpop.f32.mrf.mxu0
      %v3020 = vpop.f32.mrf.mxu0
      %v3021 = vadd.f32 0.0, %v3020
      %v3022 = vpop.f32.mrf.mxu0
      %3023 = vmatprep.mubr.bf16.mxu0 0
      %3024 = vmatmul.mubr.bf16.gmra.mxu0 %v2793
      %v3025 = vpop.f32.mrf.mxu0
      %v3026 = vadd.f32 0.0, %v3025
      %v3027 = vpop.f32.mrf.mxu0
      %v3028 = vpop.f32.mrf.mxu0
      %v3029 = vadd.f32 0.0, %v3028
      %v3030 = vpop.f32.mrf.mxu0
      %3031 = vmatprep.mubr.bf16.mxu0 0
      %3032 = vmatmul.mubr.bf16.gmra.mxu0 %v2801
      %v3033 = vpop.f32.mrf.mxu0
      %v3034 = vadd.f32 0.0, %v3033
      %v3035 = vpop.f32.mrf.mxu0
      %v3036 = vpop.f32.mrf.mxu0
      %v3037 = vadd.f32 0.0, %v3036
      %v3038 = vpop.f32.mrf.mxu0
      %3039 = vmatprep.mubr.bf16.mxu0 0
      %3040 = vmatmul.mubr.bf16.gmra.mxu0 %v2809
      %v3041 = vpop.f32.mrf.mxu0
      %v3042 = vadd.f32 0.0, %v3041
      %v3043 = vpop.f32.mrf.mxu0
      %v3044 = vpop.f32.mrf.mxu0
      %v3045 = vadd.f32 0.0, %v3044
      %v3046 = vpop.f32.mrf.mxu0
      %3047 = vmatprep.mubr.bf16.mxu0 0
      %3048 = vmatmul.mubr.bf16.gmra.mxu0 %v2817
      %v3049 = vpop.f32.mrf.mxu0
      %v3050 = vpop.f32.mrf.mxu0
      %v3051 = vpop.f32.mrf.mxu0
      %v3052 = vadd.f32 0.0, %v3051
      %v3053 = vpop.f32.mrf.mxu0
      %3054 = vmatprep.mubr.bf16.mxu0 0
      %3055 = vmatmul.mubr.bf16.gmra.mxu0 %v2825
      %v3056 = vpop.f32.mrf.mxu0
      %v3057 = vadd.f32 0.0, %v3056
      %v3058 = vpop.f32.mrf.mxu0
      %v3059 = vpop.f32.mrf.mxu0
      %v3060 = vadd.f32 0.0, %v3059
      %v3061 = vpop.f32.mrf.mxu0
      %3062 = vmatprep.mubr.bf16.mxu0 0
      %3063 = vmatmul.mubr.bf16.gmra.mxu0 %v2833
      %v3064 = vpop.f32.mrf.mxu0
      %v3065 = vadd.f32 0.0, %v3064
      %v3066 = vpop.f32.mrf.mxu0
      %v3067 = vpop.f32.mrf.mxu0
      %v3068 = vadd.f32 0.0, %v3067
      %v3069 = vpop.f32.mrf.mxu0
      %3070 = vmatprep.mubr.bf16.mxu0 0
      %3071 = vmatmul.mubr.bf16.gmra.mxu0 %v2841
      %v3072 = vpop.f32.mrf.mxu0
      %v3073 = vadd.f32 0.0, %v3072
      %v3074 = vpop.f32.mrf.mxu0
      %v3075 = vpop.f32.mrf.mxu0
      %v3076 = vadd.f32 0.0, %v3075
      %v3077 = vpop.f32.mrf.mxu0
      %3078 = vmatprep.mubr.bf16.mxu0 0
      %3079 = vmatmul.mubr.bf16.gmra.mxu0 %v2849
      %v3080 = vpop.f32.mrf.mxu0
      %v3081 = vadd.f32 0.0, %v3080
      %v3082 = vpop.f32.mrf.mxu0
      %v3083 = vpop.f32.mrf.mxu0
      %v3084 = vpop.f32.mrf.mxu0
      %3085 = vmatprep.mubr.bf16.mxu0 0
      %3086 = vmatmul.mubr.bf16.gmra.mxu0 %v2857
      %v3087 = vpop.f32.mrf.mxu0
      %v3088 = vadd.f32 0.0, %v3087
      %v3089 = vpop.f32.mrf.mxu0
      %v3090 = vpop.f32.mrf.mxu0
      %v3091 = vadd.f32 0.0, %v3090
      %v3092 = vpop.f32.mrf.mxu0
      %3093 = vmatprep.mubr.bf16.mxu0 0
      %3094 = vmatmul.mubr.bf16.gmra.mxu0 %v2865
      %v3095 = vpop.f32.mrf.mxu0
      %v3096 = vadd.f32 0.0, %v3095
      %v3097 = vpop.f32.mrf.mxu0
      %v3098 = vpop.f32.mrf.mxu0
      %v3099 = vadd.f32 0.0, %v3098
      %v3100 = vpop.f32.mrf.mxu0
      %3101 = vmatprep.mubr.bf16.mxu0 0
      %3102 = vmatmul.mubr.bf16.gmra.mxu0 %v2873
      %v3103 = vpop.f32.mrf.mxu0
      %v3104 = vadd.f32 0.0, %v3103
      %v3105 = vpop.f32.mrf.mxu0
      %v3106 = vpop.f32.mrf.mxu0
      %v3107 = vadd.f32 0.0, %v3106
      %v3108 = vpop.f32.mrf.mxu0
      %3109 = vmatprep.mubr.bf16.mxu0 0
      %3110 = vmatmul.mubr.bf16.gmra.mxu0 %v2881
      %v3111 = vpop.f32.mrf.mxu0
      %v3112 = vadd.f32 0.0, %v3111
      %v3113 = vpop.f32.mrf.mxu0
      %v3114 = vpop.f32.mrf.mxu0
      %v3115 = vadd.f32 0.0, %v3114
      %v3116 = vpop.f32.mrf.mxu0
      %3117 = vmatprep.mubr.bf16.mxu0 0
      %3118 = vmatmul.mubr.bf16.gmra.mxu0 %v2889
      %v3119 = vpop.f32.mrf.mxu0
      %v3120 = vpop.f32.mrf.mxu0
      %v3121 = vpop.f32.mrf.mxu0
      %v3122 = vadd.f32 0.0, %v3121
      %v3123 = vpop.f32.mrf.mxu0
      %3124 = vmatprep.mubr.bf16.mxu0 0
      %3125 = vmatmul.mubr.bf16.gmra.mxu0 %v2897
      %v3126 = vpop.f32.mrf.mxu0
      %v3127 = vadd.f32 0.0, %v3126
      %v3128 = vpop.f32.mrf.mxu0
      %v3129 = vpop.f32.mrf.mxu0
      %v3130 = vadd.f32 0.0, %v3129
      %v3131 = vpop.f32.mrf.mxu0
      %3132 = vmatprep.mubr.bf16.mxu0 0
      %3133 = vmatmul.mubr.bf16.gmra.mxu0 %v2905
      %v3134 = vpop.f32.mrf.mxu0
      %v3135 = vadd.f32 0.0, %v3134
      %v3136 = vpop.f32.mrf.mxu0
      %v3137 = vpop.f32.mrf.mxu0
      %v3138 = vadd.f32 0.0, %v3137
      %v3139 = vpop.f32.mrf.mxu0
      %3140 = vmatprep.mubr.bf16.mxu0 0
      %3141 = vmatmul.mubr.bf16.gmra.mxu0 %v2913
      %v3142 = vpop.f32.mrf.mxu0
      %v3143 = vadd.f32 0.0, %v3142
      %v3144 = vpop.f32.mrf.mxu0
      %v3145 = vpop.f32.mrf.mxu0
      %v3146 = vadd.f32 0.0, %v3145
      %v3147 = vpop.f32.mrf.mxu0
      %3148 = vmatprep.mubr.bf16.mxu0 0
      %3149 = vmatmul.mubr.bf16.gmra.mxu0 %v2916
      %v3150 = vpop.f32.mrf.mxu0
      %v3151 = vadd.f32 0.0, %v3150
      %v3152 = vpop.f32.mrf.mxu0
      %v3153 = vpop.f32.mrf.mxu0
      %v3154 = vpop.f32.mrf.mxu0
      %3155 = vdwg.mxu0
      %v3156 = vadd.f32 %v2724, %v3018
      %v3157 = vadd.f32 %v2725, %v3021
      %v3158 = vadd.f32 %v2726, %v3026
      %v3159 = vadd.f32 %v2727, %v3029
      %v3160 = vadd.f32 %v2728, %v3034
      %v3161 = vadd.f32 %v2729, %v3037
      %v3162 = vadd.f32 %v2730, %v3042
      %v3163 = vadd.f32 %v2731, %v3045
      %v3164 = vadd.f32 %v2732, %v3052
      %v3165 = vadd.f32 %v2733, %v3057
      %v3166 = vadd.f32 %v2734, %v3060
      %v3167 = vadd.f32 %v2735, %v3065
      %v3168 = vadd.f32 %v2736, %v3068
      %v3169 = vadd.f32 %v2737, %v3073
      %v3170 = vadd.f32 %v2738, %v3076
      %v3171 = vadd.f32 %v2739, %v3081
      %v3172 = vadd.f32 %v2740, %v3088
      %v3173 = vadd.f32 %v2741, %v3091
      %v3174 = vadd.f32 %v2742, %v3096
      %v3175 = vadd.f32 %v2743, %v3099
      %v3176 = vadd.f32 %v2744, %v3104
      %v3177 = vadd.f32 %v2745, %v3107
      %v3178 = vadd.f32 %v2746, %v3112
      %v3179 = vadd.f32 %v2747, %v3115
      %v3180 = vadd.f32 %v2748, %v3122
      %v3181 = vadd.f32 %v2749, %v3127
      %v3182 = vadd.f32 %v2750, %v3130
      %v3183 = vadd.f32 %v2751, %v3135
      %v3184 = vadd.f32 %v2752, %v3138
      %v3185 = vadd.f32 %v2753, %v3143
      %v3186 = vadd.f32 %v2754, %v3146
      %v3187 = vadd.f32 %v2755, %v3151
      %s3188 = scalar_lea.vmem %s3, 128
      %v3189 = vld [vmem:[%s3188] sm:$0xf]
      %v3190 = vld [vmem:[%s3188 + $0x4] sm:$0xf]
      %v3191 = vld [vmem:[%s3188 + $0x8] sm:$0xf]
      %v3192 = vld [vmem:[%s3188 + $0xc] sm:$0xf]
      %v3193 = vld [vmem:[%s3188 + $0x10] sm:$0xf]
      %v3194 = vld [vmem:[%s3188 + $0x14] sm:$0xf]
      %v3195 = vld [vmem:[%s3188 + $0x18] sm:$0xf]
      %v3196 = vld [vmem:[%s3188 + $0x1c] sm:$0xf]
      %v3197 = vld [vmem:[%s3188 + $0x20] sm:$0xf]
      %v3198 = vld [vmem:[%s3188 + $0x24] sm:$0xf]
      %v3199 = vld [vmem:[%s3188 + $0x28] sm:$0xf]
      %v3200 = vld [vmem:[%s3188 + $0x2c] sm:$0xf]
      %v3201 = vld [vmem:[%s3188 + $0x30] sm:$0xf]
      %v3202 = vld [vmem:[%s3188 + $0x34] sm:$0xf]
      %v3203 = vld [vmem:[%s3188 + $0x38] sm:$0xf]
      %v3204 = vld [vmem:[%s3188 + $0x3c] sm:$0xf]
      %v3223 = vrot.slane %v2469, 1
      %v3224 = vrot.slane %v2470, 1
      %v3225 = vsel %vm1375, %v3223, %v3224
      %v3226 = vrot.slane %v2471, 1
      %v3227 = vsel %vm1375, %v3224, %v3226
      %v3228 = vrot.slane %v2472, 1
      %v3229 = vsel %vm1375, %v3226, %v3228
      %v3230 = vrot.slane %v2473, 1
      %v3231 = vsel %vm1375, %v3228, %v3230
      %v3232 = vrot.slane %v2474, 1
      %v3233 = vsel %vm1375, %v3230, %v3232
      %v3234 = vrot.slane %v2475, 1
      %v3235 = vsel %vm1375, %v3232, %v3234
      %v3236 = vrot.slane %v2476, 1
      %v3237 = vsel %vm1375, %v3234, %v3236
      %v3238 = vrot.slane %v2477, 1
      %v3239 = vsel %vm1375, %v3236, %v3238
      %v3240 = vrot.slane %v2478, 1
      %v3241 = vsel %vm1375, %v3238, %v3240
      %v3242 = vrot.slane %v2479, 1
      %v3243 = vsel %vm1375, %v3240, %v3242
      %v3244 = vrot.slane %v2480, 1
      %v3245 = vsel %vm1375, %v3242, %v3244
      %v3246 = vrot.slane %v2481, 1
      %v3247 = vsel %vm1375, %v3244, %v3246
      %v3248 = vrot.slane %v2482, 1
      %v3249 = vsel %vm1375, %v3246, %v3248
      %v3250 = vrot.slane %v2483, 1
      %v3251 = vsel %vm1375, %v3248, %v3250
      %v3252 = vrot.slane %v2484, 1
      %v3253 = vsel %vm1375, %v3250, %v3252
      %v3254 = vrot.slane %v2485, 1
      %v3255 = vsel %vm1375, %v3252, %v3254
      %v3256 = vrot.slane %v2756, 1
      %v3257 = vsel %vm1375, %v3254, %v3256
      %v3292 = vunpack.c.l.b16 %v3189
      %v3293 = vunpack.c.l.b16 %v3190
      %v3294 = vunpack.c.l.b16 %v3191
      %v3295 = vunpack.c.l.b16 %v3192
      %v3296 = vunpack.c.l.b16 %v3193
      %v3297 = vunpack.c.l.b16 %v3194
      %v3298 = vunpack.c.l.b16 %v3195
      %v3299 = vunpack.c.l.b16 %v3196
      %v3300 = vunpack.c.l.b16 %v3197
      %v3301 = vunpack.c.l.b16 %v3198
      %v3302 = vunpack.c.l.b16 %v3199
      %v3303 = vunpack.c.l.b16 %v3200
      %v3304 = vunpack.c.l.b16 %v3201
      %v3305 = vunpack.c.l.b16 %v3202
      %v3306 = vunpack.c.l.b16 %v3203
      %v3307 = vunpack.c.l.b16 %v3204
      %v3308 = vpack.c.b16 %v3293, %v3292
      %v3309 = vpack.c.b16 %v3295, %v3294
      %v3310 = vpack.c.b16 %v3297, %v3296
      %v3311 = vpack.c.b16 %v3299, %v3298
      %v3312 = vpack.c.b16 %v3301, %v3300
      %v3313 = vpack.c.b16 %v3303, %v3302
      %v3314 = vpack.c.b16 %v3305, %v3304
      %v3315 = vpack.c.b16 %v3307, %v3306
      %3324 = vmatprep.subr.bf16.mxu0 0
      %3325 = vmatpush1.bf16.msra.mxu0 %v3315
      %3326 = vmatprep.subr.bf16.mxu0 0
      %3327 = vmatpush1.bf16.msra.mxu0 %v3314
      %3328 = vmatprep.subr.bf16.mxu0 0
      %3329 = vmatpush1.bf16.msra.mxu0 %v3313
      %3330 = vmatprep.subr.bf16.mxu0 0
      %3331 = vmatpush1.bf16.msra.mxu0 %v3312
      %3332 = vmatprep.subr.bf16.mxu0 0
      %3333 = vmatpush1.bf16.msra.mxu0 %v3311
      %3334 = vmatprep.subr.bf16.mxu0 0
      %3335 = vmatpush1.bf16.msra.mxu0 %v3310
      %3336 = vmatprep.subr.bf16.mxu0 0
      %3337 = vmatpush1.bf16.msra.mxu0 %v3309
      %3338 = vmatprep.subr.bf16.mxu0 0
      %3339 = vmatpush1.bf16.msra.mxu0 %v3308
      %3340 = vmatprep.subr.bf16.mxu0 0
      %3341 = vmatpush2.bf16.msra.mxu0 0
      %3342 = vmatprep.subr.bf16.mxu0 0
      %3343 = vmatpush2.bf16.msra.mxu0 0
      %3344 = vmatprep.subr.bf16.mxu0 0
      %3345 = vmatpush2.bf16.msra.mxu0 0
      %3346 = vmatprep.subr.bf16.mxu0 0
      %3347 = vmatpush2.bf16.msra.mxu0 0
      %3348 = vmatprep.subr.bf16.mxu0 0
      %3349 = vmatpush2.bf16.msra.mxu0 0
      %3350 = vmatprep.subr.bf16.mxu0 0
      %3351 = vmatpush2.bf16.msra.mxu0 0
      %3352 = vmatprep.subr.bf16.mxu0 0
      %3353 = vmatpush2.bf16.msra.mxu0 0
      %3354 = vmatprep.subr.bf16.mxu0 0
      %3355 = vmatpush2.bf16.msra.mxu0 0
      %3356 = vmatprep.mubr.bf16.mxu0 0
      %3357 = vmatmul.mubr.bf16.gmra.mxu0 %v3225
      %v3358 = vpop.f32.mrf.mxu0
      %v3359 = vadd.f32 0.0, %v3358
      %v3360 = vpop.f32.mrf.mxu0
      %v3361 = vpop.f32.mrf.mxu0
      %v3362 = vadd.f32 0.0, %v3361
      %v3363 = vpop.f32.mrf.mxu0
      %3364 = vmatprep.mubr.bf16.mxu0 0
      %3365 = vmatmul.mubr.bf16.gmra.mxu0 %v3227
      %v3366 = vpop.f32.mrf.mxu0
      %v3367 = vadd.f32 0.0, %v3366
      %v3368 = vpop.f32.mrf.mxu0
      %v3369 = vpop.f32.mrf.mxu0
      %v3370 = vadd.f32 0.0, %v3369
      %v3371 = vpop.f32.mrf.mxu0
      %3372 = vmatprep.mubr.bf16.mxu0 0
      %3373 = vmatmul.mubr.bf16.gmra.mxu0 %v3229
      %v3374 = vpop.f32.mrf.mxu0
      %v3375 = vadd.f32 0.0, %v3374
      %v3376 = vpop.f32.mrf.mxu0
      %v3377 = vpop.f32.mrf.mxu0
      %v3378 = vadd.f32 0.0, %v3377
      %v3379 = vpop.f32.mrf.mxu0
      %3380 = vmatprep.mubr.bf16.mxu0 0
      %3381 = vmatmul.mubr.bf16.gmra.mxu0 %v3231
      %v3382 = vpop.f32.mrf.mxu0
      %v3383 = vadd.f32 0.0, %v3382
      %v3384 = vpop.f32.mrf.mxu0
      %v3385 = vpop.f32.mrf.mxu0
      %v3386 = vadd.f32 0.0, %v3385
      %v3387 = vpop.f32.mrf.mxu0
      %3388 = vmatprep.mubr.bf16.mxu0 0
      %3389 = vmatmul.mubr.bf16.gmra.mxu0 %v3233
      %v3390 = vpop.f32.mrf.mxu0
      %v3391 = vpop.f32.mrf.mxu0
      %v3392 = vpop.f32.mrf.mxu0
      %v3393 = vadd.f32 0.0, %v3392
      %v3394 = vpop.f32.mrf.mxu0
      %3395 = vmatprep.mubr.bf16.mxu0 0
      %3396 = vmatmul.mubr.bf16.gmra.mxu0 %v3235
      %v3397 = vpop.f32.mrf.mxu0
      %v3398 = vadd.f32 0.0, %v3397
      %v3399 = vpop.f32.mrf.mxu0
      %v3400 = vpop.f32.mrf.mxu0
      %v3401 = vadd.f32 0.0, %v3400
      %v3402 = vpop.f32.mrf.mxu0
      %3403 = vmatprep.mubr.bf16.mxu0 0
      %3404 = vmatmul.mubr.bf16.gmra.mxu0 %v3237
      %v3405 = vpop.f32.mrf.mxu0
      %v3406 = vadd.f32 0.0, %v3405
      %v3407 = vpop.f32.mrf.mxu0
      %v3408 = vpop.f32.mrf.mxu0
      %v3409 = vadd.f32 0.0, %v3408
      %v3410 = vpop.f32.mrf.mxu0
      %3411 = vmatprep.mubr.bf16.mxu0 0
      %3412 = vmatmul.mubr.bf16.gmra.mxu0 %v3239
      %v3413 = vpop.f32.mrf.mxu0
      %v3414 = vadd.f32 0.0, %v3413
      %v3415 = vpop.f32.mrf.mxu0
      %v3416 = vpop.f32.mrf.mxu0
      %v3417 = vadd.f32 0.0, %v3416
      %v3418 = vpop.f32.mrf.mxu0
      %3419 = vmatprep.mubr.bf16.mxu0 0
      %3420 = vmatmul.mubr.bf16.gmra.mxu0 %v3241
      %v3421 = vpop.f32.mrf.mxu0
      %v3422 = vadd.f32 0.0, %v3421
      %v3423 = vpop.f32.mrf.mxu0
      %v3424 = vpop.f32.mrf.mxu0
      %v3425 = vpop.f32.mrf.mxu0
      %3426 = vmatprep.mubr.bf16.mxu0 0
      %3427 = vmatmul.mubr.bf16.gmra.mxu0 %v3243
      %v3428 = vpop.f32.mrf.mxu0
      %v3429 = vadd.f32 0.0, %v3428
      %v3430 = vpop.f32.mrf.mxu0
      %v3431 = vpop.f32.mrf.mxu0
      %v3432 = vadd.f32 0.0, %v3431
      %v3433 = vpop.f32.mrf.mxu0
      %3434 = vmatprep.mubr.bf16.mxu0 0
      %3435 = vmatmul.mubr.bf16.gmra.mxu0 %v3245
      %v3436 = vpop.f32.mrf.mxu0
      %v3437 = vadd.f32 0.0, %v3436
      %v3438 = vpop.f32.mrf.mxu0
      %v3439 = vpop.f32.mrf.mxu0
      %v3440 = vadd.f32 0.0, %v3439
      %v3441 = vpop.f32.mrf.mxu0
      %3442 = vmatprep.mubr.bf16.mxu0 0
      %3443 = vmatmul.mubr.bf16.gmra.mxu0 %v3247
      %v3444 = vpop.f32.mrf.mxu0
      %v3445 = vadd.f32 0.0, %v3444
      %v3446 = vpop.f32.mrf.mxu0
      %v3447 = vpop.f32.mrf.mxu0
      %v3448 = vadd.f32 0.0, %v3447
      %v3449 = vpop.f32.mrf.mxu0
      %3450 = vmatprep.mubr.bf16.mxu0 0
      %3451 = vmatmul.mubr.bf16.gmra.mxu0 %v3249
      %v3452 = vpop.f32.mrf.mxu0
      %v3453 = vadd.f32 0.0, %v3452
      %v3454 = vpop.f32.mrf.mxu0
      %v3455 = vpop.f32.mrf.mxu0
      %v3456 = vadd.f32 0.0, %v3455
      %v3457 = vpop.f32.mrf.mxu0
      %3458 = vmatprep.mubr.bf16.mxu0 0
      %3459 = vmatmul.mubr.bf16.gmra.mxu0 %v3251
      %v3460 = vpop.f32.mrf.mxu0
      %v3461 = vpop.f32.mrf.mxu0
      %v3462 = vpop.f32.mrf.mxu0
      %v3463 = vadd.f32 0.0, %v3462
      %v3464 = vpop.f32.mrf.mxu0
      %3465 = vmatprep.mubr.bf16.mxu0 0
      %3466 = vmatmul.mubr.bf16.gmra.mxu0 %v3253
      %v3467 = vpop.f32.mrf.mxu0
      %v3468 = vadd.f32 0.0, %v3467
      %v3469 = vpop.f32.mrf.mxu0
      %v3470 = vpop.f32.mrf.mxu0
      %v3471 = vadd.f32 0.0, %v3470
      %v3472 = vpop.f32.mrf.mxu0
      %3473 = vmatprep.mubr.bf16.mxu0 0
      %3474 = vmatmul.mubr.bf16.gmra.mxu0 %v3255
      %v3475 = vpop.f32.mrf.mxu0
      %v3476 = vadd.f32 0.0, %v3475
      %v3477 = vpop.f32.mrf.mxu0
      %v3478 = vpop.f32.mrf.mxu0
      %v3479 = vadd.f32 0.0, %v3478
      %v3480 = vpop.f32.mrf.mxu0
      %3481 = vmatprep.mubr.bf16.mxu0 0
      %3482 = vmatmul.mubr.bf16.gmra.mxu0 %v3257
      %v3483 = vpop.f32.mrf.mxu0
      %v3484 = vadd.f32 0.0, %v3483
      %v3485 = vpop.f32.mrf.mxu0
      %v3486 = vpop.f32.mrf.mxu0
      %v3487 = vadd.f32 0.0, %v3486
      %v3488 = vpop.f32.mrf.mxu0
      %3489 = vmatprep.mubr.bf16.mxu0 0
      %3490 = vmatmul.mubr.bf16.gmra.mxu0 %v3256
      %v3491 = vpop.f32.mrf.mxu0
      %v3492 = vadd.f32 0.0, %v3491
      %v3493 = vpop.f32.mrf.mxu0
      %v3494 = vpop.f32.mrf.mxu0
      %v3495 = vpop.f32.mrf.mxu0
      %3496 = vdwg.mxu0
      %v3497 = vadd.f32 %v3156, %v3359
      %v3498 = vadd.f32 %v3157, %v3362
      %v3499 = vadd.f32 %v3158, %v3367
      %v3500 = vadd.f32 %v3159, %v3370
      %v3501 = vadd.f32 %v3160, %v3375
      %v3502 = vadd.f32 %v3161, %v3378
      %v3503 = vadd.f32 %v3162, %v3383
      %v3504 = vadd.f32 %v3163, %v3386
      %v3505 = vadd.f32 %v3164, %v3393
      %v3506 = vadd.f32 %v3165, %v3398
      %v3507 = vadd.f32 %v3166, %v3401
      %v3508 = vadd.f32 %v3167, %v3406
      %v3509 = vadd.f32 %v3168, %v3409
      %v3510 = vadd.f32 %v3169, %v3414
      %v3511 = vadd.f32 %v3170, %v3417
      %v3512 = vadd.f32 %v3171, %v3422
      %v3513 = vadd.f32 %v3172, %v3429
      %v3514 = vadd.f32 %v3173, %v3432
      %v3515 = vadd.f32 %v3174, %v3437
      %v3516 = vadd.f32 %v3175, %v3440
      %v3517 = vadd.f32 %v3176, %v3445
      %v3518 = vadd.f32 %v3177, %v3448
      %v3519 = vadd.f32 %v3178, %v3453
      %v3520 = vadd.f32 %v3179, %v3456
      %v3521 = vadd.f32 %v3180, %v3463
      %v3522 = vadd.f32 %v3181, %v3468
      %v3523 = vadd.f32 %v3182, %v3471
      %v3524 = vadd.f32 %v3183, %v3476
      %v3525 = vadd.f32 %v3184, %v3479
      %v3526 = vadd.f32 %v3185, %v3484
      %v3527 = vadd.f32 %v3186, %v3487
      %v3528 = vadd.f32 %v3187, %v3492
      %s3529 = scalar_lea.vmem %s3, 192
      %v3530 = vld [vmem:[%s3529] sm:$0xf]
      %v3531 = vld [vmem:[%s3529 + $0x4] sm:$0xf]
      %v3532 = vld [vmem:[%s3529 + $0x8] sm:$0xf]
      %v3533 = vld [vmem:[%s3529 + $0xc] sm:$0xf]
      %v3534 = vld [vmem:[%s3529 + $0x10] sm:$0xf]
      %v3535 = vld [vmem:[%s3529 + $0x14] sm:$0xf]
      %v3536 = vld [vmem:[%s3529 + $0x18] sm:$0xf]
      %v3537 = vld [vmem:[%s3529 + $0x1c] sm:$0xf]
      %v3538 = vld [vmem:[%s3529 + $0x20] sm:$0xf]
      %v3539 = vld [vmem:[%s3529 + $0x24] sm:$0xf]
      %v3540 = vld [vmem:[%s3529 + $0x28] sm:$0xf]
      %v3541 = vld [vmem:[%s3529 + $0x2c] sm:$0xf]
      %v3542 = vld [vmem:[%s3529 + $0x30] sm:$0xf]
      %v3543 = vld [vmem:[%s3529 + $0x34] sm:$0xf]
      %v3544 = vld [vmem:[%s3529 + $0x38] sm:$0xf]
      %v3545 = vld [vmem:[%s3529 + $0x3c] sm:$0xf]
      %v3546 = vrot.slane %v2775, 1
      %v3547 = vrot.slane %v2777, 2
      %v3548 = vor.u32 %v3546, %v3547
      %v3549 = vrot.slane %v2786, 1
      %v3550 = vrot.slane %v2782, 2
      %v3551 = vor.u32 %v3549, %v3550
      %v3552 = vsel %vm1707, %v3548, %v3551
      %v3553 = vrot.slane %v2794, 1
      %v3554 = vrot.slane %v2790, 2
      %v3555 = vor.u32 %v3553, %v3554
      %v3556 = vsel %vm1707, %v3551, %v3555
      %v3557 = vrot.slane %v2802, 1
      %v3558 = vrot.slane %v2798, 2
      %v3559 = vor.u32 %v3557, %v3558
      %v3560 = vsel %vm1707, %v3555, %v3559
      %v3561 = vrot.slane %v2810, 1
      %v3562 = vrot.slane %v2806, 2
      %v3563 = vor.u32 %v3561, %v3562
      %v3564 = vsel %vm1707, %v3559, %v3563
      %v3565 = vrot.slane %v2818, 1
      %v3566 = vrot.slane %v2814, 2
      %v3567 = vor.u32 %v3565, %v3566
      %v3568 = vsel %vm1707, %v3563, %v3567
      %v3569 = vrot.slane %v2826, 1
      %v3570 = vrot.slane %v2822, 2
      %v3571 = vor.u32 %v3569, %v3570
      %v3572 = vsel %vm1707, %v3567, %v3571
      %v3573 = vrot.slane %v2834, 1
      %v3574 = vrot.slane %v2830, 2
      %v3575 = vor.u32 %v3573, %v3574
      %v3576 = vsel %vm1707, %v3571, %v3575
      %v3577 = vrot.slane %v2842, 1
      %v3578 = vrot.slane %v2838, 2
      %v3579 = vor.u32 %v3577, %v3578
      %v3580 = vsel %vm1707, %v3575, %v3579
      %v3581 = vrot.slane %v2850, 1
      %v3582 = vrot.slane %v2846, 2
      %v3583 = vor.u32 %v3581, %v3582
      %v3584 = vsel %vm1707, %v3579, %v3583
      %v3585 = vrot.slane %v2858, 1
      %v3586 = vrot.slane %v2854, 2
      %v3587 = vor.u32 %v3585, %v3586
      %v3588 = vsel %vm1707, %v3583, %v3587
      %v3589 = vrot.slane %v2866, 1
      %v3590 = vrot.slane %v2862, 2
      %v3591 = vor.u32 %v3589, %v3590
      %v3592 = vsel %vm1707, %v3587, %v3591
      %v3593 = vrot.slane %v2874, 1
      %v3594 = vrot.slane %v2870, 2
      %v3595 = vor.u32 %v3593, %v3594
      %v3596 = vsel %vm1707, %v3591, %v3595
      %v3597 = vrot.slane %v2882, 1
      %v3598 = vrot.slane %v2878, 2
      %v3599 = vor.u32 %v3597, %v3598
      %v3600 = vsel %vm1707, %v3595, %v3599
      %v3601 = vrot.slane %v2890, 1
      %v3602 = vrot.slane %v2886, 2
      %v3603 = vor.u32 %v3601, %v3602
      %v3604 = vsel %vm1707, %v3599, %v3603
      %v3605 = vrot.slane %v2898, 1
      %v3606 = vrot.slane %v2894, 2
      %v3607 = vor.u32 %v3605, %v3606
      %v3608 = vsel %vm1707, %v3603, %v3607
      %v3609 = vrot.slane %v2906, 1
      %v3610 = vrot.slane %v2902, 2
      %v3611 = vor.u32 %v3609, %v3610
      %v3612 = vsel %vm1707, %v3607, %v3611
      %v3613 = vrot.slane %v2914, 1
      %v3614 = vrot.slane %v2910, 2
      %v3615 = vor.u32 %v3613, %v3614
      %v3616 = vsel %vm1707, %v3611, %v3615
      %v3651 = vunpack.c.l.b16 %v3530
      %v3652 = vunpack.c.l.b16 %v3531
      %v3653 = vunpack.c.l.b16 %v3532
      %v3654 = vunpack.c.l.b16 %v3533
      %v3655 = vunpack.c.l.b16 %v3534
      %v3656 = vunpack.c.l.b16 %v3535
      %v3657 = vunpack.c.l.b16 %v3536
      %v3658 = vunpack.c.l.b16 %v3537
      %v3659 = vunpack.c.l.b16 %v3538
      %v3660 = vunpack.c.l.b16 %v3539
      %v3661 = vunpack.c.l.b16 %v3540
      %v3662 = vunpack.c.l.b16 %v3541
      %v3663 = vunpack.c.l.b16 %v3542
      %v3664 = vunpack.c.l.b16 %v3543
      %v3665 = vunpack.c.l.b16 %v3544
      %v3666 = vunpack.c.l.b16 %v3545
      %v3667 = vpack.c.b16 %v3652, %v3651
      %v3668 = vpack.c.b16 %v3654, %v3653
      %v3669 = vpack.c.b16 %v3656, %v3655
      %v3670 = vpack.c.b16 %v3658, %v3657
      %v3671 = vpack.c.b16 %v3660, %v3659
      %v3672 = vpack.c.b16 %v3662, %v3661
      %v3673 = vpack.c.b16 %v3664, %v3663
      %v3674 = vpack.c.b16 %v3666, %v3665
      %3683 = vmatprep.subr.bf16.mxu0 0
      %3684 = vmatpush1.bf16.msra.mxu0 %v3674
      %3685 = vmatprep.subr.bf16.mxu0 0
      %3686 = vmatpush1.bf16.msra.mxu0 %v3673
      %3687 = vmatprep.subr.bf16.mxu0 0
      %3688 = vmatpush1.bf16.msra.mxu0 %v3672
      %3689 = vmatprep.subr.bf16.mxu0 0
      %3690 = vmatpush1.bf16.msra.mxu0 %v3671
      %3691 = vmatprep.subr.bf16.mxu0 0
      %3692 = vmatpush1.bf16.msra.mxu0 %v3670
      %3693 = vmatprep.subr.bf16.mxu0 0
      %3694 = vmatpush1.bf16.msra.mxu0 %v3669
      %3695 = vmatprep.subr.bf16.mxu0 0
      %3696 = vmatpush1.bf16.msra.mxu0 %v3668
      %3697 = vmatprep.subr.bf16.mxu0 0
      %3698 = vmatpush1.bf16.msra.mxu0 %v3667
      %3699 = vmatprep.subr.bf16.mxu0 0
      %3700 = vmatpush2.bf16.msra.mxu0 0
      %3701 = vmatprep.subr.bf16.mxu0 0
      %3702 = vmatpush2.bf16.msra.mxu0 0
      %3703 = vmatprep.subr.bf16.mxu0 0
      %3704 = vmatpush2.bf16.msra.mxu0 0
      %3705 = vmatprep.subr.bf16.mxu0 0
      %3706 = vmatpush2.bf16.msra.mxu0 0
      %3707 = vmatprep.subr.bf16.mxu0 0
      %3708 = vmatpush2.bf16.msra.mxu0 0
      %3709 = vmatprep.subr.bf16.mxu0 0
      %3710 = vmatpush2.bf16.msra.mxu0 0
      %3711 = vmatprep.subr.bf16.mxu0 0
      %3712 = vmatpush2.bf16.msra.mxu0 0
      %3713 = vmatprep.subr.bf16.mxu0 0
      %3714 = vmatpush2.bf16.msra.mxu0 0
      %3715 = vmatprep.mubr.bf16.mxu0 0
      %3716 = vmatmul.mubr.bf16.gmra.mxu0 %v3552
      %v3717 = vpop.f32.mrf.mxu0
      %v3718 = vadd.f32 0.0, %v3717
      %v3719 = vpop.f32.mrf.mxu0
      %v3720 = vpop.f32.mrf.mxu0
      %v3721 = vadd.f32 0.0, %v3720
      %v3722 = vpop.f32.mrf.mxu0
      %3723 = vmatprep.mubr.bf16.mxu0 0
      %3724 = vmatmul.mubr.bf16.gmra.mxu0 %v3556
      %v3725 = vpop.f32.mrf.mxu0
      %v3726 = vadd.f32 0.0, %v3725
      %v3727 = vpop.f32.mrf.mxu0
      %v3728 = vpop.f32.mrf.mxu0
      %v3729 = vadd.f32 0.0, %v3728
      %v3730 = vpop.f32.mrf.mxu0
      %3731 = vmatprep.mubr.bf16.mxu0 0
      %3732 = vmatmul.mubr.bf16.gmra.mxu0 %v3560
      %v3733 = vpop.f32.mrf.mxu0
      %v3734 = vadd.f32 0.0, %v3733
      %v3735 = vpop.f32.mrf.mxu0
      %v3736 = vpop.f32.mrf.mxu0
      %v3737 = vadd.f32 0.0, %v3736
      %v3738 = vpop.f32.mrf.mxu0
      %3739 = vmatprep.mubr.bf16.mxu0 0
      %3740 = vmatmul.mubr.bf16.gmra.mxu0 %v3564
      %v3741 = vpop.f32.mrf.mxu0
      %v3742 = vadd.f32 0.0, %v3741
      %v3743 = vpop.f32.mrf.mxu0
      %v3744 = vpop.f32.mrf.mxu0
      %v3745 = vadd.f32 0.0, %v3744
      %v3746 = vpop.f32.mrf.mxu0
      %3747 = vmatprep.mubr.bf16.mxu0 0
      %3748 = vmatmul.mubr.bf16.gmra.mxu0 %v3568
      %v3749 = vpop.f32.mrf.mxu0
      %v3750 = vpop.f32.mrf.mxu0
      %v3751 = vpop.f32.mrf.mxu0
      %v3752 = vadd.f32 0.0, %v3751
      %v3753 = vpop.f32.mrf.mxu0
      %3754 = vmatprep.mubr.bf16.mxu0 0
      %3755 = vmatmul.mubr.bf16.gmra.mxu0 %v3572
      %v3756 = vpop.f32.mrf.mxu0
      %v3757 = vadd.f32 0.0, %v3756
      %v3758 = vpop.f32.mrf.mxu0
      %v3759 = vpop.f32.mrf.mxu0
      %v3760 = vadd.f32 0.0, %v3759
      %v3761 = vpop.f32.mrf.mxu0
      %3762 = vmatprep.mubr.bf16.mxu0 0
      %3763 = vmatmul.mubr.bf16.gmra.mxu0 %v3576
      %v3764 = vpop.f32.mrf.mxu0
      %v3765 = vadd.f32 0.0, %v3764
      %v3766 = vpop.f32.mrf.mxu0
      %v3767 = vpop.f32.mrf.mxu0
      %v3768 = vadd.f32 0.0, %v3767
      %v3769 = vpop.f32.mrf.mxu0
      %3770 = vmatprep.mubr.bf16.mxu0 0
      %3771 = vmatmul.mubr.bf16.gmra.mxu0 %v3580
      %v3772 = vpop.f32.mrf.mxu0
      %v3773 = vadd.f32 0.0, %v3772
      %v3774 = vpop.f32.mrf.mxu0
      %v3775 = vpop.f32.mrf.mxu0
      %v3776 = vadd.f32 0.0, %v3775
      %v3777 = vpop.f32.mrf.mxu0
      %3778 = vmatprep.mubr.bf16.mxu0 0
      %3779 = vmatmul.mubr.bf16.gmra.mxu0 %v3584
      %v3780 = vpop.f32.mrf.mxu0
      %v3781 = vadd.f32 0.0, %v3780
      %v3782 = vpop.f32.mrf.mxu0
      %v3783 = vpop.f32.mrf.mxu0
      %v3784 = vpop.f32.mrf.mxu0
      %3785 = vmatprep.mubr.bf16.mxu0 0
      %3786 = vmatmul.mubr.bf16.gmra.mxu0 %v3588
      %v3787 = vpop.f32.mrf.mxu0
      %v3788 = vadd.f32 0.0, %v3787
      %v3789 = vpop.f32.mrf.mxu0
      %v3790 = vpop.f32.mrf.mxu0
      %v3791 = vadd.f32 0.0, %v3790
      %v3792 = vpop.f32.mrf.mxu0
      %3793 = vmatprep.mubr.bf16.mxu0 0
      %3794 = vmatmul.mubr.bf16.gmra.mxu0 %v3592
      %v3795 = vpop.f32.mrf.mxu0
      %v3796 = vadd.f32 0.0, %v3795
      %v3797 = vpop.f32.mrf.mxu0
      %v3798 = vpop.f32.mrf.mxu0
      %v3799 = vadd.f32 0.0, %v3798
      %v3800 = vpop.f32.mrf.mxu0
      %3801 = vmatprep.mubr.bf16.mxu0 0
      %3802 = vmatmul.mubr.bf16.gmra.mxu0 %v3596
      %v3803 = vpop.f32.mrf.mxu0
      %v3804 = vadd.f32 0.0, %v3803
      %v3805 = vpop.f32.mrf.mxu0
      %v3806 = vpop.f32.mrf.mxu0
      %v3807 = vadd.f32 0.0, %v3806
      %v3808 = vpop.f32.mrf.mxu0
      %3809 = vmatprep.mubr.bf16.mxu0 0
      %3810 = vmatmul.mubr.bf16.gmra.mxu0 %v3600
      %v3811 = vpop.f32.mrf.mxu0
      %v3812 = vadd.f32 0.0, %v3811
      %v3813 = vpop.f32.mrf.mxu0
      %v3814 = vpop.f32.mrf.mxu0
      %v3815 = vadd.f32 0.0, %v3814
      %v3816 = vpop.f32.mrf.mxu0
      %3817 = vmatprep.mubr.bf16.mxu0 0
      %3818 = vmatmul.mubr.bf16.gmra.mxu0 %v3604
      %v3819 = vpop.f32.mrf.mxu0
      %v3820 = vpop.f32.mrf.mxu0
      %v3821 = vpop.f32.mrf.mxu0
      %v3822 = vadd.f32 0.0, %v3821
      %v3823 = vpop.f32.mrf.mxu0
      %3824 = vmatprep.mubr.bf16.mxu0 0
      %3825 = vmatmul.mubr.bf16.gmra.mxu0 %v3608
      %v3826 = vpop.f32.mrf.mxu0
      %v3827 = vadd.f32 0.0, %v3826
      %v3828 = vpop.f32.mrf.mxu0
      %v3829 = vpop.f32.mrf.mxu0
      %v3830 = vadd.f32 0.0, %v3829
      %v3831 = vpop.f32.mrf.mxu0
      %3832 = vmatprep.mubr.bf16.mxu0 0
      %3833 = vmatmul.mubr.bf16.gmra.mxu0 %v3612
      %v3834 = vpop.f32.mrf.mxu0
      %v3835 = vadd.f32 0.0, %v3834
      %v3836 = vpop.f32.mrf.mxu0
      %v3837 = vpop.f32.mrf.mxu0
      %v3838 = vadd.f32 0.0, %v3837
      %v3839 = vpop.f32.mrf.mxu0
      %3840 = vmatprep.mubr.bf16.mxu0 0
      %3841 = vmatmul.mubr.bf16.gmra.mxu0 %v3616
      %v3842 = vpop.f32.mrf.mxu0
      %v3843 = vadd.f32 0.0, %v3842
      %v3844 = vpop.f32.mrf.mxu0
      %v3845 = vpop.f32.mrf.mxu0
      %v3846 = vadd.f32 0.0, %v3845
      %v3847 = vpop.f32.mrf.mxu0
      %3848 = vmatprep.mubr.bf16.mxu0 0
      %3849 = vmatmul.mubr.bf16.gmra.mxu0 %v3615
      %v3850 = vpop.f32.mrf.mxu0
      %v3851 = vadd.f32 0.0, %v3850
      %v3852 = vpop.f32.mrf.mxu0
      %v3853 = vpop.f32.mrf.mxu0
      %v3854 = vpop.f32.mrf.mxu0
      %3855 = vdwg.mxu0
      %v3856 = vadd.f32 %v3497, %v3718
      %v3857 = vadd.f32 %v3498, %v3721
      %v3858 = vadd.f32 %v3499, %v3726
      %v3859 = vadd.f32 %v3500, %v3729
      %v3860 = vadd.f32 %v3501, %v3734
      %v3861 = vadd.f32 %v3502, %v3737
      %v3862 = vadd.f32 %v3503, %v3742
      %v3863 = vadd.f32 %v3504, %v3745
      %v3864 = vadd.f32 %v3505, %v3752
      %v3865 = vadd.f32 %v3506, %v3757
      %v3866 = vadd.f32 %v3507, %v3760
      %v3867 = vadd.f32 %v3508, %v3765
      %v3868 = vadd.f32 %v3509, %v3768
      %v3869 = vadd.f32 %v3510, %v3773
      %v3870 = vadd.f32 %v3511, %v3776
      %v3871 = vadd.f32 %v3512, %v3781
      %v3872 = vadd.f32 %v3513, %v3788
      %v3873 = vadd.f32 %v3514, %v3791
      %v3874 = vadd.f32 %v3515, %v3796
      %v3875 = vadd.f32 %v3516, %v3799
      %v3876 = vadd.f32 %v3517, %v3804
      %v3877 = vadd.f32 %v3518, %v3807
      %v3878 = vadd.f32 %v3519, %v3812
      %v3879 = vadd.f32 %v3520, %v3815
      %v3880 = vadd.f32 %v3521, %v3822
      %v3881 = vadd.f32 %v3522, %v3827
      %v3882 = vadd.f32 %v3523, %v3830
      %v3883 = vadd.f32 %v3524, %v3835
      %v3884 = vadd.f32 %v3525, %v3838
      %v3885 = vadd.f32 %v3526, %v3843
      %v3886 = vadd.f32 %v3527, %v3846
      %v3887 = vadd.f32 %v3528, %v3851
      %s3888 = scalar_lea.vmem %s3, 256
      %v3889 = vld [vmem:[%s3888] sm:$0xf]
      %v3890 = vld [vmem:[%s3888 + $0x4] sm:$0xf]
      %v3891 = vld [vmem:[%s3888 + $0x8] sm:$0xf]
      %v3892 = vld [vmem:[%s3888 + $0xc] sm:$0xf]
      %v3893 = vld [vmem:[%s3888 + $0x10] sm:$0xf]
      %v3894 = vld [vmem:[%s3888 + $0x14] sm:$0xf]
      %v3895 = vld [vmem:[%s3888 + $0x18] sm:$0xf]
      %v3896 = vld [vmem:[%s3888 + $0x1c] sm:$0xf]
      %v3897 = vld [vmem:[%s3888 + $0x20] sm:$0xf]
      %v3898 = vld [vmem:[%s3888 + $0x24] sm:$0xf]
      %v3899 = vld [vmem:[%s3888 + $0x28] sm:$0xf]
      %v3900 = vld [vmem:[%s3888 + $0x2c] sm:$0xf]
      %v3901 = vld [vmem:[%s3888 + $0x30] sm:$0xf]
      %v3902 = vld [vmem:[%s3888 + $0x34] sm:$0xf]
      %v3903 = vld [vmem:[%s3888 + $0x38] sm:$0xf]
      %v3904 = vld [vmem:[%s3888 + $0x3c] sm:$0xf]
      %v3905 = vrot.slane %v2469, 2
      %v3906 = vrot.slane %v2470, 2
      %v3907 = vsel %vm2075, %v3905, %v3906
      %v3908 = vrot.slane %v2471, 2
      %v3909 = vsel %vm2075, %v3906, %v3908
      %v3910 = vrot.slane %v2472, 2
      %v3911 = vsel %vm2075, %v3908, %v3910
      %v3912 = vrot.slane %v2473, 2
      %v3913 = vsel %vm2075, %v3910, %v3912
      %v3914 = vrot.slane %v2474, 2
      %v3915 = vsel %vm2075, %v3912, %v3914
      %v3916 = vrot.slane %v2475, 2
      %v3917 = vsel %vm2075, %v3914, %v3916
      %v3918 = vrot.slane %v2476, 2
      %v3919 = vsel %vm2075, %v3916, %v3918
      %v3920 = vrot.slane %v2477, 2
      %v3921 = vsel %vm2075, %v3918, %v3920
      %v3922 = vrot.slane %v2478, 2
      %v3923 = vsel %vm2075, %v3920, %v3922
      %v3924 = vrot.slane %v2479, 2
      %v3925 = vsel %vm2075, %v3922, %v3924
      %v3926 = vrot.slane %v2480, 2
      %v3927 = vsel %vm2075, %v3924, %v3926
      %v3928 = vrot.slane %v2481, 2
      %v3929 = vsel %vm2075, %v3926, %v3928
      %v3930 = vrot.slane %v2482, 2
      %v3931 = vsel %vm2075, %v3928, %v3930
      %v3932 = vrot.slane %v2483, 2
      %v3933 = vsel %vm2075, %v3930, %v3932
      %v3934 = vrot.slane %v2484, 2
      %v3935 = vsel %vm2075, %v3932, %v3934
      %v3936 = vrot.slane %v2485, 2
      %v3937 = vsel %vm2075, %v3934, %v3936
      %v3938 = vrot.slane %v2756, 2
      %v3939 = vsel %vm2075, %v3936, %v3938
      %v3974 = vunpack.c.l.b16 %v3889
      %v3975 = vunpack.c.l.b16 %v3890
      %v3976 = vunpack.c.l.b16 %v3891
      %v3977 = vunpack.c.l.b16 %v3892
      %v3978 = vunpack.c.l.b16 %v3893
      %v3979 = vunpack.c.l.b16 %v3894
      %v3980 = vunpack.c.l.b16 %v3895
      %v3981 = vunpack.c.l.b16 %v3896
      %v3982 = vunpack.c.l.b16 %v3897
      %v3983 = vunpack.c.l.b16 %v3898
      %v3984 = vunpack.c.l.b16 %v3899
      %v3985 = vunpack.c.l.b16 %v3900
      %v3986 = vunpack.c.l.b16 %v3901
      %v3987 = vunpack.c.l.b16 %v3902
      %v3988 = vunpack.c.l.b16 %v3903
      %v3989 = vunpack.c.l.b16 %v3904
      %v3990 = vpack.c.b16 %v3975, %v3974
      %v3991 = vpack.c.b16 %v3977, %v3976
      %v3992 = vpack.c.b16 %v3979, %v3978
      %v3993 = vpack.c.b16 %v3981, %v3980
      %v3994 = vpack.c.b16 %v3983, %v3982
      %v3995 = vpack.c.b16 %v3985, %v3984
      %v3996 = vpack.c.b16 %v3987, %v3986
      %v3997 = vpack.c.b16 %v3989, %v3988
      %4006 = vmatprep.subr.bf16.mxu0 0
      %4007 = vmatpush1.bf16.msra.mxu0 %v3997
      %4008 = vmatprep.subr.bf16.mxu0 0
      %4009 = vmatpush1.bf16.msra.mxu0 %v3996
      %4010 = vmatprep.subr.bf16.mxu0 0
      %4011 = vmatpush1.bf16.msra.mxu0 %v3995
      %4012 = vmatprep.subr.bf16.mxu0 0
      %4013 = vmatpush1.bf16.msra.mxu0 %v3994
      %4014 = vmatprep.subr.bf16.mxu0 0
      %4015 = vmatpush1.bf16.msra.mxu0 %v3993
      %4016 = vmatprep.subr.bf16.mxu0 0
      %4017 = vmatpush1.bf16.msra.mxu0 %v3992
      %4018 = vmatprep.subr.bf16.mxu0 0
      %4019 = vmatpush1.bf16.msra.mxu0 %v3991
      %4020 = vmatprep.subr.bf16.mxu0 0
      %4021 = vmatpush1.bf16.msra.mxu0 %v3990
      %4022 = vmatprep.subr.bf16.mxu0 0
      %4023 = vmatpush2.bf16.msra.mxu0 0
      %4024 = vmatprep.subr.bf16.mxu0 0
      %4025 = vmatpush2.bf16.msra.mxu0 0
      %4026 = vmatprep.subr.bf16.mxu0 0
      %4027 = vmatpush2.bf16.msra.mxu0 0
      %4028 = vmatprep.subr.bf16.mxu0 0
      %4029 = vmatpush2.bf16.msra.mxu0 0
      %4030 = vmatprep.subr.bf16.mxu0 0
      %4031 = vmatpush2.bf16.msra.mxu0 0
      %4032 = vmatprep.subr.bf16.mxu0 0
      %4033 = vmatpush2.bf16.msra.mxu0 0
      %4034 = vmatprep.subr.bf16.mxu0 0
      %4035 = vmatpush2.bf16.msra.mxu0 0
      %4036 = vmatprep.subr.bf16.mxu0 0
      %4037 = vmatpush2.bf16.msra.mxu0 0
      %4038 = vmatprep.mubr.bf16.mxu0 0
      %4039 = vmatmul.mubr.bf16.gmra.mxu0 %v3907
      %v4040 = vpop.f32.mrf.mxu0
      %v4041 = vadd.f32 0.0, %v4040
      %v4042 = vpop.f32.mrf.mxu0
      %v4043 = vpop.f32.mrf.mxu0
      %v4044 = vadd.f32 0.0, %v4043
      %v4045 = vpop.f32.mrf.mxu0
      %4046 = vmatprep.mubr.bf16.mxu0 0
      %4047 = vmatmul.mubr.bf16.gmra.mxu0 %v3909
      %v4048 = vpop.f32.mrf.mxu0
      %v4049 = vadd.f32 0.0, %v4048
      %v4050 = vpop.f32.mrf.mxu0
      %v4051 = vpop.f32.mrf.mxu0
      %v4052 = vadd.f32 0.0, %v4051
      %v4053 = vpop.f32.mrf.mxu0
      %4054 = vmatprep.mubr.bf16.mxu0 0
      %4055 = vmatmul.mubr.bf16.gmra.mxu0 %v3911
      %v4056 = vpop.f32.mrf.mxu0
      %v4057 = vadd.f32 0.0, %v4056
      %v4058 = vpop.f32.mrf.mxu0
      %v4059 = vpop.f32.mrf.mxu0
      %v4060 = vadd.f32 0.0, %v4059
      %v4061 = vpop.f32.mrf.mxu0
      %4062 = vmatprep.mubr.bf16.mxu0 0
      %4063 = vmatmul.mubr.bf16.gmra.mxu0 %v3913
      %v4064 = vpop.f32.mrf.mxu0
      %v4065 = vadd.f32 0.0, %v4064
      %v4066 = vpop.f32.mrf.mxu0
      %v4067 = vpop.f32.mrf.mxu0
      %v4068 = vadd.f32 0.0, %v4067
      %v4069 = vpop.f32.mrf.mxu0
      %4070 = vmatprep.mubr.bf16.mxu0 0
      %4071 = vmatmul.mubr.bf16.gmra.mxu0 %v3915
      %v4072 = vpop.f32.mrf.mxu0
      %v4073 = vpop.f32.mrf.mxu0
      %v4074 = vpop.f32.mrf.mxu0
      %v4075 = vadd.f32 0.0, %v4074
      %v4076 = vpop.f32.mrf.mxu0
      %4077 = vmatprep.mubr.bf16.mxu0 0
      %4078 = vmatmul.mubr.bf16.gmra.mxu0 %v3917
      %v4079 = vpop.f32.mrf.mxu0
      %v4080 = vadd.f32 0.0, %v4079
      %v4081 = vpop.f32.mrf.mxu0
      %v4082 = vpop.f32.mrf.mxu0
      %v4083 = vadd.f32 0.0, %v4082
      %v4084 = vpop.f32.mrf.mxu0
      %4085 = vmatprep.mubr.bf16.mxu0 0
      %4086 = vmatmul.mubr.bf16.gmra.mxu0 %v3919
      %v4087 = vpop.f32.mrf.mxu0
      %v4088 = vadd.f32 0.0, %v4087
      %v4089 = vpop.f32.mrf.mxu0
      %v4090 = vpop.f32.mrf.mxu0
      %v4091 = vadd.f32 0.0, %v4090
      %v4092 = vpop.f32.mrf.mxu0
      %4093 = vmatprep.mubr.bf16.mxu0 0
      %4094 = vmatmul.mubr.bf16.gmra.mxu0 %v3921
      %v4095 = vpop.f32.mrf.mxu0
      %v4096 = vadd.f32 0.0, %v4095
      %v4097 = vpop.f32.mrf.mxu0
      %v4098 = vpop.f32.mrf.mxu0
      %v4099 = vadd.f32 0.0, %v4098
      %v4100 = vpop.f32.mrf.mxu0
      %4101 = vmatprep.mubr.bf16.mxu0 0
      %4102 = vmatmul.mubr.bf16.gmra.mxu0 %v3923
      %v4103 = vpop.f32.mrf.mxu0
      %v4104 = vadd.f32 0.0, %v4103
      %v4105 = vpop.f32.mrf.mxu0
      %v4106 = vpop.f32.mrf.mxu0
      %v4107 = vpop.f32.mrf.mxu0
      %4108 = vmatprep.mubr.bf16.mxu0 0
      %4109 = vmatmul.mubr.bf16.gmra.mxu0 %v3925
      %v4110 = vpop.f32.mrf.mxu0
      %v4111 = vadd.f32 0.0, %v4110
      %v4112 = vpop.f32.mrf.mxu0
      %v4113 = vpop.f32.mrf.mxu0
      %v4114 = vadd.f32 0.0, %v4113
      %v4115 = vpop.f32.mrf.mxu0
      %4116 = vmatprep.mubr.bf16.mxu0 0
      %4117 = vmatmul.mubr.bf16.gmra.mxu0 %v3927
      %v4118 = vpop.f32.mrf.mxu0
      %v4119 = vadd.f32 0.0, %v4118
      %v4120 = vpop.f32.mrf.mxu0
      %v4121 = vpop.f32.mrf.mxu0
      %v4122 = vadd.f32 0.0, %v4121
      %v4123 = vpop.f32.mrf.mxu0
      %4124 = vmatprep.mubr.bf16.mxu0 0
      %4125 = vmatmul.mubr.bf16.gmra.mxu0 %v3929
      %v4126 = vpop.f32.mrf.mxu0
      %v4127 = vadd.f32 0.0, %v4126
      %v4128 = vpop.f32.mrf.mxu0
      %v4129 = vpop.f32.mrf.mxu0
      %v4130 = vadd.f32 0.0, %v4129
      %v4131 = vpop.f32.mrf.mxu0
      %4132 = vmatprep.mubr.bf16.mxu0 0
      %4133 = vmatmul.mubr.bf16.gmra.mxu0 %v3931
      %v4134 = vpop.f32.mrf.mxu0
      %v4135 = vadd.f32 0.0, %v4134
      %v4136 = vpop.f32.mrf.mxu0
      %v4137 = vpop.f32.mrf.mxu0
      %v4138 = vadd.f32 0.0, %v4137
      %v4139 = vpop.f32.mrf.mxu0
      %4140 = vmatprep.mubr.bf16.mxu0 0
      %4141 = vmatmul.mubr.bf16.gmra.mxu0 %v3933
      %v4142 = vpop.f32.mrf.mxu0
      %v4143 = vpop.f32.mrf.mxu0
      %v4144 = vpop.f32.mrf.mxu0
      %v4145 = vadd.f32 0.0, %v4144
      %v4146 = vpop.f32.mrf.mxu0
      %4147 = vmatprep.mubr.bf16.mxu0 0
      %4148 = vmatmul.mubr.bf16.gmra.mxu0 %v3935
      %v4149 = vpop.f32.mrf.mxu0
      %v4150 = vadd.f32 0.0, %v4149
      %v4151 = vpop.f32.mrf.mxu0
      %v4152 = vpop.f32.mrf.mxu0
      %v4153 = vadd.f32 0.0, %v4152
      %v4154 = vpop.f32.mrf.mxu0
      %4155 = vmatprep.mubr.bf16.mxu0 0
      %4156 = vmatmul.mubr.bf16.gmra.mxu0 %v3937
      %v4157 = vpop.f32.mrf.mxu0
      %v4158 = vadd.f32 0.0, %v4157
      %v4159 = vpop.f32.mrf.mxu0
      %v4160 = vpop.f32.mrf.mxu0
      %v4161 = vadd.f32 0.0, %v4160
      %v4162 = vpop.f32.mrf.mxu0
      %4163 = vmatprep.mubr.bf16.mxu0 0
      %4164 = vmatmul.mubr.bf16.gmra.mxu0 %v3939
      %v4165 = vpop.f32.mrf.mxu0
      %v4166 = vadd.f32 0.0, %v4165
      %v4167 = vpop.f32.mrf.mxu0
      %v4168 = vpop.f32.mrf.mxu0
      %v4169 = vadd.f32 0.0, %v4168
      %v4170 = vpop.f32.mrf.mxu0
      %4171 = vmatprep.mubr.bf16.mxu0 0
      %4172 = vmatmul.mubr.bf16.gmra.mxu0 %v3938
      %v4173 = vpop.f32.mrf.mxu0
      %v4174 = vadd.f32 0.0, %v4173
      %v4175 = vpop.f32.mrf.mxu0
      %v4176 = vpop.f32.mrf.mxu0
      %v4177 = vpop.f32.mrf.mxu0
      %4178 = vdwg.mxu0
      %v4179 = vadd.f32 %v3856, %v4041
      %v4180 = vadd.f32 %v3857, %v4044
      %v4181 = vadd.f32 %v3858, %v4049
      %v4182 = vadd.f32 %v3859, %v4052
      %v4183 = vadd.f32 %v3860, %v4057
      %v4184 = vadd.f32 %v3861, %v4060
      %v4185 = vadd.f32 %v3862, %v4065
      %v4186 = vadd.f32 %v3863, %v4068
      %v4187 = vadd.f32 %v3864, %v4075
      %v4188 = vadd.f32 %v3865, %v4080
      %v4189 = vadd.f32 %v3866, %v4083
      %v4190 = vadd.f32 %v3867, %v4088
      %v4191 = vadd.f32 %v3868, %v4091
      %v4192 = vadd.f32 %v3869, %v4096
      %v4193 = vadd.f32 %v3870, %v4099
      %v4194 = vadd.f32 %v3871, %v4104
      %v4195 = vadd.f32 %v3872, %v4111
      %v4196 = vadd.f32 %v3873, %v4114
      %v4197 = vadd.f32 %v3874, %v4119
      %v4198 = vadd.f32 %v3875, %v4122
      %v4199 = vadd.f32 %v3876, %v4127
      %v4200 = vadd.f32 %v3877, %v4130
      %v4201 = vadd.f32 %v3878, %v4135
      %v4202 = vadd.f32 %v3879, %v4138
      %v4203 = vadd.f32 %v3880, %v4145
      %v4204 = vadd.f32 %v3881, %v4150
      %v4205 = vadd.f32 %v3882, %v4153
      %v4206 = vadd.f32 %v3883, %v4158
      %v4207 = vadd.f32 %v3884, %v4161
      %v4208 = vadd.f32 %v3885, %v4166
      %v4209 = vadd.f32 %v3886, %v4169
      %v4210 = vadd.f32 %v3887, %v4174
      %v4211 = vtanh.pop %v4179
      %v4212 = vtanh.pop %v4180
      %v4213 = vtanh.pop %v4181
      %v4214 = vtanh.pop %v4182
      %v4215 = vtanh.pop %v4183
      %v4216 = vtanh.pop %v4184
      %v4217 = vtanh.pop %v4185
      %v4218 = vtanh.pop %v4186
      %v4219 = vtanh.pop %v4187
      %v4220 = vtanh.pop %v4188
      %v4221 = vtanh.pop %v4189
      %v4222 = vtanh.pop %v4190
      %v4223 = vtanh.pop %v4191
      %v4224 = vtanh.pop %v4192
      %v4225 = vtanh.pop %v4193
      %v4226 = vtanh.pop %v4194
      %v4227 = vtanh.pop %v4195
      %v4228 = vtanh.pop %v4196
      %v4229 = vtanh.pop %v4197
      %v4230 = vtanh.pop %v4198
      %v4231 = vtanh.pop %v4199
      %v4232 = vtanh.pop %v4200
      %v4233 = vtanh.pop %v4201
      %v4234 = vtanh.pop %v4202
      %v4235 = vtanh.pop %v4203
      %v4236 = vtanh.pop %v4204
      %v4237 = vtanh.pop %v4205
      %v4238 = vtanh.pop %v4206
      %v4239 = vtanh.pop %v4207
      %v4240 = vtanh.pop %v4208
      %v4241 = vtanh.pop %v4209
      %v4242 = vtanh.pop %v4210
      %4243 = vxpose.xlu0.b32.start [1/16] %v4211, 128
      %4244 = vxpose.xlu0.b32.cont [2/16] %v4212, 128
      %4245 = vxpose.xlu0.b32.cont [3/16] %v4213, 128
      %4246 = vxpose.xlu0.b32.cont [4/16] %v4214, 128
      %4247 = vxpose.xlu0.b32.cont [5/16] %v4215, 128
      %4248 = vxpose.xlu0.b32.cont [6/16] %v4216, 128
      %4249 = vxpose.xlu0.b32.cont [7/16] %v4217, 128
      %4250 = vxpose.xlu0.b32.cont [8/16] %v4218, 128
      %4251 = vxpose.xlu0.b32.cont [9/16] 0.0, 128
      %4252 = vxpose.xlu0.b32.cont [10/16] 0.0, 128
      %4253 = vxpose.xlu0.b32.cont [11/16] 0.0, 128
      %4254 = vxpose.xlu0.b32.cont [12/16] 0.0, 128
      %4255 = vxpose.xlu0.b32.cont [13/16] 0.0, 128
      %4256 = vxpose.xlu0.b32.cont [14/16] 0.0, 128
      %4257 = vxpose.xlu0.b32.cont [15/16] 0.0, 128
      %4258 = vxpose.xlu0.b32.end [16/16] 0.0, 128
      %v4259 = vpop.trf.xlu0
      %v4260 = vpop.trf.xlu0
      %v4261 = vpop.trf.xlu0
      %v4262 = vpop.trf.xlu0
      %v4263 = vpop.trf.xlu0
      %v4264 = vpop.trf.xlu0
      %v4265 = vpop.trf.xlu0
      %v4266 = vpop.trf.xlu0
      %v4267 = vpop.trf.xlu0
      %v4268 = vpop.trf.xlu0
      %v4269 = vpop.trf.xlu0
      %v4270 = vpop.trf.xlu0
      %v4271 = vpop.trf.xlu0
      %v4272 = vpop.trf.xlu0
      %v4273 = vpop.trf.xlu0
      %v4274 = vpop.trf.xlu0
      %vm4275 = vcmask 523264
      %4276 = vst.msk [vmem:[%s231] sm:$0xff] %vm4275, %v4259
      %4277 = vst.msk [vmem:[%s231 + $0x8] sm:$0xff] %vm4275, %v4260
      %4278 = vst.msk [vmem:[%s231 + $0x10] sm:$0xff] %vm4275, %v4261
      %4279 = vst.msk [vmem:[%s231 + $0x18] sm:$0xff] %vm4275, %v4262
      %4280 = vst.msk [vmem:[%s231 + $0x20] sm:$0xff] %vm4275, %v4263
      %4281 = vst.msk [vmem:[%s231 + $0x28] sm:$0xff] %vm4275, %v4264
      %4282 = vst.msk [vmem:[%s231 + $0x30] sm:$0xff] %vm4275, %v4265
      %4283 = vst.msk [vmem:[%s231 + $0x38] sm:$0xff] %vm4275, %v4266
      %4284 = vst.msk [vmem:[%s231 + $0x40] sm:$0xff] %vm4275, %v4267
      %4285 = vst.msk [vmem:[%s231 + $0x48] sm:$0xff] %vm4275, %v4268
      %4286 = vst.msk [vmem:[%s231 + $0x50] sm:$0xff] %vm4275, %v4269
      %4287 = vst.msk [vmem:[%s231 + $0x58] sm:$0xff] %vm4275, %v4270
      %4288 = vst.msk [vmem:[%s231 + $0x60] sm:$0xff] %vm4275, %v4271
      %4289 = vst.msk [vmem:[%s231 + $0x68] sm:$0xff] %vm4275, %v4272
      %4290 = vst.msk [vmem:[%s231 + $0x70] sm:$0xff] %vm4275, %v4273
      %4291 = vst.msk [vmem:[%s231 + $0x78] sm:$0xff] %vm4275, %v4274
      %4292 = vxpose.xlu0.b32.start [1/16] %v4219, 128
      %4293 = vxpose.xlu0.b32.cont [2/16] %v4220, 128
      %4294 = vxpose.xlu0.b32.cont [3/16] %v4221, 128
      %4295 = vxpose.xlu0.b32.cont [4/16] %v4222, 128
      %4296 = vxpose.xlu0.b32.cont [5/16] %v4223, 128
      %4297 = vxpose.xlu0.b32.cont [6/16] %v4224, 128
      %4298 = vxpose.xlu0.b32.cont [7/16] %v4225, 128
      %4299 = vxpose.xlu0.b32.cont [8/16] %v4226, 128
      %4300 = vxpose.xlu0.b32.cont [9/16] 0.0, 128
      %4301 = vxpose.xlu0.b32.cont [10/16] 0.0, 128
      %4302 = vxpose.xlu0.b32.cont [11/16] 0.0, 128
      %4303 = vxpose.xlu0.b32.cont [12/16] 0.0, 128
      %4304 = vxpose.xlu0.b32.cont [13/16] 0.0, 128
      %4305 = vxpose.xlu0.b32.cont [14/16] 0.0, 128
      %4306 = vxpose.xlu0.b32.cont [15/16] 0.0, 128
      %4307 = vxpose.xlu0.b32.end [16/16] 0.0, 128
      %v4308 = vpop.trf.xlu0
      %v4309 = vpop.trf.xlu0
      %v4310 = vpop.trf.xlu0
      %v4311 = vpop.trf.xlu0
      %v4312 = vpop.trf.xlu0
      %v4313 = vpop.trf.xlu0
      %v4314 = vpop.trf.xlu0
      %v4315 = vpop.trf.xlu0
      %v4316 = vpop.trf.xlu0
      %v4317 = vpop.trf.xlu0
      %v4318 = vpop.trf.xlu0
      %v4319 = vpop.trf.xlu0
      %v4320 = vpop.trf.xlu0
      %v4321 = vpop.trf.xlu0
      %v4322 = vpop.trf.xlu0
      %v4323 = vpop.trf.xlu0
      %s4324 = scalar_lea.vmem %s231, 128
      %4325 = vst.msk [vmem:[%s4324] sm:$0xff] %vm4275, %v4308
      %4326 = vst.msk [vmem:[%s4324 + $0x8] sm:$0xff] %vm4275, %v4309
      %4327 = vst.msk [vmem:[%s4324 + $0x10] sm:$0xff] %vm4275, %v4310
      %4328 = vst.msk [vmem:[%s4324 + $0x18] sm:$0xff] %vm4275, %v4311
      %4329 = vst.msk [vmem:[%s4324 + $0x20] sm:$0xff] %vm4275, %v4312
      %4330 = vst.msk [vmem:[%s4324 + $0x28] sm:$0xff] %vm4275, %v4313
      %4331 = vst.msk [vmem:[%s4324 + $0x30] sm:$0xff] %vm4275, %v4314
      %4332 = vst.msk [vmem:[%s4324 + $0x38] sm:$0xff] %vm4275, %v4315
      %4333 = vst.msk [vmem:[%s4324 + $0x40] sm:$0xff] %vm4275, %v4316
      %4334 = vst.msk [vmem:[%s4324 + $0x48] sm:$0xff] %vm4275, %v4317
      %4335 = vst.msk [vmem:[%s4324 + $0x50] sm:$0xff] %vm4275, %v4318
      %4336 = vst.msk [vmem:[%s4324 + $0x58] sm:$0xff] %vm4275, %v4319
      %4337 = vst.msk [vmem:[%s4324 + $0x60] sm:$0xff] %vm4275, %v4320
      %4338 = vst.msk [vmem:[%s4324 + $0x68] sm:$0xff] %vm4275, %v4321
      %4339 = vst.msk [vmem:[%s4324 + $0x70] sm:$0xff] %vm4275, %v4322
      %4340 = vst.msk [vmem:[%s4324 + $0x78] sm:$0xff] %vm4275, %v4323
      %4341 = vxpose.xlu0.b32.start [1/16] %v4227, 128
      %4342 = vxpose.xlu0.b32.cont [2/16] %v4228, 128
      %4343 = vxpose.xlu0.b32.cont [3/16] %v4229, 128
      %4344 = vxpose.xlu0.b32.cont [4/16] %v4230, 128
      %4345 = vxpose.xlu0.b32.cont [5/16] %v4231, 128
      %4346 = vxpose.xlu0.b32.cont [6/16] %v4232, 128
      %4347 = vxpose.xlu0.b32.cont [7/16] %v4233, 128
      %4348 = vxpose.xlu0.b32.cont [8/16] %v4234, 128
      %4349 = vxpose.xlu0.b32.cont [9/16] 0.0, 128
      %4350 = vxpose.xlu0.b32.cont [10/16] 0.0, 128
      %4351 = vxpose.xlu0.b32.cont [11/16] 0.0, 128
      %4352 = vxpose.xlu0.b32.cont [12/16] 0.0, 128
      %4353 = vxpose.xlu0.b32.cont [13/16] 0.0, 128
      %4354 = vxpose.xlu0.b32.cont [14/16] 0.0, 128
      %4355 = vxpose.xlu0.b32.cont [15/16] 0.0, 128
      %4356 = vxpose.xlu0.b32.end [16/16] 0.0, 128
      %v4357 = vpop.trf.xlu0
      %v4358 = vpop.trf.xlu0
      %v4359 = vpop.trf.xlu0
      %v4360 = vpop.trf.xlu0
      %v4361 = vpop.trf.xlu0
      %v4362 = vpop.trf.xlu0
      %v4363 = vpop.trf.xlu0
      %v4364 = vpop.trf.xlu0
      %v4365 = vpop.trf.xlu0
      %v4366 = vpop.trf.xlu0
      %v4367 = vpop.trf.xlu0
      %v4368 = vpop.trf.xlu0
      %v4369 = vpop.trf.xlu0
      %v4370 = vpop.trf.xlu0
      %v4371 = vpop.trf.xlu0
      %v4372 = vpop.trf.xlu0
      %s4373 = scalar_lea.vmem %s231, 256
      %4374 = vst.msk [vmem:[%s4373] sm:$0xff] %vm4275, %v4357
      %4375 = vst.msk [vmem:[%s4373 + $0x8] sm:$0xff] %vm4275, %v4358
      %4376 = vst.msk [vmem:[%s4373 + $0x10] sm:$0xff] %vm4275, %v4359
      %4377 = vst.msk [vmem:[%s4373 + $0x18] sm:$0xff] %vm4275, %v4360
      %4378 = vst.msk [vmem:[%s4373 + $0x20] sm:$0xff] %vm4275, %v4361
      %4379 = vst.msk [vmem:[%s4373 + $0x28] sm:$0xff] %vm4275, %v4362
      %4380 = vst.msk [vmem:[%s4373 + $0x30] sm:$0xff] %vm4275, %v4363
      %4381 = vst.msk [vmem:[%s4373 + $0x38] sm:$0xff] %vm4275, %v4364
      %4382 = vst.msk [vmem:[%s4373 + $0x40] sm:$0xff] %vm4275, %v4365
      %4383 = vst.msk [vmem:[%s4373 + $0x48] sm:$0xff] %vm4275, %v4366
      %4384 = vst.msk [vmem:[%s4373 + $0x50] sm:$0xff] %vm4275, %v4367
      %4385 = vst.msk [vmem:[%s4373 + $0x58] sm:$0xff] %vm4275, %v4368
      %4386 = vst.msk [vmem:[%s4373 + $0x60] sm:$0xff] %vm4275, %v4369
      %4387 = vst.msk [vmem:[%s4373 + $0x68] sm:$0xff] %vm4275, %v4370
      %4388 = vst.msk [vmem:[%s4373 + $0x70] sm:$0xff] %vm4275, %v4371
      %4389 = vst.msk [vmem:[%s4373 + $0x78] sm:$0xff] %vm4275, %v4372
      %4390 = vxpose.xlu0.b32.start [1/16] %v4235, 128
      %4391 = vxpose.xlu0.b32.cont [2/16] %v4236, 128
      %4392 = vxpose.xlu0.b32.cont [3/16] %v4237, 128
      %4393 = vxpose.xlu0.b32.cont [4/16] %v4238, 128
      %4394 = vxpose.xlu0.b32.cont [5/16] %v4239, 128
      %4395 = vxpose.xlu0.b32.cont [6/16] %v4240, 128
      %4396 = vxpose.xlu0.b32.cont [7/16] %v4241, 128
      %4397 = vxpose.xlu0.b32.cont [8/16] %v4242, 128
      %4398 = vxpose.xlu0.b32.cont [9/16] 0.0, 128
      %4399 = vxpose.xlu0.b32.cont [10/16] 0.0, 128
      %4400 = vxpose.xlu0.b32.cont [11/16] 0.0, 128
      %4401 = vxpose.xlu0.b32.cont [12/16] 0.0, 128
      %4402 = vxpose.xlu0.b32.cont [13/16] 0.0, 128
      %4403 = vxpose.xlu0.b32.cont [14/16] 0.0, 128
      %4404 = vxpose.xlu0.b32.cont [15/16] 0.0, 128
      %4405 = vxpose.xlu0.b32.end [16/16] 0.0, 128
      %v4406 = vpop.trf.xlu0
      %v4407 = vpop.trf.xlu0
      %v4408 = vpop.trf.xlu0
      %v4409 = vpop.trf.xlu0
      %v4410 = vpop.trf.xlu0
      %v4411 = vpop.trf.xlu0
      %v4412 = vpop.trf.xlu0
      %v4413 = vpop.trf.xlu0
      %v4414 = vpop.trf.xlu0
      %v4415 = vpop.trf.xlu0
      %v4416 = vpop.trf.xlu0
      %v4417 = vpop.trf.xlu0
      %v4418 = vpop.trf.xlu0
      %v4419 = vpop.trf.xlu0
      %v4420 = vpop.trf.xlu0
      %v4421 = vpop.trf.xlu0
      %s4422 = scalar_lea.vmem %s231, 384
      %4423 = vst.msk [vmem:[%s4422] sm:$0xff] %vm4275, %v4406
      %4424 = vst.msk [vmem:[%s4422 + $0x8] sm:$0xff] %vm4275, %v4407
      %4425 = vst.msk [vmem:[%s4422 + $0x10] sm:$0xff] %vm4275, %v4408
      %4426 = vst.msk [vmem:[%s4422 + $0x18] sm:$0xff] %vm4275, %v4409
      %4427 = vst.msk [vmem:[%s4422 + $0x20] sm:$0xff] %vm4275, %v4410
      %4428 = vst.msk [vmem:[%s4422 + $0x28] sm:$0xff] %vm4275, %v4411
      %4429 = vst.msk [vmem:[%s4422 + $0x30] sm:$0xff] %vm4275, %v4412
      %4430 = vst.msk [vmem:[%s4422 + $0x38] sm:$0xff] %vm4275, %v4413
      %4431 = vst.msk [vmem:[%s4422 + $0x40] sm:$0xff] %vm4275, %v4414
      %4432 = vst.msk [vmem:[%s4422 + $0x48] sm:$0xff] %vm4275, %v4415
      %4433 = vst.msk [vmem:[%s4422 + $0x50] sm:$0xff] %vm4275, %v4416
      %4434 = vst.msk [vmem:[%s4422 + $0x58] sm:$0xff] %vm4275, %v4417
      %4435 = vst.msk [vmem:[%s4422 + $0x60] sm:$0xff] %vm4275, %v4418
      %4436 = vst.msk [vmem:[%s4422 + $0x68] sm:$0xff] %vm4275, %v4419
      %4437 = vst.msk [vmem:[%s4422 + $0x70] sm:$0xff] %vm4275, %v4420
      %4438 = vst.msk [vmem:[%s4422 + $0x78] sm:$0xff] %vm4275, %v4421
      %s4439 = smul.u32 4, %s16
      %p4440 = scmp.lt.s32.totalorder %s4439, 15
      %s4441 = scalar_select %p4440, %s4439, 15
      %s4442 = smul.addr %s4441, 16
      %s4443 = smul.addr %s4442, 8
      %s4444 = scalar_lea.vmem %s5, %s4443
      // Predicated region
      $region41: #{causal_conv_block.1} parent=39 // pred_check
        %p4445 = pneg %p144
      $region42: #{causal_conv_block.1} parent=39 // pred_check_branch
        %4447 = sbr.rel (%p4445) target = $region44
      $region43: #{causal_conv_block.1} parent=39 // pred_region
        %s4448 = smul.u32 4, %s16
      $region44: #{causal_conv_block.1} parent=39 // pred_fallthru
        _
    $region40: #{causal_conv_block.1} parent=5 // pred_fallthru
      _
    %p4449 = scmp.le.s32.totalorder 2, %s11
    // Predicated region
    $region45: #{causal_conv_block.1} parent=5 // pred_check
      %p4450 = pneg %p4449
    $region46: #{causal_conv_block.1} parent=5 // pred_check_branch
      %4452 = sbr.rel (%p4450) target = $region48
    $region47: #{causal_conv_block.1} parent=5 // pred_region
      %s4453 = ssub.s32 %s11, 2
      // Predicated region
      $region49: #{causal_conv_block.1} parent=47 // pred_check
        %p4454 = pneg %p150
      $region50: #{causal_conv_block.1} parent=47 // pred_check_branch
        %4456 = sbr.rel (%p4454) target = $region52
      $region51: #{causal_conv_block.1} parent=47 // pred_region
        %s4457 = smul.u32 4, %s17
        %p4458 = scmp.lt.s32.totalorder %s4457, 15
        %s4459 = scalar_select %p4458, %s4457, 15
        %s4460 = smul.addr %s4459, 16
        %s4461 = smul.addr %s4460, 8
        %s4462 = scalar_lea.vmem %s5, %s4461
      $region52: #{causal_conv_block.1} parent=47 // pred_fallthru
        _
    $region48: #{causal_conv_block.1} parent=5 // pred_fallthru
      _
  $region6: #{causal_conv_block.1} parent=0 // loop_footer
    %s15 = sadd.s32 1, %s11
  $region7: #{causal_conv_block.1} parent=0 // loop_footer_branch
    %10 = sbr.rel target = $region3
  $region8: #{causal_conv_block.1} parent=0 // loop_exit
    _

</llo_original>
